<compile_context>
chip_gen: v5e
topology: v5e:2x2
jax: 0.10.0
libtpu: 0.0.40
codegen_flags: <defaults>
</compile_context>

<pallas_src>
import functools

import jax
import jax.numpy as jnp
from jax.experimental import pallas as pl
from jax.experimental.pallas import tpu as pltpu

HIDDEN = 256
LANE = 128


# --------------------------------------------------------------------------
# Kernel
# --------------------------------------------------------------------------
def char_model_kernel(x_ref, wih0_ref, b0_ref, whh0_hbm, w1_hbm, b1_ref,
                      wlin_hbm, blin_ref, out_ref,
                      whh0_vmem, w1_vmem, wlin_vmem, dma_sem,
                      *, gate_dtype):
    T, B, _ = x_ref.shape
    H = HIDDEN

    # Kick off the big HBM->VMEM weight DMAs immediately; each is waited on
    # just before its first use so the transfer hides behind earlier compute.
    w1_cp = pltpu.make_async_copy(w1_hbm, w1_vmem, dma_sem.at[0])
    whh0_cp = pltpu.make_async_copy(whh0_hbm, whh0_vmem, dma_sem.at[1])
    wlin_cp = pltpu.make_async_copy(wlin_hbm, wlin_vmem, dma_sem.at[2])
    w1_cp.start()
    if T > 1:               # whh0 only needed when there is a step t+1
        whh0_cp.start()
    wlin_cp.start()

    wih0 = wih0_ref[...]          # (1, 4H) f32
    b0 = b0_ref[...]              # (1, 4H) f32
    b1 = b1_ref[...]              # (1, 4H) f32

    def x_proj(t):
        # input_size == 1, so the layer-0 "ih matmul" is a lane-broadcast
        # multiply-add; recomputed per step (~1 vreg of work) so it never
        # occupies vregs across the unrolled loop.
        return x_ref[t] * wih0 + b0

    def lstm_cell(z, c):
        # Gate column order was permuted at prep time to (i, f, o, g): one
        # sigmoid over a contiguous 3H slice, one tanh over the last H.
        zg = z.astype(gate_dtype)
        sig = jax.nn.sigmoid(zg[:, :3 * H])
        i = sig[:, 0 * H:1 * H]
        f = sig[:, 1 * H:2 * H]
        o = sig[:, 2 * H:3 * H]
        g = jnp.tanh(zg[:, 3 * H:])
        # cell state stays f32 on every chip
        c_new = f.astype(jnp.float32) * c + (i * g).astype(jnp.float32)
        h_new = o * jnp.tanh(c_new.astype(gate_dtype))
        # carry h in bf16 so the next step's MXU input needs no convert
        return h_new.astype(jnp.bfloat16), c_new

    h0 = jnp.zeros((B, H), jnp.bfloat16)
    h1 = jnp.zeros((B, H), jnp.bfloat16)
    c0 = jnp.zeros((B, H), jnp.float32)
    c1 = jnp.zeros((B, H), jnp.float32)

    # Software-pipelined, statically unrolled recurrence.
    # h0(0) == 0  =>  z0(0) = x_proj(0): no matmul needed for the first step.
    z0_t = x_proj(0)
    for t in range(T):
        h0, c0 = lstm_cell(z0_t, c0)                      # layer-0 gates, step t

        if t == 0:
            w1_cp.wait()                                  # first use of w1
        # layer-1 matmul for step t ...
        z1_t = jnp.dot(jnp.concatenate([h0, h1], axis=-1), w1_vmem[...],
                       preferred_element_type=jnp.float32) + b1
        # ... and layer-0 matmul for step t+1, issued back-to-back
        # (both depend only on h0(t) and older state).
        if t + 1 < T:
            if t == 0:
                whh0_cp.wait()                            # first use of whh0
            z0_t = x_proj(t + 1) + jnp.dot(h0, whh0_vmem[...],
                                           preferred_element_type=jnp.float32)

        h1, c1 = lstm_cell(z1_t, c1)                      # layer-1 gates, step t

    # Dropout(p=0.2) is identity in eval mode.
    wlin_cp.wait()                    # classifier weights: DMA fully hidden
    logits = jnp.dot(h1, wlin_vmem[...],
                     preferred_element_type=jnp.float32) + blin_ref[...]
    out_ref[...] = logits.astype(out_ref.dtype)


# --------------------------------------------------------------------------
# Wrapper
# --------------------------------------------------------------------------
def _gate_dtype_for_device():
    """bf16 gate/EUP math only on chips with bf16-native VPU/EUP (v6e/v7x)."""
    try:
        kind = jax.devices()[0].device_kind.lower()
    except Exception:
        return jnp.float32
    if ("v6" in kind) or ("v7" in kind) or ("7x" in kind):
        return jnp.bfloat16
    return jnp.float32     # v5e / unknown: keep f32 gates


def char_model_forward(x, params, gate_dtype=None):
    """x: (B, T, 1) float32 (batch_first, like the PyTorch module).

    Note: M = B pads to 8/16 sublanes anyway, so batching up to ~16 sequences
    per call is free throughput for the recurrence (the head stays 128-wide).
    """
    if gate_dtype is None:
        gate_dtype = _gate_dtype_for_device()

    B, T, _ = x.shape
    H = HIDDEN
    x_tm = jnp.transpose(x, (1, 0, 2)).astype(jnp.float32)    # (T, B, 1)
    n_pad = params["w_lin"].shape[1]                          # lane-dense (128)

    vmem = lambda: pl.BlockSpec(memory_space=pltpu.MemorySpace.VMEM)
    hbm = lambda: pl.BlockSpec(memory_space=pl.ANY)

    out_padded = pl.pallas_call(
        functools.partial(char_model_kernel, gate_dtype=gate_dtype),
        out_shape=jax.ShapeDtypeStruct((B, n_pad), jnp.float32),
        in_specs=[vmem(),   # x           (tiny, auto-DMA)
                  vmem(),   # w_ih0       (tiny, auto-DMA)
                  vmem(),   # b0
                  hbm(),    # w_hh0       -> manual DMA
                  hbm(),    # w1          -> manual DMA
                  vmem(),   # b1
                  hbm(),    # w_lin       -> manual DMA
                  vmem()],  # b_lin
        out_specs=vmem(),
        scratch_shapes=[pltpu.VMEM((H, 4 * H), jnp.bfloat16),      # whh0
                        pltpu.VMEM((2 * H, 4 * H), jnp.bfloat16),  # w1
                        pltpu.VMEM((H, n_pad), jnp.bfloat16),      # w_lin
                        pltpu.SemaphoreType.DMA((3,))],
        # no grid: total resident footprint ~1.7 MB, fully VMEM-resident on
        # v5e/v6e/v7x; per-grid-step overhead would dominate a few-us kernel.
    )(x_tm,
      params["w_ih0"], params["b0"], params["w_hh0"],
      params["w1"], params["b1"],
      params["w_lin"], params["b_lin"])

    return out_padded[:, :params["n_vocab"]]


# --------------------------------------------------------------------------
# Parameter construction (PyTorch layout -> kernel layout)
# --------------------------------------------------------------------------
def _reorder_gates(w, H=HIDDEN):
    """PyTorch gate row-block order (i, f, g, o) -> kernel order (i, f, o, g)."""
    i, f, g, o = w[0 * H:1 * H], w[1 * H:2 * H], w[2 * H:3 * H], w[3 * H:4 * H]
    return jnp.concatenate([i, f, o, g], axis=0)


def prepare_params(tp, n_vocab, H=HIDDEN):
    """tp holds PyTorch-shaped tensors (weight_ih_l0 (4H,1), weight_hh_l* (4H,H),
    bias_* (4H,), linear weight (n_vocab,H), linear bias (n_vocab,))."""
    r = _reorder_gates
    n_pad = max(LANE, -(-n_vocab // LANE) * LANE)

    w_ih0 = r(tp["weight_ih_l0"]).T                                   # (1, 4H) f32
    b0 = r(tp["bias_ih_l0"] + tp["bias_hh_l0"])[None, :]              # (1, 4H) f32
    w_hh0 = r(tp["weight_hh_l0"]).T.astype(jnp.bfloat16)              # (H, 4H)
    # fused layer-1 weight: rows [w_ih_l1 ; w_hh_l1] to match concat([h0, h1])
    w1 = jnp.concatenate([r(tp["weight_ih_l1"]).T,
                          r(tp["weight_hh_l1"]).T],
                         axis=0).astype(jnp.bfloat16)                 # (2H, 4H)
    b1 = r(tp["bias_ih_l1"] + tp["bias_hh_l1"])[None, :]              # (1, 4H) f32
    # classifier padded to a lane-dense width (128); wrapper slices back
    w_lin = (jnp.zeros((H, n_pad), jnp.float32)
             .at[:, :n_vocab].set(tp["linear_w"].T)).astype(jnp.bfloat16)
    b_lin = jnp.zeros((1, n_pad), jnp.float32).at[0, :n_vocab].set(tp["linear_b"])

    return {"w_ih0": w_ih0, "b0": b0, "w_hh0": w_hh0,
            "w1": w1, "b1": b1, "w_lin": w_lin, "b_lin": b_lin,
            "n_vocab": n_vocab}


def init_params(key, n_vocab, H=HIDDEN):
    """Deterministic synthetic init (PyTorch-style U(-1/sqrt(H), 1/sqrt(H)))."""
    ks = jax.random.split(key, 10)
    s = 1.0 / (H ** 0.5)

    def u(k, shape):
        return jax.random.uniform(k, shape, jnp.float32, -s, s)

    torch_params = {
        "weight_ih_l0": u(ks[0], (4 * H, 1)),
        "weight_hh_l0": u(ks[1], (4 * H, H)),
        "bias_ih_l0":   u(ks[2], (4 * H,)),
        "bias_hh_l0":   u(ks[3], (4 * H,)),
        "weight_ih_l1": u(ks[4], (4 * H, H)),
        "weight_hh_l1": u(ks[5], (4 * H, H)),
        "bias_ih_l1":   u(ks[6], (4 * H,)),
        "bias_hh_l1":   u(ks[7], (4 * H,)),
        "linear_w":     u(ks[8], (n_vocab, H)),
        "linear_b":     u(ks[9], (n_vocab,)),
    }
    return prepare_params(torch_params, n_vocab, H)


if __name__ == "__main__":
    key = jax.random.PRNGKey(0)
    k_param, k_x = jax.random.split(key)

    B, T, n_vocab = 2, 8, 65
    params = init_params(k_param, n_vocab)
    x = jax.random.uniform(k_x, (B, T, 1), jnp.float32)   # (batch, seq, 1)

    out = char_model_forward(x, params)
    out = jax.block_until_ready(out)
    assert out.shape == (B, n_vocab) and out.dtype == jnp.float32
    print("KERNEL_OK")
</pallas_src>

<mosaic_0001>
module attributes {stable_mosaic.version = 11 : i64} {
  func.func @char_model_kernel(%arg0: memref<8x2x1xf32, #tpu.memory_space<vmem>>, %arg1: memref<1x1024xf32, #tpu.memory_space<vmem>>, %arg2: memref<1x1024xf32, #tpu.memory_space<vmem>>, %arg3: memref<256x1024xbf16, #tpu.memory_space<any>>, %arg4: memref<512x1024xbf16, #tpu.memory_space<any>>, %arg5: memref<1x1024xf32, #tpu.memory_space<vmem>>, %arg6: memref<256x128xbf16, #tpu.memory_space<any>>, %arg7: memref<1x128xf32, #tpu.memory_space<vmem>>, %arg8: memref<2x128xf32, #tpu.memory_space<vmem>>, %arg9: memref<256x1024xbf16, #tpu.memory_space<vmem>>, %arg10: memref<512x1024xbf16, #tpu.memory_space<vmem>>, %arg11: memref<256x128xbf16, #tpu.memory_space<vmem>>, %arg12: memref<3x!tpu.dma_semaphore, #tpu.memory_space<semaphore_mem>>) attributes {dimension_semantics = [], scalar_prefetch = 0 : i64, scratch_operands = 4 : i64, tpu.core_type = #tpu.core_type<tc>} {
    %c0_i32 = arith.constant 0 : i32
    %0 = tpu.memref_slice %arg12[%c0_i32] : memref<3x!tpu.dma_semaphore, #tpu.memory_space<semaphore_mem>> -> memref<1x!tpu.dma_semaphore, #tpu.memory_space<semaphore_mem>>
    %1 = tpu.memref_squeeze %0 : memref<1x!tpu.dma_semaphore, #tpu.memory_space<semaphore_mem>> -> memref<!tpu.dma_semaphore, #tpu.memory_space<semaphore_mem>>
    tpu.enqueue_dma source(%arg4 : memref<512x1024xbf16, #tpu.memory_space<any>>) target(%arg10 : memref<512x1024xbf16, #tpu.memory_space<vmem>>) target_semaphore(%1 : memref<!tpu.dma_semaphore, #tpu.memory_space<semaphore_mem>>)
    %c1_i32 = arith.constant 1 : i32
    %2 = tpu.memref_slice %arg12[%c1_i32] : memref<3x!tpu.dma_semaphore, #tpu.memory_space<semaphore_mem>> -> memref<1x!tpu.dma_semaphore, #tpu.memory_space<semaphore_mem>>
    %3 = tpu.memref_squeeze %2 : memref<1x!tpu.dma_semaphore, #tpu.memory_space<semaphore_mem>> -> memref<!tpu.dma_semaphore, #tpu.memory_space<semaphore_mem>>
    tpu.enqueue_dma source(%arg3 : memref<256x1024xbf16, #tpu.memory_space<any>>) target(%arg9 : memref<256x1024xbf16, #tpu.memory_space<vmem>>) target_semaphore(%3 : memref<!tpu.dma_semaphore, #tpu.memory_space<semaphore_mem>>)
    %c2_i32 = arith.constant 2 : i32
    %4 = tpu.memref_slice %arg12[%c2_i32] : memref<3x!tpu.dma_semaphore, #tpu.memory_space<semaphore_mem>> -> memref<1x!tpu.dma_semaphore, #tpu.memory_space<semaphore_mem>>
    %5 = tpu.memref_squeeze %4 : memref<1x!tpu.dma_semaphore, #tpu.memory_space<semaphore_mem>> -> memref<!tpu.dma_semaphore, #tpu.memory_space<semaphore_mem>>
    tpu.enqueue_dma source(%arg6 : memref<256x128xbf16, #tpu.memory_space<any>>) target(%arg11 : memref<256x128xbf16, #tpu.memory_space<vmem>>) target_semaphore(%5 : memref<!tpu.dma_semaphore, #tpu.memory_space<semaphore_mem>>)
    %c0 = arith.constant 0 : index
    %c0_0 = arith.constant 0 : index
    %6 = vector.load %arg1[%c0, %c0_0] : memref<1x1024xf32, #tpu.memory_space<vmem>>, vector<1x1024xf32>
    %c0_1 = arith.constant 0 : index
    %c0_2 = arith.constant 0 : index
    %7 = vector.load %arg2[%c0_1, %c0_2] : memref<1x1024xf32, #tpu.memory_space<vmem>>, vector<1x1024xf32>
    %c0_3 = arith.constant 0 : index
    %c0_4 = arith.constant 0 : index
    %8 = vector.load %arg5[%c0_3, %c0_4] : memref<1x1024xf32, #tpu.memory_space<vmem>>, vector<1x1024xf32>
    %cst = arith.constant 0.000000e+00 : bf16
    %9 = vector.broadcast %cst : bf16 to vector<2x256xbf16>
    %cst_5 = arith.constant 0.000000e+00 : f32
    %10 = vector.broadcast %cst_5 : f32 to vector<2x256xf32>
    %cst_6 = arith.constant 0.000000e+00 : f32
    %11 = vector.broadcast %cst_6 : f32 to vector<2x256xf32>
    %c0_7 = arith.constant 0 : index
    %c0_8 = arith.constant 0 : index
    %c0_9 = arith.constant 0 : index
    %12 = vector.load %arg0[%c0_7, %c0_8, %c0_9] : memref<8x2x1xf32, #tpu.memory_space<vmem>>, vector<1x2x1xf32>
    %13 = vector.shape_cast %12 : vector<1x2x1xf32> to vector<2x1xf32>
    %14 = vector.broadcast %13 : vector<2x1xf32> to vector<2x1024xf32>
    %15 = vector.broadcast %6 : vector<1x1024xf32> to vector<2x1024xf32>
    %16 = arith.mulf %14, %15 : vector<2x1024xf32>
    %17 = vector.broadcast %7 : vector<1x1024xf32> to vector<2x1024xf32>
    %18 = arith.addf %16, %17 : vector<2x1024xf32>
    %19 = vector.extract_strided_slice %18 {offsets = [0, 0], sizes = [2, 768], strides = [1, 1]} : vector<2x1024xf32> to vector<2x768xf32>
    %20 = arith.negf %19 : vector<2x768xf32>
    %21 = math.exp %20 : vector<2x768xf32>
    %cst_10 = arith.constant 1.000000e+00 : f32
    %22 = vector.broadcast %cst_10 : f32 to vector<2x768xf32>
    %23 = arith.addf %22, %21 : vector<2x768xf32>
    %24 = arith.divf %22, %23 : vector<2x768xf32>
    %25 = vector.extract_strided_slice %24 {offsets = [0, 0], sizes = [2, 256], strides = [1, 1]} : vector<2x768xf32> to vector<2x256xf32>
    %26 = vector.extract_strided_slice %24 {offsets = [0, 256], sizes = [2, 256], strides = [1, 1]} : vector<2x768xf32> to vector<2x256xf32>
    %27 = vector.extract_strided_slice %24 {offsets = [0, 512], sizes = [2, 256], strides = [1, 1]} : vector<2x768xf32> to vector<2x256xf32>
    %28 = vector.extract_strided_slice %18 {offsets = [0, 768], sizes = [2, 256], strides = [1, 1]} : vector<2x1024xf32> to vector<2x256xf32>
    %29 = math.tanh %28 : vector<2x256xf32>
    %30 = arith.mulf %26, %10 : vector<2x256xf32>
    %31 = arith.mulf %25, %29 : vector<2x256xf32>
    %32 = arith.addf %30, %31 : vector<2x256xf32>
    %33 = math.tanh %32 : vector<2x256xf32>
    %34 = arith.mulf %27, %33 : vector<2x256xf32>
    %35 = arith.truncf %34 : vector<2x256xf32> to vector<2x256xbf16>
    %c0_i32_11 = arith.constant 0 : i32
    %36 = tpu.memref_slice %arg12[%c0_i32_11] : memref<3x!tpu.dma_semaphore, #tpu.memory_space<semaphore_mem>> -> memref<1x!tpu.dma_semaphore, #tpu.memory_space<semaphore_mem>>
    %37 = tpu.memref_squeeze %36 : memref<1x!tpu.dma_semaphore, #tpu.memory_space<semaphore_mem>> -> memref<!tpu.dma_semaphore, #tpu.memory_space<semaphore_mem>>
    tpu.wait_dma2 semaphore(%37 : memref<!tpu.dma_semaphore, #tpu.memory_space<semaphore_mem>>) src(%arg4 : memref<512x1024xbf16, #tpu.memory_space<any>>) dst(%arg10 : memref<512x1024xbf16, #tpu.memory_space<vmem>>)
    %38 = tpu.concatenate %35, %9 in 1 : vector<2x256xbf16>, vector<2x256xbf16> -> vector<2x512xbf16>
    %c0_12 = arith.constant 0 : index
    %c0_13 = arith.constant 0 : index
    %39 = vector.load %arg10[%c0_12, %c0_13] : memref<512x1024xbf16, #tpu.memory_space<vmem>>, vector<512x1024xbf16>
    %cst_14 = arith.constant dense<0.000000e+00> : vector<2x1024xf32>
    %40 = tpu.matmul %38, %39, %cst_14 {dimension_numbers = #tpu.dot_dimension_numbers<[1], [0], [0], [1], [0, 0, 1, 1], [], []>} : vector<2x512xbf16>, vector<512x1024xbf16>, vector<2x1024xf32> -> vector<2x1024xf32>
    %41 = vector.broadcast %8 : vector<1x1024xf32> to vector<2x1024xf32>
    %42 = arith.addf %40, %41 : vector<2x1024xf32>
    %c1_i32_15 = arith.constant 1 : i32
    %43 = tpu.memref_slice %arg12[%c1_i32_15] : memref<3x!tpu.dma_semaphore, #tpu.memory_space<semaphore_mem>> -> memref<1x!tpu.dma_semaphore, #tpu.memory_space<semaphore_mem>>
    %44 = tpu.memref_squeeze %43 : memref<1x!tpu.dma_semaphore, #tpu.memory_space<semaphore_mem>> -> memref<!tpu.dma_semaphore, #tpu.memory_space<semaphore_mem>>
    tpu.wait_dma2 semaphore(%44 : memref<!tpu.dma_semaphore, #tpu.memory_space<semaphore_mem>>) src(%arg3 : memref<256x1024xbf16, #tpu.memory_space<any>>) dst(%arg9 : memref<256x1024xbf16, #tpu.memory_space<vmem>>)
    %c1 = arith.constant 1 : index
    %c0_16 = arith.constant 0 : index
    %c0_17 = arith.constant 0 : index
    %45 = vector.load %arg0[%c1, %c0_16, %c0_17] : memref<8x2x1xf32, #tpu.memory_space<vmem>>, vector<1x2x1xf32>
    %46 = vector.shape_cast %45 : vector<1x2x1xf32> to vector<2x1xf32>
    %47 = vector.broadcast %46 : vector<2x1xf32> to vector<2x1024xf32>
    %48 = vector.broadcast %6 : vector<1x1024xf32> to vector<2x1024xf32>
    %49 = arith.mulf %47, %48 : vector<2x1024xf32>
    %50 = vector.broadcast %7 : vector<1x1024xf32> to vector<2x1024xf32>
    %51 = arith.addf %49, %50 : vector<2x1024xf32>
    %c0_18 = arith.constant 0 : index
    %c0_19 = arith.constant 0 : index
    %52 = vector.load %arg9[%c0_18, %c0_19] : memref<256x1024xbf16, #tpu.memory_space<vmem>>, vector<256x1024xbf16>
    %cst_20 = arith.constant dense<0.000000e+00> : vector<2x1024xf32>
    %53 = tpu.matmul %35, %52, %cst_20 {dimension_numbers = #tpu.dot_dimension_numbers<[1], [0], [0], [1], [0, 0, 1, 1], [], []>} : vector<2x256xbf16>, vector<256x1024xbf16>, vector<2x1024xf32> -> vector<2x1024xf32>
    %54 = arith.addf %51, %53 : vector<2x1024xf32>
    %55 = vector.extract_strided_slice %42 {offsets = [0, 0], sizes = [2, 768], strides = [1, 1]} : vector<2x1024xf32> to vector<2x768xf32>
    %56 = arith.negf %55 : vector<2x768xf32>
    %57 = math.exp %56 : vector<2x768xf32>
    %cst_21 = arith.constant 1.000000e+00 : f32
    %58 = vector.broadcast %cst_21 : f32 to vector<2x768xf32>
    %59 = arith.addf %58, %57 : vector<2x768xf32>
    %60 = arith.divf %58, %59 : vector<2x768xf32>
    %61 = vector.extract_strided_slice %60 {offsets = [0, 0], sizes = [2, 256], strides = [1, 1]} : vector<2x768xf32> to vector<2x256xf32>
    %62 = vector.extract_strided_slice %60 {offsets = [0, 256], sizes = [2, 256], strides = [1, 1]} : vector<2x768xf32> to vector<2x256xf32>
    %63 = vector.extract_strided_slice %60 {offsets = [0, 512], sizes = [2, 256], strides = [1, 1]} : vector<2x768xf32> to vector<2x256xf32>
    %64 = vector.extract_strided_slice %42 {offsets = [0, 768], sizes = [2, 256], strides = [1, 1]} : vector<2x1024xf32> to vector<2x256xf32>
    %65 = math.tanh %64 : vector<2x256xf32>
    %66 = arith.mulf %62, %11 : vector<2x256xf32>
    %67 = arith.mulf %61, %65 : vector<2x256xf32>
    %68 = arith.addf %66, %67 : vector<2x256xf32>
    %69 = math.tanh %68 : vector<2x256xf32>
    %70 = arith.mulf %63, %69 : vector<2x256xf32>
    %71 = arith.truncf %70 : vector<2x256xf32> to vector<2x256xbf16>
    %72 = vector.extract_strided_slice %54 {offsets = [0, 0], sizes = [2, 768], strides = [1, 1]} : vector<2x1024xf32> to vector<2x768xf32>
    %73 = arith.negf %72 : vector<2x768xf32>
    %74 = math.exp %73 : vector<2x768xf32>
    %cst_22 = arith.constant 1.000000e+00 : f32
    %75 = vector.broadcast %cst_22 : f32 to vector<2x768xf32>
    %76 = arith.addf %75, %74 : vector<2x768xf32>
    %77 = arith.divf %75, %76 : vector<2x768xf32>
    %78 = vector.extract_strided_slice %77 {offsets = [0, 0], sizes = [2, 256], strides = [1, 1]} : vector<2x768xf32> to vector<2x256xf32>
    %79 = vector.extract_strided_slice %77 {offsets = [0, 256], sizes = [2, 256], strides = [1, 1]} : vector<2x768xf32> to vector<2x256xf32>
    %80 = vector.extract_strided_slice %77 {offsets = [0, 512], sizes = [2, 256], strides = [1, 1]} : vector<2x768xf32> to vector<2x256xf32>
    %81 = vector.extract_strided_slice %54 {offsets = [0, 768], sizes = [2, 256], strides = [1, 1]} : vector<2x1024xf32> to vector<2x256xf32>
    %82 = math.tanh %81 : vector<2x256xf32>
    %83 = arith.mulf %79, %32 : vector<2x256xf32>
    %84 = arith.mulf %78, %82 : vector<2x256xf32>
    %85 = arith.addf %83, %84 : vector<2x256xf32>
    %86 = math.tanh %85 : vector<2x256xf32>
    %87 = arith.mulf %80, %86 : vector<2x256xf32>
    %88 = arith.truncf %87 : vector<2x256xf32> to vector<2x256xbf16>
    %89 = tpu.concatenate %88, %71 in 1 : vector<2x256xbf16>, vector<2x256xbf16> -> vector<2x512xbf16>
    %c0_23 = arith.constant 0 : index
    %c0_24 = arith.constant 0 : index
    %90 = vector.load %arg10[%c0_23, %c0_24] : memref<512x1024xbf16, #tpu.memory_space<vmem>>, vector<512x1024xbf16>
    %cst_25 = arith.constant dense<0.000000e+00> : vector<2x1024xf32>
    %91 = tpu.matmul %89, %90, %cst_25 {dimension_numbers = #tpu.dot_dimension_numbers<[1], [0], [0], [1], [0, 0, 1, 1], [], []>} : vector<2x512xbf16>, vector<512x1024xbf16>, vector<2x1024xf32> -> vector<2x1024xf32>
    %92 = vector.broadcast %8 : vector<1x1024xf32> to vector<2x1024xf32>
    %93 = arith.addf %91, %92 : vector<2x1024xf32>
    %c2 = arith.constant 2 : index
    %c0_26 = arith.constant 0 : index
    %c0_27 = arith.constant 0 : index
    %94 = vector.load %arg0[%c2, %c0_26, %c0_27] : memref<8x2x1xf32, #tpu.memory_space<vmem>>, vector<1x2x1xf32>
    %95 = vector.shape_cast %94 : vector<1x2x1xf32> to vector<2x1xf32>
    %96 = vector.broadcast %95 : vector<2x1xf32> to vector<2x1024xf32>
    %97 = vector.broadcast %6 : vector<1x1024xf32> to vector<2x1024xf32>
    %98 = arith.mulf %96, %97 : vector<2x1024xf32>
    %99 = vector.broadcast %7 : vector<1x1024xf32> to vector<2x1024xf32>
    %100 = arith.addf %98, %99 : vector<2x1024xf32>
    %c0_28 = arith.constant 0 : index
    %c0_29 = arith.constant 0 : index
    %101 = vector.load %arg9[%c0_28, %c0_29] : memref<256x1024xbf16, #tpu.memory_space<vmem>>, vector<256x1024xbf16>
    %cst_30 = arith.constant dense<0.000000e+00> : vector<2x1024xf32>
    %102 = tpu.matmul %88, %101, %cst_30 {dimension_numbers = #tpu.dot_dimension_numbers<[1], [0], [0], [1], [0, 0, 1, 1], [], []>} : vector<2x256xbf16>, vector<256x1024xbf16>, vector<2x1024xf32> -> vector<2x1024xf32>
    %103 = arith.addf %100, %102 : vector<2x1024xf32>
    %104 = vector.extract_strided_slice %93 {offsets = [0, 0], sizes = [2, 768], strides = [1, 1]} : vector<2x1024xf32> to vector<2x768xf32>
    %105 = arith.negf %104 : vector<2x768xf32>
    %106 = math.exp %105 : vector<2x768xf32>
    %cst_31 = arith.constant 1.000000e+00 : f32
    %107 = vector.broadcast %cst_31 : f32 to vector<2x768xf32>
    %108 = arith.addf %107, %106 : vector<2x768xf32>
    %109 = arith.divf %107, %108 : vector<2x768xf32>
    %110 = vector.extract_strided_slice %109 {offsets = [0, 0], sizes = [2, 256], strides = [1, 1]} : vector<2x768xf32> to vector<2x256xf32>
    %111 = vector.extract_strided_slice %109 {offsets = [0, 256], sizes = [2, 256], strides = [1, 1]} : vector<2x768xf32> to vector<2x256xf32>
    %112 = vector.extract_strided_slice %109 {offsets = [0, 512], sizes = [2, 256], strides = [1, 1]} : vector<2x768xf32> to vector<2x256xf32>
    %113 = vector.extract_strided_slice %93 {offsets = [0, 768], sizes = [2, 256], strides = [1, 1]} : vector<2x1024xf32> to vector<2x256xf32>
    %114 = math.tanh %113 : vector<2x256xf32>
    %115 = arith.mulf %111, %68 : vector<2x256xf32>
    %116 = arith.mulf %110, %114 : vector<2x256xf32>
    %117 = arith.addf %115, %116 : vector<2x256xf32>
    %118 = math.tanh %117 : vector<2x256xf32>
    %119 = arith.mulf %112, %118 : vector<2x256xf32>
    %120 = arith.truncf %119 : vector<2x256xf32> to vector<2x256xbf16>
    %121 = vector.extract_strided_slice %103 {offsets = [0, 0], sizes = [2, 768], strides = [1, 1]} : vector<2x1024xf32> to vector<2x768xf32>
    %122 = arith.negf %121 : vector<2x768xf32>
    %123 = math.exp %122 : vector<2x768xf32>
    %cst_32 = arith.constant 1.000000e+00 : f32
    %124 = vector.broadcast %cst_32 : f32 to vector<2x768xf32>
    %125 = arith.addf %124, %123 : vector<2x768xf32>
    %126 = arith.divf %124, %125 : vector<2x768xf32>
    %127 = vector.extract_strided_slice %126 {offsets = [0, 0], sizes = [2, 256], strides = [1, 1]} : vector<2x768xf32> to vector<2x256xf32>
    %128 = vector.extract_strided_slice %126 {offsets = [0, 256], sizes = [2, 256], strides = [1, 1]} : vector<2x768xf32> to vector<2x256xf32>
    %129 = vector.extract_strided_slice %126 {offsets = [0, 512], sizes = [2, 256], strides = [1, 1]} : vector<2x768xf32> to vector<2x256xf32>
    %130 = vector.extract_strided_slice %103 {offsets = [0, 768], sizes = [2, 256], strides = [1, 1]} : vector<2x1024xf32> to vector<2x256xf32>
    %131 = math.tanh %130 : vector<2x256xf32>
    %132 = arith.mulf %128, %85 : vector<2x256xf32>
    %133 = arith.mulf %127, %131 : vector<2x256xf32>
    %134 = arith.addf %132, %133 : vector<2x256xf32>
    %135 = math.tanh %134 : vector<2x256xf32>
    %136 = arith.mulf %129, %135 : vector<2x256xf32>
    %137 = arith.truncf %136 : vector<2x256xf32> to vector<2x256xbf16>
    %138 = tpu.concatenate %137, %120 in 1 : vector<2x256xbf16>, vector<2x256xbf16> -> vector<2x512xbf16>
    %c0_33 = arith.constant 0 : index
    %c0_34 = arith.constant 0 : index
    %139 = vector.load %arg10[%c0_33, %c0_34] : memref<512x1024xbf16, #tpu.memory_space<vmem>>, vector<512x1024xbf16>
    %cst_35 = arith.constant dense<0.000000e+00> : vector<2x1024xf32>
    %140 = tpu.matmul %138, %139, %cst_35 {dimension_numbers = #tpu.dot_dimension_numbers<[1], [0], [0], [1], [0, 0, 1, 1], [], []>} : vector<2x512xbf16>, vector<512x1024xbf16>, vector<2x1024xf32> -> vector<2x1024xf32>
    %141 = vector.broadcast %8 : vector<1x1024xf32> to vector<2x1024xf32>
    %142 = arith.addf %140, %141 : vector<2x1024xf32>
    %c3 = arith.constant 3 : index
    %c0_36 = arith.constant 0 : index
    %c0_37 = arith.constant 0 : index
    %143 = vector.load %arg0[%c3, %c0_36, %c0_37] : memref<8x2x1xf32, #tpu.memory_space<vmem>>, vector<1x2x1xf32>
    %144 = vector.shape_cast %143 : vector<1x2x1xf32> to vector<2x1xf32>
    %145 = vector.broadcast %144 : vector<2x1xf32> to vector<2x1024xf32>
    %146 = vector.broadcast %6 : vector<1x1024xf32> to vector<2x1024xf32>
    %147 = arith.mulf %145, %146 : vector<2x1024xf32>
    %148 = vector.broadcast %7 : vector<1x1024xf32> to vector<2x1024xf32>
    %149 = arith.addf %147, %148 : vector<2x1024xf32>
    %c0_38 = arith.constant 0 : index
    %c0_39 = arith.constant 0 : index
    %150 = vector.load %arg9[%c0_38, %c0_39] : memref<256x1024xbf16, #tpu.memory_space<vmem>>, vector<256x1024xbf16>
    %cst_40 = arith.constant dense<0.000000e+00> : vector<2x1024xf32>
    %151 = tpu.matmul %137, %150, %cst_40 {dimension_numbers = #tpu.dot_dimension_numbers<[1], [0], [0], [1], [0, 0, 1, 1], [], []>} : vector<2x256xbf16>, vector<256x1024xbf16>, vector<2x1024xf32> -> vector<2x1024xf32>
    %152 = arith.addf %149, %151 : vector<2x1024xf32>
    %153 = vector.extract_strided_slice %142 {offsets = [0, 0], sizes = [2, 768], strides = [1, 1]} : vector<2x1024xf32> to vector<2x768xf32>
    %154 = arith.negf %153 : vector<2x768xf32>
    %155 = math.exp %154 : vector<2x768xf32>
    %cst_41 = arith.constant 1.000000e+00 : f32
    %156 = vector.broadcast %cst_41 : f32 to vector<2x768xf32>
    %157 = arith.addf %156, %155 : vector<2x768xf32>
    %158 = arith.divf %156, %157 : vector<2x768xf32>
    %159 = vector.extract_strided_slice %158 {offsets = [0, 0], sizes = [2, 256], strides = [1, 1]} : vector<2x768xf32> to vector<2x256xf32>
    %160 = vector.extract_strided_slice %158 {offsets = [0, 256], sizes = [2, 256], strides = [1, 1]} : vector<2x768xf32> to vector<2x256xf32>
    %161 = vector.extract_strided_slice %158 {offsets = [0, 512], sizes = [2, 256], strides = [1, 1]} : vector<2x768xf32> to vector<2x256xf32>
    %162 = vector.extract_strided_slice %142 {offsets = [0, 768], sizes = [2, 256], strides = [1, 1]} : vector<2x1024xf32> to vector<2x256xf32>
    %163 = math.tanh %162 : vector<2x256xf32>
    %164 = arith.mulf %160, %117 : vector<2x256xf32>
    %165 = arith.mulf %159, %163 : vector<2x256xf32>
    %166 = arith.addf %164, %165 : vector<2x256xf32>
    %167 = math.tanh %166 : vector<2x256xf32>
    %168 = arith.mulf %161, %167 : vector<2x256xf32>
    %169 = arith.truncf %168 : vector<2x256xf32> to vector<2x256xbf16>
    %170 = vector.extract_strided_slice %152 {offsets = [0, 0], sizes = [2, 768], strides = [1, 1]} : vector<2x1024xf32> to vector<2x768xf32>
    %171 = arith.negf %170 : vector<2x768xf32>
    %172 = math.exp %171 : vector<2x768xf32>
    %cst_42 = arith.constant 1.000000e+00 : f32
    %173 = vector.broadcast %cst_42 : f32 to vector<2x768xf32>
    %174 = arith.addf %173, %172 : vector<2x768xf32>
    %175 = arith.divf %173, %174 : vector<2x768xf32>
    %176 = vector.extract_strided_slice %175 {offsets = [0, 0], sizes = [2, 256], strides = [1, 1]} : vector<2x768xf32> to vector<2x256xf32>
    %177 = vector.extract_strided_slice %175 {offsets = [0, 256], sizes = [2, 256], strides = [1, 1]} : vector<2x768xf32> to vector<2x256xf32>
    %178 = vector.extract_strided_slice %175 {offsets = [0, 512], sizes = [2, 256], strides = [1, 1]} : vector<2x768xf32> to vector<2x256xf32>
    %179 = vector.extract_strided_slice %152 {offsets = [0, 768], sizes = [2, 256], strides = [1, 1]} : vector<2x1024xf32> to vector<2x256xf32>
    %180 = math.tanh %179 : vector<2x256xf32>
    %181 = arith.mulf %177, %134 : vector<2x256xf32>
    %182 = arith.mulf %176, %180 : vector<2x256xf32>
    %183 = arith.addf %181, %182 : vector<2x256xf32>
    %184 = math.tanh %183 : vector<2x256xf32>
    %185 = arith.mulf %178, %184 : vector<2x256xf32>
    %186 = arith.truncf %185 : vector<2x256xf32> to vector<2x256xbf16>
    %187 = tpu.concatenate %186, %169 in 1 : vector<2x256xbf16>, vector<2x256xbf16> -> vector<2x512xbf16>
    %c0_43 = arith.constant 0 : index
    %c0_44 = arith.constant 0 : index
    %188 = vector.load %arg10[%c0_43, %c0_44] : memref<512x1024xbf16, #tpu.memory_space<vmem>>, vector<512x1024xbf16>
    %cst_45 = arith.constant dense<0.000000e+00> : vector<2x1024xf32>
    %189 = tpu.matmul %187, %188, %cst_45 {dimension_numbers = #tpu.dot_dimension_numbers<[1], [0], [0], [1], [0, 0, 1, 1], [], []>} : vector<2x512xbf16>, vector<512x1024xbf16>, vector<2x1024xf32> -> vector<2x1024xf32>
    %190 = vector.broadcast %8 : vector<1x1024xf32> to vector<2x1024xf32>
    %191 = arith.addf %189, %190 : vector<2x1024xf32>
    %c4 = arith.constant 4 : index
    %c0_46 = arith.constant 0 : index
    %c0_47 = arith.constant 0 : index
    %192 = vector.load %arg0[%c4, %c0_46, %c0_47] : memref<8x2x1xf32, #tpu.memory_space<vmem>>, vector<1x2x1xf32>
    %193 = vector.shape_cast %192 : vector<1x2x1xf32> to vector<2x1xf32>
    %194 = vector.broadcast %193 : vector<2x1xf32> to vector<2x1024xf32>
    %195 = vector.broadcast %6 : vector<1x1024xf32> to vector<2x1024xf32>
    %196 = arith.mulf %194, %195 : vector<2x1024xf32>
    %197 = vector.broadcast %7 : vector<1x1024xf32> to vector<2x1024xf32>
    %198 = arith.addf %196, %197 : vector<2x1024xf32>
    %c0_48 = arith.constant 0 : index
    %c0_49 = arith.constant 0 : index
    %199 = vector.load %arg9[%c0_48, %c0_49] : memref<256x1024xbf16, #tpu.memory_space<vmem>>, vector<256x1024xbf16>
    %cst_50 = arith.constant dense<0.000000e+00> : vector<2x1024xf32>
    %200 = tpu.matmul %186, %199, %cst_50 {dimension_numbers = #tpu.dot_dimension_numbers<[1], [0], [0], [1], [0, 0, 1, 1], [], []>} : vector<2x256xbf16>, vector<256x1024xbf16>, vector<2x1024xf32> -> vector<2x1024xf32>
    %201 = arith.addf %198, %200 : vector<2x1024xf32>
    %202 = vector.extract_strided_slice %191 {offsets = [0, 0], sizes = [2, 768], strides = [1, 1]} : vector<2x1024xf32> to vector<2x768xf32>
    %203 = arith.negf %202 : vector<2x768xf32>
    %204 = math.exp %203 : vector<2x768xf32>
    %cst_51 = arith.constant 1.000000e+00 : f32
    %205 = vector.broadcast %cst_51 : f32 to vector<2x768xf32>
    %206 = arith.addf %205, %204 : vector<2x768xf32>
    %207 = arith.divf %205, %206 : vector<2x768xf32>
    %208 = vector.extract_strided_slice %207 {offsets = [0, 0], sizes = [2, 256], strides = [1, 1]} : vector<2x768xf32> to vector<2x256xf32>
    %209 = vector.extract_strided_slice %207 {offsets = [0, 256], sizes = [2, 256], strides = [1, 1]} : vector<2x768xf32> to vector<2x256xf32>
    %210 = vector.extract_strided_slice %207 {offsets = [0, 512], sizes = [2, 256], strides = [1, 1]} : vector<2x768xf32> to vector<2x256xf32>
    %211 = vector.extract_strided_slice %191 {offsets = [0, 768], sizes = [2, 256], strides = [1, 1]} : vector<2x1024xf32> to vector<2x256xf32>
    %212 = math.tanh %211 : vector<2x256xf32>
    %213 = arith.mulf %209, %166 : vector<2x256xf32>
    %214 = arith.mulf %208, %212 : vector<2x256xf32>
    %215 = arith.addf %213, %214 : vector<2x256xf32>
    %216 = math.tanh %215 : vector<2x256xf32>
    %217 = arith.mulf %210, %216 : vector<2x256xf32>
    %218 = arith.truncf %217 : vector<2x256xf32> to vector<2x256xbf16>
    %219 = vector.extract_strided_slice %201 {offsets = [0, 0], sizes = [2, 768], strides = [1, 1]} : vector<2x1024xf32> to vector<2x768xf32>
    %220 = arith.negf %219 : vector<2x768xf32>
    %221 = math.exp %220 : vector<2x768xf32>
    %cst_52 = arith.constant 1.000000e+00 : f32
    %222 = vector.broadcast %cst_52 : f32 to vector<2x768xf32>
    %223 = arith.addf %222, %221 : vector<2x768xf32>
    %224 = arith.divf %222, %223 : vector<2x768xf32>
    %225 = vector.extract_strided_slice %224 {offsets = [0, 0], sizes = [2, 256], strides = [1, 1]} : vector<2x768xf32> to vector<2x256xf32>
    %226 = vector.extract_strided_slice %224 {offsets = [0, 256], sizes = [2, 256], strides = [1, 1]} : vector<2x768xf32> to vector<2x256xf32>
    %227 = vector.extract_strided_slice %224 {offsets = [0, 512], sizes = [2, 256], strides = [1, 1]} : vector<2x768xf32> to vector<2x256xf32>
    %228 = vector.extract_strided_slice %201 {offsets = [0, 768], sizes = [2, 256], strides = [1, 1]} : vector<2x1024xf32> to vector<2x256xf32>
    %229 = math.tanh %228 : vector<2x256xf32>
    %230 = arith.mulf %226, %183 : vector<2x256xf32>
    %231 = arith.mulf %225, %229 : vector<2x256xf32>
    %232 = arith.addf %230, %231 : vector<2x256xf32>
    %233 = math.tanh %232 : vector<2x256xf32>
    %234 = arith.mulf %227, %233 : vector<2x256xf32>
    %235 = arith.truncf %234 : vector<2x256xf32> to vector<2x256xbf16>
    %236 = tpu.concatenate %235, %218 in 1 : vector<2x256xbf16>, vector<2x256xbf16> -> vector<2x512xbf16>
    %c0_53 = arith.constant 0 : index
    %c0_54 = arith.constant 0 : index
    %237 = vector.load %arg10[%c0_53, %c0_54] : memref<512x1024xbf16, #tpu.memory_space<vmem>>, vector<512x1024xbf16>
    %cst_55 = arith.constant dense<0.000000e+00> : vector<2x1024xf32>
    %238 = tpu.matmul %236, %237, %cst_55 {dimension_numbers = #tpu.dot_dimension_numbers<[1], [0], [0], [1], [0, 0, 1, 1], [], []>} : vector<2x512xbf16>, vector<512x1024xbf16>, vector<2x1024xf32> -> vector<2x1024xf32>
    %239 = vector.broadcast %8 : vector<1x1024xf32> to vector<2x1024xf32>
    %240 = arith.addf %238, %239 : vector<2x1024xf32>
    %c5 = arith.constant 5 : index
    %c0_56 = arith.constant 0 : index
    %c0_57 = arith.constant 0 : index
    %241 = vector.load %arg0[%c5, %c0_56, %c0_57] : memref<8x2x1xf32, #tpu.memory_space<vmem>>, vector<1x2x1xf32>
    %242 = vector.shape_cast %241 : vector<1x2x1xf32> to vector<2x1xf32>
    %243 = vector.broadcast %242 : vector<2x1xf32> to vector<2x1024xf32>
    %244 = vector.broadcast %6 : vector<1x1024xf32> to vector<2x1024xf32>
    %245 = arith.mulf %243, %244 : vector<2x1024xf32>
    %246 = vector.broadcast %7 : vector<1x1024xf32> to vector<2x1024xf32>
    %247 = arith.addf %245, %246 : vector<2x1024xf32>
    %c0_58 = arith.constant 0 : index
    %c0_59 = arith.constant 0 : index
    %248 = vector.load %arg9[%c0_58, %c0_59] : memref<256x1024xbf16, #tpu.memory_space<vmem>>, vector<256x1024xbf16>
    %cst_60 = arith.constant dense<0.000000e+00> : vector<2x1024xf32>
    %249 = tpu.matmul %235, %248, %cst_60 {dimension_numbers = #tpu.dot_dimension_numbers<[1], [0], [0], [1], [0, 0, 1, 1], [], []>} : vector<2x256xbf16>, vector<256x1024xbf16>, vector<2x1024xf32> -> vector<2x1024xf32>
    %250 = arith.addf %247, %249 : vector<2x1024xf32>
    %251 = vector.extract_strided_slice %240 {offsets = [0, 0], sizes = [2, 768], strides = [1, 1]} : vector<2x1024xf32> to vector<2x768xf32>
    %252 = arith.negf %251 : vector<2x768xf32>
    %253 = math.exp %252 : vector<2x768xf32>
    %cst_61 = arith.constant 1.000000e+00 : f32
    %254 = vector.broadcast %cst_61 : f32 to vector<2x768xf32>
    %255 = arith.addf %254, %253 : vector<2x768xf32>
    %256 = arith.divf %254, %255 : vector<2x768xf32>
    %257 = vector.extract_strided_slice %256 {offsets = [0, 0], sizes = [2, 256], strides = [1, 1]} : vector<2x768xf32> to vector<2x256xf32>
    %258 = vector.extract_strided_slice %256 {offsets = [0, 256], sizes = [2, 256], strides = [1, 1]} : vector<2x768xf32> to vector<2x256xf32>
    %259 = vector.extract_strided_slice %256 {offsets = [0, 512], sizes = [2, 256], strides = [1, 1]} : vector<2x768xf32> to vector<2x256xf32>
    %260 = vector.extract_strided_slice %240 {offsets = [0, 768], sizes = [2, 256], strides = [1, 1]} : vector<2x1024xf32> to vector<2x256xf32>
    %261 = math.tanh %260 : vector<2x256xf32>
    %262 = arith.mulf %258, %215 : vector<2x256xf32>
    %263 = arith.mulf %257, %261 : vector<2x256xf32>
    %264 = arith.addf %262, %263 : vector<2x256xf32>
    %265 = math.tanh %264 : vector<2x256xf32>
    %266 = arith.mulf %259, %265 : vector<2x256xf32>
    %267 = arith.truncf %266 : vector<2x256xf32> to vector<2x256xbf16>
    %268 = vector.extract_strided_slice %250 {offsets = [0, 0], sizes = [2, 768], strides = [1, 1]} : vector<2x1024xf32> to vector<2x768xf32>
    %269 = arith.negf %268 : vector<2x768xf32>
    %270 = math.exp %269 : vector<2x768xf32>
    %cst_62 = arith.constant 1.000000e+00 : f32
    %271 = vector.broadcast %cst_62 : f32 to vector<2x768xf32>
    %272 = arith.addf %271, %270 : vector<2x768xf32>
    %273 = arith.divf %271, %272 : vector<2x768xf32>
    %274 = vector.extract_strided_slice %273 {offsets = [0, 0], sizes = [2, 256], strides = [1, 1]} : vector<2x768xf32> to vector<2x256xf32>
    %275 = vector.extract_strided_slice %273 {offsets = [0, 256], sizes = [2, 256], strides = [1, 1]} : vector<2x768xf32> to vector<2x256xf32>
    %276 = vector.extract_strided_slice %273 {offsets = [0, 512], sizes = [2, 256], strides = [1, 1]} : vector<2x768xf32> to vector<2x256xf32>
    %277 = vector.extract_strided_slice %250 {offsets = [0, 768], sizes = [2, 256], strides = [1, 1]} : vector<2x1024xf32> to vector<2x256xf32>
    %278 = math.tanh %277 : vector<2x256xf32>
    %279 = arith.mulf %275, %232 : vector<2x256xf32>
    %280 = arith.mulf %274, %278 : vector<2x256xf32>
    %281 = arith.addf %279, %280 : vector<2x256xf32>
    %282 = math.tanh %281 : vector<2x256xf32>
    %283 = arith.mulf %276, %282 : vector<2x256xf32>
    %284 = arith.truncf %283 : vector<2x256xf32> to vector<2x256xbf16>
    %285 = tpu.concatenate %284, %267 in 1 : vector<2x256xbf16>, vector<2x256xbf16> -> vector<2x512xbf16>
    %c0_63 = arith.constant 0 : index
    %c0_64 = arith.constant 0 : index
    %286 = vector.load %arg10[%c0_63, %c0_64] : memref<512x1024xbf16, #tpu.memory_space<vmem>>, vector<512x1024xbf16>
    %cst_65 = arith.constant dense<0.000000e+00> : vector<2x1024xf32>
    %287 = tpu.matmul %285, %286, %cst_65 {dimension_numbers = #tpu.dot_dimension_numbers<[1], [0], [0], [1], [0, 0, 1, 1], [], []>} : vector<2x512xbf16>, vector<512x1024xbf16>, vector<2x1024xf32> -> vector<2x1024xf32>
    %288 = vector.broadcast %8 : vector<1x1024xf32> to vector<2x1024xf32>
    %289 = arith.addf %287, %288 : vector<2x1024xf32>
    %c6 = arith.constant 6 : index
    %c0_66 = arith.constant 0 : index
    %c0_67 = arith.constant 0 : index
    %290 = vector.load %arg0[%c6, %c0_66, %c0_67] : memref<8x2x1xf32, #tpu.memory_space<vmem>>, vector<1x2x1xf32>
    %291 = vector.shape_cast %290 : vector<1x2x1xf32> to vector<2x1xf32>
    %292 = vector.broadcast %291 : vector<2x1xf32> to vector<2x1024xf32>
    %293 = vector.broadcast %6 : vector<1x1024xf32> to vector<2x1024xf32>
    %294 = arith.mulf %292, %293 : vector<2x1024xf32>
    %295 = vector.broadcast %7 : vector<1x1024xf32> to vector<2x1024xf32>
    %296 = arith.addf %294, %295 : vector<2x1024xf32>
    %c0_68 = arith.constant 0 : index
    %c0_69 = arith.constant 0 : index
    %297 = vector.load %arg9[%c0_68, %c0_69] : memref<256x1024xbf16, #tpu.memory_space<vmem>>, vector<256x1024xbf16>
    %cst_70 = arith.constant dense<0.000000e+00> : vector<2x1024xf32>
    %298 = tpu.matmul %284, %297, %cst_70 {dimension_numbers = #tpu.dot_dimension_numbers<[1], [0], [0], [1], [0, 0, 1, 1], [], []>} : vector<2x256xbf16>, vector<256x1024xbf16>, vector<2x1024xf32> -> vector<2x1024xf32>
    %299 = arith.addf %296, %298 : vector<2x1024xf32>
    %300 = vector.extract_strided_slice %289 {offsets = [0, 0], sizes = [2, 768], strides = [1, 1]} : vector<2x1024xf32> to vector<2x768xf32>
    %301 = arith.negf %300 : vector<2x768xf32>
    %302 = math.exp %301 : vector<2x768xf32>
    %cst_71 = arith.constant 1.000000e+00 : f32
    %303 = vector.broadcast %cst_71 : f32 to vector<2x768xf32>
    %304 = arith.addf %303, %302 : vector<2x768xf32>
    %305 = arith.divf %303, %304 : vector<2x768xf32>
    %306 = vector.extract_strided_slice %305 {offsets = [0, 0], sizes = [2, 256], strides = [1, 1]} : vector<2x768xf32> to vector<2x256xf32>
    %307 = vector.extract_strided_slice %305 {offsets = [0, 256], sizes = [2, 256], strides = [1, 1]} : vector<2x768xf32> to vector<2x256xf32>
    %308 = vector.extract_strided_slice %305 {offsets = [0, 512], sizes = [2, 256], strides = [1, 1]} : vector<2x768xf32> to vector<2x256xf32>
    %309 = vector.extract_strided_slice %289 {offsets = [0, 768], sizes = [2, 256], strides = [1, 1]} : vector<2x1024xf32> to vector<2x256xf32>
    %310 = math.tanh %309 : vector<2x256xf32>
    %311 = arith.mulf %307, %264 : vector<2x256xf32>
    %312 = arith.mulf %306, %310 : vector<2x256xf32>
    %313 = arith.addf %311, %312 : vector<2x256xf32>
    %314 = math.tanh %313 : vector<2x256xf32>
    %315 = arith.mulf %308, %314 : vector<2x256xf32>
    %316 = arith.truncf %315 : vector<2x256xf32> to vector<2x256xbf16>
    %317 = vector.extract_strided_slice %299 {offsets = [0, 0], sizes = [2, 768], strides = [1, 1]} : vector<2x1024xf32> to vector<2x768xf32>
    %318 = arith.negf %317 : vector<2x768xf32>
    %319 = math.exp %318 : vector<2x768xf32>
    %cst_72 = arith.constant 1.000000e+00 : f32
    %320 = vector.broadcast %cst_72 : f32 to vector<2x768xf32>
    %321 = arith.addf %320, %319 : vector<2x768xf32>
    %322 = arith.divf %320, %321 : vector<2x768xf32>
    %323 = vector.extract_strided_slice %322 {offsets = [0, 0], sizes = [2, 256], strides = [1, 1]} : vector<2x768xf32> to vector<2x256xf32>
    %324 = vector.extract_strided_slice %322 {offsets = [0, 256], sizes = [2, 256], strides = [1, 1]} : vector<2x768xf32> to vector<2x256xf32>
    %325 = vector.extract_strided_slice %322 {offsets = [0, 512], sizes = [2, 256], strides = [1, 1]} : vector<2x768xf32> to vector<2x256xf32>
    %326 = vector.extract_strided_slice %299 {offsets = [0, 768], sizes = [2, 256], strides = [1, 1]} : vector<2x1024xf32> to vector<2x256xf32>
    %327 = math.tanh %326 : vector<2x256xf32>
    %328 = arith.mulf %324, %281 : vector<2x256xf32>
    %329 = arith.mulf %323, %327 : vector<2x256xf32>
    %330 = arith.addf %328, %329 : vector<2x256xf32>
    %331 = math.tanh %330 : vector<2x256xf32>
    %332 = arith.mulf %325, %331 : vector<2x256xf32>
    %333 = arith.truncf %332 : vector<2x256xf32> to vector<2x256xbf16>
    %334 = tpu.concatenate %333, %316 in 1 : vector<2x256xbf16>, vector<2x256xbf16> -> vector<2x512xbf16>
    %c0_73 = arith.constant 0 : index
    %c0_74 = arith.constant 0 : index
    %335 = vector.load %arg10[%c0_73, %c0_74] : memref<512x1024xbf16, #tpu.memory_space<vmem>>, vector<512x1024xbf16>
    %cst_75 = arith.constant dense<0.000000e+00> : vector<2x1024xf32>
    %336 = tpu.matmul %334, %335, %cst_75 {dimension_numbers = #tpu.dot_dimension_numbers<[1], [0], [0], [1], [0, 0, 1, 1], [], []>} : vector<2x512xbf16>, vector<512x1024xbf16>, vector<2x1024xf32> -> vector<2x1024xf32>
    %337 = vector.broadcast %8 : vector<1x1024xf32> to vector<2x1024xf32>
    %338 = arith.addf %336, %337 : vector<2x1024xf32>
    %c7 = arith.constant 7 : index
    %c0_76 = arith.constant 0 : index
    %c0_77 = arith.constant 0 : index
    %339 = vector.load %arg0[%c7, %c0_76, %c0_77] : memref<8x2x1xf32, #tpu.memory_space<vmem>>, vector<1x2x1xf32>
    %340 = vector.shape_cast %339 : vector<1x2x1xf32> to vector<2x1xf32>
    %341 = vector.broadcast %340 : vector<2x1xf32> to vector<2x1024xf32>
    %342 = vector.broadcast %6 : vector<1x1024xf32> to vector<2x1024xf32>
    %343 = arith.mulf %341, %342 : vector<2x1024xf32>
    %344 = vector.broadcast %7 : vector<1x1024xf32> to vector<2x1024xf32>
    %345 = arith.addf %343, %344 : vector<2x1024xf32>
    %c0_78 = arith.constant 0 : index
    %c0_79 = arith.constant 0 : index
    %346 = vector.load %arg9[%c0_78, %c0_79] : memref<256x1024xbf16, #tpu.memory_space<vmem>>, vector<256x1024xbf16>
    %cst_80 = arith.constant dense<0.000000e+00> : vector<2x1024xf32>
    %347 = tpu.matmul %333, %346, %cst_80 {dimension_numbers = #tpu.dot_dimension_numbers<[1], [0], [0], [1], [0, 0, 1, 1], [], []>} : vector<2x256xbf16>, vector<256x1024xbf16>, vector<2x1024xf32> -> vector<2x1024xf32>
    %348 = arith.addf %345, %347 : vector<2x1024xf32>
    %349 = vector.extract_strided_slice %338 {offsets = [0, 0], sizes = [2, 768], strides = [1, 1]} : vector<2x1024xf32> to vector<2x768xf32>
    %350 = arith.negf %349 : vector<2x768xf32>
    %351 = math.exp %350 : vector<2x768xf32>
    %cst_81 = arith.constant 1.000000e+00 : f32
    %352 = vector.broadcast %cst_81 : f32 to vector<2x768xf32>
    %353 = arith.addf %352, %351 : vector<2x768xf32>
    %354 = arith.divf %352, %353 : vector<2x768xf32>
    %355 = vector.extract_strided_slice %354 {offsets = [0, 0], sizes = [2, 256], strides = [1, 1]} : vector<2x768xf32> to vector<2x256xf32>
    %356 = vector.extract_strided_slice %354 {offsets = [0, 256], sizes = [2, 256], strides = [1, 1]} : vector<2x768xf32> to vector<2x256xf32>
    %357 = vector.extract_strided_slice %354 {offsets = [0, 512], sizes = [2, 256], strides = [1, 1]} : vector<2x768xf32> to vector<2x256xf32>
    %358 = vector.extract_strided_slice %338 {offsets = [0, 768], sizes = [2, 256], strides = [1, 1]} : vector<2x1024xf32> to vector<2x256xf32>
    %359 = math.tanh %358 : vector<2x256xf32>
    %360 = arith.mulf %356, %313 : vector<2x256xf32>
    %361 = arith.mulf %355, %359 : vector<2x256xf32>
    %362 = arith.addf %360, %361 : vector<2x256xf32>
    %363 = math.tanh %362 : vector<2x256xf32>
    %364 = arith.mulf %357, %363 : vector<2x256xf32>
    %365 = arith.truncf %364 : vector<2x256xf32> to vector<2x256xbf16>
    %366 = vector.extract_strided_slice %348 {offsets = [0, 0], sizes = [2, 768], strides = [1, 1]} : vector<2x1024xf32> to vector<2x768xf32>
    %367 = arith.negf %366 : vector<2x768xf32>
    %368 = math.exp %367 : vector<2x768xf32>
    %cst_82 = arith.constant 1.000000e+00 : f32
    %369 = vector.broadcast %cst_82 : f32 to vector<2x768xf32>
    %370 = arith.addf %369, %368 : vector<2x768xf32>
    %371 = arith.divf %369, %370 : vector<2x768xf32>
    %372 = vector.extract_strided_slice %371 {offsets = [0, 0], sizes = [2, 256], strides = [1, 1]} : vector<2x768xf32> to vector<2x256xf32>
    %373 = vector.extract_strided_slice %371 {offsets = [0, 256], sizes = [2, 256], strides = [1, 1]} : vector<2x768xf32> to vector<2x256xf32>
    %374 = vector.extract_strided_slice %371 {offsets = [0, 512], sizes = [2, 256], strides = [1, 1]} : vector<2x768xf32> to vector<2x256xf32>
    %375 = vector.extract_strided_slice %348 {offsets = [0, 768], sizes = [2, 256], strides = [1, 1]} : vector<2x1024xf32> to vector<2x256xf32>
    %376 = math.tanh %375 : vector<2x256xf32>
    %377 = arith.mulf %373, %330 : vector<2x256xf32>
    %378 = arith.mulf %372, %376 : vector<2x256xf32>
    %379 = arith.addf %377, %378 : vector<2x256xf32>
    %380 = math.tanh %379 : vector<2x256xf32>
    %381 = arith.mulf %374, %380 : vector<2x256xf32>
    %382 = arith.truncf %381 : vector<2x256xf32> to vector<2x256xbf16>
    %383 = tpu.concatenate %382, %365 in 1 : vector<2x256xbf16>, vector<2x256xbf16> -> vector<2x512xbf16>
    %c0_83 = arith.constant 0 : index
    %c0_84 = arith.constant 0 : index
    %384 = vector.load %arg10[%c0_83, %c0_84] : memref<512x1024xbf16, #tpu.memory_space<vmem>>, vector<512x1024xbf16>
    %cst_85 = arith.constant dense<0.000000e+00> : vector<2x1024xf32>
    %385 = tpu.matmul %383, %384, %cst_85 {dimension_numbers = #tpu.dot_dimension_numbers<[1], [0], [0], [1], [0, 0, 1, 1], [], []>} : vector<2x512xbf16>, vector<512x1024xbf16>, vector<2x1024xf32> -> vector<2x1024xf32>
    %386 = vector.broadcast %8 : vector<1x1024xf32> to vector<2x1024xf32>
    %387 = arith.addf %385, %386 : vector<2x1024xf32>
    %388 = vector.extract_strided_slice %387 {offsets = [0, 0], sizes = [2, 768], strides = [1, 1]} : vector<2x1024xf32> to vector<2x768xf32>
    %389 = arith.negf %388 : vector<2x768xf32>
    %390 = math.exp %389 : vector<2x768xf32>
    %cst_86 = arith.constant 1.000000e+00 : f32
    %391 = vector.broadcast %cst_86 : f32 to vector<2x768xf32>
    %392 = arith.addf %391, %390 : vector<2x768xf32>
    %393 = arith.divf %391, %392 : vector<2x768xf32>
    %394 = vector.extract_strided_slice %393 {offsets = [0, 0], sizes = [2, 256], strides = [1, 1]} : vector<2x768xf32> to vector<2x256xf32>
    %395 = vector.extract_strided_slice %393 {offsets = [0, 256], sizes = [2, 256], strides = [1, 1]} : vector<2x768xf32> to vector<2x256xf32>
    %396 = vector.extract_strided_slice %393 {offsets = [0, 512], sizes = [2, 256], strides = [1, 1]} : vector<2x768xf32> to vector<2x256xf32>
    %397 = vector.extract_strided_slice %387 {offsets = [0, 768], sizes = [2, 256], strides = [1, 1]} : vector<2x1024xf32> to vector<2x256xf32>
    %398 = math.tanh %397 : vector<2x256xf32>
    %399 = arith.mulf %395, %362 : vector<2x256xf32>
    %400 = arith.mulf %394, %398 : vector<2x256xf32>
    %401 = arith.addf %399, %400 : vector<2x256xf32>
    %402 = math.tanh %401 : vector<2x256xf32>
    %403 = arith.mulf %396, %402 : vector<2x256xf32>
    %404 = arith.truncf %403 : vector<2x256xf32> to vector<2x256xbf16>
    %c2_i32_87 = arith.constant 2 : i32
    %405 = tpu.memref_slice %arg12[%c2_i32_87] : memref<3x!tpu.dma_semaphore, #tpu.memory_space<semaphore_mem>> -> memref<1x!tpu.dma_semaphore, #tpu.memory_space<semaphore_mem>>
    %406 = tpu.memref_squeeze %405 : memref<1x!tpu.dma_semaphore, #tpu.memory_space<semaphore_mem>> -> memref<!tpu.dma_semaphore, #tpu.memory_space<semaphore_mem>>
    tpu.wait_dma2 semaphore(%406 : memref<!tpu.dma_semaphore, #tpu.memory_space<semaphore_mem>>) src(%arg6 : memref<256x128xbf16, #tpu.memory_space<any>>) dst(%arg11 : memref<256x128xbf16, #tpu.memory_space<vmem>>)
    %c0_88 = arith.constant 0 : index
    %c0_89 = arith.constant 0 : index
    %407 = vector.load %arg11[%c0_88, %c0_89] : memref<256x128xbf16, #tpu.memory_space<vmem>>, vector<256x128xbf16>
    %cst_90 = arith.constant dense<0.000000e+00> : vector<2x128xf32>
    %408 = tpu.matmul %404, %407, %cst_90 {dimension_numbers = #tpu.dot_dimension_numbers<[1], [0], [0], [1], [0, 0, 1, 1], [], []>} : vector<2x256xbf16>, vector<256x128xbf16>, vector<2x128xf32> -> vector<2x128xf32>
    %c0_91 = arith.constant 0 : index
    %c0_92 = arith.constant 0 : index
    %409 = vector.load %arg7[%c0_91, %c0_92] : memref<1x128xf32, #tpu.memory_space<vmem>>, vector<1x128xf32>
    %410 = vector.broadcast %409 : vector<1x128xf32> to vector<2x128xf32>
    %411 = arith.addf %408, %410 : vector<2x128xf32>
    %c0_93 = arith.constant 0 : index
    %c0_94 = arith.constant 0 : index
    %412 = vector.load %arg8[%c0_93, %c0_94] : memref<2x128xf32, #tpu.memory_space<vmem>>, vector<2x128xf32>
    tpu.vector_store %arg8[%c0_93, %c0_94], %411 {strides = array<i32>} : memref<2x128xf32, #tpu.memory_space<vmem>>, vector<2x128xf32>,
    return
  }
}

</mosaic_0001>

<llo_original>
// kernel: tpu_custom_call.1
$region0: #{tpu_custom_call.1}
  #allocation0 [shape = 'u32[]', space=smem, size = 0x4, offset = 0x4, fixed_abs, tag = 'smem constant byte address 0x4 - core index']
  #allocation1 [shape = 'u32[72,128]{1,0:T(1,128)}', space=vmem, size = 0x9000, scoped, tag = 'internal scratch']
  #allocation2 [shape = 'bf16[256,1024]{1,0:T(8,128)(2,1)}', space=vmem, size = 0x80000, scoped, tag = 'scratch operand']
  #allocation3 [shape = 'bf16[512,1024]{1,0:T(8,128)(2,1)}', space=vmem, size = 0x100000, scoped, tag = 'scratch operand']
  #allocation4 [shape = 'bf16[256,128]{1,0:T(8,128)(2,1)}', space=vmem, size = 0x10000, scoped, tag = 'scratch operand']
  #allocation5 [shape = 's32[3]{0}', space=sflag, size = 0xc, scoped, tag = 'scratch operand']
  #allocation10 [shape = 's32[]', space=sflag, size = 0x4, offset = 0, fixed_abs, tag = 'sflag constant byte address 0x0 - dummy sync flag']
  #allocation11 [shape = 's32[]', space=sflag, size = 0x4, offset = 0, fixed_abs, tag = 'sflag constant byte address 0x0 - dummy sync flag']
  #allocation12 [shape = 'u32[]', space=smem, size = 0x4, offset = 0x44, fixed_abs, tag = 'smem constant byte address 0x44 - assertion arg 0']
  #allocation13 [shape = 'u32[]', space=smem, size = 0x4, offset = 0x48, fixed_abs, tag = 'smem constant byte address 0x48 - assertion arg 1']
  #allocation14 [shape = 's32[]', space=sflag, size = 0x4, offset = 0, fixed_abs, tag = 'sflag constant byte address 0x0 - dummy sync flag']
  #allocation15 [shape = 's32[]', space=sflag, size = 0x4, offset = 0, fixed_abs, tag = 'sflag constant byte address 0x0 - dummy sync flag']
  #allocation16 [shape = 's32[]', space=sflag, size = 0x4, offset = 0, fixed_abs, tag = 'sflag constant byte address 0x0 - dummy sync flag']
  #allocation17 [shape = 's32[]', space=sflag, size = 0x4, offset = 0, fixed_abs, tag = 'sflag constant byte address 0x0 - dummy sync flag']
  %s0 = inlined_call_operand.vmem [shape: f32[8,2,1], index: 0, kind: input, shape index: {}]
  %s1 = inlined_call_operand.vmem [shape: f32[1,1024], index: 1, kind: input, shape index: {}]
  %s2 = inlined_call_operand.vmem [shape: f32[1,1024], index: 2, kind: input, shape index: {}]
  %s3 = inlined_call_operand.hbm [shape: bf16[256,1024], index: 3, kind: input, shape index: {}]
  %s4 = inlined_call_operand.hbm [shape: bf16[512,1024], index: 4, kind: input, shape index: {}]
  %s5 = inlined_call_operand.hbm [shape: f32[1,1024], index: 5, kind: input, shape index: {}]
  %s6 = inlined_call_operand.hbm [shape: bf16[256,128], index: 6, kind: input, shape index: {}]
  %s7 = inlined_call_operand.vmem [shape: f32[1,128], index: 7, kind: input, shape index: {}]
  %s8 = inlined_call_operand.hbm [shape: f32[2,128], index: 8, kind: output, shape index: {}]
  %s9 = sld [smem:[#allocation0]]
  $region46: #{tpu_custom_call.1} parent=0
    _
  %s11 = ssub.s32 1, %s9
  %s12 = scalar_select 0, %s11, %s9
  $region1: #{tpu_custom_call.1} parent=0
    #allocation6 [shape = 'u8[4096]{0}', space=vmem, size = 0x1000, scoped, tag = 'input window, operand 5, single buffered']
    #allocation7 [shape = 's32[1]{0}', space=sflag, size = 0x4, scoped, tag = 'scoped memory for tpu_custom_call.1']
    #allocation8 [shape = 's32[1]{0}', space=sflag, size = 0x4, scoped, tag = 'scoped memory for tpu_custom_call.1']
    #allocation9 [shape = 'u8[1024]{0}', space=vmem, size = 0x400, scoped, tag = 'output window, operand 0, single buffered']
    %13 = vsyncpa [#allocation7], 0
    %14 = vsyncpa [#allocation8], 0
    // Predicated region
    $region2: #{tpu_custom_call.1} parent=1 // pred_check
      _
    $region3: #{tpu_custom_call.1} parent=1 // pred_check_branch
      %16 = sbr.rel (0) target = $region5
    $region4: #{tpu_custom_call.1} parent=1 // pred_region
      _
    $region5: #{tpu_custom_call.1} parent=1 // pred_fallthru
      _
    // Predicated region
    $region6: #{tpu_custom_call.1} parent=1 // pred_check
      _
    $region7: #{tpu_custom_call.1} parent=1 // pred_check_branch
      %18 = sbr.rel (0) target = $region9
    $region8: #{tpu_custom_call.1} parent=1 // pred_region
      _
    $region9: #{tpu_custom_call.1} parent=1 // pred_fallthru
      _
    // Predicated region
    $region10: #{tpu_custom_call.1} parent=1 // pred_check
      _
    $region11: #{tpu_custom_call.1} parent=1 // pred_check_branch
      %20 = sbr.rel (0) target = $region13
    $region12: #{tpu_custom_call.1} parent=1 // pred_region
      _
    $region13: #{tpu_custom_call.1} parent=1 // pred_fallthru
      _
    // Predicated region
    $region14: #{tpu_custom_call.1} parent=1 // pred_check
      _
    $region15: #{tpu_custom_call.1} parent=1 // pred_check_branch
      %22 = sbr.rel (0) target = $region17
    $region16: #{tpu_custom_call.1} parent=1 // pred_region
      %24 = vsyncadd [#allocation7], 0
      %s26 = sshll.u32 %s5, 4
      %s27 = int_to_ptr.hbm [resolvable:$true] %s26
      %s28 = sshll.u32 [#allocation6], 4
      %s29 = int_to_ptr.vmem [resolvable:$true] %s28
      %31 = dma.hbm_to_vmem [thread:$0]  %s27, 128, %s29, [#allocation7]
    $region17: #{tpu_custom_call.1} parent=1 // pred_fallthru
      _
    // Predicated region
    $region18: #{tpu_custom_call.1} parent=1 // pred_check
      _
    $region19: #{tpu_custom_call.1} parent=1 // pred_check_branch
      %33 = sbr.rel (0) target = $region21
    $region20: #{tpu_custom_call.1} parent=1 // pred_region
      _
    $region21: #{tpu_custom_call.1} parent=1 // pred_fallthru
      _
    // Predicated region
    $region22: #{tpu_custom_call.1} parent=1 // pred_check
      _
    $region23: #{tpu_custom_call.1} parent=1 // pred_check_branch
      %35 = sbr.rel (0) target = $region25
    $region24: #{tpu_custom_call.1} parent=1 // pred_region
      %37 = dma.done [#allocation7], 128
    $region25: #{tpu_custom_call.1} parent=1 // pred_fallthru
      _
    // Predicated region
    $region26: #{tpu_custom_call.1} parent=1 // pred_check
      _
    $region27: #{tpu_custom_call.1} parent=1 // pred_check_branch
      %40 = sbr.rel target = $region29
    $region28: #{tpu_custom_call.1} parent=1 // pred_region
      %41 = sst [smem:[#allocation12]] [#allocation11]
      %42 = sst [smem:[#allocation13]] [#allocation10]
    $region29: #{tpu_custom_call.1} parent=1 // pred_fallthru
      _
    %44 = shalt.err (0)
    %s46 = sshll.u32 %s4, 4
    %s47 = int_to_ptr.hbm [resolvable:$true] %s46
    %s48 = sshll.u32 [#allocation3], 4
    %s49 = int_to_ptr.vmem [resolvable:$true] %s48
    %51 = dma.hbm_to_vmem [thread:$0]  %s47, 32768, %s49, [#allocation5]
    %s52 = scalar_lea.sflag [#allocation5], 1
    // Predicated region
    $region30: #{tpu_custom_call.1} parent=1 // pred_check
      _
    $region31: #{tpu_custom_call.1} parent=1 // pred_check_branch
      %54 = sbr.rel target = $region33
    $region32: #{tpu_custom_call.1} parent=1 // pred_region
      %55 = sst [smem:[#allocation12]] [#allocation15]
      %56 = sst [smem:[#allocation13]] [#allocation14]
    $region33: #{tpu_custom_call.1} parent=1 // pred_fallthru
      _
    %58 = shalt.err (0)
    %s60 = sshll.u32 %s3, 4
    %s61 = int_to_ptr.hbm [resolvable:$true] %s60
    %s62 = sshll.u32 [#allocation2], 4
    %s63 = int_to_ptr.vmem [resolvable:$true] %s62
    %65 = dma.hbm_to_vmem [thread:$0]  %s61, 16384, %s63, %s52
    %s66 = scalar_lea.sflag [#allocation5], 2
    // Predicated region
    $region34: #{tpu_custom_call.1} parent=1 // pred_check
      _
    $region35: #{tpu_custom_call.1} parent=1 // pred_check_branch
      %68 = sbr.rel target = $region37
    $region36: #{tpu_custom_call.1} parent=1 // pred_region
      %69 = sst [smem:[#allocation12]] [#allocation17]
      %70 = sst [smem:[#allocation13]] [#allocation16]
    $region37: #{tpu_custom_call.1} parent=1 // pred_fallthru
      _
    %72 = shalt.err (0)
    %s74 = sshll.u32 %s6, 4
    %s75 = int_to_ptr.hbm [resolvable:$true] %s74
    %s76 = sshll.u32 [#allocation4], 4
    %s77 = int_to_ptr.vmem [resolvable:$true] %s76
    %79 = dma.hbm_to_vmem [thread:$0]  %s75, 2048, %s77, %s66
    %v80 = vld [vmem:[%s1] sm:$0xff]
    %v81 = vld [vmem:[%s2] sm:$0xff]
    %v82 = vld [vmem:[#allocation6] sm:$0xff]
    %v83 = vld [vmem:[%s0] sm:$0x3]
    %85 = vset.pattern.permute.xlu0 0
    %86 = vperm.xlu0 %85, %v83
    %v87 = vpop.permute.xlu0 %86
    %v90 = vperm.slane %v80, 0
    %v91 = vperm.slane %v80, 1
    %v92 = vperm.slane %v80, 2
    %v93 = vperm.slane %v80, 3
    %v94 = vperm.slane %v80, 4
    %v95 = vperm.slane %v80, 5
    %v96 = vperm.slane %v80, 6
    %v97 = vperm.slane %v80, 7
    %v106 = vmul.f32 %v87, %v90
    %v107 = vmul.f32 %v87, %v91
    %v108 = vmul.f32 %v87, %v92
    %v109 = vmul.f32 %v87, %v93
    %v110 = vmul.f32 %v87, %v94
    %v111 = vmul.f32 %v87, %v95
    %v112 = vmul.f32 %v87, %v96
    %v113 = vmul.f32 %v87, %v97
    %v115 = vperm.slane %v81, 0
    %v116 = vperm.slane %v81, 1
    %v117 = vperm.slane %v81, 2
    %v118 = vperm.slane %v81, 3
    %v119 = vperm.slane %v81, 4
    %v120 = vperm.slane %v81, 5
    %v121 = vperm.slane %v81, 6
    %v122 = vperm.slane %v81, 7
    %v131 = vadd.f32 %v106, %v115
    %v132 = vadd.f32 %v107, %v116
    %v133 = vadd.f32 %v108, %v117
    %v134 = vadd.f32 %v109, %v118
    %v135 = vadd.f32 %v110, %v119
    %v136 = vadd.f32 %v111, %v120
    %v137 = vadd.f32 %v112, %v121
    %v138 = vadd.f32 %v113, %v122
    %v139 = vxor.u32 %v131, 2147483648
    %v140 = vxor.u32 %v132, 2147483648
    %v141 = vxor.u32 %v133, 2147483648
    %v142 = vxor.u32 %v134, 2147483648
    %v143 = vxor.u32 %v135, 2147483648
    %v144 = vxor.u32 %v136, 2147483648
    %v145 = vmul.f32 %v139, 1.442695
    %v146 = vpow.pop %v145
    %v147 = vmul.f32 %v140, 1.442695
    %v148 = vpow.pop %v147
    %v149 = vmul.f32 %v141, 1.442695
    %v150 = vpow.pop %v149
    %v151 = vmul.f32 %v142, 1.442695
    %v152 = vpow.pop %v151
    %v153 = vmul.f32 %v143, 1.442695
    %v154 = vpow.pop %v153
    %v155 = vmul.f32 %v144, 1.442695
    %v156 = vpow.pop %v155
    %v157 = vadd.f32 %v146, 1.0
    %v158 = vadd.f32 %v148, 1.0
    %v159 = vadd.f32 %v150, 1.0
    %v160 = vadd.f32 %v152, 1.0
    %v161 = vadd.f32 %v154, 1.0
    %v162 = vadd.f32 %v156, 1.0
    %v163 = vrcp.pop %v157
    %v164 = vmul.f32 %v157, %v163
    %v165 = vsub.f32 1.0, %v164
    %v166 = vmul.f32 %v163, %v165
    %v167 = vadd.f32 %v163, %v166
    %vm168 = vweird.f32 %v157
    %vm169 = vweird.f32 %v163
    %vm170 = vmor %vm168, %vm169
    %v171 = vsel %vm170, %v163, %v167
    %v172 = vand.u32 2147483647, %v157
    %vm173 = vcmp.eq.f32.partialorder %v172, 8.507059e+37
    %v174 = vand.u32 %v157, 2147483648
    %v175 = vor.u32 1.1754944e-38, %v174
    %v176 = vsel %vm173, %v175, %v171
    %v177 = vmul.f32 1.0, %v176
    %v178 = vrcp.pop %v158
    %v179 = vmul.f32 %v158, %v178
    %v180 = vsub.f32 1.0, %v179
    %v181 = vmul.f32 %v178, %v180
    %v182 = vadd.f32 %v178, %v181
    %vm183 = vweird.f32 %v158
    %vm184 = vweird.f32 %v178
    %vm185 = vmor %vm183, %vm184
    %v186 = vsel %vm185, %v178, %v182
    %v187 = vand.u32 2147483647, %v158
    %vm188 = vcmp.eq.f32.partialorder %v187, 8.507059e+37
    %v189 = vand.u32 %v158, 2147483648
    %v190 = vor.u32 1.1754944e-38, %v189
    %v191 = vsel %vm188, %v190, %v186
    %v192 = vmul.f32 1.0, %v191
    %v193 = vrcp.pop %v159
    %v194 = vmul.f32 %v159, %v193
    %v195 = vsub.f32 1.0, %v194
    %v196 = vmul.f32 %v193, %v195
    %v197 = vadd.f32 %v193, %v196
    %vm198 = vweird.f32 %v159
    %vm199 = vweird.f32 %v193
    %vm200 = vmor %vm198, %vm199
    %v201 = vsel %vm200, %v193, %v197
    %v202 = vand.u32 2147483647, %v159
    %vm203 = vcmp.eq.f32.partialorder %v202, 8.507059e+37
    %v204 = vand.u32 %v159, 2147483648
    %v205 = vor.u32 1.1754944e-38, %v204
    %v206 = vsel %vm203, %v205, %v201
    %v207 = vmul.f32 1.0, %v206
    %v208 = vrcp.pop %v160
    %v209 = vmul.f32 %v160, %v208
    %v210 = vsub.f32 1.0, %v209
    %v211 = vmul.f32 %v208, %v210
    %v212 = vadd.f32 %v208, %v211
    %vm213 = vweird.f32 %v160
    %vm214 = vweird.f32 %v208
    %vm215 = vmor %vm213, %vm214
    %v216 = vsel %vm215, %v208, %v212
    %v217 = vand.u32 2147483647, %v160
    %vm218 = vcmp.eq.f32.partialorder %v217, 8.507059e+37
    %v219 = vand.u32 %v160, 2147483648
    %v220 = vor.u32 1.1754944e-38, %v219
    %v221 = vsel %vm218, %v220, %v216
    %v222 = vmul.f32 1.0, %v221
    %v223 = vrcp.pop %v161
    %v224 = vmul.f32 %v161, %v223
    %v225 = vsub.f32 1.0, %v224
    %v226 = vmul.f32 %v223, %v225
    %v227 = vadd.f32 %v223, %v226
    %vm228 = vweird.f32 %v161
    %vm229 = vweird.f32 %v223
    %vm230 = vmor %vm228, %vm229
    %v231 = vsel %vm230, %v223, %v227
    %v232 = vand.u32 2147483647, %v161
    %vm233 = vcmp.eq.f32.partialorder %v232, 8.507059e+37
    %v234 = vand.u32 %v161, 2147483648
    %v235 = vor.u32 1.1754944e-38, %v234
    %v236 = vsel %vm233, %v235, %v231
    %v237 = vmul.f32 1.0, %v236
    %v238 = vrcp.pop %v162
    %v239 = vmul.f32 %v162, %v238
    %v240 = vsub.f32 1.0, %v239
    %v241 = vmul.f32 %v238, %v240
    %v242 = vadd.f32 %v238, %v241
    %vm243 = vweird.f32 %v162
    %vm244 = vweird.f32 %v238
    %vm245 = vmor %vm243, %vm244
    %v246 = vsel %vm245, %v238, %v242
    %v247 = vand.u32 2147483647, %v162
    %vm248 = vcmp.eq.f32.partialorder %v247, 8.507059e+37
    %v249 = vand.u32 %v162, 2147483648
    %v250 = vor.u32 1.1754944e-38, %v249
    %v251 = vsel %vm248, %v250, %v246
    %v252 = vmul.f32 1.0, %v251
    %v253 = vtanh.pop %v137
    %v254 = vtanh.pop %v138
    %v255 = vmul.f32 %v207, 0.0
    %v256 = vmul.f32 %v222, 0.0
    %v257 = vmul.f32 %v177, %v253
    %v258 = vmul.f32 %v192, %v254
    %v259 = vadd.f32 %v255, %v257
    %v260 = vadd.f32 %v256, %v258
    %v261 = vtanh.pop %v259
    %v262 = vtanh.pop %v260
    %v263 = vmul.f32 %v237, %v261
    %v264 = vmul.f32 %v252, %v262
    %v265 = vpack.c.bf16 %v264, %v263
    %s266 = smul.u32 4, 64
    %s267 = smul.u32 %s266, 8
    %s268 = sshll.u32 %s267, 4
    %269 = dma.done [#allocation5], %s268
    %v271 = vunpack.c.l.b16 %v265
    %v272 = vunpack.c.h.b16 %v265
    %v273 = vpack.c.b16 %v271, %v271
    %v274 = vpack.c.b16 %v272, %v272
    %v277 = vld [vmem:[#allocation3] sm:$0xff]
    %v278 = vld [vmem:[#allocation3 + $0x8] sm:$0xff]
    %v279 = vld [vmem:[#allocation3 + $0x10] sm:$0xff]
    %v280 = vld [vmem:[#allocation3 + $0x18] sm:$0xff]
    %v281 = vld [vmem:[#allocation3 + $0x20] sm:$0xff]
    %v282 = vld [vmem:[#allocation3 + $0x28] sm:$0xff]
    %v283 = vld [vmem:[#allocation3 + $0x30] sm:$0xff]
    %v284 = vld [vmem:[#allocation3 + $0x38] sm:$0xff]
    %v285 = vld [vmem:[#allocation3 + $0x40] sm:$0xff]
    %v286 = vld [vmem:[#allocation3 + $0x48] sm:$0xff]
    %v287 = vld [vmem:[#allocation3 + $0x50] sm:$0xff]
    %v288 = vld [vmem:[#allocation3 + $0x58] sm:$0xff]
    %v289 = vld [vmem:[#allocation3 + $0x60] sm:$0xff]
    %v290 = vld [vmem:[#allocation3 + $0x68] sm:$0xff]
    %v291 = vld [vmem:[#allocation3 + $0x70] sm:$0xff]
    %v292 = vld [vmem:[#allocation3 + $0x78] sm:$0xff]
    %v293 = vld [vmem:[#allocation3 + $0x80] sm:$0xff]
    %v294 = vld [vmem:[#allocation3 + $0x88] sm:$0xff]
    %v295 = vld [vmem:[#allocation3 + $0x90] sm:$0xff]
    %v296 = vld [vmem:[#allocation3 + $0x98] sm:$0xff]
    %v297 = vld [vmem:[#allocation3 + $0xa0] sm:$0xff]
    %v298 = vld [vmem:[#allocation3 + $0xa8] sm:$0xff]
    %v299 = vld [vmem:[#allocation3 + $0xb0] sm:$0xff]
    %v300 = vld [vmem:[#allocation3 + $0xb8] sm:$0xff]
    %v301 = vld [vmem:[#allocation3 + $0xc0] sm:$0xff]
    %v302 = vld [vmem:[#allocation3 + $0xc8] sm:$0xff]
    %v303 = vld [vmem:[#allocation3 + $0xd0] sm:$0xff]
    %v304 = vld [vmem:[#allocation3 + $0xd8] sm:$0xff]
    %v305 = vld [vmem:[#allocation3 + $0xe0] sm:$0xff]
    %v306 = vld [vmem:[#allocation3 + $0xe8] sm:$0xff]
    %v307 = vld [vmem:[#allocation3 + $0xf0] sm:$0xff]
    %v308 = vld [vmem:[#allocation3 + $0xf8] sm:$0xff]
    %v309 = vld [vmem:[#allocation3 + $0x100] sm:$0xff]
    %v310 = vld [vmem:[#allocation3 + $0x108] sm:$0xff]
    %v311 = vld [vmem:[#allocation3 + $0x110] sm:$0xff]
    %v312 = vld [vmem:[#allocation3 + $0x118] sm:$0xff]
    %v313 = vld [vmem:[#allocation3 + $0x120] sm:$0xff]
    %v314 = vld [vmem:[#allocation3 + $0x128] sm:$0xff]
    %v315 = vld [vmem:[#allocation3 + $0x130] sm:$0xff]
    %v316 = vld [vmem:[#allocation3 + $0x138] sm:$0xff]
    %v317 = vld [vmem:[#allocation3 + $0x140] sm:$0xff]
    %v318 = vld [vmem:[#allocation3 + $0x148] sm:$0xff]
    %v319 = vld [vmem:[#allocation3 + $0x150] sm:$0xff]
    %v320 = vld [vmem:[#allocation3 + $0x158] sm:$0xff]
    %v321 = vld [vmem:[#allocation3 + $0x160] sm:$0xff]
    %v322 = vld [vmem:[#allocation3 + $0x168] sm:$0xff]
    %v323 = vld [vmem:[#allocation3 + $0x170] sm:$0xff]
    %v324 = vld [vmem:[#allocation3 + $0x178] sm:$0xff]
    %v325 = vld [vmem:[#allocation3 + $0x180] sm:$0xff]
    %v326 = vld [vmem:[#allocation3 + $0x188] sm:$0xff]
    %v327 = vld [vmem:[#allocation3 + $0x190] sm:$0xff]
    %v328 = vld [vmem:[#allocation3 + $0x198] sm:$0xff]
    %v329 = vld [vmem:[#allocation3 + $0x1a0] sm:$0xff]
    %v330 = vld [vmem:[#allocation3 + $0x1a8] sm:$0xff]
    %v331 = vld [vmem:[#allocation3 + $0x1b0] sm:$0xff]
    %v332 = vld [vmem:[#allocation3 + $0x1b8] sm:$0xff]
    %v333 = vld [vmem:[#allocation3 + $0x1c0] sm:$0xff]
    %v334 = vld [vmem:[#allocation3 + $0x1c8] sm:$0xff]
    %v335 = vld [vmem:[#allocation3 + $0x1d0] sm:$0xff]
    %v336 = vld [vmem:[#allocation3 + $0x1d8] sm:$0xff]
    %v337 = vld [vmem:[#allocation3 + $0x1e0] sm:$0xff]
    %v338 = vld [vmem:[#allocation3 + $0x1e8] sm:$0xff]
    %v339 = vld [vmem:[#allocation3 + $0x1f0] sm:$0xff]
    %v340 = vld [vmem:[#allocation3 + $0x1f8] sm:$0xff]
    %v341 = vld [vmem:[#allocation3 + $0x200] sm:$0xff]
    %v342 = vld [vmem:[#allocation3 + $0x208] sm:$0xff]
    %v343 = vld [vmem:[#allocation3 + $0x210] sm:$0xff]
    %v344 = vld [vmem:[#allocation3 + $0x218] sm:$0xff]
    %v345 = vld [vmem:[#allocation3 + $0x220] sm:$0xff]
    %v346 = vld [vmem:[#allocation3 + $0x228] sm:$0xff]
    %v347 = vld [vmem:[#allocation3 + $0x230] sm:$0xff]
    %v348 = vld [vmem:[#allocation3 + $0x238] sm:$0xff]
    %v349 = vld [vmem:[#allocation3 + $0x240] sm:$0xff]
    %v350 = vld [vmem:[#allocation3 + $0x248] sm:$0xff]
    %v351 = vld [vmem:[#allocation3 + $0x250] sm:$0xff]
    %v352 = vld [vmem:[#allocation3 + $0x258] sm:$0xff]
    %v353 = vld [vmem:[#allocation3 + $0x260] sm:$0xff]
    %v354 = vld [vmem:[#allocation3 + $0x268] sm:$0xff]
    %v355 = vld [vmem:[#allocation3 + $0x270] sm:$0xff]
    %v356 = vld [vmem:[#allocation3 + $0x278] sm:$0xff]
    %v357 = vld [vmem:[#allocation3 + $0x280] sm:$0xff]
    %v358 = vld [vmem:[#allocation3 + $0x288] sm:$0xff]
    %v359 = vld [vmem:[#allocation3 + $0x290] sm:$0xff]
    %v360 = vld [vmem:[#allocation3 + $0x298] sm:$0xff]
    %v361 = vld [vmem:[#allocation3 + $0x2a0] sm:$0xff]
    %v362 = vld [vmem:[#allocation3 + $0x2a8] sm:$0xff]
    %v363 = vld [vmem:[#allocation3 + $0x2b0] sm:$0xff]
    %v364 = vld [vmem:[#allocation3 + $0x2b8] sm:$0xff]
    %v365 = vld [vmem:[#allocation3 + $0x2c0] sm:$0xff]
    %v366 = vld [vmem:[#allocation3 + $0x2c8] sm:$0xff]
    %v367 = vld [vmem:[#allocation3 + $0x2d0] sm:$0xff]
    %v368 = vld [vmem:[#allocation3 + $0x2d8] sm:$0xff]
    %v369 = vld [vmem:[#allocation3 + $0x2e0] sm:$0xff]
    %v370 = vld [vmem:[#allocation3 + $0x2e8] sm:$0xff]
    %v371 = vld [vmem:[#allocation3 + $0x2f0] sm:$0xff]
    %v372 = vld [vmem:[#allocation3 + $0x2f8] sm:$0xff]
    %v373 = vld [vmem:[#allocation3 + $0x300] sm:$0xff]
    %v374 = vld [vmem:[#allocation3 + $0x308] sm:$0xff]
    %v375 = vld [vmem:[#allocation3 + $0x310] sm:$0xff]
    %v376 = vld [vmem:[#allocation3 + $0x318] sm:$0xff]
    %v377 = vld [vmem:[#allocation3 + $0x320] sm:$0xff]
    %v378 = vld [vmem:[#allocation3 + $0x328] sm:$0xff]
    %v379 = vld [vmem:[#allocation3 + $0x330] sm:$0xff]
    %v380 = vld [vmem:[#allocation3 + $0x338] sm:$0xff]
    %v381 = vld [vmem:[#allocation3 + $0x340] sm:$0xff]
    %v382 = vld [vmem:[#allocation3 + $0x348] sm:$0xff]
    %v383 = vld [vmem:[#allocation3 + $0x350] sm:$0xff]
    %v384 = vld [vmem:[#allocation3 + $0x358] sm:$0xff]
    %v385 = vld [vmem:[#allocation3 + $0x360] sm:$0xff]
    %v386 = vld [vmem:[#allocation3 + $0x368] sm:$0xff]
    %v387 = vld [vmem:[#allocation3 + $0x370] sm:$0xff]
    %v388 = vld [vmem:[#allocation3 + $0x378] sm:$0xff]
    %v389 = vld [vmem:[#allocation3 + $0x380] sm:$0xff]
    %v390 = vld [vmem:[#allocation3 + $0x388] sm:$0xff]
    %v391 = vld [vmem:[#allocation3 + $0x390] sm:$0xff]
    %v392 = vld [vmem:[#allocation3 + $0x398] sm:$0xff]
    %v393 = vld [vmem:[#allocation3 + $0x3a0] sm:$0xff]
    %v394 = vld [vmem:[#allocation3 + $0x3a8] sm:$0xff]
    %v395 = vld [vmem:[#allocation3 + $0x3b0] sm:$0xff]
    %v396 = vld [vmem:[#allocation3 + $0x3b8] sm:$0xff]
    %v397 = vld [vmem:[#allocation3 + $0x3c0] sm:$0xff]
    %v398 = vld [vmem:[#allocation3 + $0x3c8] sm:$0xff]
    %v399 = vld [vmem:[#allocation3 + $0x3d0] sm:$0xff]
    %v400 = vld [vmem:[#allocation3 + $0x3d8] sm:$0xff]
    %v401 = vld [vmem:[#allocation3 + $0x3e0] sm:$0xff]
    %v402 = vld [vmem:[#allocation3 + $0x3e8] sm:$0xff]
    %v403 = vld [vmem:[#allocation3 + $0x3f0] sm:$0xff]
    %v404 = vld [vmem:[#allocation3 + $0x3f8] sm:$0xff]
    %v405 = vld [vmem:[#allocation3 + $0x400] sm:$0xff]
    %v406 = vld [vmem:[#allocation3 + $0x408] sm:$0xff]
    %v407 = vld [vmem:[#allocation3 + $0x410] sm:$0xff]
    %v408 = vld [vmem:[#allocation3 + $0x418] sm:$0xff]
    %v409 = vld [vmem:[#allocation3 + $0x420] sm:$0xff]
    %v410 = vld [vmem:[#allocation3 + $0x428] sm:$0xff]
    %v411 = vld [vmem:[#allocation3 + $0x430] sm:$0xff]
    %v412 = vld [vmem:[#allocation3 + $0x438] sm:$0xff]
    %v413 = vld [vmem:[#allocation3 + $0x440] sm:$0xff]
    %v414 = vld [vmem:[#allocation3 + $0x448] sm:$0xff]
    %v415 = vld [vmem:[#allocation3 + $0x450] sm:$0xff]
    %v416 = vld [vmem:[#allocation3 + $0x458] sm:$0xff]
    %v417 = vld [vmem:[#allocation3 + $0x460] sm:$0xff]
    %v418 = vld [vmem:[#allocation3 + $0x468] sm:$0xff]
    %v419 = vld [vmem:[#allocation3 + $0x470] sm:$0xff]
    %v420 = vld [vmem:[#allocation3 + $0x478] sm:$0xff]
    %v421 = vld [vmem:[#allocation3 + $0x480] sm:$0xff]
    %v422 = vld [vmem:[#allocation3 + $0x488] sm:$0xff]
    %v423 = vld [vmem:[#allocation3 + $0x490] sm:$0xff]
    %v424 = vld [vmem:[#allocation3 + $0x498] sm:$0xff]
    %v425 = vld [vmem:[#allocation3 + $0x4a0] sm:$0xff]
    %v426 = vld [vmem:[#allocation3 + $0x4a8] sm:$0xff]
    %v427 = vld [vmem:[#allocation3 + $0x4b0] sm:$0xff]
    %v428 = vld [vmem:[#allocation3 + $0x4b8] sm:$0xff]
    %v429 = vld [vmem:[#allocation3 + $0x4c0] sm:$0xff]
    %v430 = vld [vmem:[#allocation3 + $0x4c8] sm:$0xff]
    %v431 = vld [vmem:[#allocation3 + $0x4d0] sm:$0xff]
    %v432 = vld [vmem:[#allocation3 + $0x4d8] sm:$0xff]
    %v433 = vld [vmem:[#allocation3 + $0x4e0] sm:$0xff]
    %v434 = vld [vmem:[#allocation3 + $0x4e8] sm:$0xff]
    %v435 = vld [vmem:[#allocation3 + $0x4f0] sm:$0xff]
    %v436 = vld [vmem:[#allocation3 + $0x4f8] sm:$0xff]
    %v437 = vld [vmem:[#allocation3 + $0x500] sm:$0xff]
    %v438 = vld [vmem:[#allocation3 + $0x508] sm:$0xff]
    %v439 = vld [vmem:[#allocation3 + $0x510] sm:$0xff]
    %v440 = vld [vmem:[#allocation3 + $0x518] sm:$0xff]
    %v441 = vld [vmem:[#allocation3 + $0x520] sm:$0xff]
    %v442 = vld [vmem:[#allocation3 + $0x528] sm:$0xff]
    %v443 = vld [vmem:[#allocation3 + $0x530] sm:$0xff]
    %v444 = vld [vmem:[#allocation3 + $0x538] sm:$0xff]
    %v445 = vld [vmem:[#allocation3 + $0x540] sm:$0xff]
    %v446 = vld [vmem:[#allocation3 + $0x548] sm:$0xff]
    %v447 = vld [vmem:[#allocation3 + $0x550] sm:$0xff]
    %v448 = vld [vmem:[#allocation3 + $0x558] sm:$0xff]
    %v449 = vld [vmem:[#allocation3 + $0x560] sm:$0xff]
    %v450 = vld [vmem:[#allocation3 + $0x568] sm:$0xff]
    %v451 = vld [vmem:[#allocation3 + $0x570] sm:$0xff]
    %v452 = vld [vmem:[#allocation3 + $0x578] sm:$0xff]
    %v453 = vld [vmem:[#allocation3 + $0x580] sm:$0xff]
    %v454 = vld [vmem:[#allocation3 + $0x588] sm:$0xff]
    %v455 = vld [vmem:[#allocation3 + $0x590] sm:$0xff]
    %v456 = vld [vmem:[#allocation3 + $0x598] sm:$0xff]
    %v457 = vld [vmem:[#allocation3 + $0x5a0] sm:$0xff]
    %v458 = vld [vmem:[#allocation3 + $0x5a8] sm:$0xff]
    %v459 = vld [vmem:[#allocation3 + $0x5b0] sm:$0xff]
    %v460 = vld [vmem:[#allocation3 + $0x5b8] sm:$0xff]
    %v461 = vld [vmem:[#allocation3 + $0x5c0] sm:$0xff]
    %v462 = vld [vmem:[#allocation3 + $0x5c8] sm:$0xff]
    %v463 = vld [vmem:[#allocation3 + $0x5d0] sm:$0xff]
    %v464 = vld [vmem:[#allocation3 + $0x5d8] sm:$0xff]
    %v465 = vld [vmem:[#allocation3 + $0x5e0] sm:$0xff]
    %v466 = vld [vmem:[#allocation3 + $0x5e8] sm:$0xff]
    %v467 = vld [vmem:[#allocation3 + $0x5f0] sm:$0xff]
    %v468 = vld [vmem:[#allocation3 + $0x5f8] sm:$0xff]
    %v469 = vld [vmem:[#allocation3 + $0x600] sm:$0xff]
    %v470 = vld [vmem:[#allocation3 + $0x608] sm:$0xff]
    %v471 = vld [vmem:[#allocation3 + $0x610] sm:$0xff]
    %v472 = vld [vmem:[#allocation3 + $0x618] sm:$0xff]
    %v473 = vld [vmem:[#allocation3 + $0x620] sm:$0xff]
    %v474 = vld [vmem:[#allocation3 + $0x628] sm:$0xff]
    %v475 = vld [vmem:[#allocation3 + $0x630] sm:$0xff]
    %v476 = vld [vmem:[#allocation3 + $0x638] sm:$0xff]
    %v477 = vld [vmem:[#allocation3 + $0x640] sm:$0xff]
    %v478 = vld [vmem:[#allocation3 + $0x648] sm:$0xff]
    %v479 = vld [vmem:[#allocation3 + $0x650] sm:$0xff]
    %v480 = vld [vmem:[#allocation3 + $0x658] sm:$0xff]
    %v481 = vld [vmem:[#allocation3 + $0x660] sm:$0xff]
    %v482 = vld [vmem:[#allocation3 + $0x668] sm:$0xff]
    %v483 = vld [vmem:[#allocation3 + $0x670] sm:$0xff]
    %v484 = vld [vmem:[#allocation3 + $0x678] sm:$0xff]
    %v485 = vld [vmem:[#allocation3 + $0x680] sm:$0xff]
    %v486 = vld [vmem:[#allocation3 + $0x688] sm:$0xff]
    %v487 = vld [vmem:[#allocation3 + $0x690] sm:$0xff]
    %v488 = vld [vmem:[#allocation3 + $0x698] sm:$0xff]
    %v489 = vld [vmem:[#allocation3 + $0x6a0] sm:$0xff]
    %v490 = vld [vmem:[#allocation3 + $0x6a8] sm:$0xff]
    %v491 = vld [vmem:[#allocation3 + $0x6b0] sm:$0xff]
    %v492 = vld [vmem:[#allocation3 + $0x6b8] sm:$0xff]
    %v493 = vld [vmem:[#allocation3 + $0x6c0] sm:$0xff]
    %v494 = vld [vmem:[#allocation3 + $0x6c8] sm:$0xff]
    %v495 = vld [vmem:[#allocation3 + $0x6d0] sm:$0xff]
    %v496 = vld [vmem:[#allocation3 + $0x6d8] sm:$0xff]
    %v497 = vld [vmem:[#allocation3 + $0x6e0] sm:$0xff]
    %v498 = vld [vmem:[#allocation3 + $0x6e8] sm:$0xff]
    %v499 = vld [vmem:[#allocation3 + $0x6f0] sm:$0xff]
    %v500 = vld [vmem:[#allocation3 + $0x6f8] sm:$0xff]
    %v501 = vld [vmem:[#allocation3 + $0x700] sm:$0xff]
    %v502 = vld [vmem:[#allocation3 + $0x708] sm:$0xff]
    %v503 = vld [vmem:[#allocation3 + $0x710] sm:$0xff]
    %v504 = vld [vmem:[#allocation3 + $0x718] sm:$0xff]
    %v505 = vld [vmem:[#allocation3 + $0x720] sm:$0xff]
    %v506 = vld [vmem:[#allocation3 + $0x728] sm:$0xff]
    %v507 = vld [vmem:[#allocation3 + $0x730] sm:$0xff]
    %v508 = vld [vmem:[#allocation3 + $0x738] sm:$0xff]
    %v509 = vld [vmem:[#allocation3 + $0x740] sm:$0xff]
    %v510 = vld [vmem:[#allocation3 + $0x748] sm:$0xff]
    %v511 = vld [vmem:[#allocation3 + $0x750] sm:$0xff]
    %v512 = vld [vmem:[#allocation3 + $0x758] sm:$0xff]
    %v513 = vld [vmem:[#allocation3 + $0x760] sm:$0xff]
    %v514 = vld [vmem:[#allocation3 + $0x768] sm:$0xff]
    %v515 = vld [vmem:[#allocation3 + $0x770] sm:$0xff]
    %v516 = vld [vmem:[#allocation3 + $0x778] sm:$0xff]
    %v517 = vld [vmem:[#allocation3 + $0x780] sm:$0xff]
    %v518 = vld [vmem:[#allocation3 + $0x788] sm:$0xff]
    %v519 = vld [vmem:[#allocation3 + $0x790] sm:$0xff]
    %v520 = vld [vmem:[#allocation3 + $0x798] sm:$0xff]
    %v521 = vld [vmem:[#allocation3 + $0x7a0] sm:$0xff]
    %v522 = vld [vmem:[#allocation3 + $0x7a8] sm:$0xff]
    %v523 = vld [vmem:[#allocation3 + $0x7b0] sm:$0xff]
    %v524 = vld [vmem:[#allocation3 + $0x7b8] sm:$0xff]
    %v525 = vld [vmem:[#allocation3 + $0x7c0] sm:$0xff]
    %v526 = vld [vmem:[#allocation3 + $0x7c8] sm:$0xff]
    %v527 = vld [vmem:[#allocation3 + $0x7d0] sm:$0xff]
    %v528 = vld [vmem:[#allocation3 + $0x7d8] sm:$0xff]
    %v529 = vld [vmem:[#allocation3 + $0x7e0] sm:$0xff]
    %v530 = vld [vmem:[#allocation3 + $0x7e8] sm:$0xff]
    %v531 = vld [vmem:[#allocation3 + $0x7f0] sm:$0xff]
    %v532 = vld [vmem:[#allocation3 + $0x7f8] sm:$0xff]
    %v534 = vperm.slane %v82, 0
    %v535 = vperm.slane %v82, 1
    %v536 = vperm.slane %v82, 2
    %v537 = vperm.slane %v82, 3
    %v538 = vperm.slane %v82, 4
    %v539 = vperm.slane %v82, 5
    %v540 = vperm.slane %v82, 6
    %v541 = vperm.slane %v82, 7
    %v806 = vunpack.c.l.b16 %v277
    %v807 = vunpack.c.h.b16 %v277
    %v808 = vunpack.c.l.b16 %v278
    %v809 = vunpack.c.h.b16 %v278
    %v810 = vunpack.c.l.b16 %v279
    %v811 = vunpack.c.h.b16 %v279
    %v812 = vunpack.c.l.b16 %v280
    %v813 = vunpack.c.h.b16 %v280
    %v814 = vunpack.c.l.b16 %v281
    %v815 = vunpack.c.h.b16 %v281
    %v816 = vunpack.c.l.b16 %v282
    %v817 = vunpack.c.h.b16 %v282
    %v818 = vunpack.c.l.b16 %v283
    %v819 = vunpack.c.h.b16 %v283
    %v820 = vunpack.c.l.b16 %v284
    %v821 = vunpack.c.h.b16 %v284
    %v822 = vunpack.c.l.b16 %v285
    %v823 = vunpack.c.h.b16 %v285
    %v824 = vunpack.c.l.b16 %v286
    %v825 = vunpack.c.h.b16 %v286
    %v826 = vunpack.c.l.b16 %v287
    %v827 = vunpack.c.h.b16 %v287
    %v828 = vunpack.c.l.b16 %v288
    %v829 = vunpack.c.h.b16 %v288
    %v830 = vunpack.c.l.b16 %v289
    %v831 = vunpack.c.h.b16 %v289
    %v832 = vunpack.c.l.b16 %v290
    %v833 = vunpack.c.h.b16 %v290
    %v834 = vunpack.c.l.b16 %v291
    %v835 = vunpack.c.h.b16 %v291
    %v836 = vunpack.c.l.b16 %v292
    %v837 = vunpack.c.h.b16 %v292
    %v838 = vunpack.c.l.b16 %v293
    %v839 = vunpack.c.h.b16 %v293
    %v840 = vunpack.c.l.b16 %v294
    %v841 = vunpack.c.h.b16 %v294
    %v842 = vunpack.c.l.b16 %v295
    %v843 = vunpack.c.h.b16 %v295
    %v844 = vunpack.c.l.b16 %v296
    %v845 = vunpack.c.h.b16 %v296
    %v846 = vunpack.c.l.b16 %v297
    %v847 = vunpack.c.h.b16 %v297
    %v848 = vunpack.c.l.b16 %v298
    %v849 = vunpack.c.h.b16 %v298
    %v850 = vunpack.c.l.b16 %v299
    %v851 = vunpack.c.h.b16 %v299
    %v852 = vunpack.c.l.b16 %v300
    %v853 = vunpack.c.h.b16 %v300
    %v854 = vunpack.c.l.b16 %v301
    %v855 = vunpack.c.h.b16 %v301
    %v856 = vunpack.c.l.b16 %v302
    %v857 = vunpack.c.h.b16 %v302
    %v858 = vunpack.c.l.b16 %v303
    %v859 = vunpack.c.h.b16 %v303
    %v860 = vunpack.c.l.b16 %v304
    %v861 = vunpack.c.h.b16 %v304
    %v862 = vunpack.c.l.b16 %v305
    %v863 = vunpack.c.h.b16 %v305
    %v864 = vunpack.c.l.b16 %v306
    %v865 = vunpack.c.h.b16 %v306
    %v866 = vunpack.c.l.b16 %v307
    %v867 = vunpack.c.h.b16 %v307
    %v868 = vunpack.c.l.b16 %v308
    %v869 = vunpack.c.h.b16 %v308
    %v870 = vunpack.c.l.b16 %v309
    %v871 = vunpack.c.h.b16 %v309
    %v872 = vunpack.c.l.b16 %v310
    %v873 = vunpack.c.h.b16 %v310
    %v874 = vunpack.c.l.b16 %v311
    %v875 = vunpack.c.h.b16 %v311
    %v876 = vunpack.c.l.b16 %v312
    %v877 = vunpack.c.h.b16 %v312
    %v878 = vunpack.c.l.b16 %v313
    %v879 = vunpack.c.h.b16 %v313
    %v880 = vunpack.c.l.b16 %v314
    %v881 = vunpack.c.h.b16 %v314
    %v882 = vunpack.c.l.b16 %v315
    %v883 = vunpack.c.h.b16 %v315
    %v884 = vunpack.c.l.b16 %v316
    %v885 = vunpack.c.h.b16 %v316
    %v886 = vunpack.c.l.b16 %v317
    %v887 = vunpack.c.h.b16 %v317
    %v888 = vunpack.c.l.b16 %v318
    %v889 = vunpack.c.h.b16 %v318
    %v890 = vunpack.c.l.b16 %v319
    %v891 = vunpack.c.h.b16 %v319
    %v892 = vunpack.c.l.b16 %v320
    %v893 = vunpack.c.h.b16 %v320
    %v894 = vunpack.c.l.b16 %v321
    %v895 = vunpack.c.h.b16 %v321
    %v896 = vunpack.c.l.b16 %v322
    %v897 = vunpack.c.h.b16 %v322
    %v898 = vunpack.c.l.b16 %v323
    %v899 = vunpack.c.h.b16 %v323
    %v900 = vunpack.c.l.b16 %v324
    %v901 = vunpack.c.h.b16 %v324
    %v902 = vunpack.c.l.b16 %v325
    %v903 = vunpack.c.h.b16 %v325
    %v904 = vunpack.c.l.b16 %v326
    %v905 = vunpack.c.h.b16 %v326
    %v906 = vunpack.c.l.b16 %v327
    %v907 = vunpack.c.h.b16 %v327
    %v908 = vunpack.c.l.b16 %v328
    %v909 = vunpack.c.h.b16 %v328
    %v910 = vunpack.c.l.b16 %v329
    %v911 = vunpack.c.h.b16 %v329
    %v912 = vunpack.c.l.b16 %v330
    %v913 = vunpack.c.h.b16 %v330
    %v914 = vunpack.c.l.b16 %v331
    %v915 = vunpack.c.h.b16 %v331
    %v916 = vunpack.c.l.b16 %v332
    %v917 = vunpack.c.h.b16 %v332
    %v918 = vunpack.c.l.b16 %v333
    %v919 = vunpack.c.h.b16 %v333
    %v920 = vunpack.c.l.b16 %v334
    %v921 = vunpack.c.h.b16 %v334
    %v922 = vunpack.c.l.b16 %v335
    %v923 = vunpack.c.h.b16 %v335
    %v924 = vunpack.c.l.b16 %v336
    %v925 = vunpack.c.h.b16 %v336
    %v926 = vunpack.c.l.b16 %v337
    %v927 = vunpack.c.h.b16 %v337
    %v928 = vunpack.c.l.b16 %v338
    %v929 = vunpack.c.h.b16 %v338
    %v930 = vunpack.c.l.b16 %v339
    %v931 = vunpack.c.h.b16 %v339
    %v932 = vunpack.c.l.b16 %v340
    %v933 = vunpack.c.h.b16 %v340
    %v934 = vunpack.c.l.b16 %v341
    %v935 = vunpack.c.h.b16 %v341
    %v936 = vunpack.c.l.b16 %v342
    %v937 = vunpack.c.h.b16 %v342
    %v938 = vunpack.c.l.b16 %v343
    %v939 = vunpack.c.h.b16 %v343
    %v940 = vunpack.c.l.b16 %v344
    %v941 = vunpack.c.h.b16 %v344
    %v942 = vunpack.c.l.b16 %v345
    %v943 = vunpack.c.h.b16 %v345
    %v944 = vunpack.c.l.b16 %v346
    %v945 = vunpack.c.h.b16 %v346
    %v946 = vunpack.c.l.b16 %v347
    %v947 = vunpack.c.h.b16 %v347
    %v948 = vunpack.c.l.b16 %v348
    %v949 = vunpack.c.h.b16 %v348
    %v950 = vunpack.c.l.b16 %v349
    %v951 = vunpack.c.h.b16 %v349
    %v952 = vunpack.c.l.b16 %v350
    %v953 = vunpack.c.h.b16 %v350
    %v954 = vunpack.c.l.b16 %v351
    %v955 = vunpack.c.h.b16 %v351
    %v956 = vunpack.c.l.b16 %v352
    %v957 = vunpack.c.h.b16 %v352
    %v958 = vunpack.c.l.b16 %v353
    %v959 = vunpack.c.h.b16 %v353
    %v960 = vunpack.c.l.b16 %v354
    %v961 = vunpack.c.h.b16 %v354
    %v962 = vunpack.c.l.b16 %v355
    %v963 = vunpack.c.h.b16 %v355
    %v964 = vunpack.c.l.b16 %v356
    %v965 = vunpack.c.h.b16 %v356
    %v966 = vunpack.c.l.b16 %v357
    %v967 = vunpack.c.h.b16 %v357
    %v968 = vunpack.c.l.b16 %v358
    %v969 = vunpack.c.h.b16 %v358
    %v970 = vunpack.c.l.b16 %v359
    %v971 = vunpack.c.h.b16 %v359
    %v972 = vunpack.c.l.b16 %v360
    %v973 = vunpack.c.h.b16 %v360
    %v974 = vunpack.c.l.b16 %v361
    %v975 = vunpack.c.h.b16 %v361
    %v976 = vunpack.c.l.b16 %v362
    %v977 = vunpack.c.h.b16 %v362
    %v978 = vunpack.c.l.b16 %v363
    %v979 = vunpack.c.h.b16 %v363
    %v980 = vunpack.c.l.b16 %v364
    %v981 = vunpack.c.h.b16 %v364
    %v982 = vunpack.c.l.b16 %v365
    %v983 = vunpack.c.h.b16 %v365
    %v984 = vunpack.c.l.b16 %v366
    %v985 = vunpack.c.h.b16 %v366
    %v986 = vunpack.c.l.b16 %v367
    %v987 = vunpack.c.h.b16 %v367
    %v988 = vunpack.c.l.b16 %v368
    %v989 = vunpack.c.h.b16 %v368
    %v990 = vunpack.c.l.b16 %v369
    %v991 = vunpack.c.h.b16 %v369
    %v992 = vunpack.c.l.b16 %v370
    %v993 = vunpack.c.h.b16 %v370
    %v994 = vunpack.c.l.b16 %v371
    %v995 = vunpack.c.h.b16 %v371
    %v996 = vunpack.c.l.b16 %v372
    %v997 = vunpack.c.h.b16 %v372
    %v998 = vunpack.c.l.b16 %v373
    %v999 = vunpack.c.h.b16 %v373
    %v1000 = vunpack.c.l.b16 %v374
    %v1001 = vunpack.c.h.b16 %v374
    %v1002 = vunpack.c.l.b16 %v375
    %v1003 = vunpack.c.h.b16 %v375
    %v1004 = vunpack.c.l.b16 %v376
    %v1005 = vunpack.c.h.b16 %v376
    %v1006 = vunpack.c.l.b16 %v377
    %v1007 = vunpack.c.h.b16 %v377
    %v1008 = vunpack.c.l.b16 %v378
    %v1009 = vunpack.c.h.b16 %v378
    %v1010 = vunpack.c.l.b16 %v379
    %v1011 = vunpack.c.h.b16 %v379
    %v1012 = vunpack.c.l.b16 %v380
    %v1013 = vunpack.c.h.b16 %v380
    %v1014 = vunpack.c.l.b16 %v381
    %v1015 = vunpack.c.h.b16 %v381
    %v1016 = vunpack.c.l.b16 %v382
    %v1017 = vunpack.c.h.b16 %v382
    %v1018 = vunpack.c.l.b16 %v383
    %v1019 = vunpack.c.h.b16 %v383
    %v1020 = vunpack.c.l.b16 %v384
    %v1021 = vunpack.c.h.b16 %v384
    %v1022 = vunpack.c.l.b16 %v385
    %v1023 = vunpack.c.h.b16 %v385
    %v1024 = vunpack.c.l.b16 %v386
    %v1025 = vunpack.c.h.b16 %v386
    %v1026 = vunpack.c.l.b16 %v387
    %v1027 = vunpack.c.h.b16 %v387
    %v1028 = vunpack.c.l.b16 %v388
    %v1029 = vunpack.c.h.b16 %v388
    %v1030 = vunpack.c.l.b16 %v389
    %v1031 = vunpack.c.h.b16 %v389
    %v1032 = vunpack.c.l.b16 %v390
    %v1033 = vunpack.c.h.b16 %v390
    %v1034 = vunpack.c.l.b16 %v391
    %v1035 = vunpack.c.h.b16 %v391
    %v1036 = vunpack.c.l.b16 %v392
    %v1037 = vunpack.c.h.b16 %v392
    %v1038 = vunpack.c.l.b16 %v393
    %v1039 = vunpack.c.h.b16 %v393
    %v1040 = vunpack.c.l.b16 %v394
    %v1041 = vunpack.c.h.b16 %v394
    %v1042 = vunpack.c.l.b16 %v395
    %v1043 = vunpack.c.h.b16 %v395
    %v1044 = vunpack.c.l.b16 %v396
    %v1045 = vunpack.c.h.b16 %v396
    %v1046 = vunpack.c.l.b16 %v397
    %v1047 = vunpack.c.h.b16 %v397
    %v1048 = vunpack.c.l.b16 %v398
    %v1049 = vunpack.c.h.b16 %v398
    %v1050 = vunpack.c.l.b16 %v399
    %v1051 = vunpack.c.h.b16 %v399
    %v1052 = vunpack.c.l.b16 %v400
    %v1053 = vunpack.c.h.b16 %v400
    %v1054 = vunpack.c.l.b16 %v401
    %v1055 = vunpack.c.h.b16 %v401
    %v1056 = vunpack.c.l.b16 %v402
    %v1057 = vunpack.c.h.b16 %v402
    %v1058 = vunpack.c.l.b16 %v403
    %v1059 = vunpack.c.h.b16 %v403
    %v1060 = vunpack.c.l.b16 %v404
    %v1061 = vunpack.c.h.b16 %v404
    %v1062 = vunpack.c.l.b16 %v405
    %v1063 = vunpack.c.h.b16 %v405
    %v1064 = vunpack.c.l.b16 %v406
    %v1065 = vunpack.c.h.b16 %v406
    %v1066 = vunpack.c.l.b16 %v407
    %v1067 = vunpack.c.h.b16 %v407
    %v1068 = vunpack.c.l.b16 %v408
    %v1069 = vunpack.c.h.b16 %v408
    %v1070 = vunpack.c.l.b16 %v409
    %v1071 = vunpack.c.h.b16 %v409
    %v1072 = vunpack.c.l.b16 %v410
    %v1073 = vunpack.c.h.b16 %v410
    %v1074 = vunpack.c.l.b16 %v411
    %v1075 = vunpack.c.h.b16 %v411
    %v1076 = vunpack.c.l.b16 %v412
    %v1077 = vunpack.c.h.b16 %v412
    %v1078 = vunpack.c.l.b16 %v413
    %v1079 = vunpack.c.h.b16 %v413
    %v1080 = vunpack.c.l.b16 %v414
    %v1081 = vunpack.c.h.b16 %v414
    %v1082 = vunpack.c.l.b16 %v415
    %v1083 = vunpack.c.h.b16 %v415
    %v1084 = vunpack.c.l.b16 %v416
    %v1085 = vunpack.c.h.b16 %v416
    %v1086 = vunpack.c.l.b16 %v417
    %v1087 = vunpack.c.h.b16 %v417
    %v1088 = vunpack.c.l.b16 %v418
    %v1089 = vunpack.c.h.b16 %v418
    %v1090 = vunpack.c.l.b16 %v419
    %v1091 = vunpack.c.h.b16 %v419
    %v1092 = vunpack.c.l.b16 %v420
    %v1093 = vunpack.c.h.b16 %v420
    %v1094 = vunpack.c.l.b16 %v421
    %v1095 = vunpack.c.h.b16 %v421
    %v1096 = vunpack.c.l.b16 %v422
    %v1097 = vunpack.c.h.b16 %v422
    %v1098 = vunpack.c.l.b16 %v423
    %v1099 = vunpack.c.h.b16 %v423
    %v1100 = vunpack.c.l.b16 %v424
    %v1101 = vunpack.c.h.b16 %v424
    %v1102 = vunpack.c.l.b16 %v425
    %v1103 = vunpack.c.h.b16 %v425
    %v1104 = vunpack.c.l.b16 %v426
    %v1105 = vunpack.c.h.b16 %v426
    %v1106 = vunpack.c.l.b16 %v427
    %v1107 = vunpack.c.h.b16 %v427
    %v1108 = vunpack.c.l.b16 %v428
    %v1109 = vunpack.c.h.b16 %v428
    %v1110 = vunpack.c.l.b16 %v429
    %v1111 = vunpack.c.h.b16 %v429
    %v1112 = vunpack.c.l.b16 %v430
    %v1113 = vunpack.c.h.b16 %v430
    %v1114 = vunpack.c.l.b16 %v431
    %v1115 = vunpack.c.h.b16 %v431
    %v1116 = vunpack.c.l.b16 %v432
    %v1117 = vunpack.c.h.b16 %v432
    %v1118 = vunpack.c.l.b16 %v433
    %v1119 = vunpack.c.h.b16 %v433
    %v1120 = vunpack.c.l.b16 %v434
    %v1121 = vunpack.c.h.b16 %v434
    %v1122 = vunpack.c.l.b16 %v435
    %v1123 = vunpack.c.h.b16 %v435
    %v1124 = vunpack.c.l.b16 %v436
    %v1125 = vunpack.c.h.b16 %v436
    %v1126 = vunpack.c.l.b16 %v437
    %v1127 = vunpack.c.h.b16 %v437
    %v1128 = vunpack.c.l.b16 %v438
    %v1129 = vunpack.c.h.b16 %v438
    %v1130 = vunpack.c.l.b16 %v439
    %v1131 = vunpack.c.h.b16 %v439
    %v1132 = vunpack.c.l.b16 %v440
    %v1133 = vunpack.c.h.b16 %v440
    %v1134 = vunpack.c.l.b16 %v441
    %v1135 = vunpack.c.h.b16 %v441
    %v1136 = vunpack.c.l.b16 %v442
    %v1137 = vunpack.c.h.b16 %v442
    %v1138 = vunpack.c.l.b16 %v443
    %v1139 = vunpack.c.h.b16 %v443
    %v1140 = vunpack.c.l.b16 %v444
    %v1141 = vunpack.c.h.b16 %v444
    %v1142 = vunpack.c.l.b16 %v445
    %v1143 = vunpack.c.h.b16 %v445
    %v1144 = vunpack.c.l.b16 %v446
    %v1145 = vunpack.c.h.b16 %v446
    %v1146 = vunpack.c.l.b16 %v447
    %v1147 = vunpack.c.h.b16 %v447
    %v1148 = vunpack.c.l.b16 %v448
    %v1149 = vunpack.c.h.b16 %v448
    %v1150 = vunpack.c.l.b16 %v449
    %v1151 = vunpack.c.h.b16 %v449
    %v1152 = vunpack.c.l.b16 %v450
    %v1153 = vunpack.c.h.b16 %v450
    %v1154 = vunpack.c.l.b16 %v451
    %v1155 = vunpack.c.h.b16 %v451
    %v1156 = vunpack.c.l.b16 %v452
    %v1157 = vunpack.c.h.b16 %v452
    %v1158 = vunpack.c.l.b16 %v453
    %v1159 = vunpack.c.h.b16 %v453
    %v1160 = vunpack.c.l.b16 %v454
    %v1161 = vunpack.c.h.b16 %v454
    %v1162 = vunpack.c.l.b16 %v455
    %v1163 = vunpack.c.h.b16 %v455
    %v1164 = vunpack.c.l.b16 %v456
    %v1165 = vunpack.c.h.b16 %v456
    %v1166 = vunpack.c.l.b16 %v457
    %v1167 = vunpack.c.h.b16 %v457
    %v1168 = vunpack.c.l.b16 %v458
    %v1169 = vunpack.c.h.b16 %v458
    %v1170 = vunpack.c.l.b16 %v459
    %v1171 = vunpack.c.h.b16 %v459
    %v1172 = vunpack.c.l.b16 %v460
    %v1173 = vunpack.c.h.b16 %v460
    %v1174 = vunpack.c.l.b16 %v461
    %v1175 = vunpack.c.h.b16 %v461
    %v1176 = vunpack.c.l.b16 %v462
    %v1177 = vunpack.c.h.b16 %v462
    %v1178 = vunpack.c.l.b16 %v463
    %v1179 = vunpack.c.h.b16 %v463
    %v1180 = vunpack.c.l.b16 %v464
    %v1181 = vunpack.c.h.b16 %v464
    %v1182 = vunpack.c.l.b16 %v465
    %v1183 = vunpack.c.h.b16 %v465
    %v1184 = vunpack.c.l.b16 %v466
    %v1185 = vunpack.c.h.b16 %v466
    %v1186 = vunpack.c.l.b16 %v467
    %v1187 = vunpack.c.h.b16 %v467
    %v1188 = vunpack.c.l.b16 %v468
    %v1189 = vunpack.c.h.b16 %v468
    %v1190 = vunpack.c.l.b16 %v469
    %v1191 = vunpack.c.h.b16 %v469
    %v1192 = vunpack.c.l.b16 %v470
    %v1193 = vunpack.c.h.b16 %v470
    %v1194 = vunpack.c.l.b16 %v471
    %v1195 = vunpack.c.h.b16 %v471
    %v1196 = vunpack.c.l.b16 %v472
    %v1197 = vunpack.c.h.b16 %v472
    %v1198 = vunpack.c.l.b16 %v473
    %v1199 = vunpack.c.h.b16 %v473
    %v1200 = vunpack.c.l.b16 %v474
    %v1201 = vunpack.c.h.b16 %v474
    %v1202 = vunpack.c.l.b16 %v475
    %v1203 = vunpack.c.h.b16 %v475
    %v1204 = vunpack.c.l.b16 %v476
    %v1205 = vunpack.c.h.b16 %v476
    %v1206 = vunpack.c.l.b16 %v477
    %v1207 = vunpack.c.h.b16 %v477
    %v1208 = vunpack.c.l.b16 %v478
    %v1209 = vunpack.c.h.b16 %v478
    %v1210 = vunpack.c.l.b16 %v479
    %v1211 = vunpack.c.h.b16 %v479
    %v1212 = vunpack.c.l.b16 %v480
    %v1213 = vunpack.c.h.b16 %v480
    %v1214 = vunpack.c.l.b16 %v481
    %v1215 = vunpack.c.h.b16 %v481
    %v1216 = vunpack.c.l.b16 %v482
    %v1217 = vunpack.c.h.b16 %v482
    %v1218 = vunpack.c.l.b16 %v483
    %v1219 = vunpack.c.h.b16 %v483
    %v1220 = vunpack.c.l.b16 %v484
    %v1221 = vunpack.c.h.b16 %v484
    %v1222 = vunpack.c.l.b16 %v485
    %v1223 = vunpack.c.h.b16 %v485
    %v1224 = vunpack.c.l.b16 %v486
    %v1225 = vunpack.c.h.b16 %v486
    %v1226 = vunpack.c.l.b16 %v487
    %v1227 = vunpack.c.h.b16 %v487
    %v1228 = vunpack.c.l.b16 %v488
    %v1229 = vunpack.c.h.b16 %v488
    %v1230 = vunpack.c.l.b16 %v489
    %v1231 = vunpack.c.h.b16 %v489
    %v1232 = vunpack.c.l.b16 %v490
    %v1233 = vunpack.c.h.b16 %v490
    %v1234 = vunpack.c.l.b16 %v491
    %v1235 = vunpack.c.h.b16 %v491
    %v1236 = vunpack.c.l.b16 %v492
    %v1237 = vunpack.c.h.b16 %v492
    %v1238 = vunpack.c.l.b16 %v493
    %v1239 = vunpack.c.h.b16 %v493
    %v1240 = vunpack.c.l.b16 %v494
    %v1241 = vunpack.c.h.b16 %v494
    %v1242 = vunpack.c.l.b16 %v495
    %v1243 = vunpack.c.h.b16 %v495
    %v1244 = vunpack.c.l.b16 %v496
    %v1245 = vunpack.c.h.b16 %v496
    %v1246 = vunpack.c.l.b16 %v497
    %v1247 = vunpack.c.h.b16 %v497
    %v1248 = vunpack.c.l.b16 %v498
    %v1249 = vunpack.c.h.b16 %v498
    %v1250 = vunpack.c.l.b16 %v499
    %v1251 = vunpack.c.h.b16 %v499
    %v1252 = vunpack.c.l.b16 %v500
    %v1253 = vunpack.c.h.b16 %v500
    %v1254 = vunpack.c.l.b16 %v501
    %v1255 = vunpack.c.h.b16 %v501
    %v1256 = vunpack.c.l.b16 %v502
    %v1257 = vunpack.c.h.b16 %v502
    %v1258 = vunpack.c.l.b16 %v503
    %v1259 = vunpack.c.h.b16 %v503
    %v1260 = vunpack.c.l.b16 %v504
    %v1261 = vunpack.c.h.b16 %v504
    %v1262 = vunpack.c.l.b16 %v505
    %v1263 = vunpack.c.h.b16 %v505
    %v1264 = vunpack.c.l.b16 %v506
    %v1265 = vunpack.c.h.b16 %v506
    %v1266 = vunpack.c.l.b16 %v507
    %v1267 = vunpack.c.h.b16 %v507
    %v1268 = vunpack.c.l.b16 %v508
    %v1269 = vunpack.c.h.b16 %v508
    %v1270 = vunpack.c.l.b16 %v509
    %v1271 = vunpack.c.h.b16 %v509
    %v1272 = vunpack.c.l.b16 %v510
    %v1273 = vunpack.c.h.b16 %v510
    %v1274 = vunpack.c.l.b16 %v511
    %v1275 = vunpack.c.h.b16 %v511
    %v1276 = vunpack.c.l.b16 %v512
    %v1277 = vunpack.c.h.b16 %v512
    %v1278 = vunpack.c.l.b16 %v513
    %v1279 = vunpack.c.h.b16 %v513
    %v1280 = vunpack.c.l.b16 %v514
    %v1281 = vunpack.c.h.b16 %v514
    %v1282 = vunpack.c.l.b16 %v515
    %v1283 = vunpack.c.h.b16 %v515
    %v1284 = vunpack.c.l.b16 %v516
    %v1285 = vunpack.c.h.b16 %v516
    %v1286 = vunpack.c.l.b16 %v517
    %v1287 = vunpack.c.h.b16 %v517
    %v1288 = vunpack.c.l.b16 %v518
    %v1289 = vunpack.c.h.b16 %v518
    %v1290 = vunpack.c.l.b16 %v519
    %v1291 = vunpack.c.h.b16 %v519
    %v1292 = vunpack.c.l.b16 %v520
    %v1293 = vunpack.c.h.b16 %v520
    %v1294 = vunpack.c.l.b16 %v521
    %v1295 = vunpack.c.h.b16 %v521
    %v1296 = vunpack.c.l.b16 %v522
    %v1297 = vunpack.c.h.b16 %v522
    %v1298 = vunpack.c.l.b16 %v523
    %v1299 = vunpack.c.h.b16 %v523
    %v1300 = vunpack.c.l.b16 %v524
    %v1301 = vunpack.c.h.b16 %v524
    %v1302 = vunpack.c.l.b16 %v525
    %v1303 = vunpack.c.h.b16 %v525
    %v1304 = vunpack.c.l.b16 %v526
    %v1305 = vunpack.c.h.b16 %v526
    %v1306 = vunpack.c.l.b16 %v527
    %v1307 = vunpack.c.h.b16 %v527
    %v1308 = vunpack.c.l.b16 %v528
    %v1309 = vunpack.c.h.b16 %v528
    %v1310 = vunpack.c.l.b16 %v529
    %v1311 = vunpack.c.h.b16 %v529
    %v1312 = vunpack.c.l.b16 %v530
    %v1313 = vunpack.c.h.b16 %v530
    %v1314 = vunpack.c.l.b16 %v531
    %v1315 = vunpack.c.h.b16 %v531
    %v1316 = vunpack.c.l.b16 %v532
    %v1317 = vunpack.c.h.b16 %v532
    %v1318 = vpack.c.b16 %v814, %v806
    %v1319 = vpack.c.b16 %v815, %v807
    %v1320 = vpack.c.b16 %v816, %v808
    %v1321 = vpack.c.b16 %v817, %v809
    %v1322 = vpack.c.b16 %v818, %v810
    %v1323 = vpack.c.b16 %v819, %v811
    %v1324 = vpack.c.b16 %v820, %v812
    %v1325 = vpack.c.b16 %v821, %v813
    %v1326 = vpack.c.b16 %v830, %v822
    %v1327 = vpack.c.b16 %v831, %v823
    %v1328 = vpack.c.b16 %v832, %v824
    %v1329 = vpack.c.b16 %v833, %v825
    %v1330 = vpack.c.b16 %v834, %v826
    %v1331 = vpack.c.b16 %v835, %v827
    %v1332 = vpack.c.b16 %v836, %v828
    %v1333 = vpack.c.b16 %v837, %v829
    %v1334 = vpack.c.b16 %v846, %v838
    %v1335 = vpack.c.b16 %v847, %v839
    %v1336 = vpack.c.b16 %v848, %v840
    %v1337 = vpack.c.b16 %v849, %v841
    %v1338 = vpack.c.b16 %v850, %v842
    %v1339 = vpack.c.b16 %v851, %v843
    %v1340 = vpack.c.b16 %v852, %v844
    %v1341 = vpack.c.b16 %v853, %v845
    %v1342 = vpack.c.b16 %v862, %v854
    %v1343 = vpack.c.b16 %v863, %v855
    %v1344 = vpack.c.b16 %v864, %v856
    %v1345 = vpack.c.b16 %v865, %v857
    %v1346 = vpack.c.b16 %v866, %v858
    %v1347 = vpack.c.b16 %v867, %v859
    %v1348 = vpack.c.b16 %v868, %v860
    %v1349 = vpack.c.b16 %v869, %v861
    %v1350 = vpack.c.b16 %v878, %v870
    %v1351 = vpack.c.b16 %v879, %v871
    %v1352 = vpack.c.b16 %v880, %v872
    %v1353 = vpack.c.b16 %v881, %v873
    %v1354 = vpack.c.b16 %v882, %v874
    %v1355 = vpack.c.b16 %v883, %v875
    %v1356 = vpack.c.b16 %v884, %v876
    %v1357 = vpack.c.b16 %v885, %v877
    %v1358 = vpack.c.b16 %v894, %v886
    %v1359 = vpack.c.b16 %v895, %v887
    %v1360 = vpack.c.b16 %v896, %v888
    %v1361 = vpack.c.b16 %v897, %v889
    %v1362 = vpack.c.b16 %v898, %v890
    %v1363 = vpack.c.b16 %v899, %v891
    %v1364 = vpack.c.b16 %v900, %v892
    %v1365 = vpack.c.b16 %v901, %v893
    %v1366 = vpack.c.b16 %v910, %v902
    %v1367 = vpack.c.b16 %v911, %v903
    %v1368 = vpack.c.b16 %v912, %v904
    %v1369 = vpack.c.b16 %v913, %v905
    %v1370 = vpack.c.b16 %v914, %v906
    %v1371 = vpack.c.b16 %v915, %v907
    %v1372 = vpack.c.b16 %v916, %v908
    %v1373 = vpack.c.b16 %v917, %v909
    %v1374 = vpack.c.b16 %v926, %v918
    %v1375 = vpack.c.b16 %v927, %v919
    %v1376 = vpack.c.b16 %v928, %v920
    %v1377 = vpack.c.b16 %v929, %v921
    %v1378 = vpack.c.b16 %v930, %v922
    %v1379 = vpack.c.b16 %v931, %v923
    %v1380 = vpack.c.b16 %v932, %v924
    %v1381 = vpack.c.b16 %v933, %v925
    %v1382 = vpack.c.b16 %v942, %v934
    %v1383 = vpack.c.b16 %v943, %v935
    %v1384 = vpack.c.b16 %v944, %v936
    %v1385 = vpack.c.b16 %v945, %v937
    %v1386 = vpack.c.b16 %v946, %v938
    %v1387 = vpack.c.b16 %v947, %v939
    %v1388 = vpack.c.b16 %v948, %v940
    %v1389 = vpack.c.b16 %v949, %v941
    %v1390 = vpack.c.b16 %v958, %v950
    %v1391 = vpack.c.b16 %v959, %v951
    %v1392 = vpack.c.b16 %v960, %v952
    %v1393 = vpack.c.b16 %v961, %v953
    %v1394 = vpack.c.b16 %v962, %v954
    %v1395 = vpack.c.b16 %v963, %v955
    %v1396 = vpack.c.b16 %v964, %v956
    %v1397 = vpack.c.b16 %v965, %v957
    %v1398 = vpack.c.b16 %v974, %v966
    %v1399 = vpack.c.b16 %v975, %v967
    %v1400 = vpack.c.b16 %v976, %v968
    %v1401 = vpack.c.b16 %v977, %v969
    %v1402 = vpack.c.b16 %v978, %v970
    %v1403 = vpack.c.b16 %v979, %v971
    %v1404 = vpack.c.b16 %v980, %v972
    %v1405 = vpack.c.b16 %v981, %v973
    %v1406 = vpack.c.b16 %v990, %v982
    %v1407 = vpack.c.b16 %v991, %v983
    %v1408 = vpack.c.b16 %v992, %v984
    %v1409 = vpack.c.b16 %v993, %v985
    %v1410 = vpack.c.b16 %v994, %v986
    %v1411 = vpack.c.b16 %v995, %v987
    %v1412 = vpack.c.b16 %v996, %v988
    %v1413 = vpack.c.b16 %v997, %v989
    %v1414 = vpack.c.b16 %v1006, %v998
    %v1415 = vpack.c.b16 %v1007, %v999
    %v1416 = vpack.c.b16 %v1008, %v1000
    %v1417 = vpack.c.b16 %v1009, %v1001
    %v1418 = vpack.c.b16 %v1010, %v1002
    %v1419 = vpack.c.b16 %v1011, %v1003
    %v1420 = vpack.c.b16 %v1012, %v1004
    %v1421 = vpack.c.b16 %v1013, %v1005
    %v1422 = vpack.c.b16 %v1022, %v1014
    %v1423 = vpack.c.b16 %v1023, %v1015
    %v1424 = vpack.c.b16 %v1024, %v1016
    %v1425 = vpack.c.b16 %v1025, %v1017
    %v1426 = vpack.c.b16 %v1026, %v1018
    %v1427 = vpack.c.b16 %v1027, %v1019
    %v1428 = vpack.c.b16 %v1028, %v1020
    %v1429 = vpack.c.b16 %v1029, %v1021
    %v1430 = vpack.c.b16 %v1038, %v1030
    %v1431 = vpack.c.b16 %v1039, %v1031
    %v1432 = vpack.c.b16 %v1040, %v1032
    %v1433 = vpack.c.b16 %v1041, %v1033
    %v1434 = vpack.c.b16 %v1042, %v1034
    %v1435 = vpack.c.b16 %v1043, %v1035
    %v1436 = vpack.c.b16 %v1044, %v1036
    %v1437 = vpack.c.b16 %v1045, %v1037
    %v1438 = vpack.c.b16 %v1054, %v1046
    %v1439 = vpack.c.b16 %v1055, %v1047
    %v1440 = vpack.c.b16 %v1056, %v1048
    %v1441 = vpack.c.b16 %v1057, %v1049
    %v1442 = vpack.c.b16 %v1058, %v1050
    %v1443 = vpack.c.b16 %v1059, %v1051
    %v1444 = vpack.c.b16 %v1060, %v1052
    %v1445 = vpack.c.b16 %v1061, %v1053
    %v1446 = vpack.c.b16 %v1070, %v1062
    %v1447 = vpack.c.b16 %v1071, %v1063
    %v1448 = vpack.c.b16 %v1072, %v1064
    %v1449 = vpack.c.b16 %v1073, %v1065
    %v1450 = vpack.c.b16 %v1074, %v1066
    %v1451 = vpack.c.b16 %v1075, %v1067
    %v1452 = vpack.c.b16 %v1076, %v1068
    %v1453 = vpack.c.b16 %v1077, %v1069
    %v1454 = vpack.c.b16 %v1086, %v1078
    %v1455 = vpack.c.b16 %v1087, %v1079
    %v1456 = vpack.c.b16 %v1088, %v1080
    %v1457 = vpack.c.b16 %v1089, %v1081
    %v1458 = vpack.c.b16 %v1090, %v1082
    %v1459 = vpack.c.b16 %v1091, %v1083
    %v1460 = vpack.c.b16 %v1092, %v1084
    %v1461 = vpack.c.b16 %v1093, %v1085
    %v1462 = vpack.c.b16 %v1102, %v1094
    %v1463 = vpack.c.b16 %v1103, %v1095
    %v1464 = vpack.c.b16 %v1104, %v1096
    %v1465 = vpack.c.b16 %v1105, %v1097
    %v1466 = vpack.c.b16 %v1106, %v1098
    %v1467 = vpack.c.b16 %v1107, %v1099
    %v1468 = vpack.c.b16 %v1108, %v1100
    %v1469 = vpack.c.b16 %v1109, %v1101
    %v1470 = vpack.c.b16 %v1118, %v1110
    %v1471 = vpack.c.b16 %v1119, %v1111
    %v1472 = vpack.c.b16 %v1120, %v1112
    %v1473 = vpack.c.b16 %v1121, %v1113
    %v1474 = vpack.c.b16 %v1122, %v1114
    %v1475 = vpack.c.b16 %v1123, %v1115
    %v1476 = vpack.c.b16 %v1124, %v1116
    %v1477 = vpack.c.b16 %v1125, %v1117
    %v1478 = vpack.c.b16 %v1134, %v1126
    %v1479 = vpack.c.b16 %v1135, %v1127
    %v1480 = vpack.c.b16 %v1136, %v1128
    %v1481 = vpack.c.b16 %v1137, %v1129
    %v1482 = vpack.c.b16 %v1138, %v1130
    %v1483 = vpack.c.b16 %v1139, %v1131
    %v1484 = vpack.c.b16 %v1140, %v1132
    %v1485 = vpack.c.b16 %v1141, %v1133
    %v1486 = vpack.c.b16 %v1150, %v1142
    %v1487 = vpack.c.b16 %v1151, %v1143
    %v1488 = vpack.c.b16 %v1152, %v1144
    %v1489 = vpack.c.b16 %v1153, %v1145
    %v1490 = vpack.c.b16 %v1154, %v1146
    %v1491 = vpack.c.b16 %v1155, %v1147
    %v1492 = vpack.c.b16 %v1156, %v1148
    %v1493 = vpack.c.b16 %v1157, %v1149
    %v1494 = vpack.c.b16 %v1166, %v1158
    %v1495 = vpack.c.b16 %v1167, %v1159
    %v1496 = vpack.c.b16 %v1168, %v1160
    %v1497 = vpack.c.b16 %v1169, %v1161
    %v1498 = vpack.c.b16 %v1170, %v1162
    %v1499 = vpack.c.b16 %v1171, %v1163
    %v1500 = vpack.c.b16 %v1172, %v1164
    %v1501 = vpack.c.b16 %v1173, %v1165
    %v1502 = vpack.c.b16 %v1182, %v1174
    %v1503 = vpack.c.b16 %v1183, %v1175
    %v1504 = vpack.c.b16 %v1184, %v1176
    %v1505 = vpack.c.b16 %v1185, %v1177
    %v1506 = vpack.c.b16 %v1186, %v1178
    %v1507 = vpack.c.b16 %v1187, %v1179
    %v1508 = vpack.c.b16 %v1188, %v1180
    %v1509 = vpack.c.b16 %v1189, %v1181
    %v1510 = vpack.c.b16 %v1198, %v1190
    %v1511 = vpack.c.b16 %v1199, %v1191
    %v1512 = vpack.c.b16 %v1200, %v1192
    %v1513 = vpack.c.b16 %v1201, %v1193
    %v1514 = vpack.c.b16 %v1202, %v1194
    %v1515 = vpack.c.b16 %v1203, %v1195
    %v1516 = vpack.c.b16 %v1204, %v1196
    %v1517 = vpack.c.b16 %v1205, %v1197
    %v1518 = vpack.c.b16 %v1214, %v1206
    %v1519 = vpack.c.b16 %v1215, %v1207
    %v1520 = vpack.c.b16 %v1216, %v1208
    %v1521 = vpack.c.b16 %v1217, %v1209
    %v1522 = vpack.c.b16 %v1218, %v1210
    %v1523 = vpack.c.b16 %v1219, %v1211
    %v1524 = vpack.c.b16 %v1220, %v1212
    %v1525 = vpack.c.b16 %v1221, %v1213
    %v1526 = vpack.c.b16 %v1230, %v1222
    %v1527 = vpack.c.b16 %v1231, %v1223
    %v1528 = vpack.c.b16 %v1232, %v1224
    %v1529 = vpack.c.b16 %v1233, %v1225
    %v1530 = vpack.c.b16 %v1234, %v1226
    %v1531 = vpack.c.b16 %v1235, %v1227
    %v1532 = vpack.c.b16 %v1236, %v1228
    %v1533 = vpack.c.b16 %v1237, %v1229
    %v1534 = vpack.c.b16 %v1246, %v1238
    %v1535 = vpack.c.b16 %v1247, %v1239
    %v1536 = vpack.c.b16 %v1248, %v1240
    %v1537 = vpack.c.b16 %v1249, %v1241
    %v1538 = vpack.c.b16 %v1250, %v1242
    %v1539 = vpack.c.b16 %v1251, %v1243
    %v1540 = vpack.c.b16 %v1252, %v1244
    %v1541 = vpack.c.b16 %v1253, %v1245
    %v1542 = vpack.c.b16 %v1262, %v1254
    %v1543 = vpack.c.b16 %v1263, %v1255
    %v1544 = vpack.c.b16 %v1264, %v1256
    %v1545 = vpack.c.b16 %v1265, %v1257
    %v1546 = vpack.c.b16 %v1266, %v1258
    %v1547 = vpack.c.b16 %v1267, %v1259
    %v1548 = vpack.c.b16 %v1268, %v1260
    %v1549 = vpack.c.b16 %v1269, %v1261
    %v1550 = vpack.c.b16 %v1278, %v1270
    %v1551 = vpack.c.b16 %v1279, %v1271
    %v1552 = vpack.c.b16 %v1280, %v1272
    %v1553 = vpack.c.b16 %v1281, %v1273
    %v1554 = vpack.c.b16 %v1282, %v1274
    %v1555 = vpack.c.b16 %v1283, %v1275
    %v1556 = vpack.c.b16 %v1284, %v1276
    %v1557 = vpack.c.b16 %v1285, %v1277
    %v1558 = vpack.c.b16 %v1294, %v1286
    %v1559 = vpack.c.b16 %v1295, %v1287
    %v1560 = vpack.c.b16 %v1296, %v1288
    %v1561 = vpack.c.b16 %v1297, %v1289
    %v1562 = vpack.c.b16 %v1298, %v1290
    %v1563 = vpack.c.b16 %v1299, %v1291
    %v1564 = vpack.c.b16 %v1300, %v1292
    %v1565 = vpack.c.b16 %v1301, %v1293
    %v1566 = vpack.c.b16 %v1310, %v1302
    %v1567 = vpack.c.b16 %v1311, %v1303
    %v1568 = vpack.c.b16 %v1312, %v1304
    %v1569 = vpack.c.b16 %v1313, %v1305
    %v1570 = vpack.c.b16 %v1314, %v1306
    %v1571 = vpack.c.b16 %v1315, %v1307
    %v1572 = vpack.c.b16 %v1316, %v1308
    %v1573 = vpack.c.b16 %v1317, %v1309
    %1830 = vmatpush.bf16.msra.mxu0 %v1374
    %1831 = vmatpush.bf16.msra.mxu0 %v1366
    %1832 = vmatpush.bf16.msra.mxu0 %v1358
    %1833 = vmatpush.bf16.msra.mxu0 %v1350
    %1834 = vmatpush.bf16.msra.mxu0 %v1342
    %1835 = vmatpush.bf16.msra.mxu0 %v1334
    %1836 = vmatpush.bf16.msra.mxu0 %v1326
    %1837 = vmatpush.bf16.msra.mxu0 %v1318
    %1838 = vmatmul.bf16.gmra.mxu0 %v273
    %v1839 = vpop.f32.mrf.mxu0
    %v1840 = vadd.f32 %v534, %v1839
    %v1841 = vpop.f32.mrf.mxu0
    %1842 = vdwg.mxu0
    %1843 = vmatpush.bf16.msra.mxu0 %v1438
    %1844 = vmatpush.bf16.msra.mxu0 %v1430
    %1845 = vmatpush.bf16.msra.mxu0 %v1422
    %1846 = vmatpush.bf16.msra.mxu0 %v1414
    %1847 = vmatpush.bf16.msra.mxu0 %v1406
    %1848 = vmatpush.bf16.msra.mxu0 %v1398
    %1849 = vmatpush.bf16.msra.mxu0 %v1390
    %1850 = vmatpush.bf16.msra.mxu0 %v1382
    %1851 = vmatmul.bf16.gmra.mxu0 %v274
    %v1852 = vpop.f32.mrf.mxu0
    %v1853 = vadd.f32 %v1840, %v1852
    %v1854 = vpop.f32.mrf.mxu0
    %1855 = vdwg.mxu0
    %1856 = vmatpush.bf16.msra.mxu0 %v1502
    %1857 = vmatpush.bf16.msra.mxu0 %v1494
    %1858 = vmatpush.bf16.msra.mxu0 %v1486
    %1859 = vmatpush.bf16.msra.mxu0 %v1478
    %1860 = vmatpush.bf16.msra.mxu0 %v1470
    %1861 = vmatpush.bf16.msra.mxu0 %v1462
    %1862 = vmatpush.bf16.msra.mxu0 %v1454
    %1863 = vmatpush.bf16.msra.mxu0 %v1446
    %1864 = vmatmul.bf16.gmra.mxu0 0
    %v1865 = vpop.f32.mrf.mxu0
    %v1866 = vadd.f32 %v1853, %v1865
    %v1867 = vpop.f32.mrf.mxu0
    %1868 = vdwg.mxu0
    %1869 = vmatpush.bf16.msra.mxu0 %v1566
    %1870 = vmatpush.bf16.msra.mxu0 %v1558
    %1871 = vmatpush.bf16.msra.mxu0 %v1550
    %1872 = vmatpush.bf16.msra.mxu0 %v1542
    %1873 = vmatpush.bf16.msra.mxu0 %v1534
    %1874 = vmatpush.bf16.msra.mxu0 %v1526
    %1875 = vmatpush.bf16.msra.mxu0 %v1518
    %1876 = vmatpush.bf16.msra.mxu0 %v1510
    %1877 = vmatmul.bf16.gmra.mxu0 0
    %v1878 = vpop.f32.mrf.mxu0
    %v1879 = vadd.f32 %v1866, %v1878
    %v1880 = vpop.f32.mrf.mxu0
    %1881 = vdwg.mxu0
    %1882 = vmatpush.bf16.msra.mxu0 %v1375
    %1883 = vmatpush.bf16.msra.mxu0 %v1367
    %1884 = vmatpush.bf16.msra.mxu0 %v1359
    %1885 = vmatpush.bf16.msra.mxu0 %v1351
    %1886 = vmatpush.bf16.msra.mxu0 %v1343
    %1887 = vmatpush.bf16.msra.mxu0 %v1335
    %1888 = vmatpush.bf16.msra.mxu0 %v1327
    %1889 = vmatpush.bf16.msra.mxu0 %v1319
    %1890 = vmatmul.bf16.gmra.mxu0 %v273
    %v1891 = vpop.f32.mrf.mxu0
    %v1892 = vadd.f32 %v535, %v1891
    %v1893 = vpop.f32.mrf.mxu0
    %1894 = vdwg.mxu0
    %1895 = vmatpush.bf16.msra.mxu0 %v1439
    %1896 = vmatpush.bf16.msra.mxu0 %v1431
    %1897 = vmatpush.bf16.msra.mxu0 %v1423
    %1898 = vmatpush.bf16.msra.mxu0 %v1415
    %1899 = vmatpush.bf16.msra.mxu0 %v1407
    %1900 = vmatpush.bf16.msra.mxu0 %v1399
    %1901 = vmatpush.bf16.msra.mxu0 %v1391
    %1902 = vmatpush.bf16.msra.mxu0 %v1383
    %1903 = vmatmul.bf16.gmra.mxu0 %v274
    %v1904 = vpop.f32.mrf.mxu0
    %v1905 = vadd.f32 %v1892, %v1904
    %v1906 = vpop.f32.mrf.mxu0
    %1907 = vdwg.mxu0
    %1908 = vmatpush.bf16.msra.mxu0 %v1503
    %1909 = vmatpush.bf16.msra.mxu0 %v1495
    %1910 = vmatpush.bf16.msra.mxu0 %v1487
    %1911 = vmatpush.bf16.msra.mxu0 %v1479
    %1912 = vmatpush.bf16.msra.mxu0 %v1471
    %1913 = vmatpush.bf16.msra.mxu0 %v1463
    %1914 = vmatpush.bf16.msra.mxu0 %v1455
    %1915 = vmatpush.bf16.msra.mxu0 %v1447
    %1916 = vmatmul.bf16.gmra.mxu0 0
    %v1917 = vpop.f32.mrf.mxu0
    %v1918 = vadd.f32 %v1905, %v1917
    %v1919 = vpop.f32.mrf.mxu0
    %1920 = vdwg.mxu0
    %1921 = vmatpush.bf16.msra.mxu0 %v1567
    %1922 = vmatpush.bf16.msra.mxu0 %v1559
    %1923 = vmatpush.bf16.msra.mxu0 %v1551
    %1924 = vmatpush.bf16.msra.mxu0 %v1543
    %1925 = vmatpush.bf16.msra.mxu0 %v1535
    %1926 = vmatpush.bf16.msra.mxu0 %v1527
    %1927 = vmatpush.bf16.msra.mxu0 %v1519
    %1928 = vmatpush.bf16.msra.mxu0 %v1511
    %1929 = vmatmul.bf16.gmra.mxu0 0
    %v1930 = vpop.f32.mrf.mxu0
    %v1931 = vadd.f32 %v1918, %v1930
    %v1932 = vpop.f32.mrf.mxu0
    %1933 = vdwg.mxu0
    %1934 = vmatpush.bf16.msra.mxu0 %v1376
    %1935 = vmatpush.bf16.msra.mxu0 %v1368
    %1936 = vmatpush.bf16.msra.mxu0 %v1360
    %1937 = vmatpush.bf16.msra.mxu0 %v1352
    %1938 = vmatpush.bf16.msra.mxu0 %v1344
    %1939 = vmatpush.bf16.msra.mxu0 %v1336
    %1940 = vmatpush.bf16.msra.mxu0 %v1328
    %1941 = vmatpush.bf16.msra.mxu0 %v1320
    %1942 = vmatmul.bf16.gmra.mxu0 %v273
    %v1943 = vpop.f32.mrf.mxu0
    %v1944 = vadd.f32 %v536, %v1943
    %v1945 = vpop.f32.mrf.mxu0
    %1946 = vdwg.mxu0
    %1947 = vmatpush.bf16.msra.mxu0 %v1440
    %1948 = vmatpush.bf16.msra.mxu0 %v1432
    %1949 = vmatpush.bf16.msra.mxu0 %v1424
    %1950 = vmatpush.bf16.msra.mxu0 %v1416
    %1951 = vmatpush.bf16.msra.mxu0 %v1408
    %1952 = vmatpush.bf16.msra.mxu0 %v1400
    %1953 = vmatpush.bf16.msra.mxu0 %v1392
    %1954 = vmatpush.bf16.msra.mxu0 %v1384
    %1955 = vmatmul.bf16.gmra.mxu0 %v274
    %v1956 = vpop.f32.mrf.mxu0
    %v1957 = vadd.f32 %v1944, %v1956
    %v1958 = vpop.f32.mrf.mxu0
    %1959 = vdwg.mxu0
    %1960 = vmatpush.bf16.msra.mxu0 %v1504
    %1961 = vmatpush.bf16.msra.mxu0 %v1496
    %1962 = vmatpush.bf16.msra.mxu0 %v1488
    %1963 = vmatpush.bf16.msra.mxu0 %v1480
    %1964 = vmatpush.bf16.msra.mxu0 %v1472
    %1965 = vmatpush.bf16.msra.mxu0 %v1464
    %1966 = vmatpush.bf16.msra.mxu0 %v1456
    %1967 = vmatpush.bf16.msra.mxu0 %v1448
    %1968 = vmatmul.bf16.gmra.mxu0 0
    %v1969 = vpop.f32.mrf.mxu0
    %v1970 = vadd.f32 %v1957, %v1969
    %v1971 = vpop.f32.mrf.mxu0
    %1972 = vdwg.mxu0
    %1973 = vmatpush.bf16.msra.mxu0 %v1568
    %1974 = vmatpush.bf16.msra.mxu0 %v1560
    %1975 = vmatpush.bf16.msra.mxu0 %v1552
    %1976 = vmatpush.bf16.msra.mxu0 %v1544
    %1977 = vmatpush.bf16.msra.mxu0 %v1536
    %1978 = vmatpush.bf16.msra.mxu0 %v1528
    %1979 = vmatpush.bf16.msra.mxu0 %v1520
    %1980 = vmatpush.bf16.msra.mxu0 %v1512
    %1981 = vmatmul.bf16.gmra.mxu0 0
    %v1982 = vpop.f32.mrf.mxu0
    %v1983 = vadd.f32 %v1970, %v1982
    %v1984 = vpop.f32.mrf.mxu0
    %1985 = vdwg.mxu0
    %1986 = vmatpush.bf16.msra.mxu0 %v1377
    %1987 = vmatpush.bf16.msra.mxu0 %v1369
    %1988 = vmatpush.bf16.msra.mxu0 %v1361
    %1989 = vmatpush.bf16.msra.mxu0 %v1353
    %1990 = vmatpush.bf16.msra.mxu0 %v1345
    %1991 = vmatpush.bf16.msra.mxu0 %v1337
    %1992 = vmatpush.bf16.msra.mxu0 %v1329
    %1993 = vmatpush.bf16.msra.mxu0 %v1321
    %1994 = vmatmul.bf16.gmra.mxu0 %v273
    %v1995 = vpop.f32.mrf.mxu0
    %v1996 = vadd.f32 %v537, %v1995
    %v1997 = vpop.f32.mrf.mxu0
    %1998 = vdwg.mxu0
    %1999 = vmatpush.bf16.msra.mxu0 %v1441
    %2000 = vmatpush.bf16.msra.mxu0 %v1433
    %2001 = vmatpush.bf16.msra.mxu0 %v1425
    %2002 = vmatpush.bf16.msra.mxu0 %v1417
    %2003 = vmatpush.bf16.msra.mxu0 %v1409
    %2004 = vmatpush.bf16.msra.mxu0 %v1401
    %2005 = vmatpush.bf16.msra.mxu0 %v1393
    %2006 = vmatpush.bf16.msra.mxu0 %v1385
    %2007 = vmatmul.bf16.gmra.mxu0 %v274
    %v2008 = vpop.f32.mrf.mxu0
    %v2009 = vadd.f32 %v1996, %v2008
    %v2010 = vpop.f32.mrf.mxu0
    %2011 = vdwg.mxu0
    %2012 = vmatpush.bf16.msra.mxu0 %v1505
    %2013 = vmatpush.bf16.msra.mxu0 %v1497
    %2014 = vmatpush.bf16.msra.mxu0 %v1489
    %2015 = vmatpush.bf16.msra.mxu0 %v1481
    %2016 = vmatpush.bf16.msra.mxu0 %v1473
    %2017 = vmatpush.bf16.msra.mxu0 %v1465
    %2018 = vmatpush.bf16.msra.mxu0 %v1457
    %2019 = vmatpush.bf16.msra.mxu0 %v1449
    %2020 = vmatmul.bf16.gmra.mxu0 0
    %v2021 = vpop.f32.mrf.mxu0
    %v2022 = vadd.f32 %v2009, %v2021
    %v2023 = vpop.f32.mrf.mxu0
    %2024 = vdwg.mxu0
    %2025 = vmatpush.bf16.msra.mxu0 %v1569
    %2026 = vmatpush.bf16.msra.mxu0 %v1561
    %2027 = vmatpush.bf16.msra.mxu0 %v1553
    %2028 = vmatpush.bf16.msra.mxu0 %v1545
    %2029 = vmatpush.bf16.msra.mxu0 %v1537
    %2030 = vmatpush.bf16.msra.mxu0 %v1529
    %2031 = vmatpush.bf16.msra.mxu0 %v1521
    %2032 = vmatpush.bf16.msra.mxu0 %v1513
    %2033 = vmatmul.bf16.gmra.mxu0 0
    %v2034 = vpop.f32.mrf.mxu0
    %v2035 = vadd.f32 %v2022, %v2034
    %v2036 = vpop.f32.mrf.mxu0
    %2037 = vdwg.mxu0
    %2038 = vmatpush.bf16.msra.mxu0 %v1378
    %2039 = vmatpush.bf16.msra.mxu0 %v1370
    %2040 = vmatpush.bf16.msra.mxu0 %v1362
    %2041 = vmatpush.bf16.msra.mxu0 %v1354
    %2042 = vmatpush.bf16.msra.mxu0 %v1346
    %2043 = vmatpush.bf16.msra.mxu0 %v1338
    %2044 = vmatpush.bf16.msra.mxu0 %v1330
    %2045 = vmatpush.bf16.msra.mxu0 %v1322
    %2046 = vmatmul.bf16.gmra.mxu0 %v273
    %v2047 = vpop.f32.mrf.mxu0
    %v2048 = vadd.f32 %v538, %v2047
    %v2049 = vpop.f32.mrf.mxu0
    %2050 = vdwg.mxu0
    %2051 = vmatpush.bf16.msra.mxu0 %v1442
    %2052 = vmatpush.bf16.msra.mxu0 %v1434
    %2053 = vmatpush.bf16.msra.mxu0 %v1426
    %2054 = vmatpush.bf16.msra.mxu0 %v1418
    %2055 = vmatpush.bf16.msra.mxu0 %v1410
    %2056 = vmatpush.bf16.msra.mxu0 %v1402
    %2057 = vmatpush.bf16.msra.mxu0 %v1394
    %2058 = vmatpush.bf16.msra.mxu0 %v1386
    %2059 = vmatmul.bf16.gmra.mxu0 %v274
    %v2060 = vpop.f32.mrf.mxu0
    %v2061 = vadd.f32 %v2048, %v2060
    %v2062 = vpop.f32.mrf.mxu0
    %2063 = vdwg.mxu0
    %2064 = vmatpush.bf16.msra.mxu0 %v1506
    %2065 = vmatpush.bf16.msra.mxu0 %v1498
    %2066 = vmatpush.bf16.msra.mxu0 %v1490
    %2067 = vmatpush.bf16.msra.mxu0 %v1482
    %2068 = vmatpush.bf16.msra.mxu0 %v1474
    %2069 = vmatpush.bf16.msra.mxu0 %v1466
    %2070 = vmatpush.bf16.msra.mxu0 %v1458
    %2071 = vmatpush.bf16.msra.mxu0 %v1450
    %2072 = vmatmul.bf16.gmra.mxu0 0
    %v2073 = vpop.f32.mrf.mxu0
    %v2074 = vadd.f32 %v2061, %v2073
    %v2075 = vpop.f32.mrf.mxu0
    %2076 = vdwg.mxu0
    %2077 = vmatpush.bf16.msra.mxu0 %v1570
    %2078 = vmatpush.bf16.msra.mxu0 %v1562
    %2079 = vmatpush.bf16.msra.mxu0 %v1554
    %2080 = vmatpush.bf16.msra.mxu0 %v1546
    %2081 = vmatpush.bf16.msra.mxu0 %v1538
    %2082 = vmatpush.bf16.msra.mxu0 %v1530
    %2083 = vmatpush.bf16.msra.mxu0 %v1522
    %2084 = vmatpush.bf16.msra.mxu0 %v1514
    %2085 = vmatmul.bf16.gmra.mxu0 0
    %v2086 = vpop.f32.mrf.mxu0
    %v2087 = vadd.f32 %v2074, %v2086
    %v2088 = vpop.f32.mrf.mxu0
    %2089 = vdwg.mxu0
    %2090 = vmatpush.bf16.msra.mxu0 %v1379
    %2091 = vmatpush.bf16.msra.mxu0 %v1371
    %2092 = vmatpush.bf16.msra.mxu0 %v1363
    %2093 = vmatpush.bf16.msra.mxu0 %v1355
    %2094 = vmatpush.bf16.msra.mxu0 %v1347
    %2095 = vmatpush.bf16.msra.mxu0 %v1339
    %2096 = vmatpush.bf16.msra.mxu0 %v1331
    %2097 = vmatpush.bf16.msra.mxu0 %v1323
    %2098 = vmatmul.bf16.gmra.mxu0 %v273
    %v2099 = vpop.f32.mrf.mxu0
    %v2100 = vadd.f32 %v539, %v2099
    %v2101 = vpop.f32.mrf.mxu0
    %2102 = vdwg.mxu0
    %2103 = vmatpush.bf16.msra.mxu0 %v1443
    %2104 = vmatpush.bf16.msra.mxu0 %v1435
    %2105 = vmatpush.bf16.msra.mxu0 %v1427
    %2106 = vmatpush.bf16.msra.mxu0 %v1419
    %2107 = vmatpush.bf16.msra.mxu0 %v1411
    %2108 = vmatpush.bf16.msra.mxu0 %v1403
    %2109 = vmatpush.bf16.msra.mxu0 %v1395
    %2110 = vmatpush.bf16.msra.mxu0 %v1387
    %2111 = vmatmul.bf16.gmra.mxu0 %v274
    %v2112 = vpop.f32.mrf.mxu0
    %v2113 = vadd.f32 %v2100, %v2112
    %v2114 = vpop.f32.mrf.mxu0
    %2115 = vdwg.mxu0
    %2116 = vmatpush.bf16.msra.mxu0 %v1507
    %2117 = vmatpush.bf16.msra.mxu0 %v1499
    %2118 = vmatpush.bf16.msra.mxu0 %v1491
    %2119 = vmatpush.bf16.msra.mxu0 %v1483
    %2120 = vmatpush.bf16.msra.mxu0 %v1475
    %2121 = vmatpush.bf16.msra.mxu0 %v1467
    %2122 = vmatpush.bf16.msra.mxu0 %v1459
    %2123 = vmatpush.bf16.msra.mxu0 %v1451
    %2124 = vmatmul.bf16.gmra.mxu0 0
    %v2125 = vpop.f32.mrf.mxu0
    %v2126 = vadd.f32 %v2113, %v2125
    %v2127 = vpop.f32.mrf.mxu0
    %2128 = vdwg.mxu0
    %2129 = vmatpush.bf16.msra.mxu0 %v1571
    %2130 = vmatpush.bf16.msra.mxu0 %v1563
    %2131 = vmatpush.bf16.msra.mxu0 %v1555
    %2132 = vmatpush.bf16.msra.mxu0 %v1547
    %2133 = vmatpush.bf16.msra.mxu0 %v1539
    %2134 = vmatpush.bf16.msra.mxu0 %v1531
    %2135 = vmatpush.bf16.msra.mxu0 %v1523
    %2136 = vmatpush.bf16.msra.mxu0 %v1515
    %2137 = vmatmul.bf16.gmra.mxu0 0
    %v2138 = vpop.f32.mrf.mxu0
    %v2139 = vadd.f32 %v2126, %v2138
    %v2140 = vpop.f32.mrf.mxu0
    %2141 = vdwg.mxu0
    %2142 = vmatpush.bf16.msra.mxu0 %v1380
    %2143 = vmatpush.bf16.msra.mxu0 %v1372
    %2144 = vmatpush.bf16.msra.mxu0 %v1364
    %2145 = vmatpush.bf16.msra.mxu0 %v1356
    %2146 = vmatpush.bf16.msra.mxu0 %v1348
    %2147 = vmatpush.bf16.msra.mxu0 %v1340
    %2148 = vmatpush.bf16.msra.mxu0 %v1332
    %2149 = vmatpush.bf16.msra.mxu0 %v1324
    %2150 = vmatmul.bf16.gmra.mxu0 %v273
    %v2151 = vpop.f32.mrf.mxu0
    %v2152 = vadd.f32 %v540, %v2151
    %v2153 = vpop.f32.mrf.mxu0
    %2154 = vdwg.mxu0
    %2155 = vmatpush.bf16.msra.mxu0 %v1444
    %2156 = vmatpush.bf16.msra.mxu0 %v1436
    %2157 = vmatpush.bf16.msra.mxu0 %v1428
    %2158 = vmatpush.bf16.msra.mxu0 %v1420
    %2159 = vmatpush.bf16.msra.mxu0 %v1412
    %2160 = vmatpush.bf16.msra.mxu0 %v1404
    %2161 = vmatpush.bf16.msra.mxu0 %v1396
    %2162 = vmatpush.bf16.msra.mxu0 %v1388
    %2163 = vmatmul.bf16.gmra.mxu0 %v274
    %v2164 = vpop.f32.mrf.mxu0
    %v2165 = vadd.f32 %v2152, %v2164
    %v2166 = vpop.f32.mrf.mxu0
    %2167 = vdwg.mxu0
    %2168 = vmatpush.bf16.msra.mxu0 %v1508
    %2169 = vmatpush.bf16.msra.mxu0 %v1500
    %2170 = vmatpush.bf16.msra.mxu0 %v1492
    %2171 = vmatpush.bf16.msra.mxu0 %v1484
    %2172 = vmatpush.bf16.msra.mxu0 %v1476
    %2173 = vmatpush.bf16.msra.mxu0 %v1468
    %2174 = vmatpush.bf16.msra.mxu0 %v1460
    %2175 = vmatpush.bf16.msra.mxu0 %v1452
    %2176 = vmatmul.bf16.gmra.mxu0 0
    %v2177 = vpop.f32.mrf.mxu0
    %v2178 = vadd.f32 %v2165, %v2177
    %v2179 = vpop.f32.mrf.mxu0
    %2180 = vdwg.mxu0
    %2181 = vmatpush.bf16.msra.mxu0 %v1572
    %2182 = vmatpush.bf16.msra.mxu0 %v1564
    %2183 = vmatpush.bf16.msra.mxu0 %v1556
    %2184 = vmatpush.bf16.msra.mxu0 %v1548
    %2185 = vmatpush.bf16.msra.mxu0 %v1540
    %2186 = vmatpush.bf16.msra.mxu0 %v1532
    %2187 = vmatpush.bf16.msra.mxu0 %v1524
    %2188 = vmatpush.bf16.msra.mxu0 %v1516
    %2189 = vmatmul.bf16.gmra.mxu0 0
    %v2190 = vpop.f32.mrf.mxu0
    %v2191 = vadd.f32 %v2178, %v2190
    %v2192 = vpop.f32.mrf.mxu0
    %2193 = vdwg.mxu0
    %2194 = vmatpush.bf16.msra.mxu0 %v1381
    %2195 = vmatpush.bf16.msra.mxu0 %v1373
    %2196 = vmatpush.bf16.msra.mxu0 %v1365
    %2197 = vmatpush.bf16.msra.mxu0 %v1357
    %2198 = vmatpush.bf16.msra.mxu0 %v1349
    %2199 = vmatpush.bf16.msra.mxu0 %v1341
    %2200 = vmatpush.bf16.msra.mxu0 %v1333
    %2201 = vmatpush.bf16.msra.mxu0 %v1325
    %2202 = vmatmul.bf16.gmra.mxu0 %v273
    %v2203 = vpop.f32.mrf.mxu0
    %v2204 = vadd.f32 %v541, %v2203
    %v2205 = vpop.f32.mrf.mxu0
    %2206 = vdwg.mxu0
    %2207 = vmatpush.bf16.msra.mxu0 %v1445
    %2208 = vmatpush.bf16.msra.mxu0 %v1437
    %2209 = vmatpush.bf16.msra.mxu0 %v1429
    %2210 = vmatpush.bf16.msra.mxu0 %v1421
    %2211 = vmatpush.bf16.msra.mxu0 %v1413
    %2212 = vmatpush.bf16.msra.mxu0 %v1405
    %2213 = vmatpush.bf16.msra.mxu0 %v1397
    %2214 = vmatpush.bf16.msra.mxu0 %v1389
    %2215 = vmatmul.bf16.gmra.mxu0 %v274
    %v2216 = vpop.f32.mrf.mxu0
    %v2217 = vadd.f32 %v2204, %v2216
    %v2218 = vpop.f32.mrf.mxu0
    %2219 = vdwg.mxu0
    %2220 = vmatpush.bf16.msra.mxu0 %v1509
    %2221 = vmatpush.bf16.msra.mxu0 %v1501
    %2222 = vmatpush.bf16.msra.mxu0 %v1493
    %2223 = vmatpush.bf16.msra.mxu0 %v1485
    %2224 = vmatpush.bf16.msra.mxu0 %v1477
    %2225 = vmatpush.bf16.msra.mxu0 %v1469
    %2226 = vmatpush.bf16.msra.mxu0 %v1461
    %2227 = vmatpush.bf16.msra.mxu0 %v1453
    %2228 = vmatmul.bf16.gmra.mxu0 0
    %v2229 = vpop.f32.mrf.mxu0
    %v2230 = vadd.f32 %v2217, %v2229
    %v2231 = vpop.f32.mrf.mxu0
    %2232 = vdwg.mxu0
    %2233 = vmatpush.bf16.msra.mxu0 %v1573
    %2234 = vmatpush.bf16.msra.mxu0 %v1565
    %2235 = vmatpush.bf16.msra.mxu0 %v1557
    %2236 = vmatpush.bf16.msra.mxu0 %v1549
    %2237 = vmatpush.bf16.msra.mxu0 %v1541
    %2238 = vmatpush.bf16.msra.mxu0 %v1533
    %2239 = vmatpush.bf16.msra.mxu0 %v1525
    %2240 = vmatpush.bf16.msra.mxu0 %v1517
    %2241 = vmatmul.bf16.gmra.mxu0 0
    %v2242 = vpop.f32.mrf.mxu0
    %v2243 = vadd.f32 %v2230, %v2242
    %v2244 = vpop.f32.mrf.mxu0
    %2245 = vdwg.mxu0
    %s2246 = smul.u32 4, 32
    %s2247 = smul.u32 %s2246, 8
    %s2248 = sshll.u32 %s2247, 4
    %2249 = dma.done %s52, %s2248
    %s2250 = scalar_lea.vmem %s0, 2
    %v2251 = vld [vmem:[%s2250] sm:$0x3]
    %2253 = vset.pattern.permute.xlu0 0
    %2254 = vperm.xlu0 %2253, %v2251
    %v2255 = vpop.permute.xlu0 %2254
    %v2257 = vmul.f32 %v2255, %v90
    %v2258 = vmul.f32 %v2255, %v91
    %v2259 = vmul.f32 %v2255, %v92
    %v2260 = vmul.f32 %v2255, %v93
    %v2261 = vmul.f32 %v2255, %v94
    %v2262 = vmul.f32 %v2255, %v95
    %v2263 = vmul.f32 %v2255, %v96
    %v2264 = vmul.f32 %v2255, %v97
    %v2265 = vadd.f32 %v2257, %v115
    %v2266 = vadd.f32 %v2258, %v116
    %v2267 = vadd.f32 %v2259, %v117
    %v2268 = vadd.f32 %v2260, %v118
    %v2269 = vadd.f32 %v2261, %v119
    %v2270 = vadd.f32 %v2262, %v120
    %v2271 = vadd.f32 %v2263, %v121
    %v2272 = vadd.f32 %v2264, %v122
    %v2273 = vld [vmem:[#allocation2] sm:$0xff]
    %v2274 = vld [vmem:[#allocation2 + $0x8] sm:$0xff]
    %v2275 = vld [vmem:[#allocation2 + $0x10] sm:$0xff]
    %v2276 = vld [vmem:[#allocation2 + $0x18] sm:$0xff]
    %v2277 = vld [vmem:[#allocation2 + $0x20] sm:$0xff]
    %v2278 = vld [vmem:[#allocation2 + $0x28] sm:$0xff]
    %v2279 = vld [vmem:[#allocation2 + $0x30] sm:$0xff]
    %v2280 = vld [vmem:[#allocation2 + $0x38] sm:$0xff]
    %v2281 = vld [vmem:[#allocation2 + $0x40] sm:$0xff]
    %v2282 = vld [vmem:[#allocation2 + $0x48] sm:$0xff]
    %v2283 = vld [vmem:[#allocation2 + $0x50] sm:$0xff]
    %v2284 = vld [vmem:[#allocation2 + $0x58] sm:$0xff]
    %v2285 = vld [vmem:[#allocation2 + $0x60] sm:$0xff]
    %v2286 = vld [vmem:[#allocation2 + $0x68] sm:$0xff]
    %v2287 = vld [vmem:[#allocation2 + $0x70] sm:$0xff]
    %v2288 = vld [vmem:[#allocation2 + $0x78] sm:$0xff]
    %v2289 = vld [vmem:[#allocation2 + $0x80] sm:$0xff]
    %v2290 = vld [vmem:[#allocation2 + $0x88] sm:$0xff]
    %v2291 = vld [vmem:[#allocation2 + $0x90] sm:$0xff]
    %v2292 = vld [vmem:[#allocation2 + $0x98] sm:$0xff]
    %v2293 = vld [vmem:[#allocation2 + $0xa0] sm:$0xff]
    %v2294 = vld [vmem:[#allocation2 + $0xa8] sm:$0xff]
    %v2295 = vld [vmem:[#allocation2 + $0xb0] sm:$0xff]
    %v2296 = vld [vmem:[#allocation2 + $0xb8] sm:$0xff]
    %v2297 = vld [vmem:[#allocation2 + $0xc0] sm:$0xff]
    %v2298 = vld [vmem:[#allocation2 + $0xc8] sm:$0xff]
    %v2299 = vld [vmem:[#allocation2 + $0xd0] sm:$0xff]
    %v2300 = vld [vmem:[#allocation2 + $0xd8] sm:$0xff]
    %v2301 = vld [vmem:[#allocation2 + $0xe0] sm:$0xff]
    %v2302 = vld [vmem:[#allocation2 + $0xe8] sm:$0xff]
    %v2303 = vld [vmem:[#allocation2 + $0xf0] sm:$0xff]
    %v2304 = vld [vmem:[#allocation2 + $0xf8] sm:$0xff]
    %v2305 = vld [vmem:[#allocation2 + $0x100] sm:$0xff]
    %v2306 = vld [vmem:[#allocation2 + $0x108] sm:$0xff]
    %v2307 = vld [vmem:[#allocation2 + $0x110] sm:$0xff]
    %v2308 = vld [vmem:[#allocation2 + $0x118] sm:$0xff]
    %v2309 = vld [vmem:[#allocation2 + $0x120] sm:$0xff]
    %v2310 = vld [vmem:[#allocation2 + $0x128] sm:$0xff]
    %v2311 = vld [vmem:[#allocation2 + $0x130] sm:$0xff]
    %v2312 = vld [vmem:[#allocation2 + $0x138] sm:$0xff]
    %v2313 = vld [vmem:[#allocation2 + $0x140] sm:$0xff]
    %v2314 = vld [vmem:[#allocation2 + $0x148] sm:$0xff]
    %v2315 = vld [vmem:[#allocation2 + $0x150] sm:$0xff]
    %v2316 = vld [vmem:[#allocation2 + $0x158] sm:$0xff]
    %v2317 = vld [vmem:[#allocation2 + $0x160] sm:$0xff]
    %v2318 = vld [vmem:[#allocation2 + $0x168] sm:$0xff]
    %v2319 = vld [vmem:[#allocation2 + $0x170] sm:$0xff]
    %v2320 = vld [vmem:[#allocation2 + $0x178] sm:$0xff]
    %v2321 = vld [vmem:[#allocation2 + $0x180] sm:$0xff]
    %v2322 = vld [vmem:[#allocation2 + $0x188] sm:$0xff]
    %v2323 = vld [vmem:[#allocation2 + $0x190] sm:$0xff]
    %v2324 = vld [vmem:[#allocation2 + $0x198] sm:$0xff]
    %v2325 = vld [vmem:[#allocation2 + $0x1a0] sm:$0xff]
    %v2326 = vld [vmem:[#allocation2 + $0x1a8] sm:$0xff]
    %v2327 = vld [vmem:[#allocation2 + $0x1b0] sm:$0xff]
    %v2328 = vld [vmem:[#allocation2 + $0x1b8] sm:$0xff]
    %v2329 = vld [vmem:[#allocation2 + $0x1c0] sm:$0xff]
    %v2330 = vld [vmem:[#allocation2 + $0x1c8] sm:$0xff]
    %v2331 = vld [vmem:[#allocation2 + $0x1d0] sm:$0xff]
    %v2332 = vld [vmem:[#allocation2 + $0x1d8] sm:$0xff]
    %v2333 = vld [vmem:[#allocation2 + $0x1e0] sm:$0xff]
    %v2334 = vld [vmem:[#allocation2 + $0x1e8] sm:$0xff]
    %v2335 = vld [vmem:[#allocation2 + $0x1f0] sm:$0xff]
    %v2336 = vld [vmem:[#allocation2 + $0x1f8] sm:$0xff]
    %v2337 = vld [vmem:[#allocation2 + $0x200] sm:$0xff]
    %v2338 = vld [vmem:[#allocation2 + $0x208] sm:$0xff]
    %v2339 = vld [vmem:[#allocation2 + $0x210] sm:$0xff]
    %v2340 = vld [vmem:[#allocation2 + $0x218] sm:$0xff]
    %v2341 = vld [vmem:[#allocation2 + $0x220] sm:$0xff]
    %v2342 = vld [vmem:[#allocation2 + $0x228] sm:$0xff]
    %v2343 = vld [vmem:[#allocation2 + $0x230] sm:$0xff]
    %v2344 = vld [vmem:[#allocation2 + $0x238] sm:$0xff]
    %v2345 = vld [vmem:[#allocation2 + $0x240] sm:$0xff]
    %v2346 = vld [vmem:[#allocation2 + $0x248] sm:$0xff]
    %v2347 = vld [vmem:[#allocation2 + $0x250] sm:$0xff]
    %v2348 = vld [vmem:[#allocation2 + $0x258] sm:$0xff]
    %v2349 = vld [vmem:[#allocation2 + $0x260] sm:$0xff]
    %v2350 = vld [vmem:[#allocation2 + $0x268] sm:$0xff]
    %v2351 = vld [vmem:[#allocation2 + $0x270] sm:$0xff]
    %v2352 = vld [vmem:[#allocation2 + $0x278] sm:$0xff]
    %v2353 = vld [vmem:[#allocation2 + $0x280] sm:$0xff]
    %v2354 = vld [vmem:[#allocation2 + $0x288] sm:$0xff]
    %v2355 = vld [vmem:[#allocation2 + $0x290] sm:$0xff]
    %v2356 = vld [vmem:[#allocation2 + $0x298] sm:$0xff]
    %v2357 = vld [vmem:[#allocation2 + $0x2a0] sm:$0xff]
    %v2358 = vld [vmem:[#allocation2 + $0x2a8] sm:$0xff]
    %v2359 = vld [vmem:[#allocation2 + $0x2b0] sm:$0xff]
    %v2360 = vld [vmem:[#allocation2 + $0x2b8] sm:$0xff]
    %v2361 = vld [vmem:[#allocation2 + $0x2c0] sm:$0xff]
    %v2362 = vld [vmem:[#allocation2 + $0x2c8] sm:$0xff]
    %v2363 = vld [vmem:[#allocation2 + $0x2d0] sm:$0xff]
    %v2364 = vld [vmem:[#allocation2 + $0x2d8] sm:$0xff]
    %v2365 = vld [vmem:[#allocation2 + $0x2e0] sm:$0xff]
    %v2366 = vld [vmem:[#allocation2 + $0x2e8] sm:$0xff]
    %v2367 = vld [vmem:[#allocation2 + $0x2f0] sm:$0xff]
    %v2368 = vld [vmem:[#allocation2 + $0x2f8] sm:$0xff]
    %v2369 = vld [vmem:[#allocation2 + $0x300] sm:$0xff]
    %v2370 = vld [vmem:[#allocation2 + $0x308] sm:$0xff]
    %v2371 = vld [vmem:[#allocation2 + $0x310] sm:$0xff]
    %v2372 = vld [vmem:[#allocation2 + $0x318] sm:$0xff]
    %v2373 = vld [vmem:[#allocation2 + $0x320] sm:$0xff]
    %v2374 = vld [vmem:[#allocation2 + $0x328] sm:$0xff]
    %v2375 = vld [vmem:[#allocation2 + $0x330] sm:$0xff]
    %v2376 = vld [vmem:[#allocation2 + $0x338] sm:$0xff]
    %v2377 = vld [vmem:[#allocation2 + $0x340] sm:$0xff]
    %v2378 = vld [vmem:[#allocation2 + $0x348] sm:$0xff]
    %v2379 = vld [vmem:[#allocation2 + $0x350] sm:$0xff]
    %v2380 = vld [vmem:[#allocation2 + $0x358] sm:$0xff]
    %v2381 = vld [vmem:[#allocation2 + $0x360] sm:$0xff]
    %v2382 = vld [vmem:[#allocation2 + $0x368] sm:$0xff]
    %v2383 = vld [vmem:[#allocation2 + $0x370] sm:$0xff]
    %v2384 = vld [vmem:[#allocation2 + $0x378] sm:$0xff]
    %v2385 = vld [vmem:[#allocation2 + $0x380] sm:$0xff]
    %v2386 = vld [vmem:[#allocation2 + $0x388] sm:$0xff]
    %v2387 = vld [vmem:[#allocation2 + $0x390] sm:$0xff]
    %v2388 = vld [vmem:[#allocation2 + $0x398] sm:$0xff]
    %v2389 = vld [vmem:[#allocation2 + $0x3a0] sm:$0xff]
    %v2390 = vld [vmem:[#allocation2 + $0x3a8] sm:$0xff]
    %v2391 = vld [vmem:[#allocation2 + $0x3b0] sm:$0xff]
    %v2392 = vld [vmem:[#allocation2 + $0x3b8] sm:$0xff]
    %v2393 = vld [vmem:[#allocation2 + $0x3c0] sm:$0xff]
    %v2394 = vld [vmem:[#allocation2 + $0x3c8] sm:$0xff]
    %v2395 = vld [vmem:[#allocation2 + $0x3d0] sm:$0xff]
    %v2396 = vld [vmem:[#allocation2 + $0x3d8] sm:$0xff]
    %v2397 = vld [vmem:[#allocation2 + $0x3e0] sm:$0xff]
    %v2398 = vld [vmem:[#allocation2 + $0x3e8] sm:$0xff]
    %v2399 = vld [vmem:[#allocation2 + $0x3f0] sm:$0xff]
    %v2400 = vld [vmem:[#allocation2 + $0x3f8] sm:$0xff]
    %v2529 = vunpack.c.l.b16 %v2273
    %v2530 = vunpack.c.h.b16 %v2273
    %v2531 = vunpack.c.l.b16 %v2274
    %v2532 = vunpack.c.h.b16 %v2274
    %v2533 = vunpack.c.l.b16 %v2275
    %v2534 = vunpack.c.h.b16 %v2275
    %v2535 = vunpack.c.l.b16 %v2276
    %v2536 = vunpack.c.h.b16 %v2276
    %v2537 = vunpack.c.l.b16 %v2277
    %v2538 = vunpack.c.h.b16 %v2277
    %v2539 = vunpack.c.l.b16 %v2278
    %v2540 = vunpack.c.h.b16 %v2278
    %v2541 = vunpack.c.l.b16 %v2279
    %v2542 = vunpack.c.h.b16 %v2279
    %v2543 = vunpack.c.l.b16 %v2280
    %v2544 = vunpack.c.h.b16 %v2280
    %v2545 = vunpack.c.l.b16 %v2281
    %v2546 = vunpack.c.h.b16 %v2281
    %v2547 = vunpack.c.l.b16 %v2282
    %v2548 = vunpack.c.h.b16 %v2282
    %v2549 = vunpack.c.l.b16 %v2283
    %v2550 = vunpack.c.h.b16 %v2283
    %v2551 = vunpack.c.l.b16 %v2284
    %v2552 = vunpack.c.h.b16 %v2284
    %v2553 = vunpack.c.l.b16 %v2285
    %v2554 = vunpack.c.h.b16 %v2285
    %v2555 = vunpack.c.l.b16 %v2286
    %v2556 = vunpack.c.h.b16 %v2286
    %v2557 = vunpack.c.l.b16 %v2287
    %v2558 = vunpack.c.h.b16 %v2287
    %v2559 = vunpack.c.l.b16 %v2288
    %v2560 = vunpack.c.h.b16 %v2288
    %v2561 = vunpack.c.l.b16 %v2289
    %v2562 = vunpack.c.h.b16 %v2289
    %v2563 = vunpack.c.l.b16 %v2290
    %v2564 = vunpack.c.h.b16 %v2290
    %v2565 = vunpack.c.l.b16 %v2291
    %v2566 = vunpack.c.h.b16 %v2291
    %v2567 = vunpack.c.l.b16 %v2292
    %v2568 = vunpack.c.h.b16 %v2292
    %v2569 = vunpack.c.l.b16 %v2293
    %v2570 = vunpack.c.h.b16 %v2293
    %v2571 = vunpack.c.l.b16 %v2294
    %v2572 = vunpack.c.h.b16 %v2294
    %v2573 = vunpack.c.l.b16 %v2295
    %v2574 = vunpack.c.h.b16 %v2295
    %v2575 = vunpack.c.l.b16 %v2296
    %v2576 = vunpack.c.h.b16 %v2296
    %v2577 = vunpack.c.l.b16 %v2297
    %v2578 = vunpack.c.h.b16 %v2297
    %v2579 = vunpack.c.l.b16 %v2298
    %v2580 = vunpack.c.h.b16 %v2298
    %v2581 = vunpack.c.l.b16 %v2299
    %v2582 = vunpack.c.h.b16 %v2299
    %v2583 = vunpack.c.l.b16 %v2300
    %v2584 = vunpack.c.h.b16 %v2300
    %v2585 = vunpack.c.l.b16 %v2301
    %v2586 = vunpack.c.h.b16 %v2301
    %v2587 = vunpack.c.l.b16 %v2302
    %v2588 = vunpack.c.h.b16 %v2302
    %v2589 = vunpack.c.l.b16 %v2303
    %v2590 = vunpack.c.h.b16 %v2303
    %v2591 = vunpack.c.l.b16 %v2304
    %v2592 = vunpack.c.h.b16 %v2304
    %v2593 = vunpack.c.l.b16 %v2305
    %v2594 = vunpack.c.h.b16 %v2305
    %v2595 = vunpack.c.l.b16 %v2306
    %v2596 = vunpack.c.h.b16 %v2306
    %v2597 = vunpack.c.l.b16 %v2307
    %v2598 = vunpack.c.h.b16 %v2307
    %v2599 = vunpack.c.l.b16 %v2308
    %v2600 = vunpack.c.h.b16 %v2308
    %v2601 = vunpack.c.l.b16 %v2309
    %v2602 = vunpack.c.h.b16 %v2309
    %v2603 = vunpack.c.l.b16 %v2310
    %v2604 = vunpack.c.h.b16 %v2310
    %v2605 = vunpack.c.l.b16 %v2311
    %v2606 = vunpack.c.h.b16 %v2311
    %v2607 = vunpack.c.l.b16 %v2312
    %v2608 = vunpack.c.h.b16 %v2312
    %v2609 = vunpack.c.l.b16 %v2313
    %v2610 = vunpack.c.h.b16 %v2313
    %v2611 = vunpack.c.l.b16 %v2314
    %v2612 = vunpack.c.h.b16 %v2314
    %v2613 = vunpack.c.l.b16 %v2315
    %v2614 = vunpack.c.h.b16 %v2315
    %v2615 = vunpack.c.l.b16 %v2316
    %v2616 = vunpack.c.h.b16 %v2316
    %v2617 = vunpack.c.l.b16 %v2317
    %v2618 = vunpack.c.h.b16 %v2317
    %v2619 = vunpack.c.l.b16 %v2318
    %v2620 = vunpack.c.h.b16 %v2318
    %v2621 = vunpack.c.l.b16 %v2319
    %v2622 = vunpack.c.h.b16 %v2319
    %v2623 = vunpack.c.l.b16 %v2320
    %v2624 = vunpack.c.h.b16 %v2320
    %v2625 = vunpack.c.l.b16 %v2321
    %v2626 = vunpack.c.h.b16 %v2321
    %v2627 = vunpack.c.l.b16 %v2322
    %v2628 = vunpack.c.h.b16 %v2322
    %v2629 = vunpack.c.l.b16 %v2323
    %v2630 = vunpack.c.h.b16 %v2323
    %v2631 = vunpack.c.l.b16 %v2324
    %v2632 = vunpack.c.h.b16 %v2324
    %v2633 = vunpack.c.l.b16 %v2325
    %v2634 = vunpack.c.h.b16 %v2325
    %v2635 = vunpack.c.l.b16 %v2326
    %v2636 = vunpack.c.h.b16 %v2326
    %v2637 = vunpack.c.l.b16 %v2327
    %v2638 = vunpack.c.h.b16 %v2327
    %v2639 = vunpack.c.l.b16 %v2328
    %v2640 = vunpack.c.h.b16 %v2328
    %v2641 = vunpack.c.l.b16 %v2329
    %v2642 = vunpack.c.h.b16 %v2329
    %v2643 = vunpack.c.l.b16 %v2330
    %v2644 = vunpack.c.h.b16 %v2330
    %v2645 = vunpack.c.l.b16 %v2331
    %v2646 = vunpack.c.h.b16 %v2331
    %v2647 = vunpack.c.l.b16 %v2332
    %v2648 = vunpack.c.h.b16 %v2332
    %v2649 = vunpack.c.l.b16 %v2333
    %v2650 = vunpack.c.h.b16 %v2333
    %v2651 = vunpack.c.l.b16 %v2334
    %v2652 = vunpack.c.h.b16 %v2334
    %v2653 = vunpack.c.l.b16 %v2335
    %v2654 = vunpack.c.h.b16 %v2335
    %v2655 = vunpack.c.l.b16 %v2336
    %v2656 = vunpack.c.h.b16 %v2336
    %v2657 = vunpack.c.l.b16 %v2337
    %v2658 = vunpack.c.h.b16 %v2337
    %v2659 = vunpack.c.l.b16 %v2338
    %v2660 = vunpack.c.h.b16 %v2338
    %v2661 = vunpack.c.l.b16 %v2339
    %v2662 = vunpack.c.h.b16 %v2339
    %v2663 = vunpack.c.l.b16 %v2340
    %v2664 = vunpack.c.h.b16 %v2340
    %v2665 = vunpack.c.l.b16 %v2341
    %v2666 = vunpack.c.h.b16 %v2341
    %v2667 = vunpack.c.l.b16 %v2342
    %v2668 = vunpack.c.h.b16 %v2342
    %v2669 = vunpack.c.l.b16 %v2343
    %v2670 = vunpack.c.h.b16 %v2343
    %v2671 = vunpack.c.l.b16 %v2344
    %v2672 = vunpack.c.h.b16 %v2344
    %v2673 = vunpack.c.l.b16 %v2345
    %v2674 = vunpack.c.h.b16 %v2345
    %v2675 = vunpack.c.l.b16 %v2346
    %v2676 = vunpack.c.h.b16 %v2346
    %v2677 = vunpack.c.l.b16 %v2347
    %v2678 = vunpack.c.h.b16 %v2347
    %v2679 = vunpack.c.l.b16 %v2348
    %v2680 = vunpack.c.h.b16 %v2348
    %v2681 = vunpack.c.l.b16 %v2349
    %v2682 = vunpack.c.h.b16 %v2349
    %v2683 = vunpack.c.l.b16 %v2350
    %v2684 = vunpack.c.h.b16 %v2350
    %v2685 = vunpack.c.l.b16 %v2351
    %v2686 = vunpack.c.h.b16 %v2351
    %v2687 = vunpack.c.l.b16 %v2352
    %v2688 = vunpack.c.h.b16 %v2352
    %v2689 = vunpack.c.l.b16 %v2353
    %v2690 = vunpack.c.h.b16 %v2353
    %v2691 = vunpack.c.l.b16 %v2354
    %v2692 = vunpack.c.h.b16 %v2354
    %v2693 = vunpack.c.l.b16 %v2355
    %v2694 = vunpack.c.h.b16 %v2355
    %v2695 = vunpack.c.l.b16 %v2356
    %v2696 = vunpack.c.h.b16 %v2356
    %v2697 = vunpack.c.l.b16 %v2357
    %v2698 = vunpack.c.h.b16 %v2357
    %v2699 = vunpack.c.l.b16 %v2358
    %v2700 = vunpack.c.h.b16 %v2358
    %v2701 = vunpack.c.l.b16 %v2359
    %v2702 = vunpack.c.h.b16 %v2359
    %v2703 = vunpack.c.l.b16 %v2360
    %v2704 = vunpack.c.h.b16 %v2360
    %v2705 = vunpack.c.l.b16 %v2361
    %v2706 = vunpack.c.h.b16 %v2361
    %v2707 = vunpack.c.l.b16 %v2362
    %v2708 = vunpack.c.h.b16 %v2362
    %v2709 = vunpack.c.l.b16 %v2363
    %v2710 = vunpack.c.h.b16 %v2363
    %v2711 = vunpack.c.l.b16 %v2364
    %v2712 = vunpack.c.h.b16 %v2364
    %v2713 = vunpack.c.l.b16 %v2365
    %v2714 = vunpack.c.h.b16 %v2365
    %v2715 = vunpack.c.l.b16 %v2366
    %v2716 = vunpack.c.h.b16 %v2366
    %v2717 = vunpack.c.l.b16 %v2367
    %v2718 = vunpack.c.h.b16 %v2367
    %v2719 = vunpack.c.l.b16 %v2368
    %v2720 = vunpack.c.h.b16 %v2368
    %v2721 = vunpack.c.l.b16 %v2369
    %v2722 = vunpack.c.h.b16 %v2369
    %v2723 = vunpack.c.l.b16 %v2370
    %v2724 = vunpack.c.h.b16 %v2370
    %v2725 = vunpack.c.l.b16 %v2371
    %v2726 = vunpack.c.h.b16 %v2371
    %v2727 = vunpack.c.l.b16 %v2372
    %v2728 = vunpack.c.h.b16 %v2372
    %v2729 = vunpack.c.l.b16 %v2373
    %v2730 = vunpack.c.h.b16 %v2373
    %v2731 = vunpack.c.l.b16 %v2374
    %v2732 = vunpack.c.h.b16 %v2374
    %v2733 = vunpack.c.l.b16 %v2375
    %v2734 = vunpack.c.h.b16 %v2375
    %v2735 = vunpack.c.l.b16 %v2376
    %v2736 = vunpack.c.h.b16 %v2376
    %v2737 = vunpack.c.l.b16 %v2377
    %v2738 = vunpack.c.h.b16 %v2377
    %v2739 = vunpack.c.l.b16 %v2378
    %v2740 = vunpack.c.h.b16 %v2378
    %v2741 = vunpack.c.l.b16 %v2379
    %v2742 = vunpack.c.h.b16 %v2379
    %v2743 = vunpack.c.l.b16 %v2380
    %v2744 = vunpack.c.h.b16 %v2380
    %v2745 = vunpack.c.l.b16 %v2381
    %v2746 = vunpack.c.h.b16 %v2381
    %v2747 = vunpack.c.l.b16 %v2382
    %v2748 = vunpack.c.h.b16 %v2382
    %v2749 = vunpack.c.l.b16 %v2383
    %v2750 = vunpack.c.h.b16 %v2383
    %v2751 = vunpack.c.l.b16 %v2384
    %v2752 = vunpack.c.h.b16 %v2384
    %v2753 = vunpack.c.l.b16 %v2385
    %v2754 = vunpack.c.h.b16 %v2385
    %v2755 = vunpack.c.l.b16 %v2386
    %v2756 = vunpack.c.h.b16 %v2386
    %v2757 = vunpack.c.l.b16 %v2387
    %v2758 = vunpack.c.h.b16 %v2387
    %v2759 = vunpack.c.l.b16 %v2388
    %v2760 = vunpack.c.h.b16 %v2388
    %v2761 = vunpack.c.l.b16 %v2389
    %v2762 = vunpack.c.h.b16 %v2389
    %v2763 = vunpack.c.l.b16 %v2390
    %v2764 = vunpack.c.h.b16 %v2390
    %v2765 = vunpack.c.l.b16 %v2391
    %v2766 = vunpack.c.h.b16 %v2391
    %v2767 = vunpack.c.l.b16 %v2392
    %v2768 = vunpack.c.h.b16 %v2392
    %v2769 = vunpack.c.l.b16 %v2393
    %v2770 = vunpack.c.h.b16 %v2393
    %v2771 = vunpack.c.l.b16 %v2394
    %v2772 = vunpack.c.h.b16 %v2394
    %v2773 = vunpack.c.l.b16 %v2395
    %v2774 = vunpack.c.h.b16 %v2395
    %v2775 = vunpack.c.l.b16 %v2396
    %v2776 = vunpack.c.h.b16 %v2396
    %v2777 = vunpack.c.l.b16 %v2397
    %v2778 = vunpack.c.h.b16 %v2397
    %v2779 = vunpack.c.l.b16 %v2398
    %v2780 = vunpack.c.h.b16 %v2398
    %v2781 = vunpack.c.l.b16 %v2399
    %v2782 = vunpack.c.h.b16 %v2399
    %v2783 = vunpack.c.l.b16 %v2400
    %v2784 = vunpack.c.h.b16 %v2400
    %v2785 = vpack.c.b16 %v2537, %v2529
    %v2786 = vpack.c.b16 %v2538, %v2530
    %v2787 = vpack.c.b16 %v2539, %v2531
    %v2788 = vpack.c.b16 %v2540, %v2532
    %v2789 = vpack.c.b16 %v2541, %v2533
    %v2790 = vpack.c.b16 %v2542, %v2534
    %v2791 = vpack.c.b16 %v2543, %v2535
    %v2792 = vpack.c.b16 %v2544, %v2536
    %v2793 = vpack.c.b16 %v2553, %v2545
    %v2794 = vpack.c.b16 %v2554, %v2546
    %v2795 = vpack.c.b16 %v2555, %v2547
    %v2796 = vpack.c.b16 %v2556, %v2548
    %v2797 = vpack.c.b16 %v2557, %v2549
    %v2798 = vpack.c.b16 %v2558, %v2550
    %v2799 = vpack.c.b16 %v2559, %v2551
    %v2800 = vpack.c.b16 %v2560, %v2552
    %v2801 = vpack.c.b16 %v2569, %v2561
    %v2802 = vpack.c.b16 %v2570, %v2562
    %v2803 = vpack.c.b16 %v2571, %v2563
    %v2804 = vpack.c.b16 %v2572, %v2564
    %v2805 = vpack.c.b16 %v2573, %v2565
    %v2806 = vpack.c.b16 %v2574, %v2566
    %v2807 = vpack.c.b16 %v2575, %v2567
    %v2808 = vpack.c.b16 %v2576, %v2568
    %v2809 = vpack.c.b16 %v2585, %v2577
    %v2810 = vpack.c.b16 %v2586, %v2578
    %v2811 = vpack.c.b16 %v2587, %v2579
    %v2812 = vpack.c.b16 %v2588, %v2580
    %v2813 = vpack.c.b16 %v2589, %v2581
    %v2814 = vpack.c.b16 %v2590, %v2582
    %v2815 = vpack.c.b16 %v2591, %v2583
    %v2816 = vpack.c.b16 %v2592, %v2584
    %v2817 = vpack.c.b16 %v2601, %v2593
    %v2818 = vpack.c.b16 %v2602, %v2594
    %v2819 = vpack.c.b16 %v2603, %v2595
    %v2820 = vpack.c.b16 %v2604, %v2596
    %v2821 = vpack.c.b16 %v2605, %v2597
    %v2822 = vpack.c.b16 %v2606, %v2598
    %v2823 = vpack.c.b16 %v2607, %v2599
    %v2824 = vpack.c.b16 %v2608, %v2600
    %v2825 = vpack.c.b16 %v2617, %v2609
    %v2826 = vpack.c.b16 %v2618, %v2610
    %v2827 = vpack.c.b16 %v2619, %v2611
    %v2828 = vpack.c.b16 %v2620, %v2612
    %v2829 = vpack.c.b16 %v2621, %v2613
    %v2830 = vpack.c.b16 %v2622, %v2614
    %v2831 = vpack.c.b16 %v2623, %v2615
    %v2832 = vpack.c.b16 %v2624, %v2616
    %v2833 = vpack.c.b16 %v2633, %v2625
    %v2834 = vpack.c.b16 %v2634, %v2626
    %v2835 = vpack.c.b16 %v2635, %v2627
    %v2836 = vpack.c.b16 %v2636, %v2628
    %v2837 = vpack.c.b16 %v2637, %v2629
    %v2838 = vpack.c.b16 %v2638, %v2630
    %v2839 = vpack.c.b16 %v2639, %v2631
    %v2840 = vpack.c.b16 %v2640, %v2632
    %v2841 = vpack.c.b16 %v2649, %v2641
    %v2842 = vpack.c.b16 %v2650, %v2642
    %v2843 = vpack.c.b16 %v2651, %v2643
    %v2844 = vpack.c.b16 %v2652, %v2644
    %v2845 = vpack.c.b16 %v2653, %v2645
    %v2846 = vpack.c.b16 %v2654, %v2646
    %v2847 = vpack.c.b16 %v2655, %v2647
    %v2848 = vpack.c.b16 %v2656, %v2648
    %v2849 = vpack.c.b16 %v2665, %v2657
    %v2850 = vpack.c.b16 %v2666, %v2658
    %v2851 = vpack.c.b16 %v2667, %v2659
    %v2852 = vpack.c.b16 %v2668, %v2660
    %v2853 = vpack.c.b16 %v2669, %v2661
    %v2854 = vpack.c.b16 %v2670, %v2662
    %v2855 = vpack.c.b16 %v2671, %v2663
    %v2856 = vpack.c.b16 %v2672, %v2664
    %v2857 = vpack.c.b16 %v2681, %v2673
    %v2858 = vpack.c.b16 %v2682, %v2674
    %v2859 = vpack.c.b16 %v2683, %v2675
    %v2860 = vpack.c.b16 %v2684, %v2676
    %v2861 = vpack.c.b16 %v2685, %v2677
    %v2862 = vpack.c.b16 %v2686, %v2678
    %v2863 = vpack.c.b16 %v2687, %v2679
    %v2864 = vpack.c.b16 %v2688, %v2680
    %v2865 = vpack.c.b16 %v2697, %v2689
    %v2866 = vpack.c.b16 %v2698, %v2690
    %v2867 = vpack.c.b16 %v2699, %v2691
    %v2868 = vpack.c.b16 %v2700, %v2692
    %v2869 = vpack.c.b16 %v2701, %v2693
    %v2870 = vpack.c.b16 %v2702, %v2694
    %v2871 = vpack.c.b16 %v2703, %v2695
    %v2872 = vpack.c.b16 %v2704, %v2696
    %v2873 = vpack.c.b16 %v2713, %v2705
    %v2874 = vpack.c.b16 %v2714, %v2706
    %v2875 = vpack.c.b16 %v2715, %v2707
    %v2876 = vpack.c.b16 %v2716, %v2708
    %v2877 = vpack.c.b16 %v2717, %v2709
    %v2878 = vpack.c.b16 %v2718, %v2710
    %v2879 = vpack.c.b16 %v2719, %v2711
    %v2880 = vpack.c.b16 %v2720, %v2712
    %v2881 = vpack.c.b16 %v2729, %v2721
    %v2882 = vpack.c.b16 %v2730, %v2722
    %v2883 = vpack.c.b16 %v2731, %v2723
    %v2884 = vpack.c.b16 %v2732, %v2724
    %v2885 = vpack.c.b16 %v2733, %v2725
    %v2886 = vpack.c.b16 %v2734, %v2726
    %v2887 = vpack.c.b16 %v2735, %v2727
    %v2888 = vpack.c.b16 %v2736, %v2728
    %v2889 = vpack.c.b16 %v2745, %v2737
    %v2890 = vpack.c.b16 %v2746, %v2738
    %v2891 = vpack.c.b16 %v2747, %v2739
    %v2892 = vpack.c.b16 %v2748, %v2740
    %v2893 = vpack.c.b16 %v2749, %v2741
    %v2894 = vpack.c.b16 %v2750, %v2742
    %v2895 = vpack.c.b16 %v2751, %v2743
    %v2896 = vpack.c.b16 %v2752, %v2744
    %v2897 = vpack.c.b16 %v2761, %v2753
    %v2898 = vpack.c.b16 %v2762, %v2754
    %v2899 = vpack.c.b16 %v2763, %v2755
    %v2900 = vpack.c.b16 %v2764, %v2756
    %v2901 = vpack.c.b16 %v2765, %v2757
    %v2902 = vpack.c.b16 %v2766, %v2758
    %v2903 = vpack.c.b16 %v2767, %v2759
    %v2904 = vpack.c.b16 %v2768, %v2760
    %v2905 = vpack.c.b16 %v2777, %v2769
    %v2906 = vpack.c.b16 %v2778, %v2770
    %v2907 = vpack.c.b16 %v2779, %v2771
    %v2908 = vpack.c.b16 %v2780, %v2772
    %v2909 = vpack.c.b16 %v2781, %v2773
    %v2910 = vpack.c.b16 %v2782, %v2774
    %v2911 = vpack.c.b16 %v2783, %v2775
    %v2912 = vpack.c.b16 %v2784, %v2776
    %3041 = vmatpush.bf16.msra.mxu0 %v2841
    %3042 = vmatpush.bf16.msra.mxu0 %v2833
    %3043 = vmatpush.bf16.msra.mxu0 %v2825
    %3044 = vmatpush.bf16.msra.mxu0 %v2817
    %3045 = vmatpush.bf16.msra.mxu0 %v2809
    %3046 = vmatpush.bf16.msra.mxu0 %v2801
    %3047 = vmatpush.bf16.msra.mxu0 %v2793
    %3048 = vmatpush.bf16.msra.mxu0 %v2785
    %3049 = vmatmul.bf16.gmra.mxu0 %v273
    %v3050 = vpop.f32.mrf.mxu0
    %v3051 = vadd.f32 0.0, %v3050
    %v3052 = vpop.f32.mrf.mxu0
    %3053 = vdwg.mxu0
    %3054 = vmatpush.bf16.msra.mxu0 %v2905
    %3055 = vmatpush.bf16.msra.mxu0 %v2897
    %3056 = vmatpush.bf16.msra.mxu0 %v2889
    %3057 = vmatpush.bf16.msra.mxu0 %v2881
    %3058 = vmatpush.bf16.msra.mxu0 %v2873
    %3059 = vmatpush.bf16.msra.mxu0 %v2865
    %3060 = vmatpush.bf16.msra.mxu0 %v2857
    %3061 = vmatpush.bf16.msra.mxu0 %v2849
    %3062 = vmatmul.bf16.gmra.mxu0 %v274
    %v3063 = vpop.f32.mrf.mxu0
    %v3064 = vadd.f32 %v3051, %v3063
    %v3065 = vpop.f32.mrf.mxu0
    %3066 = vdwg.mxu0
    %3067 = vmatpush.bf16.msra.mxu0 %v2842
    %3068 = vmatpush.bf16.msra.mxu0 %v2834
    %3069 = vmatpush.bf16.msra.mxu0 %v2826
    %3070 = vmatpush.bf16.msra.mxu0 %v2818
    %3071 = vmatpush.bf16.msra.mxu0 %v2810
    %3072 = vmatpush.bf16.msra.mxu0 %v2802
    %3073 = vmatpush.bf16.msra.mxu0 %v2794
    %3074 = vmatpush.bf16.msra.mxu0 %v2786
    %3075 = vmatmul.bf16.gmra.mxu0 %v273
    %v3076 = vpop.f32.mrf.mxu0
    %v3077 = vadd.f32 0.0, %v3076
    %v3078 = vpop.f32.mrf.mxu0
    %3079 = vdwg.mxu0
    %3080 = vmatpush.bf16.msra.mxu0 %v2906
    %3081 = vmatpush.bf16.msra.mxu0 %v2898
    %3082 = vmatpush.bf16.msra.mxu0 %v2890
    %3083 = vmatpush.bf16.msra.mxu0 %v2882
    %3084 = vmatpush.bf16.msra.mxu0 %v2874
    %3085 = vmatpush.bf16.msra.mxu0 %v2866
    %3086 = vmatpush.bf16.msra.mxu0 %v2858
    %3087 = vmatpush.bf16.msra.mxu0 %v2850
    %3088 = vmatmul.bf16.gmra.mxu0 %v274
    %v3089 = vpop.f32.mrf.mxu0
    %v3090 = vadd.f32 %v3077, %v3089
    %v3091 = vpop.f32.mrf.mxu0
    %3092 = vdwg.mxu0
    %3093 = vmatpush.bf16.msra.mxu0 %v2843
    %3094 = vmatpush.bf16.msra.mxu0 %v2835
    %3095 = vmatpush.bf16.msra.mxu0 %v2827
    %3096 = vmatpush.bf16.msra.mxu0 %v2819
    %3097 = vmatpush.bf16.msra.mxu0 %v2811
    %3098 = vmatpush.bf16.msra.mxu0 %v2803
    %3099 = vmatpush.bf16.msra.mxu0 %v2795
    %3100 = vmatpush.bf16.msra.mxu0 %v2787
    %3101 = vmatmul.bf16.gmra.mxu0 %v273
    %v3102 = vpop.f32.mrf.mxu0
    %v3103 = vadd.f32 0.0, %v3102
    %v3104 = vpop.f32.mrf.mxu0
    %3105 = vdwg.mxu0
    %3106 = vmatpush.bf16.msra.mxu0 %v2907
    %3107 = vmatpush.bf16.msra.mxu0 %v2899
    %3108 = vmatpush.bf16.msra.mxu0 %v2891
    %3109 = vmatpush.bf16.msra.mxu0 %v2883
    %3110 = vmatpush.bf16.msra.mxu0 %v2875
    %3111 = vmatpush.bf16.msra.mxu0 %v2867
    %3112 = vmatpush.bf16.msra.mxu0 %v2859
    %3113 = vmatpush.bf16.msra.mxu0 %v2851
    %3114 = vmatmul.bf16.gmra.mxu0 %v274
    %v3115 = vpop.f32.mrf.mxu0
    %v3116 = vadd.f32 %v3103, %v3115
    %v3117 = vpop.f32.mrf.mxu0
    %3118 = vdwg.mxu0
    %3119 = vmatpush.bf16.msra.mxu0 %v2844
    %3120 = vmatpush.bf16.msra.mxu0 %v2836
    %3121 = vmatpush.bf16.msra.mxu0 %v2828
    %3122 = vmatpush.bf16.msra.mxu0 %v2820
    %3123 = vmatpush.bf16.msra.mxu0 %v2812
    %3124 = vmatpush.bf16.msra.mxu0 %v2804
    %3125 = vmatpush.bf16.msra.mxu0 %v2796
    %3126 = vmatpush.bf16.msra.mxu0 %v2788
    %3127 = vmatmul.bf16.gmra.mxu0 %v273
    %v3128 = vpop.f32.mrf.mxu0
    %v3129 = vadd.f32 0.0, %v3128
    %v3130 = vpop.f32.mrf.mxu0
    %3131 = vdwg.mxu0
    %3132 = vmatpush.bf16.msra.mxu0 %v2908
    %3133 = vmatpush.bf16.msra.mxu0 %v2900
    %3134 = vmatpush.bf16.msra.mxu0 %v2892
    %3135 = vmatpush.bf16.msra.mxu0 %v2884
    %3136 = vmatpush.bf16.msra.mxu0 %v2876
    %3137 = vmatpush.bf16.msra.mxu0 %v2868
    %3138 = vmatpush.bf16.msra.mxu0 %v2860
    %3139 = vmatpush.bf16.msra.mxu0 %v2852
    %3140 = vmatmul.bf16.gmra.mxu0 %v274
    %v3141 = vpop.f32.mrf.mxu0
    %v3142 = vadd.f32 %v3129, %v3141
    %v3143 = vpop.f32.mrf.mxu0
    %3144 = vdwg.mxu0
    %3145 = vmatpush.bf16.msra.mxu0 %v2845
    %3146 = vmatpush.bf16.msra.mxu0 %v2837
    %3147 = vmatpush.bf16.msra.mxu0 %v2829
    %3148 = vmatpush.bf16.msra.mxu0 %v2821
    %3149 = vmatpush.bf16.msra.mxu0 %v2813
    %3150 = vmatpush.bf16.msra.mxu0 %v2805
    %3151 = vmatpush.bf16.msra.mxu0 %v2797
    %3152 = vmatpush.bf16.msra.mxu0 %v2789
    %3153 = vmatmul.bf16.gmra.mxu0 %v273
    %v3154 = vpop.f32.mrf.mxu0
    %v3155 = vadd.f32 0.0, %v3154
    %v3156 = vpop.f32.mrf.mxu0
    %3157 = vdwg.mxu0
    %3158 = vmatpush.bf16.msra.mxu0 %v2909
    %3159 = vmatpush.bf16.msra.mxu0 %v2901
    %3160 = vmatpush.bf16.msra.mxu0 %v2893
    %3161 = vmatpush.bf16.msra.mxu0 %v2885
    %3162 = vmatpush.bf16.msra.mxu0 %v2877
    %3163 = vmatpush.bf16.msra.mxu0 %v2869
    %3164 = vmatpush.bf16.msra.mxu0 %v2861
    %3165 = vmatpush.bf16.msra.mxu0 %v2853
    %3166 = vmatmul.bf16.gmra.mxu0 %v274
    %v3167 = vpop.f32.mrf.mxu0
    %v3168 = vadd.f32 %v3155, %v3167
    %v3169 = vpop.f32.mrf.mxu0
    %3170 = vdwg.mxu0
    %3171 = vmatpush.bf16.msra.mxu0 %v2846
    %3172 = vmatpush.bf16.msra.mxu0 %v2838
    %3173 = vmatpush.bf16.msra.mxu0 %v2830
    %3174 = vmatpush.bf16.msra.mxu0 %v2822
    %3175 = vmatpush.bf16.msra.mxu0 %v2814
    %3176 = vmatpush.bf16.msra.mxu0 %v2806
    %3177 = vmatpush.bf16.msra.mxu0 %v2798
    %3178 = vmatpush.bf16.msra.mxu0 %v2790
    %3179 = vmatmul.bf16.gmra.mxu0 %v273
    %v3180 = vpop.f32.mrf.mxu0
    %v3181 = vadd.f32 0.0, %v3180
    %v3182 = vpop.f32.mrf.mxu0
    %3183 = vdwg.mxu0
    %3184 = vmatpush.bf16.msra.mxu0 %v2910
    %3185 = vmatpush.bf16.msra.mxu0 %v2902
    %3186 = vmatpush.bf16.msra.mxu0 %v2894
    %3187 = vmatpush.bf16.msra.mxu0 %v2886
    %3188 = vmatpush.bf16.msra.mxu0 %v2878
    %3189 = vmatpush.bf16.msra.mxu0 %v2870
    %3190 = vmatpush.bf16.msra.mxu0 %v2862
    %3191 = vmatpush.bf16.msra.mxu0 %v2854
    %3192 = vmatmul.bf16.gmra.mxu0 %v274
    %v3193 = vpop.f32.mrf.mxu0
    %v3194 = vadd.f32 %v3181, %v3193
    %v3195 = vpop.f32.mrf.mxu0
    %3196 = vdwg.mxu0
    %3197 = vmatpush.bf16.msra.mxu0 %v2847
    %3198 = vmatpush.bf16.msra.mxu0 %v2839
    %3199 = vmatpush.bf16.msra.mxu0 %v2831
    %3200 = vmatpush.bf16.msra.mxu0 %v2823
    %3201 = vmatpush.bf16.msra.mxu0 %v2815
    %3202 = vmatpush.bf16.msra.mxu0 %v2807
    %3203 = vmatpush.bf16.msra.mxu0 %v2799
    %3204 = vmatpush.bf16.msra.mxu0 %v2791
    %3205 = vmatmul.bf16.gmra.mxu0 %v273
    %v3206 = vpop.f32.mrf.mxu0
    %v3207 = vadd.f32 0.0, %v3206
    %v3208 = vpop.f32.mrf.mxu0
    %3209 = vdwg.mxu0
    %3210 = vmatpush.bf16.msra.mxu0 %v2911
    %3211 = vmatpush.bf16.msra.mxu0 %v2903
    %3212 = vmatpush.bf16.msra.mxu0 %v2895
    %3213 = vmatpush.bf16.msra.mxu0 %v2887
    %3214 = vmatpush.bf16.msra.mxu0 %v2879
    %3215 = vmatpush.bf16.msra.mxu0 %v2871
    %3216 = vmatpush.bf16.msra.mxu0 %v2863
    %3217 = vmatpush.bf16.msra.mxu0 %v2855
    %3218 = vmatmul.bf16.gmra.mxu0 %v274
    %v3219 = vpop.f32.mrf.mxu0
    %v3220 = vadd.f32 %v3207, %v3219
    %v3221 = vpop.f32.mrf.mxu0
    %3222 = vdwg.mxu0
    %3223 = vmatpush.bf16.msra.mxu0 %v2848
    %3224 = vmatpush.bf16.msra.mxu0 %v2840
    %3225 = vmatpush.bf16.msra.mxu0 %v2832
    %3226 = vmatpush.bf16.msra.mxu0 %v2824
    %3227 = vmatpush.bf16.msra.mxu0 %v2816
    %3228 = vmatpush.bf16.msra.mxu0 %v2808
    %3229 = vmatpush.bf16.msra.mxu0 %v2800
    %3230 = vmatpush.bf16.msra.mxu0 %v2792
    %3231 = vmatmul.bf16.gmra.mxu0 %v273
    %v3232 = vpop.f32.mrf.mxu0
    %v3233 = vadd.f32 0.0, %v3232
    %v3234 = vpop.f32.mrf.mxu0
    %3235 = vdwg.mxu0
    %3236 = vmatpush.bf16.msra.mxu0 %v2912
    %3237 = vmatpush.bf16.msra.mxu0 %v2904
    %3238 = vmatpush.bf16.msra.mxu0 %v2896
    %3239 = vmatpush.bf16.msra.mxu0 %v2888
    %3240 = vmatpush.bf16.msra.mxu0 %v2880
    %3241 = vmatpush.bf16.msra.mxu0 %v2872
    %3242 = vmatpush.bf16.msra.mxu0 %v2864
    %3243 = vmatpush.bf16.msra.mxu0 %v2856
    %3244 = vmatmul.bf16.gmra.mxu0 %v274
    %v3245 = vpop.f32.mrf.mxu0
    %v3246 = vadd.f32 %v3233, %v3245
    %v3247 = vpop.f32.mrf.mxu0
    %3248 = vdwg.mxu0
    %v3249 = vadd.f32 %v2265, %v3064
    %v3250 = vadd.f32 %v2266, %v3090
    %v3251 = vadd.f32 %v2267, %v3116
    %v3252 = vadd.f32 %v2268, %v3142
    %v3253 = vadd.f32 %v2269, %v3168
    %v3254 = vadd.f32 %v2270, %v3194
    %v3255 = vadd.f32 %v2271, %v3220
    %v3256 = vadd.f32 %v2272, %v3246
    %v3257 = vxor.u32 %v1879, 2147483648
    %v3258 = vxor.u32 %v1931, 2147483648
    %v3259 = vxor.u32 %v1983, 2147483648
    %v3260 = vxor.u32 %v2035, 2147483648
    %v3261 = vxor.u32 %v2087, 2147483648
    %v3262 = vxor.u32 %v2139, 2147483648
    %v3263 = vmul.f32 %v3257, 1.442695
    %v3264 = vpow.pop %v3263
    %v3265 = vmul.f32 %v3258, 1.442695
    %v3266 = vpow.pop %v3265
    %v3267 = vmul.f32 %v3259, 1.442695
    %v3268 = vpow.pop %v3267
    %v3269 = vmul.f32 %v3260, 1.442695
    %v3270 = vpow.pop %v3269
    %v3271 = vmul.f32 %v3261, 1.442695
    %v3272 = vpow.pop %v3271
    %v3273 = vmul.f32 %v3262, 1.442695
    %v3274 = vpow.pop %v3273
    %v3275 = vadd.f32 %v3264, 1.0
    %v3276 = vadd.f32 %v3266, 1.0
    %v3277 = vadd.f32 %v3268, 1.0
    %v3278 = vadd.f32 %v3270, 1.0
    %v3279 = vadd.f32 %v3272, 1.0
    %v3280 = vadd.f32 %v3274, 1.0
    %v3281 = vrcp.pop %v3275
    %v3282 = vmul.f32 %v3275, %v3281
    %v3283 = vsub.f32 1.0, %v3282
    %v3284 = vmul.f32 %v3281, %v3283
    %v3285 = vadd.f32 %v3281, %v3284
    %vm3286 = vweird.f32 %v3275
    %vm3287 = vweird.f32 %v3281
    %vm3288 = vmor %vm3286, %vm3287
    %v3289 = vsel %vm3288, %v3281, %v3285
    %v3290 = vand.u32 2147483647, %v3275
    %vm3291 = vcmp.eq.f32.partialorder %v3290, 8.507059e+37
    %v3292 = vand.u32 %v3275, 2147483648
    %v3293 = vor.u32 1.1754944e-38, %v3292
    %v3294 = vsel %vm3291, %v3293, %v3289
    %v3295 = vmul.f32 1.0, %v3294
    %v3296 = vrcp.pop %v3276
    %v3297 = vmul.f32 %v3276, %v3296
    %v3298 = vsub.f32 1.0, %v3297
    %v3299 = vmul.f32 %v3296, %v3298
    %v3300 = vadd.f32 %v3296, %v3299
    %vm3301 = vweird.f32 %v3276
    %vm3302 = vweird.f32 %v3296
    %vm3303 = vmor %vm3301, %vm3302
    %v3304 = vsel %vm3303, %v3296, %v3300
    %v3305 = vand.u32 2147483647, %v3276
    %vm3306 = vcmp.eq.f32.partialorder %v3305, 8.507059e+37
    %v3307 = vand.u32 %v3276, 2147483648
    %v3308 = vor.u32 1.1754944e-38, %v3307
    %v3309 = vsel %vm3306, %v3308, %v3304
    %v3310 = vmul.f32 1.0, %v3309
    %v3311 = vrcp.pop %v3277
    %v3312 = vmul.f32 %v3277, %v3311
    %v3313 = vsub.f32 1.0, %v3312
    %v3314 = vmul.f32 %v3311, %v3313
    %v3315 = vadd.f32 %v3311, %v3314
    %vm3316 = vweird.f32 %v3277
    %vm3317 = vweird.f32 %v3311
    %vm3318 = vmor %vm3316, %vm3317
    %v3319 = vsel %vm3318, %v3311, %v3315
    %v3320 = vand.u32 2147483647, %v3277
    %vm3321 = vcmp.eq.f32.partialorder %v3320, 8.507059e+37
    %v3322 = vand.u32 %v3277, 2147483648
    %v3323 = vor.u32 1.1754944e-38, %v3322
    %v3324 = vsel %vm3321, %v3323, %v3319
    %v3325 = vmul.f32 1.0, %v3324
    %v3326 = vrcp.pop %v3278
    %v3327 = vmul.f32 %v3278, %v3326
    %v3328 = vsub.f32 1.0, %v3327
    %v3329 = vmul.f32 %v3326, %v3328
    %v3330 = vadd.f32 %v3326, %v3329
    %vm3331 = vweird.f32 %v3278
    %vm3332 = vweird.f32 %v3326
    %vm3333 = vmor %vm3331, %vm3332
    %v3334 = vsel %vm3333, %v3326, %v3330
    %v3335 = vand.u32 2147483647, %v3278
    %vm3336 = vcmp.eq.f32.partialorder %v3335, 8.507059e+37
    %v3337 = vand.u32 %v3278, 2147483648
    %v3338 = vor.u32 1.1754944e-38, %v3337
    %v3339 = vsel %vm3336, %v3338, %v3334
    %v3340 = vmul.f32 1.0, %v3339
    %v3341 = vrcp.pop %v3279
    %v3342 = vmul.f32 %v3279, %v3341
    %v3343 = vsub.f32 1.0, %v3342
    %v3344 = vmul.f32 %v3341, %v3343
    %v3345 = vadd.f32 %v3341, %v3344
    %vm3346 = vweird.f32 %v3279
    %vm3347 = vweird.f32 %v3341
    %vm3348 = vmor %vm3346, %vm3347
    %v3349 = vsel %vm3348, %v3341, %v3345
    %v3350 = vand.u32 2147483647, %v3279
    %vm3351 = vcmp.eq.f32.partialorder %v3350, 8.507059e+37
    %v3352 = vand.u32 %v3279, 2147483648
    %v3353 = vor.u32 1.1754944e-38, %v3352
    %v3354 = vsel %vm3351, %v3353, %v3349
    %v3355 = vmul.f32 1.0, %v3354
    %v3356 = vrcp.pop %v3280
    %v3357 = vmul.f32 %v3280, %v3356
    %v3358 = vsub.f32 1.0, %v3357
    %v3359 = vmul.f32 %v3356, %v3358
    %v3360 = vadd.f32 %v3356, %v3359
    %vm3361 = vweird.f32 %v3280
    %vm3362 = vweird.f32 %v3356
    %vm3363 = vmor %vm3361, %vm3362
    %v3364 = vsel %vm3363, %v3356, %v3360
    %v3365 = vand.u32 2147483647, %v3280
    %vm3366 = vcmp.eq.f32.partialorder %v3365, 8.507059e+37
    %v3367 = vand.u32 %v3280, 2147483648
    %v3368 = vor.u32 1.1754944e-38, %v3367
    %v3369 = vsel %vm3366, %v3368, %v3364
    %v3370 = vmul.f32 1.0, %v3369
    %v3371 = vtanh.pop %v2191
    %v3372 = vtanh.pop %v2243
    %v3373 = vmul.f32 %v3325, 0.0
    %v3374 = vmul.f32 %v3340, 0.0
    %v3375 = vmul.f32 %v3295, %v3371
    %v3376 = vmul.f32 %v3310, %v3372
    %v3377 = vadd.f32 %v3373, %v3375
    %v3378 = vadd.f32 %v3374, %v3376
    %v3379 = vtanh.pop %v3377
    %v3380 = vtanh.pop %v3378
    %v3381 = vmul.f32 %v3355, %v3379
    %v3382 = vmul.f32 %v3370, %v3380
    %v3383 = vpack.c.bf16 %v3382, %v3381
    %v3384 = vxor.u32 %v3249, 2147483648
    %v3385 = vxor.u32 %v3250, 2147483648
    %v3386 = vxor.u32 %v3251, 2147483648
    %v3387 = vxor.u32 %v3252, 2147483648
    %v3388 = vxor.u32 %v3253, 2147483648
    %v3389 = vxor.u32 %v3254, 2147483648
    %v3390 = vmul.f32 %v3384, 1.442695
    %v3391 = vpow.pop %v3390
    %v3392 = vmul.f32 %v3385, 1.442695
    %v3393 = vpow.pop %v3392
    %v3394 = vmul.f32 %v3386, 1.442695
    %v3395 = vpow.pop %v3394
    %v3396 = vmul.f32 %v3387, 1.442695
    %v3397 = vpow.pop %v3396
    %v3398 = vmul.f32 %v3388, 1.442695
    %v3399 = vpow.pop %v3398
    %v3400 = vmul.f32 %v3389, 1.442695
    %v3401 = vpow.pop %v3400
    %v3402 = vadd.f32 %v3391, 1.0
    %v3403 = vadd.f32 %v3393, 1.0
    %v3404 = vadd.f32 %v3395, 1.0
    %v3405 = vadd.f32 %v3397, 1.0
    %v3406 = vadd.f32 %v3399, 1.0
    %v3407 = vadd.f32 %v3401, 1.0
    %v3408 = vrcp.pop %v3402
    %v3409 = vmul.f32 %v3402, %v3408
    %v3410 = vsub.f32 1.0, %v3409
    %v3411 = vmul.f32 %v3408, %v3410
    %v3412 = vadd.f32 %v3408, %v3411
    %vm3413 = vweird.f32 %v3402
    %vm3414 = vweird.f32 %v3408
    %vm3415 = vmor %vm3413, %vm3414
    %v3416 = vsel %vm3415, %v3408, %v3412
    %v3417 = vand.u32 2147483647, %v3402
    %vm3418 = vcmp.eq.f32.partialorder %v3417, 8.507059e+37
    %v3419 = vand.u32 %v3402, 2147483648
    %v3420 = vor.u32 1.1754944e-38, %v3419
    %v3421 = vsel %vm3418, %v3420, %v3416
    %v3422 = vmul.f32 1.0, %v3421
    %v3423 = vrcp.pop %v3403
    %v3424 = vmul.f32 %v3403, %v3423
    %v3425 = vsub.f32 1.0, %v3424
    %v3426 = vmul.f32 %v3423, %v3425
    %v3427 = vadd.f32 %v3423, %v3426
    %vm3428 = vweird.f32 %v3403
    %vm3429 = vweird.f32 %v3423
    %vm3430 = vmor %vm3428, %vm3429
    %v3431 = vsel %vm3430, %v3423, %v3427
    %v3432 = vand.u32 2147483647, %v3403
    %vm3433 = vcmp.eq.f32.partialorder %v3432, 8.507059e+37
    %v3434 = vand.u32 %v3403, 2147483648
    %v3435 = vor.u32 1.1754944e-38, %v3434
    %v3436 = vsel %vm3433, %v3435, %v3431
    %v3437 = vmul.f32 1.0, %v3436
    %v3438 = vrcp.pop %v3404
    %v3439 = vmul.f32 %v3404, %v3438
    %v3440 = vsub.f32 1.0, %v3439
    %v3441 = vmul.f32 %v3438, %v3440
    %v3442 = vadd.f32 %v3438, %v3441
    %vm3443 = vweird.f32 %v3404
    %vm3444 = vweird.f32 %v3438
    %vm3445 = vmor %vm3443, %vm3444
    %v3446 = vsel %vm3445, %v3438, %v3442
    %v3447 = vand.u32 2147483647, %v3404
    %vm3448 = vcmp.eq.f32.partialorder %v3447, 8.507059e+37
    %v3449 = vand.u32 %v3404, 2147483648
    %v3450 = vor.u32 1.1754944e-38, %v3449
    %v3451 = vsel %vm3448, %v3450, %v3446
    %v3452 = vmul.f32 1.0, %v3451
    %v3453 = vrcp.pop %v3405
    %v3454 = vmul.f32 %v3405, %v3453
    %v3455 = vsub.f32 1.0, %v3454
    %v3456 = vmul.f32 %v3453, %v3455
    %v3457 = vadd.f32 %v3453, %v3456
    %vm3458 = vweird.f32 %v3405
    %vm3459 = vweird.f32 %v3453
    %vm3460 = vmor %vm3458, %vm3459
    %v3461 = vsel %vm3460, %v3453, %v3457
    %v3462 = vand.u32 2147483647, %v3405
    %vm3463 = vcmp.eq.f32.partialorder %v3462, 8.507059e+37
    %v3464 = vand.u32 %v3405, 2147483648
    %v3465 = vor.u32 1.1754944e-38, %v3464
    %v3466 = vsel %vm3463, %v3465, %v3461
    %v3467 = vmul.f32 1.0, %v3466
    %v3468 = vrcp.pop %v3406
    %v3469 = vmul.f32 %v3406, %v3468
    %v3470 = vsub.f32 1.0, %v3469
    %v3471 = vmul.f32 %v3468, %v3470
    %v3472 = vadd.f32 %v3468, %v3471
    %vm3473 = vweird.f32 %v3406
    %vm3474 = vweird.f32 %v3468
    %vm3475 = vmor %vm3473, %vm3474
    %v3476 = vsel %vm3475, %v3468, %v3472
    %v3477 = vand.u32 2147483647, %v3406
    %vm3478 = vcmp.eq.f32.partialorder %v3477, 8.507059e+37
    %v3479 = vand.u32 %v3406, 2147483648
    %v3480 = vor.u32 1.1754944e-38, %v3479
    %v3481 = vsel %vm3478, %v3480, %v3476
    %v3482 = vmul.f32 1.0, %v3481
    %v3483 = vrcp.pop %v3407
    %v3484 = vmul.f32 %v3407, %v3483
    %v3485 = vsub.f32 1.0, %v3484
    %v3486 = vmul.f32 %v3483, %v3485
    %v3487 = vadd.f32 %v3483, %v3486
    %vm3488 = vweird.f32 %v3407
    %vm3489 = vweird.f32 %v3483
    %vm3490 = vmor %vm3488, %vm3489
    %v3491 = vsel %vm3490, %v3483, %v3487
    %v3492 = vand.u32 2147483647, %v3407
    %vm3493 = vcmp.eq.f32.partialorder %v3492, 8.507059e+37
    %v3494 = vand.u32 %v3407, 2147483648
    %v3495 = vor.u32 1.1754944e-38, %v3494
    %v3496 = vsel %vm3493, %v3495, %v3491
    %v3497 = vmul.f32 1.0, %v3496
    %v3498 = vtanh.pop %v3255
    %v3499 = vtanh.pop %v3256
    %v3500 = vmul.f32 %v3452, %v259
    %v3501 = vmul.f32 %v3467, %v260
    %v3502 = vmul.f32 %v3422, %v3498
    %v3503 = vmul.f32 %v3437, %v3499
    %v3504 = vadd.f32 %v3500, %v3502
    %v3505 = vadd.f32 %v3501, %v3503
    %v3506 = vtanh.pop %v3504
    %v3507 = vtanh.pop %v3505
    %v3508 = vmul.f32 %v3482, %v3506
    %v3509 = vmul.f32 %v3497, %v3507
    %v3510 = vpack.c.bf16 %v3509, %v3508
    %v3512 = vunpack.c.l.b16 %v3510
    %v3513 = vunpack.c.h.b16 %v3510
    %v3514 = vpack.c.b16 %v3512, %v3512
    %v3515 = vpack.c.b16 %v3513, %v3513
    %v3519 = vunpack.c.l.b16 %v3383
    %v3520 = vunpack.c.h.b16 %v3383
    %v3521 = vpack.c.b16 %v3519, %v3519
    %v3522 = vpack.c.b16 %v3520, %v3520
    %v3525 = vld [vmem:[#allocation3] sm:$0xff]
    %v3526 = vld [vmem:[#allocation3 + $0x8] sm:$0xff]
    %v3527 = vld [vmem:[#allocation3 + $0x10] sm:$0xff]
    %v3528 = vld [vmem:[#allocation3 + $0x18] sm:$0xff]
    %v3529 = vld [vmem:[#allocation3 + $0x20] sm:$0xff]
    %v3530 = vld [vmem:[#allocation3 + $0x28] sm:$0xff]
    %v3531 = vld [vmem:[#allocation3 + $0x30] sm:$0xff]
    %v3532 = vld [vmem:[#allocation3 + $0x38] sm:$0xff]
    %v3533 = vld [vmem:[#allocation3 + $0x40] sm:$0xff]
    %v3534 = vld [vmem:[#allocation3 + $0x48] sm:$0xff]
    %v3535 = vld [vmem:[#allocation3 + $0x50] sm:$0xff]
    %v3536 = vld [vmem:[#allocation3 + $0x58] sm:$0xff]
    %v3537 = vld [vmem:[#allocation3 + $0x60] sm:$0xff]
    %v3538 = vld [vmem:[#allocation3 + $0x68] sm:$0xff]
    %v3539 = vld [vmem:[#allocation3 + $0x70] sm:$0xff]
    %v3540 = vld [vmem:[#allocation3 + $0x78] sm:$0xff]
    %v3541 = vld [vmem:[#allocation3 + $0x80] sm:$0xff]
    %v3542 = vld [vmem:[#allocation3 + $0x88] sm:$0xff]
    %v3543 = vld [vmem:[#allocation3 + $0x90] sm:$0xff]
    %v3544 = vld [vmem:[#allocation3 + $0x98] sm:$0xff]
    %v3545 = vld [vmem:[#allocation3 + $0xa0] sm:$0xff]
    %v3546 = vld [vmem:[#allocation3 + $0xa8] sm:$0xff]
    %v3547 = vld [vmem:[#allocation3 + $0xb0] sm:$0xff]
    %v3548 = vld [vmem:[#allocation3 + $0xb8] sm:$0xff]
    %v3549 = vld [vmem:[#allocation3 + $0xc0] sm:$0xff]
    %v3550 = vld [vmem:[#allocation3 + $0xc8] sm:$0xff]
    %v3551 = vld [vmem:[#allocation3 + $0xd0] sm:$0xff]
    %v3552 = vld [vmem:[#allocation3 + $0xd8] sm:$0xff]
    %v3553 = vld [vmem:[#allocation3 + $0xe0] sm:$0xff]
    %v3554 = vld [vmem:[#allocation3 + $0xe8] sm:$0xff]
    %v3555 = vld [vmem:[#allocation3 + $0xf0] sm:$0xff]
    %v3556 = vld [vmem:[#allocation3 + $0xf8] sm:$0xff]
    %v3557 = vld [vmem:[#allocation3 + $0x100] sm:$0xff]
    %v3558 = vld [vmem:[#allocation3 + $0x108] sm:$0xff]
    %v3559 = vld [vmem:[#allocation3 + $0x110] sm:$0xff]
    %v3560 = vld [vmem:[#allocation3 + $0x118] sm:$0xff]
    %v3561 = vld [vmem:[#allocation3 + $0x120] sm:$0xff]
    %v3562 = vld [vmem:[#allocation3 + $0x128] sm:$0xff]
    %v3563 = vld [vmem:[#allocation3 + $0x130] sm:$0xff]
    %v3564 = vld [vmem:[#allocation3 + $0x138] sm:$0xff]
    %v3565 = vld [vmem:[#allocation3 + $0x140] sm:$0xff]
    %v3566 = vld [vmem:[#allocation3 + $0x148] sm:$0xff]
    %v3567 = vld [vmem:[#allocation3 + $0x150] sm:$0xff]
    %v3568 = vld [vmem:[#allocation3 + $0x158] sm:$0xff]
    %v3569 = vld [vmem:[#allocation3 + $0x160] sm:$0xff]
    %v3570 = vld [vmem:[#allocation3 + $0x168] sm:$0xff]
    %v3571 = vld [vmem:[#allocation3 + $0x170] sm:$0xff]
    %v3572 = vld [vmem:[#allocation3 + $0x178] sm:$0xff]
    %v3573 = vld [vmem:[#allocation3 + $0x180] sm:$0xff]
    %v3574 = vld [vmem:[#allocation3 + $0x188] sm:$0xff]
    %v3575 = vld [vmem:[#allocation3 + $0x190] sm:$0xff]
    %v3576 = vld [vmem:[#allocation3 + $0x198] sm:$0xff]
    %v3577 = vld [vmem:[#allocation3 + $0x1a0] sm:$0xff]
    %v3578 = vld [vmem:[#allocation3 + $0x1a8] sm:$0xff]
    %v3579 = vld [vmem:[#allocation3 + $0x1b0] sm:$0xff]
    %v3580 = vld [vmem:[#allocation3 + $0x1b8] sm:$0xff]
    %v3581 = vld [vmem:[#allocation3 + $0x1c0] sm:$0xff]
    %v3582 = vld [vmem:[#allocation3 + $0x1c8] sm:$0xff]
    %v3583 = vld [vmem:[#allocation3 + $0x1d0] sm:$0xff]
    %v3584 = vld [vmem:[#allocation3 + $0x1d8] sm:$0xff]
    %v3585 = vld [vmem:[#allocation3 + $0x1e0] sm:$0xff]
    %v3586 = vld [vmem:[#allocation3 + $0x1e8] sm:$0xff]
    %v3587 = vld [vmem:[#allocation3 + $0x1f0] sm:$0xff]
    %v3588 = vld [vmem:[#allocation3 + $0x1f8] sm:$0xff]
    %v3589 = vld [vmem:[#allocation3 + $0x200] sm:$0xff]
    %v3590 = vld [vmem:[#allocation3 + $0x208] sm:$0xff]
    %v3591 = vld [vmem:[#allocation3 + $0x210] sm:$0xff]
    %v3592 = vld [vmem:[#allocation3 + $0x218] sm:$0xff]
    %v3593 = vld [vmem:[#allocation3 + $0x220] sm:$0xff]
    %v3594 = vld [vmem:[#allocation3 + $0x228] sm:$0xff]
    %v3595 = vld [vmem:[#allocation3 + $0x230] sm:$0xff]
    %v3596 = vld [vmem:[#allocation3 + $0x238] sm:$0xff]
    %v3597 = vld [vmem:[#allocation3 + $0x240] sm:$0xff]
    %v3598 = vld [vmem:[#allocation3 + $0x248] sm:$0xff]
    %v3599 = vld [vmem:[#allocation3 + $0x250] sm:$0xff]
    %v3600 = vld [vmem:[#allocation3 + $0x258] sm:$0xff]
    %v3601 = vld [vmem:[#allocation3 + $0x260] sm:$0xff]
    %v3602 = vld [vmem:[#allocation3 + $0x268] sm:$0xff]
    %v3603 = vld [vmem:[#allocation3 + $0x270] sm:$0xff]
    %v3604 = vld [vmem:[#allocation3 + $0x278] sm:$0xff]
    %v3605 = vld [vmem:[#allocation3 + $0x280] sm:$0xff]
    %v3606 = vld [vmem:[#allocation3 + $0x288] sm:$0xff]
    %v3607 = vld [vmem:[#allocation3 + $0x290] sm:$0xff]
    %v3608 = vld [vmem:[#allocation3 + $0x298] sm:$0xff]
    %v3609 = vld [vmem:[#allocation3 + $0x2a0] sm:$0xff]
    %v3610 = vld [vmem:[#allocation3 + $0x2a8] sm:$0xff]
    %v3611 = vld [vmem:[#allocation3 + $0x2b0] sm:$0xff]
    %v3612 = vld [vmem:[#allocation3 + $0x2b8] sm:$0xff]
    %v3613 = vld [vmem:[#allocation3 + $0x2c0] sm:$0xff]
    %v3614 = vld [vmem:[#allocation3 + $0x2c8] sm:$0xff]
    %v3615 = vld [vmem:[#allocation3 + $0x2d0] sm:$0xff]
    %v3616 = vld [vmem:[#allocation3 + $0x2d8] sm:$0xff]
    %v3617 = vld [vmem:[#allocation3 + $0x2e0] sm:$0xff]
    %v3618 = vld [vmem:[#allocation3 + $0x2e8] sm:$0xff]
    %v3619 = vld [vmem:[#allocation3 + $0x2f0] sm:$0xff]
    %v3620 = vld [vmem:[#allocation3 + $0x2f8] sm:$0xff]
    %v3621 = vld [vmem:[#allocation3 + $0x300] sm:$0xff]
    %v3622 = vld [vmem:[#allocation3 + $0x308] sm:$0xff]
    %v3623 = vld [vmem:[#allocation3 + $0x310] sm:$0xff]
    %v3624 = vld [vmem:[#allocation3 + $0x318] sm:$0xff]
    %v3625 = vld [vmem:[#allocation3 + $0x320] sm:$0xff]
    %v3626 = vld [vmem:[#allocation3 + $0x328] sm:$0xff]
    %v3627 = vld [vmem:[#allocation3 + $0x330] sm:$0xff]
    %v3628 = vld [vmem:[#allocation3 + $0x338] sm:$0xff]
    %v3629 = vld [vmem:[#allocation3 + $0x340] sm:$0xff]
    %v3630 = vld [vmem:[#allocation3 + $0x348] sm:$0xff]
    %v3631 = vld [vmem:[#allocation3 + $0x350] sm:$0xff]
    %v3632 = vld [vmem:[#allocation3 + $0x358] sm:$0xff]
    %v3633 = vld [vmem:[#allocation3 + $0x360] sm:$0xff]
    %v3634 = vld [vmem:[#allocation3 + $0x368] sm:$0xff]
    %v3635 = vld [vmem:[#allocation3 + $0x370] sm:$0xff]
    %v3636 = vld [vmem:[#allocation3 + $0x378] sm:$0xff]
    %v3637 = vld [vmem:[#allocation3 + $0x380] sm:$0xff]
    %v3638 = vld [vmem:[#allocation3 + $0x388] sm:$0xff]
    %v3639 = vld [vmem:[#allocation3 + $0x390] sm:$0xff]
    %v3640 = vld [vmem:[#allocation3 + $0x398] sm:$0xff]
    %v3641 = vld [vmem:[#allocation3 + $0x3a0] sm:$0xff]
    %v3642 = vld [vmem:[#allocation3 + $0x3a8] sm:$0xff]
    %v3643 = vld [vmem:[#allocation3 + $0x3b0] sm:$0xff]
    %v3644 = vld [vmem:[#allocation3 + $0x3b8] sm:$0xff]
    %v3645 = vld [vmem:[#allocation3 + $0x3c0] sm:$0xff]
    %v3646 = vld [vmem:[#allocation3 + $0x3c8] sm:$0xff]
    %v3647 = vld [vmem:[#allocation3 + $0x3d0] sm:$0xff]
    %v3648 = vld [vmem:[#allocation3 + $0x3d8] sm:$0xff]
    %v3649 = vld [vmem:[#allocation3 + $0x3e0] sm:$0xff]
    %v3650 = vld [vmem:[#allocation3 + $0x3e8] sm:$0xff]
    %v3651 = vld [vmem:[#allocation3 + $0x3f0] sm:$0xff]
    %v3652 = vld [vmem:[#allocation3 + $0x3f8] sm:$0xff]
    %v3653 = vld [vmem:[#allocation3 + $0x400] sm:$0xff]
    %v3654 = vld [vmem:[#allocation3 + $0x408] sm:$0xff]
    %v3655 = vld [vmem:[#allocation3 + $0x410] sm:$0xff]
    %v3656 = vld [vmem:[#allocation3 + $0x418] sm:$0xff]
    %v3657 = vld [vmem:[#allocation3 + $0x420] sm:$0xff]
    %v3658 = vld [vmem:[#allocation3 + $0x428] sm:$0xff]
    %v3659 = vld [vmem:[#allocation3 + $0x430] sm:$0xff]
    %v3660 = vld [vmem:[#allocation3 + $0x438] sm:$0xff]
    %v3661 = vld [vmem:[#allocation3 + $0x440] sm:$0xff]
    %v3662 = vld [vmem:[#allocation3 + $0x448] sm:$0xff]
    %v3663 = vld [vmem:[#allocation3 + $0x450] sm:$0xff]
    %v3664 = vld [vmem:[#allocation3 + $0x458] sm:$0xff]
    %v3665 = vld [vmem:[#allocation3 + $0x460] sm:$0xff]
    %v3666 = vld [vmem:[#allocation3 + $0x468] sm:$0xff]
    %v3667 = vld [vmem:[#allocation3 + $0x470] sm:$0xff]
    %v3668 = vld [vmem:[#allocation3 + $0x478] sm:$0xff]
    %v3669 = vld [vmem:[#allocation3 + $0x480] sm:$0xff]
    %v3670 = vld [vmem:[#allocation3 + $0x488] sm:$0xff]
    %v3671 = vld [vmem:[#allocation3 + $0x490] sm:$0xff]
    %v3672 = vld [vmem:[#allocation3 + $0x498] sm:$0xff]
    %v3673 = vld [vmem:[#allocation3 + $0x4a0] sm:$0xff]
    %v3674 = vld [vmem:[#allocation3 + $0x4a8] sm:$0xff]
    %v3675 = vld [vmem:[#allocation3 + $0x4b0] sm:$0xff]
    %v3676 = vld [vmem:[#allocation3 + $0x4b8] sm:$0xff]
    %v3677 = vld [vmem:[#allocation3 + $0x4c0] sm:$0xff]
    %v3678 = vld [vmem:[#allocation3 + $0x4c8] sm:$0xff]
    %v3679 = vld [vmem:[#allocation3 + $0x4d0] sm:$0xff]
    %v3680 = vld [vmem:[#allocation3 + $0x4d8] sm:$0xff]
    %v3681 = vld [vmem:[#allocation3 + $0x4e0] sm:$0xff]
    %v3682 = vld [vmem:[#allocation3 + $0x4e8] sm:$0xff]
    %v3683 = vld [vmem:[#allocation3 + $0x4f0] sm:$0xff]
    %v3684 = vld [vmem:[#allocation3 + $0x4f8] sm:$0xff]
    %v3685 = vld [vmem:[#allocation3 + $0x500] sm:$0xff]
    %v3686 = vld [vmem:[#allocation3 + $0x508] sm:$0xff]
    %v3687 = vld [vmem:[#allocation3 + $0x510] sm:$0xff]
    %v3688 = vld [vmem:[#allocation3 + $0x518] sm:$0xff]
    %v3689 = vld [vmem:[#allocation3 + $0x520] sm:$0xff]
    %v3690 = vld [vmem:[#allocation3 + $0x528] sm:$0xff]
    %v3691 = vld [vmem:[#allocation3 + $0x530] sm:$0xff]
    %v3692 = vld [vmem:[#allocation3 + $0x538] sm:$0xff]
    %v3693 = vld [vmem:[#allocation3 + $0x540] sm:$0xff]
    %v3694 = vld [vmem:[#allocation3 + $0x548] sm:$0xff]
    %v3695 = vld [vmem:[#allocation3 + $0x550] sm:$0xff]
    %v3696 = vld [vmem:[#allocation3 + $0x558] sm:$0xff]
    %v3697 = vld [vmem:[#allocation3 + $0x560] sm:$0xff]
    %v3698 = vld [vmem:[#allocation3 + $0x568] sm:$0xff]
    %v3699 = vld [vmem:[#allocation3 + $0x570] sm:$0xff]
    %v3700 = vld [vmem:[#allocation3 + $0x578] sm:$0xff]
    %v3701 = vld [vmem:[#allocation3 + $0x580] sm:$0xff]
    %v3702 = vld [vmem:[#allocation3 + $0x588] sm:$0xff]
    %v3703 = vld [vmem:[#allocation3 + $0x590] sm:$0xff]
    %v3704 = vld [vmem:[#allocation3 + $0x598] sm:$0xff]
    %v3705 = vld [vmem:[#allocation3 + $0x5a0] sm:$0xff]
    %v3706 = vld [vmem:[#allocation3 + $0x5a8] sm:$0xff]
    %v3707 = vld [vmem:[#allocation3 + $0x5b0] sm:$0xff]
    %v3708 = vld [vmem:[#allocation3 + $0x5b8] sm:$0xff]
    %v3709 = vld [vmem:[#allocation3 + $0x5c0] sm:$0xff]
    %v3710 = vld [vmem:[#allocation3 + $0x5c8] sm:$0xff]
    %v3711 = vld [vmem:[#allocation3 + $0x5d0] sm:$0xff]
    %v3712 = vld [vmem:[#allocation3 + $0x5d8] sm:$0xff]
    %v3713 = vld [vmem:[#allocation3 + $0x5e0] sm:$0xff]
    %v3714 = vld [vmem:[#allocation3 + $0x5e8] sm:$0xff]
    %v3715 = vld [vmem:[#allocation3 + $0x5f0] sm:$0xff]
    %v3716 = vld [vmem:[#allocation3 + $0x5f8] sm:$0xff]
    %v3717 = vld [vmem:[#allocation3 + $0x600] sm:$0xff]
    %v3718 = vld [vmem:[#allocation3 + $0x608] sm:$0xff]
    %v3719 = vld [vmem:[#allocation3 + $0x610] sm:$0xff]
    %v3720 = vld [vmem:[#allocation3 + $0x618] sm:$0xff]
    %v3721 = vld [vmem:[#allocation3 + $0x620] sm:$0xff]
    %v3722 = vld [vmem:[#allocation3 + $0x628] sm:$0xff]
    %v3723 = vld [vmem:[#allocation3 + $0x630] sm:$0xff]
    %v3724 = vld [vmem:[#allocation3 + $0x638] sm:$0xff]
    %v3725 = vld [vmem:[#allocation3 + $0x640] sm:$0xff]
    %v3726 = vld [vmem:[#allocation3 + $0x648] sm:$0xff]
    %v3727 = vld [vmem:[#allocation3 + $0x650] sm:$0xff]
    %v3728 = vld [vmem:[#allocation3 + $0x658] sm:$0xff]
    %v3729 = vld [vmem:[#allocation3 + $0x660] sm:$0xff]
    %v3730 = vld [vmem:[#allocation3 + $0x668] sm:$0xff]
    %v3731 = vld [vmem:[#allocation3 + $0x670] sm:$0xff]
    %v3732 = vld [vmem:[#allocation3 + $0x678] sm:$0xff]
    %v3733 = vld [vmem:[#allocation3 + $0x680] sm:$0xff]
    %v3734 = vld [vmem:[#allocation3 + $0x688] sm:$0xff]
    %v3735 = vld [vmem:[#allocation3 + $0x690] sm:$0xff]
    %v3736 = vld [vmem:[#allocation3 + $0x698] sm:$0xff]
    %v3737 = vld [vmem:[#allocation3 + $0x6a0] sm:$0xff]
    %v3738 = vld [vmem:[#allocation3 + $0x6a8] sm:$0xff]
    %v3739 = vld [vmem:[#allocation3 + $0x6b0] sm:$0xff]
    %v3740 = vld [vmem:[#allocation3 + $0x6b8] sm:$0xff]
    %v3741 = vld [vmem:[#allocation3 + $0x6c0] sm:$0xff]
    %v3742 = vld [vmem:[#allocation3 + $0x6c8] sm:$0xff]
    %v3743 = vld [vmem:[#allocation3 + $0x6d0] sm:$0xff]
    %v3744 = vld [vmem:[#allocation3 + $0x6d8] sm:$0xff]
    %v3745 = vld [vmem:[#allocation3 + $0x6e0] sm:$0xff]
    %v3746 = vld [vmem:[#allocation3 + $0x6e8] sm:$0xff]
    %v3747 = vld [vmem:[#allocation3 + $0x6f0] sm:$0xff]
    %v3748 = vld [vmem:[#allocation3 + $0x6f8] sm:$0xff]
    %v3749 = vld [vmem:[#allocation3 + $0x700] sm:$0xff]
    %v3750 = vld [vmem:[#allocation3 + $0x708] sm:$0xff]
    %v3751 = vld [vmem:[#allocation3 + $0x710] sm:$0xff]
    %v3752 = vld [vmem:[#allocation3 + $0x718] sm:$0xff]
    %v3753 = vld [vmem:[#allocation3 + $0x720] sm:$0xff]
    %v3754 = vld [vmem:[#allocation3 + $0x728] sm:$0xff]
    %v3755 = vld [vmem:[#allocation3 + $0x730] sm:$0xff]
    %v3756 = vld [vmem:[#allocation3 + $0x738] sm:$0xff]
    %v3757 = vld [vmem:[#allocation3 + $0x740] sm:$0xff]
    %v3758 = vld [vmem:[#allocation3 + $0x748] sm:$0xff]
    %v3759 = vld [vmem:[#allocation3 + $0x750] sm:$0xff]
    %v3760 = vld [vmem:[#allocation3 + $0x758] sm:$0xff]
    %v3761 = vld [vmem:[#allocation3 + $0x760] sm:$0xff]
    %v3762 = vld [vmem:[#allocation3 + $0x768] sm:$0xff]
    %v3763 = vld [vmem:[#allocation3 + $0x770] sm:$0xff]
    %v3764 = vld [vmem:[#allocation3 + $0x778] sm:$0xff]
    %v3765 = vld [vmem:[#allocation3 + $0x780] sm:$0xff]
    %v3766 = vld [vmem:[#allocation3 + $0x788] sm:$0xff]
    %v3767 = vld [vmem:[#allocation3 + $0x790] sm:$0xff]
    %v3768 = vld [vmem:[#allocation3 + $0x798] sm:$0xff]
    %v3769 = vld [vmem:[#allocation3 + $0x7a0] sm:$0xff]
    %v3770 = vld [vmem:[#allocation3 + $0x7a8] sm:$0xff]
    %v3771 = vld [vmem:[#allocation3 + $0x7b0] sm:$0xff]
    %v3772 = vld [vmem:[#allocation3 + $0x7b8] sm:$0xff]
    %v3773 = vld [vmem:[#allocation3 + $0x7c0] sm:$0xff]
    %v3774 = vld [vmem:[#allocation3 + $0x7c8] sm:$0xff]
    %v3775 = vld [vmem:[#allocation3 + $0x7d0] sm:$0xff]
    %v3776 = vld [vmem:[#allocation3 + $0x7d8] sm:$0xff]
    %v3777 = vld [vmem:[#allocation3 + $0x7e0] sm:$0xff]
    %v3778 = vld [vmem:[#allocation3 + $0x7e8] sm:$0xff]
    %v3779 = vld [vmem:[#allocation3 + $0x7f0] sm:$0xff]
    %v3780 = vld [vmem:[#allocation3 + $0x7f8] sm:$0xff]
    %v4037 = vunpack.c.l.b16 %v3525
    %v4038 = vunpack.c.h.b16 %v3525
    %v4039 = vunpack.c.l.b16 %v3526
    %v4040 = vunpack.c.h.b16 %v3526
    %v4041 = vunpack.c.l.b16 %v3527
    %v4042 = vunpack.c.h.b16 %v3527
    %v4043 = vunpack.c.l.b16 %v3528
    %v4044 = vunpack.c.h.b16 %v3528
    %v4045 = vunpack.c.l.b16 %v3529
    %v4046 = vunpack.c.h.b16 %v3529
    %v4047 = vunpack.c.l.b16 %v3530
    %v4048 = vunpack.c.h.b16 %v3530
    %v4049 = vunpack.c.l.b16 %v3531
    %v4050 = vunpack.c.h.b16 %v3531
    %v4051 = vunpack.c.l.b16 %v3532
    %v4052 = vunpack.c.h.b16 %v3532
    %v4053 = vunpack.c.l.b16 %v3533
    %v4054 = vunpack.c.h.b16 %v3533
    %v4055 = vunpack.c.l.b16 %v3534
    %v4056 = vunpack.c.h.b16 %v3534
    %v4057 = vunpack.c.l.b16 %v3535
    %v4058 = vunpack.c.h.b16 %v3535
    %v4059 = vunpack.c.l.b16 %v3536
    %v4060 = vunpack.c.h.b16 %v3536
    %v4061 = vunpack.c.l.b16 %v3537
    %v4062 = vunpack.c.h.b16 %v3537
    %v4063 = vunpack.c.l.b16 %v3538
    %v4064 = vunpack.c.h.b16 %v3538
    %v4065 = vunpack.c.l.b16 %v3539
    %v4066 = vunpack.c.h.b16 %v3539
    %v4067 = vunpack.c.l.b16 %v3540
    %v4068 = vunpack.c.h.b16 %v3540
    %v4069 = vunpack.c.l.b16 %v3541
    %v4070 = vunpack.c.h.b16 %v3541
    %v4071 = vunpack.c.l.b16 %v3542
    %v4072 = vunpack.c.h.b16 %v3542
    %v4073 = vunpack.c.l.b16 %v3543
    %v4074 = vunpack.c.h.b16 %v3543
    %v4075 = vunpack.c.l.b16 %v3544
    %v4076 = vunpack.c.h.b16 %v3544
    %v4077 = vunpack.c.l.b16 %v3545
    %v4078 = vunpack.c.h.b16 %v3545
    %v4079 = vunpack.c.l.b16 %v3546
    %v4080 = vunpack.c.h.b16 %v3546
    %v4081 = vunpack.c.l.b16 %v3547
    %v4082 = vunpack.c.h.b16 %v3547
    %v4083 = vunpack.c.l.b16 %v3548
    %v4084 = vunpack.c.h.b16 %v3548
    %v4085 = vunpack.c.l.b16 %v3549
    %v4086 = vunpack.c.h.b16 %v3549
    %v4087 = vunpack.c.l.b16 %v3550
    %v4088 = vunpack.c.h.b16 %v3550
    %v4089 = vunpack.c.l.b16 %v3551
    %v4090 = vunpack.c.h.b16 %v3551
    %v4091 = vunpack.c.l.b16 %v3552
    %v4092 = vunpack.c.h.b16 %v3552
    %v4093 = vunpack.c.l.b16 %v3553
    %v4094 = vunpack.c.h.b16 %v3553
    %v4095 = vunpack.c.l.b16 %v3554
    %v4096 = vunpack.c.h.b16 %v3554
    %v4097 = vunpack.c.l.b16 %v3555
    %v4098 = vunpack.c.h.b16 %v3555
    %v4099 = vunpack.c.l.b16 %v3556
    %v4100 = vunpack.c.h.b16 %v3556
    %v4101 = vunpack.c.l.b16 %v3557
    %v4102 = vunpack.c.h.b16 %v3557
    %v4103 = vunpack.c.l.b16 %v3558
    %v4104 = vunpack.c.h.b16 %v3558
    %v4105 = vunpack.c.l.b16 %v3559
    %v4106 = vunpack.c.h.b16 %v3559
    %v4107 = vunpack.c.l.b16 %v3560
    %v4108 = vunpack.c.h.b16 %v3560
    %v4109 = vunpack.c.l.b16 %v3561
    %v4110 = vunpack.c.h.b16 %v3561
    %v4111 = vunpack.c.l.b16 %v3562
    %v4112 = vunpack.c.h.b16 %v3562
    %v4113 = vunpack.c.l.b16 %v3563
    %v4114 = vunpack.c.h.b16 %v3563
    %v4115 = vunpack.c.l.b16 %v3564
    %v4116 = vunpack.c.h.b16 %v3564
    %v4117 = vunpack.c.l.b16 %v3565
    %v4118 = vunpack.c.h.b16 %v3565
    %v4119 = vunpack.c.l.b16 %v3566
    %v4120 = vunpack.c.h.b16 %v3566
    %v4121 = vunpack.c.l.b16 %v3567
    %v4122 = vunpack.c.h.b16 %v3567
    %v4123 = vunpack.c.l.b16 %v3568
    %v4124 = vunpack.c.h.b16 %v3568
    %v4125 = vunpack.c.l.b16 %v3569
    %v4126 = vunpack.c.h.b16 %v3569
    %v4127 = vunpack.c.l.b16 %v3570
    %v4128 = vunpack.c.h.b16 %v3570
    %v4129 = vunpack.c.l.b16 %v3571
    %v4130 = vunpack.c.h.b16 %v3571
    %v4131 = vunpack.c.l.b16 %v3572
    %v4132 = vunpack.c.h.b16 %v3572
    %v4133 = vunpack.c.l.b16 %v3573
    %v4134 = vunpack.c.h.b16 %v3573
    %v4135 = vunpack.c.l.b16 %v3574
    %v4136 = vunpack.c.h.b16 %v3574
    %v4137 = vunpack.c.l.b16 %v3575
    %v4138 = vunpack.c.h.b16 %v3575
    %v4139 = vunpack.c.l.b16 %v3576
    %v4140 = vunpack.c.h.b16 %v3576
    %v4141 = vunpack.c.l.b16 %v3577
    %v4142 = vunpack.c.h.b16 %v3577
    %v4143 = vunpack.c.l.b16 %v3578
    %v4144 = vunpack.c.h.b16 %v3578
    %v4145 = vunpack.c.l.b16 %v3579
    %v4146 = vunpack.c.h.b16 %v3579
    %v4147 = vunpack.c.l.b16 %v3580
    %v4148 = vunpack.c.h.b16 %v3580
    %v4149 = vunpack.c.l.b16 %v3581
    %v4150 = vunpack.c.h.b16 %v3581
    %v4151 = vunpack.c.l.b16 %v3582
    %v4152 = vunpack.c.h.b16 %v3582
    %v4153 = vunpack.c.l.b16 %v3583
    %v4154 = vunpack.c.h.b16 %v3583
    %v4155 = vunpack.c.l.b16 %v3584
    %v4156 = vunpack.c.h.b16 %v3584
    %v4157 = vunpack.c.l.b16 %v3585
    %v4158 = vunpack.c.h.b16 %v3585
    %v4159 = vunpack.c.l.b16 %v3586
    %v4160 = vunpack.c.h.b16 %v3586
    %v4161 = vunpack.c.l.b16 %v3587
    %v4162 = vunpack.c.h.b16 %v3587
    %v4163 = vunpack.c.l.b16 %v3588
    %v4164 = vunpack.c.h.b16 %v3588
    %v4165 = vunpack.c.l.b16 %v3589
    %v4166 = vunpack.c.h.b16 %v3589
    %v4167 = vunpack.c.l.b16 %v3590
    %v4168 = vunpack.c.h.b16 %v3590
    %v4169 = vunpack.c.l.b16 %v3591
    %v4170 = vunpack.c.h.b16 %v3591
    %v4171 = vunpack.c.l.b16 %v3592
    %v4172 = vunpack.c.h.b16 %v3592
    %v4173 = vunpack.c.l.b16 %v3593
    %v4174 = vunpack.c.h.b16 %v3593
    %v4175 = vunpack.c.l.b16 %v3594
    %v4176 = vunpack.c.h.b16 %v3594
    %v4177 = vunpack.c.l.b16 %v3595
    %v4178 = vunpack.c.h.b16 %v3595
    %v4179 = vunpack.c.l.b16 %v3596
    %v4180 = vunpack.c.h.b16 %v3596
    %v4181 = vunpack.c.l.b16 %v3597
    %v4182 = vunpack.c.h.b16 %v3597
    %v4183 = vunpack.c.l.b16 %v3598
    %v4184 = vunpack.c.h.b16 %v3598
    %v4185 = vunpack.c.l.b16 %v3599
    %v4186 = vunpack.c.h.b16 %v3599
    %v4187 = vunpack.c.l.b16 %v3600
    %v4188 = vunpack.c.h.b16 %v3600
    %v4189 = vunpack.c.l.b16 %v3601
    %v4190 = vunpack.c.h.b16 %v3601
    %v4191 = vunpack.c.l.b16 %v3602
    %v4192 = vunpack.c.h.b16 %v3602
    %v4193 = vunpack.c.l.b16 %v3603
    %v4194 = vunpack.c.h.b16 %v3603
    %v4195 = vunpack.c.l.b16 %v3604
    %v4196 = vunpack.c.h.b16 %v3604
    %v4197 = vunpack.c.l.b16 %v3605
    %v4198 = vunpack.c.h.b16 %v3605
    %v4199 = vunpack.c.l.b16 %v3606
    %v4200 = vunpack.c.h.b16 %v3606
    %v4201 = vunpack.c.l.b16 %v3607
    %v4202 = vunpack.c.h.b16 %v3607
    %v4203 = vunpack.c.l.b16 %v3608
    %v4204 = vunpack.c.h.b16 %v3608
    %v4205 = vunpack.c.l.b16 %v3609
    %v4206 = vunpack.c.h.b16 %v3609
    %v4207 = vunpack.c.l.b16 %v3610
    %v4208 = vunpack.c.h.b16 %v3610
    %v4209 = vunpack.c.l.b16 %v3611
    %v4210 = vunpack.c.h.b16 %v3611
    %v4211 = vunpack.c.l.b16 %v3612
    %v4212 = vunpack.c.h.b16 %v3612
    %v4213 = vunpack.c.l.b16 %v3613
    %v4214 = vunpack.c.h.b16 %v3613
    %v4215 = vunpack.c.l.b16 %v3614
    %v4216 = vunpack.c.h.b16 %v3614
    %v4217 = vunpack.c.l.b16 %v3615
    %v4218 = vunpack.c.h.b16 %v3615
    %v4219 = vunpack.c.l.b16 %v3616
    %v4220 = vunpack.c.h.b16 %v3616
    %v4221 = vunpack.c.l.b16 %v3617
    %v4222 = vunpack.c.h.b16 %v3617
    %v4223 = vunpack.c.l.b16 %v3618
    %v4224 = vunpack.c.h.b16 %v3618
    %v4225 = vunpack.c.l.b16 %v3619
    %v4226 = vunpack.c.h.b16 %v3619
    %v4227 = vunpack.c.l.b16 %v3620
    %v4228 = vunpack.c.h.b16 %v3620
    %v4229 = vunpack.c.l.b16 %v3621
    %v4230 = vunpack.c.h.b16 %v3621
    %v4231 = vunpack.c.l.b16 %v3622
    %v4232 = vunpack.c.h.b16 %v3622
    %v4233 = vunpack.c.l.b16 %v3623
    %v4234 = vunpack.c.h.b16 %v3623
    %v4235 = vunpack.c.l.b16 %v3624
    %v4236 = vunpack.c.h.b16 %v3624
    %v4237 = vunpack.c.l.b16 %v3625
    %v4238 = vunpack.c.h.b16 %v3625
    %v4239 = vunpack.c.l.b16 %v3626
    %v4240 = vunpack.c.h.b16 %v3626
    %v4241 = vunpack.c.l.b16 %v3627
    %v4242 = vunpack.c.h.b16 %v3627
    %v4243 = vunpack.c.l.b16 %v3628
    %v4244 = vunpack.c.h.b16 %v3628
    %v4245 = vunpack.c.l.b16 %v3629
    %v4246 = vunpack.c.h.b16 %v3629
    %v4247 = vunpack.c.l.b16 %v3630
    %v4248 = vunpack.c.h.b16 %v3630
    %v4249 = vunpack.c.l.b16 %v3631
    %v4250 = vunpack.c.h.b16 %v3631
    %v4251 = vunpack.c.l.b16 %v3632
    %v4252 = vunpack.c.h.b16 %v3632
    %v4253 = vunpack.c.l.b16 %v3633
    %v4254 = vunpack.c.h.b16 %v3633
    %v4255 = vunpack.c.l.b16 %v3634
    %v4256 = vunpack.c.h.b16 %v3634
    %v4257 = vunpack.c.l.b16 %v3635
    %v4258 = vunpack.c.h.b16 %v3635
    %v4259 = vunpack.c.l.b16 %v3636
    %v4260 = vunpack.c.h.b16 %v3636
    %v4261 = vunpack.c.l.b16 %v3637
    %v4262 = vunpack.c.h.b16 %v3637
    %v4263 = vunpack.c.l.b16 %v3638
    %v4264 = vunpack.c.h.b16 %v3638
    %v4265 = vunpack.c.l.b16 %v3639
    %v4266 = vunpack.c.h.b16 %v3639
    %v4267 = vunpack.c.l.b16 %v3640
    %v4268 = vunpack.c.h.b16 %v3640
    %v4269 = vunpack.c.l.b16 %v3641
    %v4270 = vunpack.c.h.b16 %v3641
    %v4271 = vunpack.c.l.b16 %v3642
    %v4272 = vunpack.c.h.b16 %v3642
    %v4273 = vunpack.c.l.b16 %v3643
    %v4274 = vunpack.c.h.b16 %v3643
    %v4275 = vunpack.c.l.b16 %v3644
    %v4276 = vunpack.c.h.b16 %v3644
    %v4277 = vunpack.c.l.b16 %v3645
    %v4278 = vunpack.c.h.b16 %v3645
    %v4279 = vunpack.c.l.b16 %v3646
    %v4280 = vunpack.c.h.b16 %v3646
    %v4281 = vunpack.c.l.b16 %v3647
    %v4282 = vunpack.c.h.b16 %v3647
    %v4283 = vunpack.c.l.b16 %v3648
    %v4284 = vunpack.c.h.b16 %v3648
    %v4285 = vunpack.c.l.b16 %v3649
    %v4286 = vunpack.c.h.b16 %v3649
    %v4287 = vunpack.c.l.b16 %v3650
    %v4288 = vunpack.c.h.b16 %v3650
    %v4289 = vunpack.c.l.b16 %v3651
    %v4290 = vunpack.c.h.b16 %v3651
    %v4291 = vunpack.c.l.b16 %v3652
    %v4292 = vunpack.c.h.b16 %v3652
    %v4293 = vunpack.c.l.b16 %v3653
    %v4294 = vunpack.c.h.b16 %v3653
    %v4295 = vunpack.c.l.b16 %v3654
    %v4296 = vunpack.c.h.b16 %v3654
    %v4297 = vunpack.c.l.b16 %v3655
    %v4298 = vunpack.c.h.b16 %v3655
    %v4299 = vunpack.c.l.b16 %v3656
    %v4300 = vunpack.c.h.b16 %v3656
    %v4301 = vunpack.c.l.b16 %v3657
    %v4302 = vunpack.c.h.b16 %v3657
    %v4303 = vunpack.c.l.b16 %v3658
    %v4304 = vunpack.c.h.b16 %v3658
    %v4305 = vunpack.c.l.b16 %v3659
    %v4306 = vunpack.c.h.b16 %v3659
    %v4307 = vunpack.c.l.b16 %v3660
    %v4308 = vunpack.c.h.b16 %v3660
    %v4309 = vunpack.c.l.b16 %v3661
    %v4310 = vunpack.c.h.b16 %v3661
    %v4311 = vunpack.c.l.b16 %v3662
    %v4312 = vunpack.c.h.b16 %v3662
    %v4313 = vunpack.c.l.b16 %v3663
    %v4314 = vunpack.c.h.b16 %v3663
    %v4315 = vunpack.c.l.b16 %v3664
    %v4316 = vunpack.c.h.b16 %v3664
    %v4317 = vunpack.c.l.b16 %v3665
    %v4318 = vunpack.c.h.b16 %v3665
    %v4319 = vunpack.c.l.b16 %v3666
    %v4320 = vunpack.c.h.b16 %v3666
    %v4321 = vunpack.c.l.b16 %v3667
    %v4322 = vunpack.c.h.b16 %v3667
    %v4323 = vunpack.c.l.b16 %v3668
    %v4324 = vunpack.c.h.b16 %v3668
    %v4325 = vunpack.c.l.b16 %v3669
    %v4326 = vunpack.c.h.b16 %v3669
    %v4327 = vunpack.c.l.b16 %v3670
    %v4328 = vunpack.c.h.b16 %v3670
    %v4329 = vunpack.c.l.b16 %v3671
    %v4330 = vunpack.c.h.b16 %v3671
    %v4331 = vunpack.c.l.b16 %v3672
    %v4332 = vunpack.c.h.b16 %v3672
    %v4333 = vunpack.c.l.b16 %v3673
    %v4334 = vunpack.c.h.b16 %v3673
    %v4335 = vunpack.c.l.b16 %v3674
    %v4336 = vunpack.c.h.b16 %v3674
    %v4337 = vunpack.c.l.b16 %v3675
    %v4338 = vunpack.c.h.b16 %v3675
    %v4339 = vunpack.c.l.b16 %v3676
    %v4340 = vunpack.c.h.b16 %v3676
    %v4341 = vunpack.c.l.b16 %v3677
    %v4342 = vunpack.c.h.b16 %v3677
    %v4343 = vunpack.c.l.b16 %v3678
    %v4344 = vunpack.c.h.b16 %v3678
    %v4345 = vunpack.c.l.b16 %v3679
    %v4346 = vunpack.c.h.b16 %v3679
    %v4347 = vunpack.c.l.b16 %v3680
    %v4348 = vunpack.c.h.b16 %v3680
    %v4349 = vunpack.c.l.b16 %v3681
    %v4350 = vunpack.c.h.b16 %v3681
    %v4351 = vunpack.c.l.b16 %v3682
    %v4352 = vunpack.c.h.b16 %v3682
    %v4353 = vunpack.c.l.b16 %v3683
    %v4354 = vunpack.c.h.b16 %v3683
    %v4355 = vunpack.c.l.b16 %v3684
    %v4356 = vunpack.c.h.b16 %v3684
    %v4357 = vunpack.c.l.b16 %v3685
    %v4358 = vunpack.c.h.b16 %v3685
    %v4359 = vunpack.c.l.b16 %v3686
    %v4360 = vunpack.c.h.b16 %v3686
    %v4361 = vunpack.c.l.b16 %v3687
    %v4362 = vunpack.c.h.b16 %v3687
    %v4363 = vunpack.c.l.b16 %v3688
    %v4364 = vunpack.c.h.b16 %v3688
    %v4365 = vunpack.c.l.b16 %v3689
    %v4366 = vunpack.c.h.b16 %v3689
    %v4367 = vunpack.c.l.b16 %v3690
    %v4368 = vunpack.c.h.b16 %v3690
    %v4369 = vunpack.c.l.b16 %v3691
    %v4370 = vunpack.c.h.b16 %v3691
    %v4371 = vunpack.c.l.b16 %v3692
    %v4372 = vunpack.c.h.b16 %v3692
    %v4373 = vunpack.c.l.b16 %v3693
    %v4374 = vunpack.c.h.b16 %v3693
    %v4375 = vunpack.c.l.b16 %v3694
    %v4376 = vunpack.c.h.b16 %v3694
    %v4377 = vunpack.c.l.b16 %v3695
    %v4378 = vunpack.c.h.b16 %v3695
    %v4379 = vunpack.c.l.b16 %v3696
    %v4380 = vunpack.c.h.b16 %v3696
    %v4381 = vunpack.c.l.b16 %v3697
    %v4382 = vunpack.c.h.b16 %v3697
    %v4383 = vunpack.c.l.b16 %v3698
    %v4384 = vunpack.c.h.b16 %v3698
    %v4385 = vunpack.c.l.b16 %v3699
    %v4386 = vunpack.c.h.b16 %v3699
    %v4387 = vunpack.c.l.b16 %v3700
    %v4388 = vunpack.c.h.b16 %v3700
    %v4389 = vunpack.c.l.b16 %v3701
    %v4390 = vunpack.c.h.b16 %v3701
    %v4391 = vunpack.c.l.b16 %v3702
    %v4392 = vunpack.c.h.b16 %v3702
    %v4393 = vunpack.c.l.b16 %v3703
    %v4394 = vunpack.c.h.b16 %v3703
    %v4395 = vunpack.c.l.b16 %v3704
    %v4396 = vunpack.c.h.b16 %v3704
    %v4397 = vunpack.c.l.b16 %v3705
    %v4398 = vunpack.c.h.b16 %v3705
    %v4399 = vunpack.c.l.b16 %v3706
    %v4400 = vunpack.c.h.b16 %v3706
    %v4401 = vunpack.c.l.b16 %v3707
    %v4402 = vunpack.c.h.b16 %v3707
    %v4403 = vunpack.c.l.b16 %v3708
    %v4404 = vunpack.c.h.b16 %v3708
    %v4405 = vunpack.c.l.b16 %v3709
    %v4406 = vunpack.c.h.b16 %v3709
    %v4407 = vunpack.c.l.b16 %v3710
    %v4408 = vunpack.c.h.b16 %v3710
    %v4409 = vunpack.c.l.b16 %v3711
    %v4410 = vunpack.c.h.b16 %v3711
    %v4411 = vunpack.c.l.b16 %v3712
    %v4412 = vunpack.c.h.b16 %v3712
    %v4413 = vunpack.c.l.b16 %v3713
    %v4414 = vunpack.c.h.b16 %v3713
    %v4415 = vunpack.c.l.b16 %v3714
    %v4416 = vunpack.c.h.b16 %v3714
    %v4417 = vunpack.c.l.b16 %v3715
    %v4418 = vunpack.c.h.b16 %v3715
    %v4419 = vunpack.c.l.b16 %v3716
    %v4420 = vunpack.c.h.b16 %v3716
    %v4421 = vunpack.c.l.b16 %v3717
    %v4422 = vunpack.c.h.b16 %v3717
    %v4423 = vunpack.c.l.b16 %v3718
    %v4424 = vunpack.c.h.b16 %v3718
    %v4425 = vunpack.c.l.b16 %v3719
    %v4426 = vunpack.c.h.b16 %v3719
    %v4427 = vunpack.c.l.b16 %v3720
    %v4428 = vunpack.c.h.b16 %v3720
    %v4429 = vunpack.c.l.b16 %v3721
    %v4430 = vunpack.c.h.b16 %v3721
    %v4431 = vunpack.c.l.b16 %v3722
    %v4432 = vunpack.c.h.b16 %v3722
    %v4433 = vunpack.c.l.b16 %v3723
    %v4434 = vunpack.c.h.b16 %v3723
    %v4435 = vunpack.c.l.b16 %v3724
    %v4436 = vunpack.c.h.b16 %v3724
    %v4437 = vunpack.c.l.b16 %v3725
    %v4438 = vunpack.c.h.b16 %v3725
    %v4439 = vunpack.c.l.b16 %v3726
    %v4440 = vunpack.c.h.b16 %v3726
    %v4441 = vunpack.c.l.b16 %v3727
    %v4442 = vunpack.c.h.b16 %v3727
    %v4443 = vunpack.c.l.b16 %v3728
    %v4444 = vunpack.c.h.b16 %v3728
    %v4445 = vunpack.c.l.b16 %v3729
    %v4446 = vunpack.c.h.b16 %v3729
    %v4447 = vunpack.c.l.b16 %v3730
    %v4448 = vunpack.c.h.b16 %v3730
    %v4449 = vunpack.c.l.b16 %v3731
    %v4450 = vunpack.c.h.b16 %v3731
    %v4451 = vunpack.c.l.b16 %v3732
    %v4452 = vunpack.c.h.b16 %v3732
    %v4453 = vunpack.c.l.b16 %v3733
    %v4454 = vunpack.c.h.b16 %v3733
    %v4455 = vunpack.c.l.b16 %v3734
    %v4456 = vunpack.c.h.b16 %v3734
    %v4457 = vunpack.c.l.b16 %v3735
    %v4458 = vunpack.c.h.b16 %v3735
    %v4459 = vunpack.c.l.b16 %v3736
    %v4460 = vunpack.c.h.b16 %v3736
    %v4461 = vunpack.c.l.b16 %v3737
    %v4462 = vunpack.c.h.b16 %v3737
    %v4463 = vunpack.c.l.b16 %v3738
    %v4464 = vunpack.c.h.b16 %v3738
    %v4465 = vunpack.c.l.b16 %v3739
    %v4466 = vunpack.c.h.b16 %v3739
    %v4467 = vunpack.c.l.b16 %v3740
    %v4468 = vunpack.c.h.b16 %v3740
    %v4469 = vunpack.c.l.b16 %v3741
    %v4470 = vunpack.c.h.b16 %v3741
    %v4471 = vunpack.c.l.b16 %v3742
    %v4472 = vunpack.c.h.b16 %v3742
    %v4473 = vunpack.c.l.b16 %v3743
    %v4474 = vunpack.c.h.b16 %v3743
    %v4475 = vunpack.c.l.b16 %v3744
    %v4476 = vunpack.c.h.b16 %v3744
    %v4477 = vunpack.c.l.b16 %v3745
    %v4478 = vunpack.c.h.b16 %v3745
    %v4479 = vunpack.c.l.b16 %v3746
    %v4480 = vunpack.c.h.b16 %v3746
    %v4481 = vunpack.c.l.b16 %v3747
    %v4482 = vunpack.c.h.b16 %v3747
    %v4483 = vunpack.c.l.b16 %v3748
    %v4484 = vunpack.c.h.b16 %v3748
    %v4485 = vunpack.c.l.b16 %v3749
    %v4486 = vunpack.c.h.b16 %v3749
    %v4487 = vunpack.c.l.b16 %v3750
    %v4488 = vunpack.c.h.b16 %v3750
    %v4489 = vunpack.c.l.b16 %v3751
    %v4490 = vunpack.c.h.b16 %v3751
    %v4491 = vunpack.c.l.b16 %v3752
    %v4492 = vunpack.c.h.b16 %v3752
    %v4493 = vunpack.c.l.b16 %v3753
    %v4494 = vunpack.c.h.b16 %v3753
    %v4495 = vunpack.c.l.b16 %v3754
    %v4496 = vunpack.c.h.b16 %v3754
    %v4497 = vunpack.c.l.b16 %v3755
    %v4498 = vunpack.c.h.b16 %v3755
    %v4499 = vunpack.c.l.b16 %v3756
    %v4500 = vunpack.c.h.b16 %v3756
    %v4501 = vunpack.c.l.b16 %v3757
    %v4502 = vunpack.c.h.b16 %v3757
    %v4503 = vunpack.c.l.b16 %v3758
    %v4504 = vunpack.c.h.b16 %v3758
    %v4505 = vunpack.c.l.b16 %v3759
    %v4506 = vunpack.c.h.b16 %v3759
    %v4507 = vunpack.c.l.b16 %v3760
    %v4508 = vunpack.c.h.b16 %v3760
    %v4509 = vunpack.c.l.b16 %v3761
    %v4510 = vunpack.c.h.b16 %v3761
    %v4511 = vunpack.c.l.b16 %v3762
    %v4512 = vunpack.c.h.b16 %v3762
    %v4513 = vunpack.c.l.b16 %v3763
    %v4514 = vunpack.c.h.b16 %v3763
    %v4515 = vunpack.c.l.b16 %v3764
    %v4516 = vunpack.c.h.b16 %v3764
    %v4517 = vunpack.c.l.b16 %v3765
    %v4518 = vunpack.c.h.b16 %v3765
    %v4519 = vunpack.c.l.b16 %v3766
    %v4520 = vunpack.c.h.b16 %v3766
    %v4521 = vunpack.c.l.b16 %v3767
    %v4522 = vunpack.c.h.b16 %v3767
    %v4523 = vunpack.c.l.b16 %v3768
    %v4524 = vunpack.c.h.b16 %v3768
    %v4525 = vunpack.c.l.b16 %v3769
    %v4526 = vunpack.c.h.b16 %v3769
    %v4527 = vunpack.c.l.b16 %v3770
    %v4528 = vunpack.c.h.b16 %v3770
    %v4529 = vunpack.c.l.b16 %v3771
    %v4530 = vunpack.c.h.b16 %v3771
    %v4531 = vunpack.c.l.b16 %v3772
    %v4532 = vunpack.c.h.b16 %v3772
    %v4533 = vunpack.c.l.b16 %v3773
    %v4534 = vunpack.c.h.b16 %v3773
    %v4535 = vunpack.c.l.b16 %v3774
    %v4536 = vunpack.c.h.b16 %v3774
    %v4537 = vunpack.c.l.b16 %v3775
    %v4538 = vunpack.c.h.b16 %v3775
    %v4539 = vunpack.c.l.b16 %v3776
    %v4540 = vunpack.c.h.b16 %v3776
    %v4541 = vunpack.c.l.b16 %v3777
    %v4542 = vunpack.c.h.b16 %v3777
    %v4543 = vunpack.c.l.b16 %v3778
    %v4544 = vunpack.c.h.b16 %v3778
    %v4545 = vunpack.c.l.b16 %v3779
    %v4546 = vunpack.c.h.b16 %v3779
    %v4547 = vunpack.c.l.b16 %v3780
    %v4548 = vunpack.c.h.b16 %v3780
    %v4549 = vpack.c.b16 %v4045, %v4037
    %v4550 = vpack.c.b16 %v4046, %v4038
    %v4551 = vpack.c.b16 %v4047, %v4039
    %v4552 = vpack.c.b16 %v4048, %v4040
    %v4553 = vpack.c.b16 %v4049, %v4041
    %v4554 = vpack.c.b16 %v4050, %v4042
    %v4555 = vpack.c.b16 %v4051, %v4043
    %v4556 = vpack.c.b16 %v4052, %v4044
    %v4557 = vpack.c.b16 %v4061, %v4053
    %v4558 = vpack.c.b16 %v4062, %v4054
    %v4559 = vpack.c.b16 %v4063, %v4055
    %v4560 = vpack.c.b16 %v4064, %v4056
    %v4561 = vpack.c.b16 %v4065, %v4057
    %v4562 = vpack.c.b16 %v4066, %v4058
    %v4563 = vpack.c.b16 %v4067, %v4059
    %v4564 = vpack.c.b16 %v4068, %v4060
    %v4565 = vpack.c.b16 %v4077, %v4069
    %v4566 = vpack.c.b16 %v4078, %v4070
    %v4567 = vpack.c.b16 %v4079, %v4071
    %v4568 = vpack.c.b16 %v4080, %v4072
    %v4569 = vpack.c.b16 %v4081, %v4073
    %v4570 = vpack.c.b16 %v4082, %v4074
    %v4571 = vpack.c.b16 %v4083, %v4075
    %v4572 = vpack.c.b16 %v4084, %v4076
    %v4573 = vpack.c.b16 %v4093, %v4085
    %v4574 = vpack.c.b16 %v4094, %v4086
    %v4575 = vpack.c.b16 %v4095, %v4087
    %v4576 = vpack.c.b16 %v4096, %v4088
    %v4577 = vpack.c.b16 %v4097, %v4089
    %v4578 = vpack.c.b16 %v4098, %v4090
    %v4579 = vpack.c.b16 %v4099, %v4091
    %v4580 = vpack.c.b16 %v4100, %v4092
    %v4581 = vpack.c.b16 %v4109, %v4101
    %v4582 = vpack.c.b16 %v4110, %v4102
    %v4583 = vpack.c.b16 %v4111, %v4103
    %v4584 = vpack.c.b16 %v4112, %v4104
    %v4585 = vpack.c.b16 %v4113, %v4105
    %v4586 = vpack.c.b16 %v4114, %v4106
    %v4587 = vpack.c.b16 %v4115, %v4107
    %v4588 = vpack.c.b16 %v4116, %v4108
    %v4589 = vpack.c.b16 %v4125, %v4117
    %v4590 = vpack.c.b16 %v4126, %v4118
    %v4591 = vpack.c.b16 %v4127, %v4119
    %v4592 = vpack.c.b16 %v4128, %v4120
    %v4593 = vpack.c.b16 %v4129, %v4121
    %v4594 = vpack.c.b16 %v4130, %v4122
    %v4595 = vpack.c.b16 %v4131, %v4123
    %v4596 = vpack.c.b16 %v4132, %v4124
    %v4597 = vpack.c.b16 %v4141, %v4133
    %v4598 = vpack.c.b16 %v4142, %v4134
    %v4599 = vpack.c.b16 %v4143, %v4135
    %v4600 = vpack.c.b16 %v4144, %v4136
    %v4601 = vpack.c.b16 %v4145, %v4137
    %v4602 = vpack.c.b16 %v4146, %v4138
    %v4603 = vpack.c.b16 %v4147, %v4139
    %v4604 = vpack.c.b16 %v4148, %v4140
    %v4605 = vpack.c.b16 %v4157, %v4149
    %v4606 = vpack.c.b16 %v4158, %v4150
    %v4607 = vpack.c.b16 %v4159, %v4151
    %v4608 = vpack.c.b16 %v4160, %v4152
    %v4609 = vpack.c.b16 %v4161, %v4153
    %v4610 = vpack.c.b16 %v4162, %v4154
    %v4611 = vpack.c.b16 %v4163, %v4155
    %v4612 = vpack.c.b16 %v4164, %v4156
    %v4613 = vpack.c.b16 %v4173, %v4165
    %v4614 = vpack.c.b16 %v4174, %v4166
    %v4615 = vpack.c.b16 %v4175, %v4167
    %v4616 = vpack.c.b16 %v4176, %v4168
    %v4617 = vpack.c.b16 %v4177, %v4169
    %v4618 = vpack.c.b16 %v4178, %v4170
    %v4619 = vpack.c.b16 %v4179, %v4171
    %v4620 = vpack.c.b16 %v4180, %v4172
    %v4621 = vpack.c.b16 %v4189, %v4181
    %v4622 = vpack.c.b16 %v4190, %v4182
    %v4623 = vpack.c.b16 %v4191, %v4183
    %v4624 = vpack.c.b16 %v4192, %v4184
    %v4625 = vpack.c.b16 %v4193, %v4185
    %v4626 = vpack.c.b16 %v4194, %v4186
    %v4627 = vpack.c.b16 %v4195, %v4187
    %v4628 = vpack.c.b16 %v4196, %v4188
    %v4629 = vpack.c.b16 %v4205, %v4197
    %v4630 = vpack.c.b16 %v4206, %v4198
    %v4631 = vpack.c.b16 %v4207, %v4199
    %v4632 = vpack.c.b16 %v4208, %v4200
    %v4633 = vpack.c.b16 %v4209, %v4201
    %v4634 = vpack.c.b16 %v4210, %v4202
    %v4635 = vpack.c.b16 %v4211, %v4203
    %v4636 = vpack.c.b16 %v4212, %v4204
    %v4637 = vpack.c.b16 %v4221, %v4213
    %v4638 = vpack.c.b16 %v4222, %v4214
    %v4639 = vpack.c.b16 %v4223, %v4215
    %v4640 = vpack.c.b16 %v4224, %v4216
    %v4641 = vpack.c.b16 %v4225, %v4217
    %v4642 = vpack.c.b16 %v4226, %v4218
    %v4643 = vpack.c.b16 %v4227, %v4219
    %v4644 = vpack.c.b16 %v4228, %v4220
    %v4645 = vpack.c.b16 %v4237, %v4229
    %v4646 = vpack.c.b16 %v4238, %v4230
    %v4647 = vpack.c.b16 %v4239, %v4231
    %v4648 = vpack.c.b16 %v4240, %v4232
    %v4649 = vpack.c.b16 %v4241, %v4233
    %v4650 = vpack.c.b16 %v4242, %v4234
    %v4651 = vpack.c.b16 %v4243, %v4235
    %v4652 = vpack.c.b16 %v4244, %v4236
    %v4653 = vpack.c.b16 %v4253, %v4245
    %v4654 = vpack.c.b16 %v4254, %v4246
    %v4655 = vpack.c.b16 %v4255, %v4247
    %v4656 = vpack.c.b16 %v4256, %v4248
    %v4657 = vpack.c.b16 %v4257, %v4249
    %v4658 = vpack.c.b16 %v4258, %v4250
    %v4659 = vpack.c.b16 %v4259, %v4251
    %v4660 = vpack.c.b16 %v4260, %v4252
    %v4661 = vpack.c.b16 %v4269, %v4261
    %v4662 = vpack.c.b16 %v4270, %v4262
    %v4663 = vpack.c.b16 %v4271, %v4263
    %v4664 = vpack.c.b16 %v4272, %v4264
    %v4665 = vpack.c.b16 %v4273, %v4265
    %v4666 = vpack.c.b16 %v4274, %v4266
    %v4667 = vpack.c.b16 %v4275, %v4267
    %v4668 = vpack.c.b16 %v4276, %v4268
    %v4669 = vpack.c.b16 %v4285, %v4277
    %v4670 = vpack.c.b16 %v4286, %v4278
    %v4671 = vpack.c.b16 %v4287, %v4279
    %v4672 = vpack.c.b16 %v4288, %v4280
    %v4673 = vpack.c.b16 %v4289, %v4281
    %v4674 = vpack.c.b16 %v4290, %v4282
    %v4675 = vpack.c.b16 %v4291, %v4283
    %v4676 = vpack.c.b16 %v4292, %v4284
    %v4677 = vpack.c.b16 %v4301, %v4293
    %v4678 = vpack.c.b16 %v4302, %v4294
    %v4679 = vpack.c.b16 %v4303, %v4295
    %v4680 = vpack.c.b16 %v4304, %v4296
    %v4681 = vpack.c.b16 %v4305, %v4297
    %v4682 = vpack.c.b16 %v4306, %v4298
    %v4683 = vpack.c.b16 %v4307, %v4299
    %v4684 = vpack.c.b16 %v4308, %v4300
    %v4685 = vpack.c.b16 %v4317, %v4309
    %v4686 = vpack.c.b16 %v4318, %v4310
    %v4687 = vpack.c.b16 %v4319, %v4311
    %v4688 = vpack.c.b16 %v4320, %v4312
    %v4689 = vpack.c.b16 %v4321, %v4313
    %v4690 = vpack.c.b16 %v4322, %v4314
    %v4691 = vpack.c.b16 %v4323, %v4315
    %v4692 = vpack.c.b16 %v4324, %v4316
    %v4693 = vpack.c.b16 %v4333, %v4325
    %v4694 = vpack.c.b16 %v4334, %v4326
    %v4695 = vpack.c.b16 %v4335, %v4327
    %v4696 = vpack.c.b16 %v4336, %v4328
    %v4697 = vpack.c.b16 %v4337, %v4329
    %v4698 = vpack.c.b16 %v4338, %v4330
    %v4699 = vpack.c.b16 %v4339, %v4331
    %v4700 = vpack.c.b16 %v4340, %v4332
    %v4701 = vpack.c.b16 %v4349, %v4341
    %v4702 = vpack.c.b16 %v4350, %v4342
    %v4703 = vpack.c.b16 %v4351, %v4343
    %v4704 = vpack.c.b16 %v4352, %v4344
    %v4705 = vpack.c.b16 %v4353, %v4345
    %v4706 = vpack.c.b16 %v4354, %v4346
    %v4707 = vpack.c.b16 %v4355, %v4347
    %v4708 = vpack.c.b16 %v4356, %v4348
    %v4709 = vpack.c.b16 %v4365, %v4357
    %v4710 = vpack.c.b16 %v4366, %v4358
    %v4711 = vpack.c.b16 %v4367, %v4359
    %v4712 = vpack.c.b16 %v4368, %v4360
    %v4713 = vpack.c.b16 %v4369, %v4361
    %v4714 = vpack.c.b16 %v4370, %v4362
    %v4715 = vpack.c.b16 %v4371, %v4363
    %v4716 = vpack.c.b16 %v4372, %v4364
    %v4717 = vpack.c.b16 %v4381, %v4373
    %v4718 = vpack.c.b16 %v4382, %v4374
    %v4719 = vpack.c.b16 %v4383, %v4375
    %v4720 = vpack.c.b16 %v4384, %v4376
    %v4721 = vpack.c.b16 %v4385, %v4377
    %v4722 = vpack.c.b16 %v4386, %v4378
    %v4723 = vpack.c.b16 %v4387, %v4379
    %v4724 = vpack.c.b16 %v4388, %v4380
    %v4725 = vpack.c.b16 %v4397, %v4389
    %v4726 = vpack.c.b16 %v4398, %v4390
    %v4727 = vpack.c.b16 %v4399, %v4391
    %v4728 = vpack.c.b16 %v4400, %v4392
    %v4729 = vpack.c.b16 %v4401, %v4393
    %v4730 = vpack.c.b16 %v4402, %v4394
    %v4731 = vpack.c.b16 %v4403, %v4395
    %v4732 = vpack.c.b16 %v4404, %v4396
    %v4733 = vpack.c.b16 %v4413, %v4405
    %v4734 = vpack.c.b16 %v4414, %v4406
    %v4735 = vpack.c.b16 %v4415, %v4407
    %v4736 = vpack.c.b16 %v4416, %v4408
    %v4737 = vpack.c.b16 %v4417, %v4409
    %v4738 = vpack.c.b16 %v4418, %v4410
    %v4739 = vpack.c.b16 %v4419, %v4411
    %v4740 = vpack.c.b16 %v4420, %v4412
    %v4741 = vpack.c.b16 %v4429, %v4421
    %v4742 = vpack.c.b16 %v4430, %v4422
    %v4743 = vpack.c.b16 %v4431, %v4423
    %v4744 = vpack.c.b16 %v4432, %v4424
    %v4745 = vpack.c.b16 %v4433, %v4425
    %v4746 = vpack.c.b16 %v4434, %v4426
    %v4747 = vpack.c.b16 %v4435, %v4427
    %v4748 = vpack.c.b16 %v4436, %v4428
    %v4749 = vpack.c.b16 %v4445, %v4437
    %v4750 = vpack.c.b16 %v4446, %v4438
    %v4751 = vpack.c.b16 %v4447, %v4439
    %v4752 = vpack.c.b16 %v4448, %v4440
    %v4753 = vpack.c.b16 %v4449, %v4441
    %v4754 = vpack.c.b16 %v4450, %v4442
    %v4755 = vpack.c.b16 %v4451, %v4443
    %v4756 = vpack.c.b16 %v4452, %v4444
    %v4757 = vpack.c.b16 %v4461, %v4453
    %v4758 = vpack.c.b16 %v4462, %v4454
    %v4759 = vpack.c.b16 %v4463, %v4455
    %v4760 = vpack.c.b16 %v4464, %v4456
    %v4761 = vpack.c.b16 %v4465, %v4457
    %v4762 = vpack.c.b16 %v4466, %v4458
    %v4763 = vpack.c.b16 %v4467, %v4459
    %v4764 = vpack.c.b16 %v4468, %v4460
    %v4765 = vpack.c.b16 %v4477, %v4469
    %v4766 = vpack.c.b16 %v4478, %v4470
    %v4767 = vpack.c.b16 %v4479, %v4471
    %v4768 = vpack.c.b16 %v4480, %v4472
    %v4769 = vpack.c.b16 %v4481, %v4473
    %v4770 = vpack.c.b16 %v4482, %v4474
    %v4771 = vpack.c.b16 %v4483, %v4475
    %v4772 = vpack.c.b16 %v4484, %v4476
    %v4773 = vpack.c.b16 %v4493, %v4485
    %v4774 = vpack.c.b16 %v4494, %v4486
    %v4775 = vpack.c.b16 %v4495, %v4487
    %v4776 = vpack.c.b16 %v4496, %v4488
    %v4777 = vpack.c.b16 %v4497, %v4489
    %v4778 = vpack.c.b16 %v4498, %v4490
    %v4779 = vpack.c.b16 %v4499, %v4491
    %v4780 = vpack.c.b16 %v4500, %v4492
    %v4781 = vpack.c.b16 %v4509, %v4501
    %v4782 = vpack.c.b16 %v4510, %v4502
    %v4783 = vpack.c.b16 %v4511, %v4503
    %v4784 = vpack.c.b16 %v4512, %v4504
    %v4785 = vpack.c.b16 %v4513, %v4505
    %v4786 = vpack.c.b16 %v4514, %v4506
    %v4787 = vpack.c.b16 %v4515, %v4507
    %v4788 = vpack.c.b16 %v4516, %v4508
    %v4789 = vpack.c.b16 %v4525, %v4517
    %v4790 = vpack.c.b16 %v4526, %v4518
    %v4791 = vpack.c.b16 %v4527, %v4519
    %v4792 = vpack.c.b16 %v4528, %v4520
    %v4793 = vpack.c.b16 %v4529, %v4521
    %v4794 = vpack.c.b16 %v4530, %v4522
    %v4795 = vpack.c.b16 %v4531, %v4523
    %v4796 = vpack.c.b16 %v4532, %v4524
    %v4797 = vpack.c.b16 %v4541, %v4533
    %v4798 = vpack.c.b16 %v4542, %v4534
    %v4799 = vpack.c.b16 %v4543, %v4535
    %v4800 = vpack.c.b16 %v4544, %v4536
    %v4801 = vpack.c.b16 %v4545, %v4537
    %v4802 = vpack.c.b16 %v4546, %v4538
    %v4803 = vpack.c.b16 %v4547, %v4539
    %v4804 = vpack.c.b16 %v4548, %v4540
    %5061 = vmatpush.bf16.msra.mxu0 %v4605
    %5062 = vmatpush.bf16.msra.mxu0 %v4597
    %5063 = vmatpush.bf16.msra.mxu0 %v4589
    %5064 = vmatpush.bf16.msra.mxu0 %v4581
    %5065 = vmatpush.bf16.msra.mxu0 %v4573
    %5066 = vmatpush.bf16.msra.mxu0 %v4565
    %5067 = vmatpush.bf16.msra.mxu0 %v4557
    %5068 = vmatpush.bf16.msra.mxu0 %v4549
    %5069 = vmatmul.bf16.gmra.mxu0 %v3514
    %v5070 = vpop.f32.mrf.mxu0
    %v5071 = vadd.f32 %v534, %v5070
    %v5072 = vpop.f32.mrf.mxu0
    %5073 = vdwg.mxu0
    %5074 = vmatpush.bf16.msra.mxu0 %v4669
    %5075 = vmatpush.bf16.msra.mxu0 %v4661
    %5076 = vmatpush.bf16.msra.mxu0 %v4653
    %5077 = vmatpush.bf16.msra.mxu0 %v4645
    %5078 = vmatpush.bf16.msra.mxu0 %v4637
    %5079 = vmatpush.bf16.msra.mxu0 %v4629
    %5080 = vmatpush.bf16.msra.mxu0 %v4621
    %5081 = vmatpush.bf16.msra.mxu0 %v4613
    %5082 = vmatmul.bf16.gmra.mxu0 %v3515
    %v5083 = vpop.f32.mrf.mxu0
    %v5084 = vadd.f32 %v5071, %v5083
    %v5085 = vpop.f32.mrf.mxu0
    %5086 = vdwg.mxu0
    %5087 = vmatpush.bf16.msra.mxu0 %v4733
    %5088 = vmatpush.bf16.msra.mxu0 %v4725
    %5089 = vmatpush.bf16.msra.mxu0 %v4717
    %5090 = vmatpush.bf16.msra.mxu0 %v4709
    %5091 = vmatpush.bf16.msra.mxu0 %v4701
    %5092 = vmatpush.bf16.msra.mxu0 %v4693
    %5093 = vmatpush.bf16.msra.mxu0 %v4685
    %5094 = vmatpush.bf16.msra.mxu0 %v4677
    %5095 = vmatmul.bf16.gmra.mxu0 %v3521
    %v5096 = vpop.f32.mrf.mxu0
    %v5097 = vadd.f32 %v5084, %v5096
    %v5098 = vpop.f32.mrf.mxu0
    %5099 = vdwg.mxu0
    %5100 = vmatpush.bf16.msra.mxu0 %v4797
    %5101 = vmatpush.bf16.msra.mxu0 %v4789
    %5102 = vmatpush.bf16.msra.mxu0 %v4781
    %5103 = vmatpush.bf16.msra.mxu0 %v4773
    %5104 = vmatpush.bf16.msra.mxu0 %v4765
    %5105 = vmatpush.bf16.msra.mxu0 %v4757
    %5106 = vmatpush.bf16.msra.mxu0 %v4749
    %5107 = vmatpush.bf16.msra.mxu0 %v4741
    %5108 = vmatmul.bf16.gmra.mxu0 %v3522
    %v5109 = vpop.f32.mrf.mxu0
    %v5110 = vadd.f32 %v5097, %v5109
    %v5111 = vpop.f32.mrf.mxu0
    %5112 = vdwg.mxu0
    %5113 = vmatpush.bf16.msra.mxu0 %v4606
    %5114 = vmatpush.bf16.msra.mxu0 %v4598
    %5115 = vmatpush.bf16.msra.mxu0 %v4590
    %5116 = vmatpush.bf16.msra.mxu0 %v4582
    %5117 = vmatpush.bf16.msra.mxu0 %v4574
    %5118 = vmatpush.bf16.msra.mxu0 %v4566
    %5119 = vmatpush.bf16.msra.mxu0 %v4558
    %5120 = vmatpush.bf16.msra.mxu0 %v4550
    %5121 = vmatmul.bf16.gmra.mxu0 %v3514
    %v5122 = vpop.f32.mrf.mxu0
    %v5123 = vadd.f32 %v535, %v5122
    %v5124 = vpop.f32.mrf.mxu0
    %5125 = vdwg.mxu0
    %5126 = vmatpush.bf16.msra.mxu0 %v4670
    %5127 = vmatpush.bf16.msra.mxu0 %v4662
    %5128 = vmatpush.bf16.msra.mxu0 %v4654
    %5129 = vmatpush.bf16.msra.mxu0 %v4646
    %5130 = vmatpush.bf16.msra.mxu0 %v4638
    %5131 = vmatpush.bf16.msra.mxu0 %v4630
    %5132 = vmatpush.bf16.msra.mxu0 %v4622
    %5133 = vmatpush.bf16.msra.mxu0 %v4614
    %5134 = vmatmul.bf16.gmra.mxu0 %v3515
    %v5135 = vpop.f32.mrf.mxu0
    %v5136 = vadd.f32 %v5123, %v5135
    %v5137 = vpop.f32.mrf.mxu0
    %5138 = vdwg.mxu0
    %5139 = vmatpush.bf16.msra.mxu0 %v4734
    %5140 = vmatpush.bf16.msra.mxu0 %v4726
    %5141 = vmatpush.bf16.msra.mxu0 %v4718
    %5142 = vmatpush.bf16.msra.mxu0 %v4710
    %5143 = vmatpush.bf16.msra.mxu0 %v4702
    %5144 = vmatpush.bf16.msra.mxu0 %v4694
    %5145 = vmatpush.bf16.msra.mxu0 %v4686
    %5146 = vmatpush.bf16.msra.mxu0 %v4678
    %5147 = vmatmul.bf16.gmra.mxu0 %v3521
    %v5148 = vpop.f32.mrf.mxu0
    %v5149 = vadd.f32 %v5136, %v5148
    %v5150 = vpop.f32.mrf.mxu0
    %5151 = vdwg.mxu0
    %5152 = vmatpush.bf16.msra.mxu0 %v4798
    %5153 = vmatpush.bf16.msra.mxu0 %v4790
    %5154 = vmatpush.bf16.msra.mxu0 %v4782
    %5155 = vmatpush.bf16.msra.mxu0 %v4774
    %5156 = vmatpush.bf16.msra.mxu0 %v4766
    %5157 = vmatpush.bf16.msra.mxu0 %v4758
    %5158 = vmatpush.bf16.msra.mxu0 %v4750
    %5159 = vmatpush.bf16.msra.mxu0 %v4742
    %5160 = vmatmul.bf16.gmra.mxu0 %v3522
    %v5161 = vpop.f32.mrf.mxu0
    %v5162 = vadd.f32 %v5149, %v5161
    %v5163 = vpop.f32.mrf.mxu0
    %5164 = vdwg.mxu0
    %5165 = vmatpush.bf16.msra.mxu0 %v4607
    %5166 = vmatpush.bf16.msra.mxu0 %v4599
    %5167 = vmatpush.bf16.msra.mxu0 %v4591
    %5168 = vmatpush.bf16.msra.mxu0 %v4583
    %5169 = vmatpush.bf16.msra.mxu0 %v4575
    %5170 = vmatpush.bf16.msra.mxu0 %v4567
    %5171 = vmatpush.bf16.msra.mxu0 %v4559
    %5172 = vmatpush.bf16.msra.mxu0 %v4551
    %5173 = vmatmul.bf16.gmra.mxu0 %v3514
    %v5174 = vpop.f32.mrf.mxu0
    %v5175 = vadd.f32 %v536, %v5174
    %v5176 = vpop.f32.mrf.mxu0
    %5177 = vdwg.mxu0
    %5178 = vmatpush.bf16.msra.mxu0 %v4671
    %5179 = vmatpush.bf16.msra.mxu0 %v4663
    %5180 = vmatpush.bf16.msra.mxu0 %v4655
    %5181 = vmatpush.bf16.msra.mxu0 %v4647
    %5182 = vmatpush.bf16.msra.mxu0 %v4639
    %5183 = vmatpush.bf16.msra.mxu0 %v4631
    %5184 = vmatpush.bf16.msra.mxu0 %v4623
    %5185 = vmatpush.bf16.msra.mxu0 %v4615
    %5186 = vmatmul.bf16.gmra.mxu0 %v3515
    %v5187 = vpop.f32.mrf.mxu0
    %v5188 = vadd.f32 %v5175, %v5187
    %v5189 = vpop.f32.mrf.mxu0
    %5190 = vdwg.mxu0
    %5191 = vmatpush.bf16.msra.mxu0 %v4735
    %5192 = vmatpush.bf16.msra.mxu0 %v4727
    %5193 = vmatpush.bf16.msra.mxu0 %v4719
    %5194 = vmatpush.bf16.msra.mxu0 %v4711
    %5195 = vmatpush.bf16.msra.mxu0 %v4703
    %5196 = vmatpush.bf16.msra.mxu0 %v4695
    %5197 = vmatpush.bf16.msra.mxu0 %v4687
    %5198 = vmatpush.bf16.msra.mxu0 %v4679
    %5199 = vmatmul.bf16.gmra.mxu0 %v3521
    %v5200 = vpop.f32.mrf.mxu0
    %v5201 = vadd.f32 %v5188, %v5200
    %v5202 = vpop.f32.mrf.mxu0
    %5203 = vdwg.mxu0
    %5204 = vmatpush.bf16.msra.mxu0 %v4799
    %5205 = vmatpush.bf16.msra.mxu0 %v4791
    %5206 = vmatpush.bf16.msra.mxu0 %v4783
    %5207 = vmatpush.bf16.msra.mxu0 %v4775
    %5208 = vmatpush.bf16.msra.mxu0 %v4767
    %5209 = vmatpush.bf16.msra.mxu0 %v4759
    %5210 = vmatpush.bf16.msra.mxu0 %v4751
    %5211 = vmatpush.bf16.msra.mxu0 %v4743
    %5212 = vmatmul.bf16.gmra.mxu0 %v3522
    %v5213 = vpop.f32.mrf.mxu0
    %v5214 = vadd.f32 %v5201, %v5213
    %v5215 = vpop.f32.mrf.mxu0
    %5216 = vdwg.mxu0
    %5217 = vmatpush.bf16.msra.mxu0 %v4608
    %5218 = vmatpush.bf16.msra.mxu0 %v4600
    %5219 = vmatpush.bf16.msra.mxu0 %v4592
    %5220 = vmatpush.bf16.msra.mxu0 %v4584
    %5221 = vmatpush.bf16.msra.mxu0 %v4576
    %5222 = vmatpush.bf16.msra.mxu0 %v4568
    %5223 = vmatpush.bf16.msra.mxu0 %v4560
    %5224 = vmatpush.bf16.msra.mxu0 %v4552
    %5225 = vmatmul.bf16.gmra.mxu0 %v3514
    %v5226 = vpop.f32.mrf.mxu0
    %v5227 = vadd.f32 %v537, %v5226
    %v5228 = vpop.f32.mrf.mxu0
    %5229 = vdwg.mxu0
    %5230 = vmatpush.bf16.msra.mxu0 %v4672
    %5231 = vmatpush.bf16.msra.mxu0 %v4664
    %5232 = vmatpush.bf16.msra.mxu0 %v4656
    %5233 = vmatpush.bf16.msra.mxu0 %v4648
    %5234 = vmatpush.bf16.msra.mxu0 %v4640
    %5235 = vmatpush.bf16.msra.mxu0 %v4632
    %5236 = vmatpush.bf16.msra.mxu0 %v4624
    %5237 = vmatpush.bf16.msra.mxu0 %v4616
    %5238 = vmatmul.bf16.gmra.mxu0 %v3515
    %v5239 = vpop.f32.mrf.mxu0
    %v5240 = vadd.f32 %v5227, %v5239
    %v5241 = vpop.f32.mrf.mxu0
    %5242 = vdwg.mxu0
    %5243 = vmatpush.bf16.msra.mxu0 %v4736
    %5244 = vmatpush.bf16.msra.mxu0 %v4728
    %5245 = vmatpush.bf16.msra.mxu0 %v4720
    %5246 = vmatpush.bf16.msra.mxu0 %v4712
    %5247 = vmatpush.bf16.msra.mxu0 %v4704
    %5248 = vmatpush.bf16.msra.mxu0 %v4696
    %5249 = vmatpush.bf16.msra.mxu0 %v4688
    %5250 = vmatpush.bf16.msra.mxu0 %v4680
    %5251 = vmatmul.bf16.gmra.mxu0 %v3521
    %v5252 = vpop.f32.mrf.mxu0
    %v5253 = vadd.f32 %v5240, %v5252
    %v5254 = vpop.f32.mrf.mxu0
    %5255 = vdwg.mxu0
    %5256 = vmatpush.bf16.msra.mxu0 %v4800
    %5257 = vmatpush.bf16.msra.mxu0 %v4792
    %5258 = vmatpush.bf16.msra.mxu0 %v4784
    %5259 = vmatpush.bf16.msra.mxu0 %v4776
    %5260 = vmatpush.bf16.msra.mxu0 %v4768
    %5261 = vmatpush.bf16.msra.mxu0 %v4760
    %5262 = vmatpush.bf16.msra.mxu0 %v4752
    %5263 = vmatpush.bf16.msra.mxu0 %v4744
    %5264 = vmatmul.bf16.gmra.mxu0 %v3522
    %v5265 = vpop.f32.mrf.mxu0
    %v5266 = vadd.f32 %v5253, %v5265
    %v5267 = vpop.f32.mrf.mxu0
    %5268 = vdwg.mxu0
    %5269 = vmatpush.bf16.msra.mxu0 %v4609
    %5270 = vmatpush.bf16.msra.mxu0 %v4601
    %5271 = vmatpush.bf16.msra.mxu0 %v4593
    %5272 = vmatpush.bf16.msra.mxu0 %v4585
    %5273 = vmatpush.bf16.msra.mxu0 %v4577
    %5274 = vmatpush.bf16.msra.mxu0 %v4569
    %5275 = vmatpush.bf16.msra.mxu0 %v4561
    %5276 = vmatpush.bf16.msra.mxu0 %v4553
    %5277 = vmatmul.bf16.gmra.mxu0 %v3514
    %v5278 = vpop.f32.mrf.mxu0
    %v5279 = vadd.f32 %v538, %v5278
    %v5280 = vpop.f32.mrf.mxu0
    %5281 = vdwg.mxu0
    %5282 = vmatpush.bf16.msra.mxu0 %v4673
    %5283 = vmatpush.bf16.msra.mxu0 %v4665
    %5284 = vmatpush.bf16.msra.mxu0 %v4657
    %5285 = vmatpush.bf16.msra.mxu0 %v4649
    %5286 = vmatpush.bf16.msra.mxu0 %v4641
    %5287 = vmatpush.bf16.msra.mxu0 %v4633
    %5288 = vmatpush.bf16.msra.mxu0 %v4625
    %5289 = vmatpush.bf16.msra.mxu0 %v4617
    %5290 = vmatmul.bf16.gmra.mxu0 %v3515
    %v5291 = vpop.f32.mrf.mxu0
    %v5292 = vadd.f32 %v5279, %v5291
    %v5293 = vpop.f32.mrf.mxu0
    %5294 = vdwg.mxu0
    %5295 = vmatpush.bf16.msra.mxu0 %v4737
    %5296 = vmatpush.bf16.msra.mxu0 %v4729
    %5297 = vmatpush.bf16.msra.mxu0 %v4721
    %5298 = vmatpush.bf16.msra.mxu0 %v4713
    %5299 = vmatpush.bf16.msra.mxu0 %v4705
    %5300 = vmatpush.bf16.msra.mxu0 %v4697
    %5301 = vmatpush.bf16.msra.mxu0 %v4689
    %5302 = vmatpush.bf16.msra.mxu0 %v4681
    %5303 = vmatmul.bf16.gmra.mxu0 %v3521
    %v5304 = vpop.f32.mrf.mxu0
    %v5305 = vadd.f32 %v5292, %v5304
    %v5306 = vpop.f32.mrf.mxu0
    %5307 = vdwg.mxu0
    %5308 = vmatpush.bf16.msra.mxu0 %v4801
    %5309 = vmatpush.bf16.msra.mxu0 %v4793
    %5310 = vmatpush.bf16.msra.mxu0 %v4785
    %5311 = vmatpush.bf16.msra.mxu0 %v4777
    %5312 = vmatpush.bf16.msra.mxu0 %v4769
    %5313 = vmatpush.bf16.msra.mxu0 %v4761
    %5314 = vmatpush.bf16.msra.mxu0 %v4753
    %5315 = vmatpush.bf16.msra.mxu0 %v4745
    %5316 = vmatmul.bf16.gmra.mxu0 %v3522
    %v5317 = vpop.f32.mrf.mxu0
    %v5318 = vadd.f32 %v5305, %v5317
    %v5319 = vpop.f32.mrf.mxu0
    %5320 = vdwg.mxu0
    %5321 = vmatpush.bf16.msra.mxu0 %v4610
    %5322 = vmatpush.bf16.msra.mxu0 %v4602
    %5323 = vmatpush.bf16.msra.mxu0 %v4594
    %5324 = vmatpush.bf16.msra.mxu0 %v4586
    %5325 = vmatpush.bf16.msra.mxu0 %v4578
    %5326 = vmatpush.bf16.msra.mxu0 %v4570
    %5327 = vmatpush.bf16.msra.mxu0 %v4562
    %5328 = vmatpush.bf16.msra.mxu0 %v4554
    %5329 = vmatmul.bf16.gmra.mxu0 %v3514
    %v5330 = vpop.f32.mrf.mxu0
    %v5331 = vadd.f32 %v539, %v5330
    %v5332 = vpop.f32.mrf.mxu0
    %5333 = vdwg.mxu0
    %5334 = vmatpush.bf16.msra.mxu0 %v4674
    %5335 = vmatpush.bf16.msra.mxu0 %v4666
    %5336 = vmatpush.bf16.msra.mxu0 %v4658
    %5337 = vmatpush.bf16.msra.mxu0 %v4650
    %5338 = vmatpush.bf16.msra.mxu0 %v4642
    %5339 = vmatpush.bf16.msra.mxu0 %v4634
    %5340 = vmatpush.bf16.msra.mxu0 %v4626
    %5341 = vmatpush.bf16.msra.mxu0 %v4618
    %5342 = vmatmul.bf16.gmra.mxu0 %v3515
    %v5343 = vpop.f32.mrf.mxu0
    %v5344 = vadd.f32 %v5331, %v5343
    %v5345 = vpop.f32.mrf.mxu0
    %5346 = vdwg.mxu0
    %5347 = vmatpush.bf16.msra.mxu0 %v4738
    %5348 = vmatpush.bf16.msra.mxu0 %v4730
    %5349 = vmatpush.bf16.msra.mxu0 %v4722
    %5350 = vmatpush.bf16.msra.mxu0 %v4714
    %5351 = vmatpush.bf16.msra.mxu0 %v4706
    %5352 = vmatpush.bf16.msra.mxu0 %v4698
    %5353 = vmatpush.bf16.msra.mxu0 %v4690
    %5354 = vmatpush.bf16.msra.mxu0 %v4682
    %5355 = vmatmul.bf16.gmra.mxu0 %v3521
    %v5356 = vpop.f32.mrf.mxu0
    %v5357 = vadd.f32 %v5344, %v5356
    %v5358 = vpop.f32.mrf.mxu0
    %5359 = vdwg.mxu0
    %5360 = vmatpush.bf16.msra.mxu0 %v4802
    %5361 = vmatpush.bf16.msra.mxu0 %v4794
    %5362 = vmatpush.bf16.msra.mxu0 %v4786
    %5363 = vmatpush.bf16.msra.mxu0 %v4778
    %5364 = vmatpush.bf16.msra.mxu0 %v4770
    %5365 = vmatpush.bf16.msra.mxu0 %v4762
    %5366 = vmatpush.bf16.msra.mxu0 %v4754
    %5367 = vmatpush.bf16.msra.mxu0 %v4746
    %5368 = vmatmul.bf16.gmra.mxu0 %v3522
    %v5369 = vpop.f32.mrf.mxu0
    %v5370 = vadd.f32 %v5357, %v5369
    %v5371 = vpop.f32.mrf.mxu0
    %5372 = vdwg.mxu0
    %5373 = vmatpush.bf16.msra.mxu0 %v4611
    %5374 = vmatpush.bf16.msra.mxu0 %v4603
    %5375 = vmatpush.bf16.msra.mxu0 %v4595
    %5376 = vmatpush.bf16.msra.mxu0 %v4587
    %5377 = vmatpush.bf16.msra.mxu0 %v4579
    %5378 = vmatpush.bf16.msra.mxu0 %v4571
    %5379 = vmatpush.bf16.msra.mxu0 %v4563
    %5380 = vmatpush.bf16.msra.mxu0 %v4555
    %5381 = vmatmul.bf16.gmra.mxu0 %v3514
    %v5382 = vpop.f32.mrf.mxu0
    %v5383 = vadd.f32 %v540, %v5382
    %v5384 = vpop.f32.mrf.mxu0
    %5385 = vdwg.mxu0
    %5386 = vmatpush.bf16.msra.mxu0 %v4675
    %5387 = vmatpush.bf16.msra.mxu0 %v4667
    %5388 = vmatpush.bf16.msra.mxu0 %v4659
    %5389 = vmatpush.bf16.msra.mxu0 %v4651
    %5390 = vmatpush.bf16.msra.mxu0 %v4643
    %5391 = vmatpush.bf16.msra.mxu0 %v4635
    %5392 = vmatpush.bf16.msra.mxu0 %v4627
    %5393 = vmatpush.bf16.msra.mxu0 %v4619
    %5394 = vmatmul.bf16.gmra.mxu0 %v3515
    %v5395 = vpop.f32.mrf.mxu0
    %v5396 = vadd.f32 %v5383, %v5395
    %v5397 = vpop.f32.mrf.mxu0
    %5398 = vdwg.mxu0
    %5399 = vmatpush.bf16.msra.mxu0 %v4739
    %5400 = vmatpush.bf16.msra.mxu0 %v4731
    %5401 = vmatpush.bf16.msra.mxu0 %v4723
    %5402 = vmatpush.bf16.msra.mxu0 %v4715
    %5403 = vmatpush.bf16.msra.mxu0 %v4707
    %5404 = vmatpush.bf16.msra.mxu0 %v4699
    %5405 = vmatpush.bf16.msra.mxu0 %v4691
    %5406 = vmatpush.bf16.msra.mxu0 %v4683
    %5407 = vmatmul.bf16.gmra.mxu0 %v3521
    %v5408 = vpop.f32.mrf.mxu0
    %v5409 = vadd.f32 %v5396, %v5408
    %v5410 = vpop.f32.mrf.mxu0
    %5411 = vdwg.mxu0
    %5412 = vmatpush.bf16.msra.mxu0 %v4803
    %5413 = vmatpush.bf16.msra.mxu0 %v4795
    %5414 = vmatpush.bf16.msra.mxu0 %v4787
    %5415 = vmatpush.bf16.msra.mxu0 %v4779
    %5416 = vmatpush.bf16.msra.mxu0 %v4771
    %5417 = vmatpush.bf16.msra.mxu0 %v4763
    %5418 = vmatpush.bf16.msra.mxu0 %v4755
    %5419 = vmatpush.bf16.msra.mxu0 %v4747
    %5420 = vmatmul.bf16.gmra.mxu0 %v3522
    %v5421 = vpop.f32.mrf.mxu0
    %v5422 = vadd.f32 %v5409, %v5421
    %v5423 = vpop.f32.mrf.mxu0
    %5424 = vdwg.mxu0
    %5425 = vmatpush.bf16.msra.mxu0 %v4612
    %5426 = vmatpush.bf16.msra.mxu0 %v4604
    %5427 = vmatpush.bf16.msra.mxu0 %v4596
    %5428 = vmatpush.bf16.msra.mxu0 %v4588
    %5429 = vmatpush.bf16.msra.mxu0 %v4580
    %5430 = vmatpush.bf16.msra.mxu0 %v4572
    %5431 = vmatpush.bf16.msra.mxu0 %v4564
    %5432 = vmatpush.bf16.msra.mxu0 %v4556
    %5433 = vmatmul.bf16.gmra.mxu0 %v3514
    %v5434 = vpop.f32.mrf.mxu0
    %v5435 = vadd.f32 %v541, %v5434
    %v5436 = vpop.f32.mrf.mxu0
    %5437 = vdwg.mxu0
    %5438 = vmatpush.bf16.msra.mxu0 %v4676
    %5439 = vmatpush.bf16.msra.mxu0 %v4668
    %5440 = vmatpush.bf16.msra.mxu0 %v4660
    %5441 = vmatpush.bf16.msra.mxu0 %v4652
    %5442 = vmatpush.bf16.msra.mxu0 %v4644
    %5443 = vmatpush.bf16.msra.mxu0 %v4636
    %5444 = vmatpush.bf16.msra.mxu0 %v4628
    %5445 = vmatpush.bf16.msra.mxu0 %v4620
    %5446 = vmatmul.bf16.gmra.mxu0 %v3515
    %v5447 = vpop.f32.mrf.mxu0
    %v5448 = vadd.f32 %v5435, %v5447
    %v5449 = vpop.f32.mrf.mxu0
    %5450 = vdwg.mxu0
    %5451 = vmatpush.bf16.msra.mxu0 %v4740
    %5452 = vmatpush.bf16.msra.mxu0 %v4732
    %5453 = vmatpush.bf16.msra.mxu0 %v4724
    %5454 = vmatpush.bf16.msra.mxu0 %v4716
    %5455 = vmatpush.bf16.msra.mxu0 %v4708
    %5456 = vmatpush.bf16.msra.mxu0 %v4700
    %5457 = vmatpush.bf16.msra.mxu0 %v4692
    %5458 = vmatpush.bf16.msra.mxu0 %v4684
    %5459 = vmatmul.bf16.gmra.mxu0 %v3521
    %v5460 = vpop.f32.mrf.mxu0
    %v5461 = vadd.f32 %v5448, %v5460
    %v5462 = vpop.f32.mrf.mxu0
    %5463 = vdwg.mxu0
    %5464 = vmatpush.bf16.msra.mxu0 %v4804
    %5465 = vmatpush.bf16.msra.mxu0 %v4796
    %5466 = vmatpush.bf16.msra.mxu0 %v4788
    %5467 = vmatpush.bf16.msra.mxu0 %v4780
    %5468 = vmatpush.bf16.msra.mxu0 %v4772
    %5469 = vmatpush.bf16.msra.mxu0 %v4764
    %5470 = vmatpush.bf16.msra.mxu0 %v4756
    %5471 = vmatpush.bf16.msra.mxu0 %v4748
    %5472 = vmatmul.bf16.gmra.mxu0 %v3522
    %v5473 = vpop.f32.mrf.mxu0
    %v5474 = vadd.f32 %v5461, %v5473
    %v5475 = vpop.f32.mrf.mxu0
    %5476 = vdwg.mxu0
    %s5477 = scalar_lea.vmem %s0, 4
    %v5478 = vld [vmem:[%s5477] sm:$0x3]
    %5480 = vset.pattern.permute.xlu0 0
    %5481 = vperm.xlu0 %5480, %v5478
    %v5482 = vpop.permute.xlu0 %5481
    %v5484 = vmul.f32 %v5482, %v90
    %v5485 = vmul.f32 %v5482, %v91
    %v5486 = vmul.f32 %v5482, %v92
    %v5487 = vmul.f32 %v5482, %v93
    %v5488 = vmul.f32 %v5482, %v94
    %v5489 = vmul.f32 %v5482, %v95
    %v5490 = vmul.f32 %v5482, %v96
    %v5491 = vmul.f32 %v5482, %v97
    %v5492 = vadd.f32 %v5484, %v115
    %v5493 = vadd.f32 %v5485, %v116
    %v5494 = vadd.f32 %v5486, %v117
    %v5495 = vadd.f32 %v5487, %v118
    %v5496 = vadd.f32 %v5488, %v119
    %v5497 = vadd.f32 %v5489, %v120
    %v5498 = vadd.f32 %v5490, %v121
    %v5499 = vadd.f32 %v5491, %v122
    %5500 = vmatpush.bf16.msra.mxu0 %v2841
    %5501 = vmatpush.bf16.msra.mxu0 %v2833
    %5502 = vmatpush.bf16.msra.mxu0 %v2825
    %5503 = vmatpush.bf16.msra.mxu0 %v2817
    %5504 = vmatpush.bf16.msra.mxu0 %v2809
    %5505 = vmatpush.bf16.msra.mxu0 %v2801
    %5506 = vmatpush.bf16.msra.mxu0 %v2793
    %5507 = vmatpush.bf16.msra.mxu0 %v2785
    %5508 = vmatmul.bf16.gmra.mxu0 %v3514
    %v5509 = vpop.f32.mrf.mxu0
    %v5510 = vadd.f32 0.0, %v5509
    %v5511 = vpop.f32.mrf.mxu0
    %5512 = vdwg.mxu0
    %5513 = vmatpush.bf16.msra.mxu0 %v2905
    %5514 = vmatpush.bf16.msra.mxu0 %v2897
    %5515 = vmatpush.bf16.msra.mxu0 %v2889
    %5516 = vmatpush.bf16.msra.mxu0 %v2881
    %5517 = vmatpush.bf16.msra.mxu0 %v2873
    %5518 = vmatpush.bf16.msra.mxu0 %v2865
    %5519 = vmatpush.bf16.msra.mxu0 %v2857
    %5520 = vmatpush.bf16.msra.mxu0 %v2849
    %5521 = vmatmul.bf16.gmra.mxu0 %v3515
    %v5522 = vpop.f32.mrf.mxu0
    %v5523 = vadd.f32 %v5510, %v5522
    %v5524 = vpop.f32.mrf.mxu0
    %5525 = vdwg.mxu0
    %5526 = vmatpush.bf16.msra.mxu0 %v2842
    %5527 = vmatpush.bf16.msra.mxu0 %v2834
    %5528 = vmatpush.bf16.msra.mxu0 %v2826
    %5529 = vmatpush.bf16.msra.mxu0 %v2818
    %5530 = vmatpush.bf16.msra.mxu0 %v2810
    %5531 = vmatpush.bf16.msra.mxu0 %v2802
    %5532 = vmatpush.bf16.msra.mxu0 %v2794
    %5533 = vmatpush.bf16.msra.mxu0 %v2786
    %5534 = vmatmul.bf16.gmra.mxu0 %v3514
    %v5535 = vpop.f32.mrf.mxu0
    %v5536 = vadd.f32 0.0, %v5535
    %v5537 = vpop.f32.mrf.mxu0
    %5538 = vdwg.mxu0
    %5539 = vmatpush.bf16.msra.mxu0 %v2906
    %5540 = vmatpush.bf16.msra.mxu0 %v2898
    %5541 = vmatpush.bf16.msra.mxu0 %v2890
    %5542 = vmatpush.bf16.msra.mxu0 %v2882
    %5543 = vmatpush.bf16.msra.mxu0 %v2874
    %5544 = vmatpush.bf16.msra.mxu0 %v2866
    %5545 = vmatpush.bf16.msra.mxu0 %v2858
    %5546 = vmatpush.bf16.msra.mxu0 %v2850
    %5547 = vmatmul.bf16.gmra.mxu0 %v3515
    %v5548 = vpop.f32.mrf.mxu0
    %v5549 = vadd.f32 %v5536, %v5548
    %v5550 = vpop.f32.mrf.mxu0
    %5551 = vdwg.mxu0
    %5552 = vmatpush.bf16.msra.mxu0 %v2843
    %5553 = vmatpush.bf16.msra.mxu0 %v2835
    %5554 = vmatpush.bf16.msra.mxu0 %v2827
    %5555 = vmatpush.bf16.msra.mxu0 %v2819
    %5556 = vmatpush.bf16.msra.mxu0 %v2811
    %5557 = vmatpush.bf16.msra.mxu0 %v2803
    %5558 = vmatpush.bf16.msra.mxu0 %v2795
    %5559 = vmatpush.bf16.msra.mxu0 %v2787
    %5560 = vmatmul.bf16.gmra.mxu0 %v3514
    %v5561 = vpop.f32.mrf.mxu0
    %v5562 = vadd.f32 0.0, %v5561
    %v5563 = vpop.f32.mrf.mxu0
    %5564 = vdwg.mxu0
    %5565 = vmatpush.bf16.msra.mxu0 %v2907
    %5566 = vmatpush.bf16.msra.mxu0 %v2899
    %5567 = vmatpush.bf16.msra.mxu0 %v2891
    %5568 = vmatpush.bf16.msra.mxu0 %v2883
    %5569 = vmatpush.bf16.msra.mxu0 %v2875
    %5570 = vmatpush.bf16.msra.mxu0 %v2867
    %5571 = vmatpush.bf16.msra.mxu0 %v2859
    %5572 = vmatpush.bf16.msra.mxu0 %v2851
    %5573 = vmatmul.bf16.gmra.mxu0 %v3515
    %v5574 = vpop.f32.mrf.mxu0
    %v5575 = vadd.f32 %v5562, %v5574
    %v5576 = vpop.f32.mrf.mxu0
    %5577 = vdwg.mxu0
    %5578 = vmatpush.bf16.msra.mxu0 %v2844
    %5579 = vmatpush.bf16.msra.mxu0 %v2836
    %5580 = vmatpush.bf16.msra.mxu0 %v2828
    %5581 = vmatpush.bf16.msra.mxu0 %v2820
    %5582 = vmatpush.bf16.msra.mxu0 %v2812
    %5583 = vmatpush.bf16.msra.mxu0 %v2804
    %5584 = vmatpush.bf16.msra.mxu0 %v2796
    %5585 = vmatpush.bf16.msra.mxu0 %v2788
    %5586 = vmatmul.bf16.gmra.mxu0 %v3514
    %v5587 = vpop.f32.mrf.mxu0
    %v5588 = vadd.f32 0.0, %v5587
    %v5589 = vpop.f32.mrf.mxu0
    %5590 = vdwg.mxu0
    %5591 = vmatpush.bf16.msra.mxu0 %v2908
    %5592 = vmatpush.bf16.msra.mxu0 %v2900
    %5593 = vmatpush.bf16.msra.mxu0 %v2892
    %5594 = vmatpush.bf16.msra.mxu0 %v2884
    %5595 = vmatpush.bf16.msra.mxu0 %v2876
    %5596 = vmatpush.bf16.msra.mxu0 %v2868
    %5597 = vmatpush.bf16.msra.mxu0 %v2860
    %5598 = vmatpush.bf16.msra.mxu0 %v2852
    %5599 = vmatmul.bf16.gmra.mxu0 %v3515
    %v5600 = vpop.f32.mrf.mxu0
    %v5601 = vadd.f32 %v5588, %v5600
    %v5602 = vpop.f32.mrf.mxu0
    %5603 = vdwg.mxu0
    %5604 = vmatpush.bf16.msra.mxu0 %v2845
    %5605 = vmatpush.bf16.msra.mxu0 %v2837
    %5606 = vmatpush.bf16.msra.mxu0 %v2829
    %5607 = vmatpush.bf16.msra.mxu0 %v2821
    %5608 = vmatpush.bf16.msra.mxu0 %v2813
    %5609 = vmatpush.bf16.msra.mxu0 %v2805
    %5610 = vmatpush.bf16.msra.mxu0 %v2797
    %5611 = vmatpush.bf16.msra.mxu0 %v2789
    %5612 = vmatmul.bf16.gmra.mxu0 %v3514
    %v5613 = vpop.f32.mrf.mxu0
    %v5614 = vadd.f32 0.0, %v5613
    %v5615 = vpop.f32.mrf.mxu0
    %5616 = vdwg.mxu0
    %5617 = vmatpush.bf16.msra.mxu0 %v2909
    %5618 = vmatpush.bf16.msra.mxu0 %v2901
    %5619 = vmatpush.bf16.msra.mxu0 %v2893
    %5620 = vmatpush.bf16.msra.mxu0 %v2885
    %5621 = vmatpush.bf16.msra.mxu0 %v2877
    %5622 = vmatpush.bf16.msra.mxu0 %v2869
    %5623 = vmatpush.bf16.msra.mxu0 %v2861
    %5624 = vmatpush.bf16.msra.mxu0 %v2853
    %5625 = vmatmul.bf16.gmra.mxu0 %v3515
    %v5626 = vpop.f32.mrf.mxu0
    %v5627 = vadd.f32 %v5614, %v5626
    %v5628 = vpop.f32.mrf.mxu0
    %5629 = vdwg.mxu0
    %5630 = vmatpush.bf16.msra.mxu0 %v2846
    %5631 = vmatpush.bf16.msra.mxu0 %v2838
    %5632 = vmatpush.bf16.msra.mxu0 %v2830
    %5633 = vmatpush.bf16.msra.mxu0 %v2822
    %5634 = vmatpush.bf16.msra.mxu0 %v2814
    %5635 = vmatpush.bf16.msra.mxu0 %v2806
    %5636 = vmatpush.bf16.msra.mxu0 %v2798
    %5637 = vmatpush.bf16.msra.mxu0 %v2790
    %5638 = vmatmul.bf16.gmra.mxu0 %v3514
    %v5639 = vpop.f32.mrf.mxu0
    %v5640 = vadd.f32 0.0, %v5639
    %v5641 = vpop.f32.mrf.mxu0
    %5642 = vdwg.mxu0
    %5643 = vmatpush.bf16.msra.mxu0 %v2910
    %5644 = vmatpush.bf16.msra.mxu0 %v2902
    %5645 = vmatpush.bf16.msra.mxu0 %v2894
    %5646 = vmatpush.bf16.msra.mxu0 %v2886
    %5647 = vmatpush.bf16.msra.mxu0 %v2878
    %5648 = vmatpush.bf16.msra.mxu0 %v2870
    %5649 = vmatpush.bf16.msra.mxu0 %v2862
    %5650 = vmatpush.bf16.msra.mxu0 %v2854
    %5651 = vmatmul.bf16.gmra.mxu0 %v3515
    %v5652 = vpop.f32.mrf.mxu0
    %v5653 = vadd.f32 %v5640, %v5652
    %v5654 = vpop.f32.mrf.mxu0
    %5655 = vdwg.mxu0
    %5656 = vmatpush.bf16.msra.mxu0 %v2847
    %5657 = vmatpush.bf16.msra.mxu0 %v2839
    %5658 = vmatpush.bf16.msra.mxu0 %v2831
    %5659 = vmatpush.bf16.msra.mxu0 %v2823
    %5660 = vmatpush.bf16.msra.mxu0 %v2815
    %5661 = vmatpush.bf16.msra.mxu0 %v2807
    %5662 = vmatpush.bf16.msra.mxu0 %v2799
    %5663 = vmatpush.bf16.msra.mxu0 %v2791
    %5664 = vmatmul.bf16.gmra.mxu0 %v3514
    %v5665 = vpop.f32.mrf.mxu0
    %v5666 = vadd.f32 0.0, %v5665
    %v5667 = vpop.f32.mrf.mxu0
    %5668 = vdwg.mxu0
    %5669 = vmatpush.bf16.msra.mxu0 %v2911
    %5670 = vmatpush.bf16.msra.mxu0 %v2903
    %5671 = vmatpush.bf16.msra.mxu0 %v2895
    %5672 = vmatpush.bf16.msra.mxu0 %v2887
    %5673 = vmatpush.bf16.msra.mxu0 %v2879
    %5674 = vmatpush.bf16.msra.mxu0 %v2871
    %5675 = vmatpush.bf16.msra.mxu0 %v2863
    %5676 = vmatpush.bf16.msra.mxu0 %v2855
    %5677 = vmatmul.bf16.gmra.mxu0 %v3515
    %v5678 = vpop.f32.mrf.mxu0
    %v5679 = vadd.f32 %v5666, %v5678
    %v5680 = vpop.f32.mrf.mxu0
    %5681 = vdwg.mxu0
    %5682 = vmatpush.bf16.msra.mxu0 %v2848
    %5683 = vmatpush.bf16.msra.mxu0 %v2840
    %5684 = vmatpush.bf16.msra.mxu0 %v2832
    %5685 = vmatpush.bf16.msra.mxu0 %v2824
    %5686 = vmatpush.bf16.msra.mxu0 %v2816
    %5687 = vmatpush.bf16.msra.mxu0 %v2808
    %5688 = vmatpush.bf16.msra.mxu0 %v2800
    %5689 = vmatpush.bf16.msra.mxu0 %v2792
    %5690 = vmatmul.bf16.gmra.mxu0 %v3514
    %v5691 = vpop.f32.mrf.mxu0
    %v5692 = vadd.f32 0.0, %v5691
    %v5693 = vpop.f32.mrf.mxu0
    %5694 = vdwg.mxu0
    %5695 = vmatpush.bf16.msra.mxu0 %v2912
    %5696 = vmatpush.bf16.msra.mxu0 %v2904
    %5697 = vmatpush.bf16.msra.mxu0 %v2896
    %5698 = vmatpush.bf16.msra.mxu0 %v2888
    %5699 = vmatpush.bf16.msra.mxu0 %v2880
    %5700 = vmatpush.bf16.msra.mxu0 %v2872
    %5701 = vmatpush.bf16.msra.mxu0 %v2864
    %5702 = vmatpush.bf16.msra.mxu0 %v2856
    %5703 = vmatmul.bf16.gmra.mxu0 %v3515
    %v5704 = vpop.f32.mrf.mxu0
    %v5705 = vadd.f32 %v5692, %v5704
    %v5706 = vpop.f32.mrf.mxu0
    %5707 = vdwg.mxu0
    %v5708 = vadd.f32 %v5492, %v5523
    %v5709 = vadd.f32 %v5493, %v5549
    %v5710 = vadd.f32 %v5494, %v5575
    %v5711 = vadd.f32 %v5495, %v5601
    %v5712 = vadd.f32 %v5496, %v5627
    %v5713 = vadd.f32 %v5497, %v5653
    %v5714 = vadd.f32 %v5498, %v5679
    %v5715 = vadd.f32 %v5499, %v5705
    %v5716 = vxor.u32 %v5110, 2147483648
    %v5717 = vxor.u32 %v5162, 2147483648
    %v5718 = vxor.u32 %v5214, 2147483648
    %v5719 = vxor.u32 %v5266, 2147483648
    %v5720 = vxor.u32 %v5318, 2147483648
    %v5721 = vxor.u32 %v5370, 2147483648
    %v5722 = vmul.f32 %v5716, 1.442695
    %v5723 = vpow.pop %v5722
    %v5724 = vmul.f32 %v5717, 1.442695
    %v5725 = vpow.pop %v5724
    %v5726 = vmul.f32 %v5718, 1.442695
    %v5727 = vpow.pop %v5726
    %v5728 = vmul.f32 %v5719, 1.442695
    %v5729 = vpow.pop %v5728
    %v5730 = vmul.f32 %v5720, 1.442695
    %v5731 = vpow.pop %v5730
    %v5732 = vmul.f32 %v5721, 1.442695
    %v5733 = vpow.pop %v5732
    %v5734 = vadd.f32 %v5723, 1.0
    %v5735 = vadd.f32 %v5725, 1.0
    %v5736 = vadd.f32 %v5727, 1.0
    %v5737 = vadd.f32 %v5729, 1.0
    %v5738 = vadd.f32 %v5731, 1.0
    %v5739 = vadd.f32 %v5733, 1.0
    %v5740 = vrcp.pop %v5734
    %v5741 = vmul.f32 %v5734, %v5740
    %v5742 = vsub.f32 1.0, %v5741
    %v5743 = vmul.f32 %v5740, %v5742
    %v5744 = vadd.f32 %v5740, %v5743
    %vm5745 = vweird.f32 %v5734
    %vm5746 = vweird.f32 %v5740
    %vm5747 = vmor %vm5745, %vm5746
    %v5748 = vsel %vm5747, %v5740, %v5744
    %v5749 = vand.u32 2147483647, %v5734
    %vm5750 = vcmp.eq.f32.partialorder %v5749, 8.507059e+37
    %v5751 = vand.u32 %v5734, 2147483648
    %v5752 = vor.u32 1.1754944e-38, %v5751
    %v5753 = vsel %vm5750, %v5752, %v5748
    %v5754 = vmul.f32 1.0, %v5753
    %v5755 = vrcp.pop %v5735
    %v5756 = vmul.f32 %v5735, %v5755
    %v5757 = vsub.f32 1.0, %v5756
    %v5758 = vmul.f32 %v5755, %v5757
    %v5759 = vadd.f32 %v5755, %v5758
    %vm5760 = vweird.f32 %v5735
    %vm5761 = vweird.f32 %v5755
    %vm5762 = vmor %vm5760, %vm5761
    %v5763 = vsel %vm5762, %v5755, %v5759
    %v5764 = vand.u32 2147483647, %v5735
    %vm5765 = vcmp.eq.f32.partialorder %v5764, 8.507059e+37
    %v5766 = vand.u32 %v5735, 2147483648
    %v5767 = vor.u32 1.1754944e-38, %v5766
    %v5768 = vsel %vm5765, %v5767, %v5763
    %v5769 = vmul.f32 1.0, %v5768
    %v5770 = vrcp.pop %v5736
    %v5771 = vmul.f32 %v5736, %v5770
    %v5772 = vsub.f32 1.0, %v5771
    %v5773 = vmul.f32 %v5770, %v5772
    %v5774 = vadd.f32 %v5770, %v5773
    %vm5775 = vweird.f32 %v5736
    %vm5776 = vweird.f32 %v5770
    %vm5777 = vmor %vm5775, %vm5776
    %v5778 = vsel %vm5777, %v5770, %v5774
    %v5779 = vand.u32 2147483647, %v5736
    %vm5780 = vcmp.eq.f32.partialorder %v5779, 8.507059e+37
    %v5781 = vand.u32 %v5736, 2147483648
    %v5782 = vor.u32 1.1754944e-38, %v5781
    %v5783 = vsel %vm5780, %v5782, %v5778
    %v5784 = vmul.f32 1.0, %v5783
    %v5785 = vrcp.pop %v5737
    %v5786 = vmul.f32 %v5737, %v5785
    %v5787 = vsub.f32 1.0, %v5786
    %v5788 = vmul.f32 %v5785, %v5787
    %v5789 = vadd.f32 %v5785, %v5788
    %vm5790 = vweird.f32 %v5737
    %vm5791 = vweird.f32 %v5785
    %vm5792 = vmor %vm5790, %vm5791
    %v5793 = vsel %vm5792, %v5785, %v5789
    %v5794 = vand.u32 2147483647, %v5737
    %vm5795 = vcmp.eq.f32.partialorder %v5794, 8.507059e+37
    %v5796 = vand.u32 %v5737, 2147483648
    %v5797 = vor.u32 1.1754944e-38, %v5796
    %v5798 = vsel %vm5795, %v5797, %v5793
    %v5799 = vmul.f32 1.0, %v5798
    %v5800 = vrcp.pop %v5738
    %v5801 = vmul.f32 %v5738, %v5800
    %v5802 = vsub.f32 1.0, %v5801
    %v5803 = vmul.f32 %v5800, %v5802
    %v5804 = vadd.f32 %v5800, %v5803
    %vm5805 = vweird.f32 %v5738
    %vm5806 = vweird.f32 %v5800
    %vm5807 = vmor %vm5805, %vm5806
    %v5808 = vsel %vm5807, %v5800, %v5804
    %v5809 = vand.u32 2147483647, %v5738
    %vm5810 = vcmp.eq.f32.partialorder %v5809, 8.507059e+37
    %v5811 = vand.u32 %v5738, 2147483648
    %v5812 = vor.u32 1.1754944e-38, %v5811
    %v5813 = vsel %vm5810, %v5812, %v5808
    %v5814 = vmul.f32 1.0, %v5813
    %v5815 = vrcp.pop %v5739
    %v5816 = vmul.f32 %v5739, %v5815
    %v5817 = vsub.f32 1.0, %v5816
    %v5818 = vmul.f32 %v5815, %v5817
    %v5819 = vadd.f32 %v5815, %v5818
    %vm5820 = vweird.f32 %v5739
    %vm5821 = vweird.f32 %v5815
    %vm5822 = vmor %vm5820, %vm5821
    %v5823 = vsel %vm5822, %v5815, %v5819
    %v5824 = vand.u32 2147483647, %v5739
    %vm5825 = vcmp.eq.f32.partialorder %v5824, 8.507059e+37
    %v5826 = vand.u32 %v5739, 2147483648
    %v5827 = vor.u32 1.1754944e-38, %v5826
    %v5828 = vsel %vm5825, %v5827, %v5823
    %v5829 = vmul.f32 1.0, %v5828
    %v5830 = vtanh.pop %v5422
    %v5831 = vtanh.pop %v5474
    %v5832 = vmul.f32 %v5784, %v3377
    %v5833 = vmul.f32 %v5799, %v3378
    %v5834 = vmul.f32 %v5754, %v5830
    %v5835 = vmul.f32 %v5769, %v5831
    %v5836 = vadd.f32 %v5832, %v5834
    %v5837 = vadd.f32 %v5833, %v5835
    %v5838 = vtanh.pop %v5836
    %v5839 = vtanh.pop %v5837
    %v5840 = vmul.f32 %v5814, %v5838
    %v5841 = vmul.f32 %v5829, %v5839
    %v5842 = vpack.c.bf16 %v5841, %v5840
    %v5843 = vxor.u32 %v5708, 2147483648
    %v5844 = vxor.u32 %v5709, 2147483648
    %v5845 = vxor.u32 %v5710, 2147483648
    %v5846 = vxor.u32 %v5711, 2147483648
    %v5847 = vxor.u32 %v5712, 2147483648
    %v5848 = vxor.u32 %v5713, 2147483648
    %v5849 = vmul.f32 %v5843, 1.442695
    %v5850 = vpow.pop %v5849
    %v5851 = vmul.f32 %v5844, 1.442695
    %v5852 = vpow.pop %v5851
    %v5853 = vmul.f32 %v5845, 1.442695
    %v5854 = vpow.pop %v5853
    %v5855 = vmul.f32 %v5846, 1.442695
    %v5856 = vpow.pop %v5855
    %v5857 = vmul.f32 %v5847, 1.442695
    %v5858 = vpow.pop %v5857
    %v5859 = vmul.f32 %v5848, 1.442695
    %v5860 = vpow.pop %v5859
    %v5861 = vadd.f32 %v5850, 1.0
    %v5862 = vadd.f32 %v5852, 1.0
    %v5863 = vadd.f32 %v5854, 1.0
    %v5864 = vadd.f32 %v5856, 1.0
    %v5865 = vadd.f32 %v5858, 1.0
    %v5866 = vadd.f32 %v5860, 1.0
    %v5867 = vrcp.pop %v5861
    %v5868 = vmul.f32 %v5861, %v5867
    %v5869 = vsub.f32 1.0, %v5868
    %v5870 = vmul.f32 %v5867, %v5869
    %v5871 = vadd.f32 %v5867, %v5870
    %vm5872 = vweird.f32 %v5861
    %vm5873 = vweird.f32 %v5867
    %vm5874 = vmor %vm5872, %vm5873
    %v5875 = vsel %vm5874, %v5867, %v5871
    %v5876 = vand.u32 2147483647, %v5861
    %vm5877 = vcmp.eq.f32.partialorder %v5876, 8.507059e+37
    %v5878 = vand.u32 %v5861, 2147483648
    %v5879 = vor.u32 1.1754944e-38, %v5878
    %v5880 = vsel %vm5877, %v5879, %v5875
    %v5881 = vmul.f32 1.0, %v5880
    %v5882 = vrcp.pop %v5862
    %v5883 = vmul.f32 %v5862, %v5882
    %v5884 = vsub.f32 1.0, %v5883
    %v5885 = vmul.f32 %v5882, %v5884
    %v5886 = vadd.f32 %v5882, %v5885
    %vm5887 = vweird.f32 %v5862
    %vm5888 = vweird.f32 %v5882
    %vm5889 = vmor %vm5887, %vm5888
    %v5890 = vsel %vm5889, %v5882, %v5886
    %v5891 = vand.u32 2147483647, %v5862
    %vm5892 = vcmp.eq.f32.partialorder %v5891, 8.507059e+37
    %v5893 = vand.u32 %v5862, 2147483648
    %v5894 = vor.u32 1.1754944e-38, %v5893
    %v5895 = vsel %vm5892, %v5894, %v5890
    %v5896 = vmul.f32 1.0, %v5895
    %v5897 = vrcp.pop %v5863
    %v5898 = vmul.f32 %v5863, %v5897
    %v5899 = vsub.f32 1.0, %v5898
    %v5900 = vmul.f32 %v5897, %v5899
    %v5901 = vadd.f32 %v5897, %v5900
    %vm5902 = vweird.f32 %v5863
    %vm5903 = vweird.f32 %v5897
    %vm5904 = vmor %vm5902, %vm5903
    %v5905 = vsel %vm5904, %v5897, %v5901
    %v5906 = vand.u32 2147483647, %v5863
    %vm5907 = vcmp.eq.f32.partialorder %v5906, 8.507059e+37
    %v5908 = vand.u32 %v5863, 2147483648
    %v5909 = vor.u32 1.1754944e-38, %v5908
    %v5910 = vsel %vm5907, %v5909, %v5905
    %v5911 = vmul.f32 1.0, %v5910
    %v5912 = vrcp.pop %v5864
    %v5913 = vmul.f32 %v5864, %v5912
    %v5914 = vsub.f32 1.0, %v5913
    %v5915 = vmul.f32 %v5912, %v5914
    %v5916 = vadd.f32 %v5912, %v5915
    %vm5917 = vweird.f32 %v5864
    %vm5918 = vweird.f32 %v5912
    %vm5919 = vmor %vm5917, %vm5918
    %v5920 = vsel %vm5919, %v5912, %v5916
    %v5921 = vand.u32 2147483647, %v5864
    %vm5922 = vcmp.eq.f32.partialorder %v5921, 8.507059e+37
    %v5923 = vand.u32 %v5864, 2147483648
    %v5924 = vor.u32 1.1754944e-38, %v5923
    %v5925 = vsel %vm5922, %v5924, %v5920
    %v5926 = vmul.f32 1.0, %v5925
    %v5927 = vrcp.pop %v5865
    %v5928 = vmul.f32 %v5865, %v5927
    %v5929 = vsub.f32 1.0, %v5928
    %v5930 = vmul.f32 %v5927, %v5929
    %v5931 = vadd.f32 %v5927, %v5930
    %vm5932 = vweird.f32 %v5865
    %vm5933 = vweird.f32 %v5927
    %vm5934 = vmor %vm5932, %vm5933
    %v5935 = vsel %vm5934, %v5927, %v5931
    %v5936 = vand.u32 2147483647, %v5865
    %vm5937 = vcmp.eq.f32.partialorder %v5936, 8.507059e+37
    %v5938 = vand.u32 %v5865, 2147483648
    %v5939 = vor.u32 1.1754944e-38, %v5938
    %v5940 = vsel %vm5937, %v5939, %v5935
    %v5941 = vmul.f32 1.0, %v5940
    %v5942 = vrcp.pop %v5866
    %v5943 = vmul.f32 %v5866, %v5942
    %v5944 = vsub.f32 1.0, %v5943
    %v5945 = vmul.f32 %v5942, %v5944
    %v5946 = vadd.f32 %v5942, %v5945
    %vm5947 = vweird.f32 %v5866
    %vm5948 = vweird.f32 %v5942
    %vm5949 = vmor %vm5947, %vm5948
    %v5950 = vsel %vm5949, %v5942, %v5946
    %v5951 = vand.u32 2147483647, %v5866
    %vm5952 = vcmp.eq.f32.partialorder %v5951, 8.507059e+37
    %v5953 = vand.u32 %v5866, 2147483648
    %v5954 = vor.u32 1.1754944e-38, %v5953
    %v5955 = vsel %vm5952, %v5954, %v5950
    %v5956 = vmul.f32 1.0, %v5955
    %v5957 = vtanh.pop %v5714
    %v5958 = vtanh.pop %v5715
    %v5959 = vmul.f32 %v5911, %v3504
    %v5960 = vmul.f32 %v5926, %v3505
    %v5961 = vmul.f32 %v5881, %v5957
    %v5962 = vmul.f32 %v5896, %v5958
    %v5963 = vadd.f32 %v5959, %v5961
    %v5964 = vadd.f32 %v5960, %v5962
    %v5965 = vtanh.pop %v5963
    %v5966 = vtanh.pop %v5964
    %v5967 = vmul.f32 %v5941, %v5965
    %v5968 = vmul.f32 %v5956, %v5966
    %v5969 = vpack.c.bf16 %v5968, %v5967
    %v5971 = vunpack.c.l.b16 %v5969
    %v5972 = vunpack.c.h.b16 %v5969
    %v5973 = vpack.c.b16 %v5971, %v5971
    %v5974 = vpack.c.b16 %v5972, %v5972
    %v5978 = vunpack.c.l.b16 %v5842
    %v5979 = vunpack.c.h.b16 %v5842
    %v5980 = vpack.c.b16 %v5978, %v5978
    %v5981 = vpack.c.b16 %v5979, %v5979
    %5984 = vmatpush.bf16.msra.mxu0 %v4605
    %5985 = vmatpush.bf16.msra.mxu0 %v4597
    %5986 = vmatpush.bf16.msra.mxu0 %v4589
    %5987 = vmatpush.bf16.msra.mxu0 %v4581
    %5988 = vmatpush.bf16.msra.mxu0 %v4573
    %5989 = vmatpush.bf16.msra.mxu0 %v4565
    %5990 = vmatpush.bf16.msra.mxu0 %v4557
    %5991 = vmatpush.bf16.msra.mxu0 %v4549
    %5992 = vmatmul.bf16.gmra.mxu0 %v5973
    %v5993 = vpop.f32.mrf.mxu0
    %v5994 = vadd.f32 %v534, %v5993
    %v5995 = vpop.f32.mrf.mxu0
    %5996 = vdwg.mxu0
    %5997 = vmatpush.bf16.msra.mxu0 %v4669
    %5998 = vmatpush.bf16.msra.mxu0 %v4661
    %5999 = vmatpush.bf16.msra.mxu0 %v4653
    %6000 = vmatpush.bf16.msra.mxu0 %v4645
    %6001 = vmatpush.bf16.msra.mxu0 %v4637
    %6002 = vmatpush.bf16.msra.mxu0 %v4629
    %6003 = vmatpush.bf16.msra.mxu0 %v4621
    %6004 = vmatpush.bf16.msra.mxu0 %v4613
    %6005 = vmatmul.bf16.gmra.mxu0 %v5974
    %v6006 = vpop.f32.mrf.mxu0
    %v6007 = vadd.f32 %v5994, %v6006
    %v6008 = vpop.f32.mrf.mxu0
    %6009 = vdwg.mxu0
    %6010 = vmatpush.bf16.msra.mxu0 %v4733
    %6011 = vmatpush.bf16.msra.mxu0 %v4725
    %6012 = vmatpush.bf16.msra.mxu0 %v4717
    %6013 = vmatpush.bf16.msra.mxu0 %v4709
    %6014 = vmatpush.bf16.msra.mxu0 %v4701
    %6015 = vmatpush.bf16.msra.mxu0 %v4693
    %6016 = vmatpush.bf16.msra.mxu0 %v4685
    %6017 = vmatpush.bf16.msra.mxu0 %v4677
    %6018 = vmatmul.bf16.gmra.mxu0 %v5980
    %v6019 = vpop.f32.mrf.mxu0
    %v6020 = vadd.f32 %v6007, %v6019
    %v6021 = vpop.f32.mrf.mxu0
    %6022 = vdwg.mxu0
    %6023 = vmatpush.bf16.msra.mxu0 %v4797
    %6024 = vmatpush.bf16.msra.mxu0 %v4789
    %6025 = vmatpush.bf16.msra.mxu0 %v4781
    %6026 = vmatpush.bf16.msra.mxu0 %v4773
    %6027 = vmatpush.bf16.msra.mxu0 %v4765
    %6028 = vmatpush.bf16.msra.mxu0 %v4757
    %6029 = vmatpush.bf16.msra.mxu0 %v4749
    %6030 = vmatpush.bf16.msra.mxu0 %v4741
    %6031 = vmatmul.bf16.gmra.mxu0 %v5981
    %v6032 = vpop.f32.mrf.mxu0
    %v6033 = vadd.f32 %v6020, %v6032
    %v6034 = vpop.f32.mrf.mxu0
    %6035 = vdwg.mxu0
    %6036 = vmatpush.bf16.msra.mxu0 %v4606
    %6037 = vmatpush.bf16.msra.mxu0 %v4598
    %6038 = vmatpush.bf16.msra.mxu0 %v4590
    %6039 = vmatpush.bf16.msra.mxu0 %v4582
    %6040 = vmatpush.bf16.msra.mxu0 %v4574
    %6041 = vmatpush.bf16.msra.mxu0 %v4566
    %6042 = vmatpush.bf16.msra.mxu0 %v4558
    %6043 = vmatpush.bf16.msra.mxu0 %v4550
    %6044 = vmatmul.bf16.gmra.mxu0 %v5973
    %v6045 = vpop.f32.mrf.mxu0
    %v6046 = vadd.f32 %v535, %v6045
    %v6047 = vpop.f32.mrf.mxu0
    %6048 = vdwg.mxu0
    %6049 = vmatpush.bf16.msra.mxu0 %v4670
    %6050 = vmatpush.bf16.msra.mxu0 %v4662
    %6051 = vmatpush.bf16.msra.mxu0 %v4654
    %6052 = vmatpush.bf16.msra.mxu0 %v4646
    %6053 = vmatpush.bf16.msra.mxu0 %v4638
    %6054 = vmatpush.bf16.msra.mxu0 %v4630
    %6055 = vmatpush.bf16.msra.mxu0 %v4622
    %6056 = vmatpush.bf16.msra.mxu0 %v4614
    %6057 = vmatmul.bf16.gmra.mxu0 %v5974
    %v6058 = vpop.f32.mrf.mxu0
    %v6059 = vadd.f32 %v6046, %v6058
    %v6060 = vpop.f32.mrf.mxu0
    %6061 = vdwg.mxu0
    %6062 = vmatpush.bf16.msra.mxu0 %v4734
    %6063 = vmatpush.bf16.msra.mxu0 %v4726
    %6064 = vmatpush.bf16.msra.mxu0 %v4718
    %6065 = vmatpush.bf16.msra.mxu0 %v4710
    %6066 = vmatpush.bf16.msra.mxu0 %v4702
    %6067 = vmatpush.bf16.msra.mxu0 %v4694
    %6068 = vmatpush.bf16.msra.mxu0 %v4686
    %6069 = vmatpush.bf16.msra.mxu0 %v4678
    %6070 = vmatmul.bf16.gmra.mxu0 %v5980
    %v6071 = vpop.f32.mrf.mxu0
    %v6072 = vadd.f32 %v6059, %v6071
    %v6073 = vpop.f32.mrf.mxu0
    %6074 = vdwg.mxu0
    %6075 = vmatpush.bf16.msra.mxu0 %v4798
    %6076 = vmatpush.bf16.msra.mxu0 %v4790
    %6077 = vmatpush.bf16.msra.mxu0 %v4782
    %6078 = vmatpush.bf16.msra.mxu0 %v4774
    %6079 = vmatpush.bf16.msra.mxu0 %v4766
    %6080 = vmatpush.bf16.msra.mxu0 %v4758
    %6081 = vmatpush.bf16.msra.mxu0 %v4750
    %6082 = vmatpush.bf16.msra.mxu0 %v4742
    %6083 = vmatmul.bf16.gmra.mxu0 %v5981
    %v6084 = vpop.f32.mrf.mxu0
    %v6085 = vadd.f32 %v6072, %v6084
    %v6086 = vpop.f32.mrf.mxu0
    %6087 = vdwg.mxu0
    %6088 = vmatpush.bf16.msra.mxu0 %v4607
    %6089 = vmatpush.bf16.msra.mxu0 %v4599
    %6090 = vmatpush.bf16.msra.mxu0 %v4591
    %6091 = vmatpush.bf16.msra.mxu0 %v4583
    %6092 = vmatpush.bf16.msra.mxu0 %v4575
    %6093 = vmatpush.bf16.msra.mxu0 %v4567
    %6094 = vmatpush.bf16.msra.mxu0 %v4559
    %6095 = vmatpush.bf16.msra.mxu0 %v4551
    %6096 = vmatmul.bf16.gmra.mxu0 %v5973
    %v6097 = vpop.f32.mrf.mxu0
    %v6098 = vadd.f32 %v536, %v6097
    %v6099 = vpop.f32.mrf.mxu0
    %6100 = vdwg.mxu0
    %6101 = vmatpush.bf16.msra.mxu0 %v4671
    %6102 = vmatpush.bf16.msra.mxu0 %v4663
    %6103 = vmatpush.bf16.msra.mxu0 %v4655
    %6104 = vmatpush.bf16.msra.mxu0 %v4647
    %6105 = vmatpush.bf16.msra.mxu0 %v4639
    %6106 = vmatpush.bf16.msra.mxu0 %v4631
    %6107 = vmatpush.bf16.msra.mxu0 %v4623
    %6108 = vmatpush.bf16.msra.mxu0 %v4615
    %6109 = vmatmul.bf16.gmra.mxu0 %v5974
    %v6110 = vpop.f32.mrf.mxu0
    %v6111 = vadd.f32 %v6098, %v6110
    %v6112 = vpop.f32.mrf.mxu0
    %6113 = vdwg.mxu0
    %6114 = vmatpush.bf16.msra.mxu0 %v4735
    %6115 = vmatpush.bf16.msra.mxu0 %v4727
    %6116 = vmatpush.bf16.msra.mxu0 %v4719
    %6117 = vmatpush.bf16.msra.mxu0 %v4711
    %6118 = vmatpush.bf16.msra.mxu0 %v4703
    %6119 = vmatpush.bf16.msra.mxu0 %v4695
    %6120 = vmatpush.bf16.msra.mxu0 %v4687
    %6121 = vmatpush.bf16.msra.mxu0 %v4679
    %6122 = vmatmul.bf16.gmra.mxu0 %v5980
    %v6123 = vpop.f32.mrf.mxu0
    %v6124 = vadd.f32 %v6111, %v6123
    %v6125 = vpop.f32.mrf.mxu0
    %6126 = vdwg.mxu0
    %6127 = vmatpush.bf16.msra.mxu0 %v4799
    %6128 = vmatpush.bf16.msra.mxu0 %v4791
    %6129 = vmatpush.bf16.msra.mxu0 %v4783
    %6130 = vmatpush.bf16.msra.mxu0 %v4775
    %6131 = vmatpush.bf16.msra.mxu0 %v4767
    %6132 = vmatpush.bf16.msra.mxu0 %v4759
    %6133 = vmatpush.bf16.msra.mxu0 %v4751
    %6134 = vmatpush.bf16.msra.mxu0 %v4743
    %6135 = vmatmul.bf16.gmra.mxu0 %v5981
    %v6136 = vpop.f32.mrf.mxu0
    %v6137 = vadd.f32 %v6124, %v6136
    %v6138 = vpop.f32.mrf.mxu0
    %6139 = vdwg.mxu0
    %6140 = vmatpush.bf16.msra.mxu0 %v4608
    %6141 = vmatpush.bf16.msra.mxu0 %v4600
    %6142 = vmatpush.bf16.msra.mxu0 %v4592
    %6143 = vmatpush.bf16.msra.mxu0 %v4584
    %6144 = vmatpush.bf16.msra.mxu0 %v4576
    %6145 = vmatpush.bf16.msra.mxu0 %v4568
    %6146 = vmatpush.bf16.msra.mxu0 %v4560
    %6147 = vmatpush.bf16.msra.mxu0 %v4552
    %6148 = vmatmul.bf16.gmra.mxu0 %v5973
    %v6149 = vpop.f32.mrf.mxu0
    %v6150 = vadd.f32 %v537, %v6149
    %v6151 = vpop.f32.mrf.mxu0
    %6152 = vdwg.mxu0
    %6153 = vmatpush.bf16.msra.mxu0 %v4672
    %6154 = vmatpush.bf16.msra.mxu0 %v4664
    %6155 = vmatpush.bf16.msra.mxu0 %v4656
    %6156 = vmatpush.bf16.msra.mxu0 %v4648
    %6157 = vmatpush.bf16.msra.mxu0 %v4640
    %6158 = vmatpush.bf16.msra.mxu0 %v4632
    %6159 = vmatpush.bf16.msra.mxu0 %v4624
    %6160 = vmatpush.bf16.msra.mxu0 %v4616
    %6161 = vmatmul.bf16.gmra.mxu0 %v5974
    %v6162 = vpop.f32.mrf.mxu0
    %v6163 = vadd.f32 %v6150, %v6162
    %v6164 = vpop.f32.mrf.mxu0
    %6165 = vdwg.mxu0
    %6166 = vmatpush.bf16.msra.mxu0 %v4736
    %6167 = vmatpush.bf16.msra.mxu0 %v4728
    %6168 = vmatpush.bf16.msra.mxu0 %v4720
    %6169 = vmatpush.bf16.msra.mxu0 %v4712
    %6170 = vmatpush.bf16.msra.mxu0 %v4704
    %6171 = vmatpush.bf16.msra.mxu0 %v4696
    %6172 = vmatpush.bf16.msra.mxu0 %v4688
    %6173 = vmatpush.bf16.msra.mxu0 %v4680
    %6174 = vmatmul.bf16.gmra.mxu0 %v5980
    %v6175 = vpop.f32.mrf.mxu0
    %v6176 = vadd.f32 %v6163, %v6175
    %v6177 = vpop.f32.mrf.mxu0
    %6178 = vdwg.mxu0
    %6179 = vmatpush.bf16.msra.mxu0 %v4800
    %6180 = vmatpush.bf16.msra.mxu0 %v4792
    %6181 = vmatpush.bf16.msra.mxu0 %v4784
    %6182 = vmatpush.bf16.msra.mxu0 %v4776
    %6183 = vmatpush.bf16.msra.mxu0 %v4768
    %6184 = vmatpush.bf16.msra.mxu0 %v4760
    %6185 = vmatpush.bf16.msra.mxu0 %v4752
    %6186 = vmatpush.bf16.msra.mxu0 %v4744
    %6187 = vmatmul.bf16.gmra.mxu0 %v5981
    %v6188 = vpop.f32.mrf.mxu0
    %v6189 = vadd.f32 %v6176, %v6188
    %v6190 = vpop.f32.mrf.mxu0
    %6191 = vdwg.mxu0
    %6192 = vmatpush.bf16.msra.mxu0 %v4609
    %6193 = vmatpush.bf16.msra.mxu0 %v4601
    %6194 = vmatpush.bf16.msra.mxu0 %v4593
    %6195 = vmatpush.bf16.msra.mxu0 %v4585
    %6196 = vmatpush.bf16.msra.mxu0 %v4577
    %6197 = vmatpush.bf16.msra.mxu0 %v4569
    %6198 = vmatpush.bf16.msra.mxu0 %v4561
    %6199 = vmatpush.bf16.msra.mxu0 %v4553
    %6200 = vmatmul.bf16.gmra.mxu0 %v5973
    %v6201 = vpop.f32.mrf.mxu0
    %v6202 = vadd.f32 %v538, %v6201
    %v6203 = vpop.f32.mrf.mxu0
    %6204 = vdwg.mxu0
    %6205 = vmatpush.bf16.msra.mxu0 %v4673
    %6206 = vmatpush.bf16.msra.mxu0 %v4665
    %6207 = vmatpush.bf16.msra.mxu0 %v4657
    %6208 = vmatpush.bf16.msra.mxu0 %v4649
    %6209 = vmatpush.bf16.msra.mxu0 %v4641
    %6210 = vmatpush.bf16.msra.mxu0 %v4633
    %6211 = vmatpush.bf16.msra.mxu0 %v4625
    %6212 = vmatpush.bf16.msra.mxu0 %v4617
    %6213 = vmatmul.bf16.gmra.mxu0 %v5974
    %v6214 = vpop.f32.mrf.mxu0
    %v6215 = vadd.f32 %v6202, %v6214
    %v6216 = vpop.f32.mrf.mxu0
    %6217 = vdwg.mxu0
    %6218 = vmatpush.bf16.msra.mxu0 %v4737
    %6219 = vmatpush.bf16.msra.mxu0 %v4729
    %6220 = vmatpush.bf16.msra.mxu0 %v4721
    %6221 = vmatpush.bf16.msra.mxu0 %v4713
    %6222 = vmatpush.bf16.msra.mxu0 %v4705
    %6223 = vmatpush.bf16.msra.mxu0 %v4697
    %6224 = vmatpush.bf16.msra.mxu0 %v4689
    %6225 = vmatpush.bf16.msra.mxu0 %v4681
    %6226 = vmatmul.bf16.gmra.mxu0 %v5980
    %v6227 = vpop.f32.mrf.mxu0
    %v6228 = vadd.f32 %v6215, %v6227
    %v6229 = vpop.f32.mrf.mxu0
    %6230 = vdwg.mxu0
    %6231 = vmatpush.bf16.msra.mxu0 %v4801
    %6232 = vmatpush.bf16.msra.mxu0 %v4793
    %6233 = vmatpush.bf16.msra.mxu0 %v4785
    %6234 = vmatpush.bf16.msra.mxu0 %v4777
    %6235 = vmatpush.bf16.msra.mxu0 %v4769
    %6236 = vmatpush.bf16.msra.mxu0 %v4761
    %6237 = vmatpush.bf16.msra.mxu0 %v4753
    %6238 = vmatpush.bf16.msra.mxu0 %v4745
    %6239 = vmatmul.bf16.gmra.mxu0 %v5981
    %v6240 = vpop.f32.mrf.mxu0
    %v6241 = vadd.f32 %v6228, %v6240
    %v6242 = vpop.f32.mrf.mxu0
    %6243 = vdwg.mxu0
    %6244 = vmatpush.bf16.msra.mxu0 %v4610
    %6245 = vmatpush.bf16.msra.mxu0 %v4602
    %6246 = vmatpush.bf16.msra.mxu0 %v4594
    %6247 = vmatpush.bf16.msra.mxu0 %v4586
    %6248 = vmatpush.bf16.msra.mxu0 %v4578
    %6249 = vmatpush.bf16.msra.mxu0 %v4570
    %6250 = vmatpush.bf16.msra.mxu0 %v4562
    %6251 = vmatpush.bf16.msra.mxu0 %v4554
    %6252 = vmatmul.bf16.gmra.mxu0 %v5973
    %v6253 = vpop.f32.mrf.mxu0
    %v6254 = vadd.f32 %v539, %v6253
    %v6255 = vpop.f32.mrf.mxu0
    %6256 = vdwg.mxu0
    %6257 = vmatpush.bf16.msra.mxu0 %v4674
    %6258 = vmatpush.bf16.msra.mxu0 %v4666
    %6259 = vmatpush.bf16.msra.mxu0 %v4658
    %6260 = vmatpush.bf16.msra.mxu0 %v4650
    %6261 = vmatpush.bf16.msra.mxu0 %v4642
    %6262 = vmatpush.bf16.msra.mxu0 %v4634
    %6263 = vmatpush.bf16.msra.mxu0 %v4626
    %6264 = vmatpush.bf16.msra.mxu0 %v4618
    %6265 = vmatmul.bf16.gmra.mxu0 %v5974
    %v6266 = vpop.f32.mrf.mxu0
    %v6267 = vadd.f32 %v6254, %v6266
    %v6268 = vpop.f32.mrf.mxu0
    %6269 = vdwg.mxu0
    %6270 = vmatpush.bf16.msra.mxu0 %v4738
    %6271 = vmatpush.bf16.msra.mxu0 %v4730
    %6272 = vmatpush.bf16.msra.mxu0 %v4722
    %6273 = vmatpush.bf16.msra.mxu0 %v4714
    %6274 = vmatpush.bf16.msra.mxu0 %v4706
    %6275 = vmatpush.bf16.msra.mxu0 %v4698
    %6276 = vmatpush.bf16.msra.mxu0 %v4690
    %6277 = vmatpush.bf16.msra.mxu0 %v4682
    %6278 = vmatmul.bf16.gmra.mxu0 %v5980
    %v6279 = vpop.f32.mrf.mxu0
    %v6280 = vadd.f32 %v6267, %v6279
    %v6281 = vpop.f32.mrf.mxu0
    %6282 = vdwg.mxu0
    %6283 = vmatpush.bf16.msra.mxu0 %v4802
    %6284 = vmatpush.bf16.msra.mxu0 %v4794
    %6285 = vmatpush.bf16.msra.mxu0 %v4786
    %6286 = vmatpush.bf16.msra.mxu0 %v4778
    %6287 = vmatpush.bf16.msra.mxu0 %v4770
    %6288 = vmatpush.bf16.msra.mxu0 %v4762
    %6289 = vmatpush.bf16.msra.mxu0 %v4754
    %6290 = vmatpush.bf16.msra.mxu0 %v4746
    %6291 = vmatmul.bf16.gmra.mxu0 %v5981
    %v6292 = vpop.f32.mrf.mxu0
    %v6293 = vadd.f32 %v6280, %v6292
    %v6294 = vpop.f32.mrf.mxu0
    %6295 = vdwg.mxu0
    %6296 = vmatpush.bf16.msra.mxu0 %v4611
    %6297 = vmatpush.bf16.msra.mxu0 %v4603
    %6298 = vmatpush.bf16.msra.mxu0 %v4595
    %6299 = vmatpush.bf16.msra.mxu0 %v4587
    %6300 = vmatpush.bf16.msra.mxu0 %v4579
    %6301 = vmatpush.bf16.msra.mxu0 %v4571
    %6302 = vmatpush.bf16.msra.mxu0 %v4563
    %6303 = vmatpush.bf16.msra.mxu0 %v4555
    %6304 = vmatmul.bf16.gmra.mxu0 %v5973
    %v6305 = vpop.f32.mrf.mxu0
    %v6306 = vadd.f32 %v540, %v6305
    %v6307 = vpop.f32.mrf.mxu0
    %6308 = vdwg.mxu0
    %6309 = vmatpush.bf16.msra.mxu0 %v4675
    %6310 = vmatpush.bf16.msra.mxu0 %v4667
    %6311 = vmatpush.bf16.msra.mxu0 %v4659
    %6312 = vmatpush.bf16.msra.mxu0 %v4651
    %6313 = vmatpush.bf16.msra.mxu0 %v4643
    %6314 = vmatpush.bf16.msra.mxu0 %v4635
    %6315 = vmatpush.bf16.msra.mxu0 %v4627
    %6316 = vmatpush.bf16.msra.mxu0 %v4619
    %6317 = vmatmul.bf16.gmra.mxu0 %v5974
    %v6318 = vpop.f32.mrf.mxu0
    %v6319 = vadd.f32 %v6306, %v6318
    %v6320 = vpop.f32.mrf.mxu0
    %6321 = vdwg.mxu0
    %6322 = vmatpush.bf16.msra.mxu0 %v4739
    %6323 = vmatpush.bf16.msra.mxu0 %v4731
    %6324 = vmatpush.bf16.msra.mxu0 %v4723
    %6325 = vmatpush.bf16.msra.mxu0 %v4715
    %6326 = vmatpush.bf16.msra.mxu0 %v4707
    %6327 = vmatpush.bf16.msra.mxu0 %v4699
    %6328 = vmatpush.bf16.msra.mxu0 %v4691
    %6329 = vmatpush.bf16.msra.mxu0 %v4683
    %6330 = vmatmul.bf16.gmra.mxu0 %v5980
    %v6331 = vpop.f32.mrf.mxu0
    %v6332 = vadd.f32 %v6319, %v6331
    %v6333 = vpop.f32.mrf.mxu0
    %6334 = vdwg.mxu0
    %6335 = vmatpush.bf16.msra.mxu0 %v4803
    %6336 = vmatpush.bf16.msra.mxu0 %v4795
    %6337 = vmatpush.bf16.msra.mxu0 %v4787
    %6338 = vmatpush.bf16.msra.mxu0 %v4779
    %6339 = vmatpush.bf16.msra.mxu0 %v4771
    %6340 = vmatpush.bf16.msra.mxu0 %v4763
    %6341 = vmatpush.bf16.msra.mxu0 %v4755
    %6342 = vmatpush.bf16.msra.mxu0 %v4747
    %6343 = vmatmul.bf16.gmra.mxu0 %v5981
    %v6344 = vpop.f32.mrf.mxu0
    %v6345 = vadd.f32 %v6332, %v6344
    %v6346 = vpop.f32.mrf.mxu0
    %6347 = vdwg.mxu0
    %6348 = vmatpush.bf16.msra.mxu0 %v4612
    %6349 = vmatpush.bf16.msra.mxu0 %v4604
    %6350 = vmatpush.bf16.msra.mxu0 %v4596
    %6351 = vmatpush.bf16.msra.mxu0 %v4588
    %6352 = vmatpush.bf16.msra.mxu0 %v4580
    %6353 = vmatpush.bf16.msra.mxu0 %v4572
    %6354 = vmatpush.bf16.msra.mxu0 %v4564
    %6355 = vmatpush.bf16.msra.mxu0 %v4556
    %6356 = vmatmul.bf16.gmra.mxu0 %v5973
    %v6357 = vpop.f32.mrf.mxu0
    %v6358 = vadd.f32 %v541, %v6357
    %v6359 = vpop.f32.mrf.mxu0
    %6360 = vdwg.mxu0
    %6361 = vmatpush.bf16.msra.mxu0 %v4676
    %6362 = vmatpush.bf16.msra.mxu0 %v4668
    %6363 = vmatpush.bf16.msra.mxu0 %v4660
    %6364 = vmatpush.bf16.msra.mxu0 %v4652
    %6365 = vmatpush.bf16.msra.mxu0 %v4644
    %6366 = vmatpush.bf16.msra.mxu0 %v4636
    %6367 = vmatpush.bf16.msra.mxu0 %v4628
    %6368 = vmatpush.bf16.msra.mxu0 %v4620
    %6369 = vmatmul.bf16.gmra.mxu0 %v5974
    %v6370 = vpop.f32.mrf.mxu0
    %v6371 = vadd.f32 %v6358, %v6370
    %v6372 = vpop.f32.mrf.mxu0
    %6373 = vdwg.mxu0
    %6374 = vmatpush.bf16.msra.mxu0 %v4740
    %6375 = vmatpush.bf16.msra.mxu0 %v4732
    %6376 = vmatpush.bf16.msra.mxu0 %v4724
    %6377 = vmatpush.bf16.msra.mxu0 %v4716
    %6378 = vmatpush.bf16.msra.mxu0 %v4708
    %6379 = vmatpush.bf16.msra.mxu0 %v4700
    %6380 = vmatpush.bf16.msra.mxu0 %v4692
    %6381 = vmatpush.bf16.msra.mxu0 %v4684
    %6382 = vmatmul.bf16.gmra.mxu0 %v5980
    %v6383 = vpop.f32.mrf.mxu0
    %v6384 = vadd.f32 %v6371, %v6383
    %v6385 = vpop.f32.mrf.mxu0
    %6386 = vdwg.mxu0
    %6387 = vmatpush.bf16.msra.mxu0 %v4804
    %6388 = vmatpush.bf16.msra.mxu0 %v4796
    %6389 = vmatpush.bf16.msra.mxu0 %v4788
    %6390 = vmatpush.bf16.msra.mxu0 %v4780
    %6391 = vmatpush.bf16.msra.mxu0 %v4772
    %6392 = vmatpush.bf16.msra.mxu0 %v4764
    %6393 = vmatpush.bf16.msra.mxu0 %v4756
    %6394 = vmatpush.bf16.msra.mxu0 %v4748
    %6395 = vmatmul.bf16.gmra.mxu0 %v5981
    %v6396 = vpop.f32.mrf.mxu0
    %v6397 = vadd.f32 %v6384, %v6396
    %v6398 = vpop.f32.mrf.mxu0
    %6399 = vdwg.mxu0
    %s6400 = scalar_lea.vmem %s0, 6
    %v6401 = vld [vmem:[%s6400] sm:$0x3]
    %6403 = vset.pattern.permute.xlu0 0
    %6404 = vperm.xlu0 %6403, %v6401
    %v6405 = vpop.permute.xlu0 %6404
    %v6407 = vmul.f32 %v6405, %v90
    %v6408 = vmul.f32 %v6405, %v91
    %v6409 = vmul.f32 %v6405, %v92
    %v6410 = vmul.f32 %v6405, %v93
    %v6411 = vmul.f32 %v6405, %v94
    %v6412 = vmul.f32 %v6405, %v95
    %v6413 = vmul.f32 %v6405, %v96
    %v6414 = vmul.f32 %v6405, %v97
    %v6415 = vadd.f32 %v6407, %v115
    %v6416 = vadd.f32 %v6408, %v116
    %v6417 = vadd.f32 %v6409, %v117
    %v6418 = vadd.f32 %v6410, %v118
    %v6419 = vadd.f32 %v6411, %v119
    %v6420 = vadd.f32 %v6412, %v120
    %v6421 = vadd.f32 %v6413, %v121
    %v6422 = vadd.f32 %v6414, %v122
    %6423 = vmatpush.bf16.msra.mxu0 %v2841
    %6424 = vmatpush.bf16.msra.mxu0 %v2833
    %6425 = vmatpush.bf16.msra.mxu0 %v2825
    %6426 = vmatpush.bf16.msra.mxu0 %v2817
    %6427 = vmatpush.bf16.msra.mxu0 %v2809
    %6428 = vmatpush.bf16.msra.mxu0 %v2801
    %6429 = vmatpush.bf16.msra.mxu0 %v2793
    %6430 = vmatpush.bf16.msra.mxu0 %v2785
    %6431 = vmatmul.bf16.gmra.mxu0 %v5973
    %v6432 = vpop.f32.mrf.mxu0
    %v6433 = vadd.f32 0.0, %v6432
    %v6434 = vpop.f32.mrf.mxu0
    %6435 = vdwg.mxu0
    %6436 = vmatpush.bf16.msra.mxu0 %v2905
    %6437 = vmatpush.bf16.msra.mxu0 %v2897
    %6438 = vmatpush.bf16.msra.mxu0 %v2889
    %6439 = vmatpush.bf16.msra.mxu0 %v2881
    %6440 = vmatpush.bf16.msra.mxu0 %v2873
    %6441 = vmatpush.bf16.msra.mxu0 %v2865
    %6442 = vmatpush.bf16.msra.mxu0 %v2857
    %6443 = vmatpush.bf16.msra.mxu0 %v2849
    %6444 = vmatmul.bf16.gmra.mxu0 %v5974
    %v6445 = vpop.f32.mrf.mxu0
    %v6446 = vadd.f32 %v6433, %v6445
    %v6447 = vpop.f32.mrf.mxu0
    %6448 = vdwg.mxu0
    %6449 = vmatpush.bf16.msra.mxu0 %v2842
    %6450 = vmatpush.bf16.msra.mxu0 %v2834
    %6451 = vmatpush.bf16.msra.mxu0 %v2826
    %6452 = vmatpush.bf16.msra.mxu0 %v2818
    %6453 = vmatpush.bf16.msra.mxu0 %v2810
    %6454 = vmatpush.bf16.msra.mxu0 %v2802
    %6455 = vmatpush.bf16.msra.mxu0 %v2794
    %6456 = vmatpush.bf16.msra.mxu0 %v2786
    %6457 = vmatmul.bf16.gmra.mxu0 %v5973
    %v6458 = vpop.f32.mrf.mxu0
    %v6459 = vadd.f32 0.0, %v6458
    %v6460 = vpop.f32.mrf.mxu0
    %6461 = vdwg.mxu0
    %6462 = vmatpush.bf16.msra.mxu0 %v2906
    %6463 = vmatpush.bf16.msra.mxu0 %v2898
    %6464 = vmatpush.bf16.msra.mxu0 %v2890
    %6465 = vmatpush.bf16.msra.mxu0 %v2882
    %6466 = vmatpush.bf16.msra.mxu0 %v2874
    %6467 = vmatpush.bf16.msra.mxu0 %v2866
    %6468 = vmatpush.bf16.msra.mxu0 %v2858
    %6469 = vmatpush.bf16.msra.mxu0 %v2850
    %6470 = vmatmul.bf16.gmra.mxu0 %v5974
    %v6471 = vpop.f32.mrf.mxu0
    %v6472 = vadd.f32 %v6459, %v6471
    %v6473 = vpop.f32.mrf.mxu0
    %6474 = vdwg.mxu0
    %6475 = vmatpush.bf16.msra.mxu0 %v2843
    %6476 = vmatpush.bf16.msra.mxu0 %v2835
    %6477 = vmatpush.bf16.msra.mxu0 %v2827
    %6478 = vmatpush.bf16.msra.mxu0 %v2819
    %6479 = vmatpush.bf16.msra.mxu0 %v2811
    %6480 = vmatpush.bf16.msra.mxu0 %v2803
    %6481 = vmatpush.bf16.msra.mxu0 %v2795
    %6482 = vmatpush.bf16.msra.mxu0 %v2787
    %6483 = vmatmul.bf16.gmra.mxu0 %v5973
    %v6484 = vpop.f32.mrf.mxu0
    %v6485 = vadd.f32 0.0, %v6484
    %v6486 = vpop.f32.mrf.mxu0
    %6487 = vdwg.mxu0
    %6488 = vmatpush.bf16.msra.mxu0 %v2907
    %6489 = vmatpush.bf16.msra.mxu0 %v2899
    %6490 = vmatpush.bf16.msra.mxu0 %v2891
    %6491 = vmatpush.bf16.msra.mxu0 %v2883
    %6492 = vmatpush.bf16.msra.mxu0 %v2875
    %6493 = vmatpush.bf16.msra.mxu0 %v2867
    %6494 = vmatpush.bf16.msra.mxu0 %v2859
    %6495 = vmatpush.bf16.msra.mxu0 %v2851
    %6496 = vmatmul.bf16.gmra.mxu0 %v5974
    %v6497 = vpop.f32.mrf.mxu0
    %v6498 = vadd.f32 %v6485, %v6497
    %v6499 = vpop.f32.mrf.mxu0
    %6500 = vdwg.mxu0
    %6501 = vmatpush.bf16.msra.mxu0 %v2844
    %6502 = vmatpush.bf16.msra.mxu0 %v2836
    %6503 = vmatpush.bf16.msra.mxu0 %v2828
    %6504 = vmatpush.bf16.msra.mxu0 %v2820
    %6505 = vmatpush.bf16.msra.mxu0 %v2812
    %6506 = vmatpush.bf16.msra.mxu0 %v2804
    %6507 = vmatpush.bf16.msra.mxu0 %v2796
    %6508 = vmatpush.bf16.msra.mxu0 %v2788
    %6509 = vmatmul.bf16.gmra.mxu0 %v5973
    %v6510 = vpop.f32.mrf.mxu0
    %v6511 = vadd.f32 0.0, %v6510
    %v6512 = vpop.f32.mrf.mxu0
    %6513 = vdwg.mxu0
    %6514 = vmatpush.bf16.msra.mxu0 %v2908
    %6515 = vmatpush.bf16.msra.mxu0 %v2900
    %6516 = vmatpush.bf16.msra.mxu0 %v2892
    %6517 = vmatpush.bf16.msra.mxu0 %v2884
    %6518 = vmatpush.bf16.msra.mxu0 %v2876
    %6519 = vmatpush.bf16.msra.mxu0 %v2868
    %6520 = vmatpush.bf16.msra.mxu0 %v2860
    %6521 = vmatpush.bf16.msra.mxu0 %v2852
    %6522 = vmatmul.bf16.gmra.mxu0 %v5974
    %v6523 = vpop.f32.mrf.mxu0
    %v6524 = vadd.f32 %v6511, %v6523
    %v6525 = vpop.f32.mrf.mxu0
    %6526 = vdwg.mxu0
    %6527 = vmatpush.bf16.msra.mxu0 %v2845
    %6528 = vmatpush.bf16.msra.mxu0 %v2837
    %6529 = vmatpush.bf16.msra.mxu0 %v2829
    %6530 = vmatpush.bf16.msra.mxu0 %v2821
    %6531 = vmatpush.bf16.msra.mxu0 %v2813
    %6532 = vmatpush.bf16.msra.mxu0 %v2805
    %6533 = vmatpush.bf16.msra.mxu0 %v2797
    %6534 = vmatpush.bf16.msra.mxu0 %v2789
    %6535 = vmatmul.bf16.gmra.mxu0 %v5973
    %v6536 = vpop.f32.mrf.mxu0
    %v6537 = vadd.f32 0.0, %v6536
    %v6538 = vpop.f32.mrf.mxu0
    %6539 = vdwg.mxu0
    %6540 = vmatpush.bf16.msra.mxu0 %v2909
    %6541 = vmatpush.bf16.msra.mxu0 %v2901
    %6542 = vmatpush.bf16.msra.mxu0 %v2893
    %6543 = vmatpush.bf16.msra.mxu0 %v2885
    %6544 = vmatpush.bf16.msra.mxu0 %v2877
    %6545 = vmatpush.bf16.msra.mxu0 %v2869
    %6546 = vmatpush.bf16.msra.mxu0 %v2861
    %6547 = vmatpush.bf16.msra.mxu0 %v2853
    %6548 = vmatmul.bf16.gmra.mxu0 %v5974
    %v6549 = vpop.f32.mrf.mxu0
    %v6550 = vadd.f32 %v6537, %v6549
    %v6551 = vpop.f32.mrf.mxu0
    %6552 = vdwg.mxu0
    %6553 = vmatpush.bf16.msra.mxu0 %v2846
    %6554 = vmatpush.bf16.msra.mxu0 %v2838
    %6555 = vmatpush.bf16.msra.mxu0 %v2830
    %6556 = vmatpush.bf16.msra.mxu0 %v2822
    %6557 = vmatpush.bf16.msra.mxu0 %v2814
    %6558 = vmatpush.bf16.msra.mxu0 %v2806
    %6559 = vmatpush.bf16.msra.mxu0 %v2798
    %6560 = vmatpush.bf16.msra.mxu0 %v2790
    %6561 = vmatmul.bf16.gmra.mxu0 %v5973
    %v6562 = vpop.f32.mrf.mxu0
    %v6563 = vadd.f32 0.0, %v6562
    %v6564 = vpop.f32.mrf.mxu0
    %6565 = vdwg.mxu0
    %6566 = vmatpush.bf16.msra.mxu0 %v2910
    %6567 = vmatpush.bf16.msra.mxu0 %v2902
    %6568 = vmatpush.bf16.msra.mxu0 %v2894
    %6569 = vmatpush.bf16.msra.mxu0 %v2886
    %6570 = vmatpush.bf16.msra.mxu0 %v2878
    %6571 = vmatpush.bf16.msra.mxu0 %v2870
    %6572 = vmatpush.bf16.msra.mxu0 %v2862
    %6573 = vmatpush.bf16.msra.mxu0 %v2854
    %6574 = vmatmul.bf16.gmra.mxu0 %v5974
    %v6575 = vpop.f32.mrf.mxu0
    %v6576 = vadd.f32 %v6563, %v6575
    %v6577 = vpop.f32.mrf.mxu0
    %6578 = vdwg.mxu0
    %6579 = vmatpush.bf16.msra.mxu0 %v2847
    %6580 = vmatpush.bf16.msra.mxu0 %v2839
    %6581 = vmatpush.bf16.msra.mxu0 %v2831
    %6582 = vmatpush.bf16.msra.mxu0 %v2823
    %6583 = vmatpush.bf16.msra.mxu0 %v2815
    %6584 = vmatpush.bf16.msra.mxu0 %v2807
    %6585 = vmatpush.bf16.msra.mxu0 %v2799
    %6586 = vmatpush.bf16.msra.mxu0 %v2791
    %6587 = vmatmul.bf16.gmra.mxu0 %v5973
    %v6588 = vpop.f32.mrf.mxu0
    %v6589 = vadd.f32 0.0, %v6588
    %v6590 = vpop.f32.mrf.mxu0
    %6591 = vdwg.mxu0
    %6592 = vmatpush.bf16.msra.mxu0 %v2911
    %6593 = vmatpush.bf16.msra.mxu0 %v2903
    %6594 = vmatpush.bf16.msra.mxu0 %v2895
    %6595 = vmatpush.bf16.msra.mxu0 %v2887
    %6596 = vmatpush.bf16.msra.mxu0 %v2879
    %6597 = vmatpush.bf16.msra.mxu0 %v2871
    %6598 = vmatpush.bf16.msra.mxu0 %v2863
    %6599 = vmatpush.bf16.msra.mxu0 %v2855
    %6600 = vmatmul.bf16.gmra.mxu0 %v5974
    %v6601 = vpop.f32.mrf.mxu0
    %v6602 = vadd.f32 %v6589, %v6601
    %v6603 = vpop.f32.mrf.mxu0
    %6604 = vdwg.mxu0
    %6605 = vmatpush.bf16.msra.mxu0 %v2848
    %6606 = vmatpush.bf16.msra.mxu0 %v2840
    %6607 = vmatpush.bf16.msra.mxu0 %v2832
    %6608 = vmatpush.bf16.msra.mxu0 %v2824
    %6609 = vmatpush.bf16.msra.mxu0 %v2816
    %6610 = vmatpush.bf16.msra.mxu0 %v2808
    %6611 = vmatpush.bf16.msra.mxu0 %v2800
    %6612 = vmatpush.bf16.msra.mxu0 %v2792
    %6613 = vmatmul.bf16.gmra.mxu0 %v5973
    %v6614 = vpop.f32.mrf.mxu0
    %v6615 = vadd.f32 0.0, %v6614
    %v6616 = vpop.f32.mrf.mxu0
    %6617 = vdwg.mxu0
    %6618 = vmatpush.bf16.msra.mxu0 %v2912
    %6619 = vmatpush.bf16.msra.mxu0 %v2904
    %6620 = vmatpush.bf16.msra.mxu0 %v2896
    %6621 = vmatpush.bf16.msra.mxu0 %v2888
    %6622 = vmatpush.bf16.msra.mxu0 %v2880
    %6623 = vmatpush.bf16.msra.mxu0 %v2872
    %6624 = vmatpush.bf16.msra.mxu0 %v2864
    %6625 = vmatpush.bf16.msra.mxu0 %v2856
    %6626 = vmatmul.bf16.gmra.mxu0 %v5974
    %v6627 = vpop.f32.mrf.mxu0
    %v6628 = vadd.f32 %v6615, %v6627
    %v6629 = vpop.f32.mrf.mxu0
    %6630 = vdwg.mxu0
    %v6631 = vadd.f32 %v6415, %v6446
    %v6632 = vadd.f32 %v6416, %v6472
    %v6633 = vadd.f32 %v6417, %v6498
    %v6634 = vadd.f32 %v6418, %v6524
    %v6635 = vadd.f32 %v6419, %v6550
    %v6636 = vadd.f32 %v6420, %v6576
    %v6637 = vadd.f32 %v6421, %v6602
    %v6638 = vadd.f32 %v6422, %v6628
    %v6639 = vxor.u32 %v6033, 2147483648
    %v6640 = vxor.u32 %v6085, 2147483648
    %v6641 = vxor.u32 %v6137, 2147483648
    %v6642 = vxor.u32 %v6189, 2147483648
    %v6643 = vxor.u32 %v6241, 2147483648
    %v6644 = vxor.u32 %v6293, 2147483648
    %v6645 = vmul.f32 %v6639, 1.442695
    %v6646 = vpow.pop %v6645
    %v6647 = vmul.f32 %v6640, 1.442695
    %v6648 = vpow.pop %v6647
    %v6649 = vmul.f32 %v6641, 1.442695
    %v6650 = vpow.pop %v6649
    %v6651 = vmul.f32 %v6642, 1.442695
    %v6652 = vpow.pop %v6651
    %v6653 = vmul.f32 %v6643, 1.442695
    %v6654 = vpow.pop %v6653
    %v6655 = vmul.f32 %v6644, 1.442695
    %v6656 = vpow.pop %v6655
    %v6657 = vadd.f32 %v6646, 1.0
    %v6658 = vadd.f32 %v6648, 1.0
    %v6659 = vadd.f32 %v6650, 1.0
    %v6660 = vadd.f32 %v6652, 1.0
    %v6661 = vadd.f32 %v6654, 1.0
    %v6662 = vadd.f32 %v6656, 1.0
    %v6663 = vrcp.pop %v6657
    %v6664 = vmul.f32 %v6657, %v6663
    %v6665 = vsub.f32 1.0, %v6664
    %v6666 = vmul.f32 %v6663, %v6665
    %v6667 = vadd.f32 %v6663, %v6666
    %vm6668 = vweird.f32 %v6657
    %vm6669 = vweird.f32 %v6663
    %vm6670 = vmor %vm6668, %vm6669
    %v6671 = vsel %vm6670, %v6663, %v6667
    %v6672 = vand.u32 2147483647, %v6657
    %vm6673 = vcmp.eq.f32.partialorder %v6672, 8.507059e+37
    %v6674 = vand.u32 %v6657, 2147483648
    %v6675 = vor.u32 1.1754944e-38, %v6674
    %v6676 = vsel %vm6673, %v6675, %v6671
    %v6677 = vmul.f32 1.0, %v6676
    %v6678 = vrcp.pop %v6658
    %v6679 = vmul.f32 %v6658, %v6678
    %v6680 = vsub.f32 1.0, %v6679
    %v6681 = vmul.f32 %v6678, %v6680
    %v6682 = vadd.f32 %v6678, %v6681
    %vm6683 = vweird.f32 %v6658
    %vm6684 = vweird.f32 %v6678
    %vm6685 = vmor %vm6683, %vm6684
    %v6686 = vsel %vm6685, %v6678, %v6682
    %v6687 = vand.u32 2147483647, %v6658
    %vm6688 = vcmp.eq.f32.partialorder %v6687, 8.507059e+37
    %v6689 = vand.u32 %v6658, 2147483648
    %v6690 = vor.u32 1.1754944e-38, %v6689
    %v6691 = vsel %vm6688, %v6690, %v6686
    %v6692 = vmul.f32 1.0, %v6691
    %v6693 = vrcp.pop %v6659
    %v6694 = vmul.f32 %v6659, %v6693
    %v6695 = vsub.f32 1.0, %v6694
    %v6696 = vmul.f32 %v6693, %v6695
    %v6697 = vadd.f32 %v6693, %v6696
    %vm6698 = vweird.f32 %v6659
    %vm6699 = vweird.f32 %v6693
    %vm6700 = vmor %vm6698, %vm6699
    %v6701 = vsel %vm6700, %v6693, %v6697
    %v6702 = vand.u32 2147483647, %v6659
    %vm6703 = vcmp.eq.f32.partialorder %v6702, 8.507059e+37
    %v6704 = vand.u32 %v6659, 2147483648
    %v6705 = vor.u32 1.1754944e-38, %v6704
    %v6706 = vsel %vm6703, %v6705, %v6701
    %v6707 = vmul.f32 1.0, %v6706
    %v6708 = vrcp.pop %v6660
    %v6709 = vmul.f32 %v6660, %v6708
    %v6710 = vsub.f32 1.0, %v6709
    %v6711 = vmul.f32 %v6708, %v6710
    %v6712 = vadd.f32 %v6708, %v6711
    %vm6713 = vweird.f32 %v6660
    %vm6714 = vweird.f32 %v6708
    %vm6715 = vmor %vm6713, %vm6714
    %v6716 = vsel %vm6715, %v6708, %v6712
    %v6717 = vand.u32 2147483647, %v6660
    %vm6718 = vcmp.eq.f32.partialorder %v6717, 8.507059e+37
    %v6719 = vand.u32 %v6660, 2147483648
    %v6720 = vor.u32 1.1754944e-38, %v6719
    %v6721 = vsel %vm6718, %v6720, %v6716
    %v6722 = vmul.f32 1.0, %v6721
    %v6723 = vrcp.pop %v6661
    %v6724 = vmul.f32 %v6661, %v6723
    %v6725 = vsub.f32 1.0, %v6724
    %v6726 = vmul.f32 %v6723, %v6725
    %v6727 = vadd.f32 %v6723, %v6726
    %vm6728 = vweird.f32 %v6661
    %vm6729 = vweird.f32 %v6723
    %vm6730 = vmor %vm6728, %vm6729
    %v6731 = vsel %vm6730, %v6723, %v6727
    %v6732 = vand.u32 2147483647, %v6661
    %vm6733 = vcmp.eq.f32.partialorder %v6732, 8.507059e+37
    %v6734 = vand.u32 %v6661, 2147483648
    %v6735 = vor.u32 1.1754944e-38, %v6734
    %v6736 = vsel %vm6733, %v6735, %v6731
    %v6737 = vmul.f32 1.0, %v6736
    %v6738 = vrcp.pop %v6662
    %v6739 = vmul.f32 %v6662, %v6738
    %v6740 = vsub.f32 1.0, %v6739
    %v6741 = vmul.f32 %v6738, %v6740
    %v6742 = vadd.f32 %v6738, %v6741
    %vm6743 = vweird.f32 %v6662
    %vm6744 = vweird.f32 %v6738
    %vm6745 = vmor %vm6743, %vm6744
    %v6746 = vsel %vm6745, %v6738, %v6742
    %v6747 = vand.u32 2147483647, %v6662
    %vm6748 = vcmp.eq.f32.partialorder %v6747, 8.507059e+37
    %v6749 = vand.u32 %v6662, 2147483648
    %v6750 = vor.u32 1.1754944e-38, %v6749
    %v6751 = vsel %vm6748, %v6750, %v6746
    %v6752 = vmul.f32 1.0, %v6751
    %v6753 = vtanh.pop %v6345
    %v6754 = vtanh.pop %v6397
    %v6755 = vmul.f32 %v6707, %v5836
    %v6756 = vmul.f32 %v6722, %v5837
    %v6757 = vmul.f32 %v6677, %v6753
    %v6758 = vmul.f32 %v6692, %v6754
    %v6759 = vadd.f32 %v6755, %v6757
    %v6760 = vadd.f32 %v6756, %v6758
    %v6761 = vtanh.pop %v6759
    %v6762 = vtanh.pop %v6760
    %v6763 = vmul.f32 %v6737, %v6761
    %v6764 = vmul.f32 %v6752, %v6762
    %v6765 = vpack.c.bf16 %v6764, %v6763
    %v6766 = vxor.u32 %v6631, 2147483648
    %v6767 = vxor.u32 %v6632, 2147483648
    %v6768 = vxor.u32 %v6633, 2147483648
    %v6769 = vxor.u32 %v6634, 2147483648
    %v6770 = vxor.u32 %v6635, 2147483648
    %v6771 = vxor.u32 %v6636, 2147483648
    %v6772 = vmul.f32 %v6766, 1.442695
    %v6773 = vpow.pop %v6772
    %v6774 = vmul.f32 %v6767, 1.442695
    %v6775 = vpow.pop %v6774
    %v6776 = vmul.f32 %v6768, 1.442695
    %v6777 = vpow.pop %v6776
    %v6778 = vmul.f32 %v6769, 1.442695
    %v6779 = vpow.pop %v6778
    %v6780 = vmul.f32 %v6770, 1.442695
    %v6781 = vpow.pop %v6780
    %v6782 = vmul.f32 %v6771, 1.442695
    %v6783 = vpow.pop %v6782
    %v6784 = vadd.f32 %v6773, 1.0
    %v6785 = vadd.f32 %v6775, 1.0
    %v6786 = vadd.f32 %v6777, 1.0
    %v6787 = vadd.f32 %v6779, 1.0
    %v6788 = vadd.f32 %v6781, 1.0
    %v6789 = vadd.f32 %v6783, 1.0
    %v6790 = vrcp.pop %v6784
    %v6791 = vmul.f32 %v6784, %v6790
    %v6792 = vsub.f32 1.0, %v6791
    %v6793 = vmul.f32 %v6790, %v6792
    %v6794 = vadd.f32 %v6790, %v6793
    %vm6795 = vweird.f32 %v6784
    %vm6796 = vweird.f32 %v6790
    %vm6797 = vmor %vm6795, %vm6796
    %v6798 = vsel %vm6797, %v6790, %v6794
    %v6799 = vand.u32 2147483647, %v6784
    %vm6800 = vcmp.eq.f32.partialorder %v6799, 8.507059e+37
    %v6801 = vand.u32 %v6784, 2147483648
    %v6802 = vor.u32 1.1754944e-38, %v6801
    %v6803 = vsel %vm6800, %v6802, %v6798
    %v6804 = vmul.f32 1.0, %v6803
    %v6805 = vrcp.pop %v6785
    %v6806 = vmul.f32 %v6785, %v6805
    %v6807 = vsub.f32 1.0, %v6806
    %v6808 = vmul.f32 %v6805, %v6807
    %v6809 = vadd.f32 %v6805, %v6808
    %vm6810 = vweird.f32 %v6785
    %vm6811 = vweird.f32 %v6805
    %vm6812 = vmor %vm6810, %vm6811
    %v6813 = vsel %vm6812, %v6805, %v6809
    %v6814 = vand.u32 2147483647, %v6785
    %vm6815 = vcmp.eq.f32.partialorder %v6814, 8.507059e+37
    %v6816 = vand.u32 %v6785, 2147483648
    %v6817 = vor.u32 1.1754944e-38, %v6816
    %v6818 = vsel %vm6815, %v6817, %v6813
    %v6819 = vmul.f32 1.0, %v6818
    %v6820 = vrcp.pop %v6786
    %v6821 = vmul.f32 %v6786, %v6820
    %v6822 = vsub.f32 1.0, %v6821
    %v6823 = vmul.f32 %v6820, %v6822
    %v6824 = vadd.f32 %v6820, %v6823
    %vm6825 = vweird.f32 %v6786
    %vm6826 = vweird.f32 %v6820
    %vm6827 = vmor %vm6825, %vm6826
    %v6828 = vsel %vm6827, %v6820, %v6824
    %v6829 = vand.u32 2147483647, %v6786
    %vm6830 = vcmp.eq.f32.partialorder %v6829, 8.507059e+37
    %v6831 = vand.u32 %v6786, 2147483648
    %v6832 = vor.u32 1.1754944e-38, %v6831
    %v6833 = vsel %vm6830, %v6832, %v6828
    %v6834 = vmul.f32 1.0, %v6833
    %v6835 = vrcp.pop %v6787
    %v6836 = vmul.f32 %v6787, %v6835
    %v6837 = vsub.f32 1.0, %v6836
    %v6838 = vmul.f32 %v6835, %v6837
    %v6839 = vadd.f32 %v6835, %v6838
    %vm6840 = vweird.f32 %v6787
    %vm6841 = vweird.f32 %v6835
    %vm6842 = vmor %vm6840, %vm6841
    %v6843 = vsel %vm6842, %v6835, %v6839
    %v6844 = vand.u32 2147483647, %v6787
    %vm6845 = vcmp.eq.f32.partialorder %v6844, 8.507059e+37
    %v6846 = vand.u32 %v6787, 2147483648
    %v6847 = vor.u32 1.1754944e-38, %v6846
    %v6848 = vsel %vm6845, %v6847, %v6843
    %v6849 = vmul.f32 1.0, %v6848
    %v6850 = vrcp.pop %v6788
    %v6851 = vmul.f32 %v6788, %v6850
    %v6852 = vsub.f32 1.0, %v6851
    %v6853 = vmul.f32 %v6850, %v6852
    %v6854 = vadd.f32 %v6850, %v6853
    %vm6855 = vweird.f32 %v6788
    %vm6856 = vweird.f32 %v6850
    %vm6857 = vmor %vm6855, %vm6856
    %v6858 = vsel %vm6857, %v6850, %v6854
    %v6859 = vand.u32 2147483647, %v6788
    %vm6860 = vcmp.eq.f32.partialorder %v6859, 8.507059e+37
    %v6861 = vand.u32 %v6788, 2147483648
    %v6862 = vor.u32 1.1754944e-38, %v6861
    %v6863 = vsel %vm6860, %v6862, %v6858
    %v6864 = vmul.f32 1.0, %v6863
    %v6865 = vrcp.pop %v6789
    %v6866 = vmul.f32 %v6789, %v6865
    %v6867 = vsub.f32 1.0, %v6866
    %v6868 = vmul.f32 %v6865, %v6867
    %v6869 = vadd.f32 %v6865, %v6868
    %vm6870 = vweird.f32 %v6789
    %vm6871 = vweird.f32 %v6865
    %vm6872 = vmor %vm6870, %vm6871
    %v6873 = vsel %vm6872, %v6865, %v6869
    %v6874 = vand.u32 2147483647, %v6789
    %vm6875 = vcmp.eq.f32.partialorder %v6874, 8.507059e+37
    %v6876 = vand.u32 %v6789, 2147483648
    %v6877 = vor.u32 1.1754944e-38, %v6876
    %v6878 = vsel %vm6875, %v6877, %v6873
    %v6879 = vmul.f32 1.0, %v6878
    %v6880 = vtanh.pop %v6637
    %v6881 = vtanh.pop %v6638
    %v6882 = vmul.f32 %v6834, %v5963
    %v6883 = vmul.f32 %v6849, %v5964
    %v6884 = vmul.f32 %v6804, %v6880
    %v6885 = vmul.f32 %v6819, %v6881
    %v6886 = vadd.f32 %v6882, %v6884
    %v6887 = vadd.f32 %v6883, %v6885
    %v6888 = vtanh.pop %v6886
    %v6889 = vtanh.pop %v6887
    %v6890 = vmul.f32 %v6864, %v6888
    %v6891 = vmul.f32 %v6879, %v6889
    %v6892 = vpack.c.bf16 %v6891, %v6890
    %v6894 = vunpack.c.l.b16 %v6892
    %v6895 = vunpack.c.h.b16 %v6892
    %v6896 = vpack.c.b16 %v6894, %v6894
    %v6897 = vpack.c.b16 %v6895, %v6895
    %v6901 = vunpack.c.l.b16 %v6765
    %v6902 = vunpack.c.h.b16 %v6765
    %v6903 = vpack.c.b16 %v6901, %v6901
    %v6904 = vpack.c.b16 %v6902, %v6902
    %6907 = vmatpush.bf16.msra.mxu0 %v4605
    %6908 = vmatpush.bf16.msra.mxu0 %v4597
    %6909 = vmatpush.bf16.msra.mxu0 %v4589
    %6910 = vmatpush.bf16.msra.mxu0 %v4581
    %6911 = vmatpush.bf16.msra.mxu0 %v4573
    %6912 = vmatpush.bf16.msra.mxu0 %v4565
    %6913 = vmatpush.bf16.msra.mxu0 %v4557
    %6914 = vmatpush.bf16.msra.mxu0 %v4549
    %6915 = vmatmul.bf16.gmra.mxu0 %v6896
    %v6916 = vpop.f32.mrf.mxu0
    %v6917 = vadd.f32 %v534, %v6916
    %v6918 = vpop.f32.mrf.mxu0
    %6919 = vdwg.mxu0
    %6920 = vmatpush.bf16.msra.mxu0 %v4669
    %6921 = vmatpush.bf16.msra.mxu0 %v4661
    %6922 = vmatpush.bf16.msra.mxu0 %v4653
    %6923 = vmatpush.bf16.msra.mxu0 %v4645
    %6924 = vmatpush.bf16.msra.mxu0 %v4637
    %6925 = vmatpush.bf16.msra.mxu0 %v4629
    %6926 = vmatpush.bf16.msra.mxu0 %v4621
    %6927 = vmatpush.bf16.msra.mxu0 %v4613
    %6928 = vmatmul.bf16.gmra.mxu0 %v6897
    %v6929 = vpop.f32.mrf.mxu0
    %v6930 = vadd.f32 %v6917, %v6929
    %v6931 = vpop.f32.mrf.mxu0
    %6932 = vdwg.mxu0
    %6933 = vmatpush.bf16.msra.mxu0 %v4733
    %6934 = vmatpush.bf16.msra.mxu0 %v4725
    %6935 = vmatpush.bf16.msra.mxu0 %v4717
    %6936 = vmatpush.bf16.msra.mxu0 %v4709
    %6937 = vmatpush.bf16.msra.mxu0 %v4701
    %6938 = vmatpush.bf16.msra.mxu0 %v4693
    %6939 = vmatpush.bf16.msra.mxu0 %v4685
    %6940 = vmatpush.bf16.msra.mxu0 %v4677
    %6941 = vmatmul.bf16.gmra.mxu0 %v6903
    %v6942 = vpop.f32.mrf.mxu0
    %v6943 = vadd.f32 %v6930, %v6942
    %v6944 = vpop.f32.mrf.mxu0
    %6945 = vdwg.mxu0
    %6946 = vmatpush.bf16.msra.mxu0 %v4797
    %6947 = vmatpush.bf16.msra.mxu0 %v4789
    %6948 = vmatpush.bf16.msra.mxu0 %v4781
    %6949 = vmatpush.bf16.msra.mxu0 %v4773
    %6950 = vmatpush.bf16.msra.mxu0 %v4765
    %6951 = vmatpush.bf16.msra.mxu0 %v4757
    %6952 = vmatpush.bf16.msra.mxu0 %v4749
    %6953 = vmatpush.bf16.msra.mxu0 %v4741
    %6954 = vmatmul.bf16.gmra.mxu0 %v6904
    %v6955 = vpop.f32.mrf.mxu0
    %v6956 = vadd.f32 %v6943, %v6955
    %v6957 = vpop.f32.mrf.mxu0
    %6958 = vdwg.mxu0
    %6959 = vmatpush.bf16.msra.mxu0 %v4606
    %6960 = vmatpush.bf16.msra.mxu0 %v4598
    %6961 = vmatpush.bf16.msra.mxu0 %v4590
    %6962 = vmatpush.bf16.msra.mxu0 %v4582
    %6963 = vmatpush.bf16.msra.mxu0 %v4574
    %6964 = vmatpush.bf16.msra.mxu0 %v4566
    %6965 = vmatpush.bf16.msra.mxu0 %v4558
    %6966 = vmatpush.bf16.msra.mxu0 %v4550
    %6967 = vmatmul.bf16.gmra.mxu0 %v6896
    %v6968 = vpop.f32.mrf.mxu0
    %v6969 = vadd.f32 %v535, %v6968
    %v6970 = vpop.f32.mrf.mxu0
    %6971 = vdwg.mxu0
    %6972 = vmatpush.bf16.msra.mxu0 %v4670
    %6973 = vmatpush.bf16.msra.mxu0 %v4662
    %6974 = vmatpush.bf16.msra.mxu0 %v4654
    %6975 = vmatpush.bf16.msra.mxu0 %v4646
    %6976 = vmatpush.bf16.msra.mxu0 %v4638
    %6977 = vmatpush.bf16.msra.mxu0 %v4630
    %6978 = vmatpush.bf16.msra.mxu0 %v4622
    %6979 = vmatpush.bf16.msra.mxu0 %v4614
    %6980 = vmatmul.bf16.gmra.mxu0 %v6897
    %v6981 = vpop.f32.mrf.mxu0
    %v6982 = vadd.f32 %v6969, %v6981
    %v6983 = vpop.f32.mrf.mxu0
    %6984 = vdwg.mxu0
    %6985 = vmatpush.bf16.msra.mxu0 %v4734
    %6986 = vmatpush.bf16.msra.mxu0 %v4726
    %6987 = vmatpush.bf16.msra.mxu0 %v4718
    %6988 = vmatpush.bf16.msra.mxu0 %v4710
    %6989 = vmatpush.bf16.msra.mxu0 %v4702
    %6990 = vmatpush.bf16.msra.mxu0 %v4694
    %6991 = vmatpush.bf16.msra.mxu0 %v4686
    %6992 = vmatpush.bf16.msra.mxu0 %v4678
    %6993 = vmatmul.bf16.gmra.mxu0 %v6903
    %v6994 = vpop.f32.mrf.mxu0
    %v6995 = vadd.f32 %v6982, %v6994
    %v6996 = vpop.f32.mrf.mxu0
    %6997 = vdwg.mxu0
    %6998 = vmatpush.bf16.msra.mxu0 %v4798
    %6999 = vmatpush.bf16.msra.mxu0 %v4790
    %7000 = vmatpush.bf16.msra.mxu0 %v4782
    %7001 = vmatpush.bf16.msra.mxu0 %v4774
    %7002 = vmatpush.bf16.msra.mxu0 %v4766
    %7003 = vmatpush.bf16.msra.mxu0 %v4758
    %7004 = vmatpush.bf16.msra.mxu0 %v4750
    %7005 = vmatpush.bf16.msra.mxu0 %v4742
    %7006 = vmatmul.bf16.gmra.mxu0 %v6904
    %v7007 = vpop.f32.mrf.mxu0
    %v7008 = vadd.f32 %v6995, %v7007
    %v7009 = vpop.f32.mrf.mxu0
    %7010 = vdwg.mxu0
    %7011 = vmatpush.bf16.msra.mxu0 %v4607
    %7012 = vmatpush.bf16.msra.mxu0 %v4599
    %7013 = vmatpush.bf16.msra.mxu0 %v4591
    %7014 = vmatpush.bf16.msra.mxu0 %v4583
    %7015 = vmatpush.bf16.msra.mxu0 %v4575
    %7016 = vmatpush.bf16.msra.mxu0 %v4567
    %7017 = vmatpush.bf16.msra.mxu0 %v4559
    %7018 = vmatpush.bf16.msra.mxu0 %v4551
    %7019 = vmatmul.bf16.gmra.mxu0 %v6896
    %v7020 = vpop.f32.mrf.mxu0
    %v7021 = vadd.f32 %v536, %v7020
    %v7022 = vpop.f32.mrf.mxu0
    %7023 = vdwg.mxu0
    %7024 = vmatpush.bf16.msra.mxu0 %v4671
    %7025 = vmatpush.bf16.msra.mxu0 %v4663
    %7026 = vmatpush.bf16.msra.mxu0 %v4655
    %7027 = vmatpush.bf16.msra.mxu0 %v4647
    %7028 = vmatpush.bf16.msra.mxu0 %v4639
    %7029 = vmatpush.bf16.msra.mxu0 %v4631
    %7030 = vmatpush.bf16.msra.mxu0 %v4623
    %7031 = vmatpush.bf16.msra.mxu0 %v4615
    %7032 = vmatmul.bf16.gmra.mxu0 %v6897
    %v7033 = vpop.f32.mrf.mxu0
    %v7034 = vadd.f32 %v7021, %v7033
    %v7035 = vpop.f32.mrf.mxu0
    %7036 = vdwg.mxu0
    %7037 = vmatpush.bf16.msra.mxu0 %v4735
    %7038 = vmatpush.bf16.msra.mxu0 %v4727
    %7039 = vmatpush.bf16.msra.mxu0 %v4719
    %7040 = vmatpush.bf16.msra.mxu0 %v4711
    %7041 = vmatpush.bf16.msra.mxu0 %v4703
    %7042 = vmatpush.bf16.msra.mxu0 %v4695
    %7043 = vmatpush.bf16.msra.mxu0 %v4687
    %7044 = vmatpush.bf16.msra.mxu0 %v4679
    %7045 = vmatmul.bf16.gmra.mxu0 %v6903
    %v7046 = vpop.f32.mrf.mxu0
    %v7047 = vadd.f32 %v7034, %v7046
    %v7048 = vpop.f32.mrf.mxu0
    %7049 = vdwg.mxu0
    %7050 = vmatpush.bf16.msra.mxu0 %v4799
    %7051 = vmatpush.bf16.msra.mxu0 %v4791
    %7052 = vmatpush.bf16.msra.mxu0 %v4783
    %7053 = vmatpush.bf16.msra.mxu0 %v4775
    %7054 = vmatpush.bf16.msra.mxu0 %v4767
    %7055 = vmatpush.bf16.msra.mxu0 %v4759
    %7056 = vmatpush.bf16.msra.mxu0 %v4751
    %7057 = vmatpush.bf16.msra.mxu0 %v4743
    %7058 = vmatmul.bf16.gmra.mxu0 %v6904
    %v7059 = vpop.f32.mrf.mxu0
    %v7060 = vadd.f32 %v7047, %v7059
    %v7061 = vpop.f32.mrf.mxu0
    %7062 = vdwg.mxu0
    %7063 = vmatpush.bf16.msra.mxu0 %v4608
    %7064 = vmatpush.bf16.msra.mxu0 %v4600
    %7065 = vmatpush.bf16.msra.mxu0 %v4592
    %7066 = vmatpush.bf16.msra.mxu0 %v4584
    %7067 = vmatpush.bf16.msra.mxu0 %v4576
    %7068 = vmatpush.bf16.msra.mxu0 %v4568
    %7069 = vmatpush.bf16.msra.mxu0 %v4560
    %7070 = vmatpush.bf16.msra.mxu0 %v4552
    %7071 = vmatmul.bf16.gmra.mxu0 %v6896
    %v7072 = vpop.f32.mrf.mxu0
    %v7073 = vadd.f32 %v537, %v7072
    %v7074 = vpop.f32.mrf.mxu0
    %7075 = vdwg.mxu0
    %7076 = vmatpush.bf16.msra.mxu0 %v4672
    %7077 = vmatpush.bf16.msra.mxu0 %v4664
    %7078 = vmatpush.bf16.msra.mxu0 %v4656
    %7079 = vmatpush.bf16.msra.mxu0 %v4648
    %7080 = vmatpush.bf16.msra.mxu0 %v4640
    %7081 = vmatpush.bf16.msra.mxu0 %v4632
    %7082 = vmatpush.bf16.msra.mxu0 %v4624
    %7083 = vmatpush.bf16.msra.mxu0 %v4616
    %7084 = vmatmul.bf16.gmra.mxu0 %v6897
    %v7085 = vpop.f32.mrf.mxu0
    %v7086 = vadd.f32 %v7073, %v7085
    %v7087 = vpop.f32.mrf.mxu0
    %7088 = vdwg.mxu0
    %7089 = vmatpush.bf16.msra.mxu0 %v4736
    %7090 = vmatpush.bf16.msra.mxu0 %v4728
    %7091 = vmatpush.bf16.msra.mxu0 %v4720
    %7092 = vmatpush.bf16.msra.mxu0 %v4712
    %7093 = vmatpush.bf16.msra.mxu0 %v4704
    %7094 = vmatpush.bf16.msra.mxu0 %v4696
    %7095 = vmatpush.bf16.msra.mxu0 %v4688
    %7096 = vmatpush.bf16.msra.mxu0 %v4680
    %7097 = vmatmul.bf16.gmra.mxu0 %v6903
    %v7098 = vpop.f32.mrf.mxu0
    %v7099 = vadd.f32 %v7086, %v7098
    %v7100 = vpop.f32.mrf.mxu0
    %7101 = vdwg.mxu0
    %7102 = vmatpush.bf16.msra.mxu0 %v4800
    %7103 = vmatpush.bf16.msra.mxu0 %v4792
    %7104 = vmatpush.bf16.msra.mxu0 %v4784
    %7105 = vmatpush.bf16.msra.mxu0 %v4776
    %7106 = vmatpush.bf16.msra.mxu0 %v4768
    %7107 = vmatpush.bf16.msra.mxu0 %v4760
    %7108 = vmatpush.bf16.msra.mxu0 %v4752
    %7109 = vmatpush.bf16.msra.mxu0 %v4744
    %7110 = vmatmul.bf16.gmra.mxu0 %v6904
    %v7111 = vpop.f32.mrf.mxu0
    %v7112 = vadd.f32 %v7099, %v7111
    %v7113 = vpop.f32.mrf.mxu0
    %7114 = vdwg.mxu0
    %7115 = vmatpush.bf16.msra.mxu0 %v4609
    %7116 = vmatpush.bf16.msra.mxu0 %v4601
    %7117 = vmatpush.bf16.msra.mxu0 %v4593
    %7118 = vmatpush.bf16.msra.mxu0 %v4585
    %7119 = vmatpush.bf16.msra.mxu0 %v4577
    %7120 = vmatpush.bf16.msra.mxu0 %v4569
    %7121 = vmatpush.bf16.msra.mxu0 %v4561
    %7122 = vmatpush.bf16.msra.mxu0 %v4553
    %7123 = vmatmul.bf16.gmra.mxu0 %v6896
    %v7124 = vpop.f32.mrf.mxu0
    %v7125 = vadd.f32 %v538, %v7124
    %v7126 = vpop.f32.mrf.mxu0
    %7127 = vdwg.mxu0
    %7128 = vmatpush.bf16.msra.mxu0 %v4673
    %7129 = vmatpush.bf16.msra.mxu0 %v4665
    %7130 = vmatpush.bf16.msra.mxu0 %v4657
    %7131 = vmatpush.bf16.msra.mxu0 %v4649
    %7132 = vmatpush.bf16.msra.mxu0 %v4641
    %7133 = vmatpush.bf16.msra.mxu0 %v4633
    %7134 = vmatpush.bf16.msra.mxu0 %v4625
    %7135 = vmatpush.bf16.msra.mxu0 %v4617
    %7136 = vmatmul.bf16.gmra.mxu0 %v6897
    %v7137 = vpop.f32.mrf.mxu0
    %v7138 = vadd.f32 %v7125, %v7137
    %v7139 = vpop.f32.mrf.mxu0
    %7140 = vdwg.mxu0
    %7141 = vmatpush.bf16.msra.mxu0 %v4737
    %7142 = vmatpush.bf16.msra.mxu0 %v4729
    %7143 = vmatpush.bf16.msra.mxu0 %v4721
    %7144 = vmatpush.bf16.msra.mxu0 %v4713
    %7145 = vmatpush.bf16.msra.mxu0 %v4705
    %7146 = vmatpush.bf16.msra.mxu0 %v4697
    %7147 = vmatpush.bf16.msra.mxu0 %v4689
    %7148 = vmatpush.bf16.msra.mxu0 %v4681
    %7149 = vmatmul.bf16.gmra.mxu0 %v6903
    %v7150 = vpop.f32.mrf.mxu0
    %v7151 = vadd.f32 %v7138, %v7150
    %v7152 = vpop.f32.mrf.mxu0
    %7153 = vdwg.mxu0
    %7154 = vmatpush.bf16.msra.mxu0 %v4801
    %7155 = vmatpush.bf16.msra.mxu0 %v4793
    %7156 = vmatpush.bf16.msra.mxu0 %v4785
    %7157 = vmatpush.bf16.msra.mxu0 %v4777
    %7158 = vmatpush.bf16.msra.mxu0 %v4769
    %7159 = vmatpush.bf16.msra.mxu0 %v4761
    %7160 = vmatpush.bf16.msra.mxu0 %v4753
    %7161 = vmatpush.bf16.msra.mxu0 %v4745
    %7162 = vmatmul.bf16.gmra.mxu0 %v6904
    %v7163 = vpop.f32.mrf.mxu0
    %v7164 = vadd.f32 %v7151, %v7163
    %v7165 = vpop.f32.mrf.mxu0
    %7166 = vdwg.mxu0
    %7167 = vmatpush.bf16.msra.mxu0 %v4610
    %7168 = vmatpush.bf16.msra.mxu0 %v4602
    %7169 = vmatpush.bf16.msra.mxu0 %v4594
    %7170 = vmatpush.bf16.msra.mxu0 %v4586
    %7171 = vmatpush.bf16.msra.mxu0 %v4578
    %7172 = vmatpush.bf16.msra.mxu0 %v4570
    %7173 = vmatpush.bf16.msra.mxu0 %v4562
    %7174 = vmatpush.bf16.msra.mxu0 %v4554
    %7175 = vmatmul.bf16.gmra.mxu0 %v6896
    %v7176 = vpop.f32.mrf.mxu0
    %v7177 = vadd.f32 %v539, %v7176
    %v7178 = vpop.f32.mrf.mxu0
    %7179 = vdwg.mxu0
    %7180 = vmatpush.bf16.msra.mxu0 %v4674
    %7181 = vmatpush.bf16.msra.mxu0 %v4666
    %7182 = vmatpush.bf16.msra.mxu0 %v4658
    %7183 = vmatpush.bf16.msra.mxu0 %v4650
    %7184 = vmatpush.bf16.msra.mxu0 %v4642
    %7185 = vmatpush.bf16.msra.mxu0 %v4634
    %7186 = vmatpush.bf16.msra.mxu0 %v4626
    %7187 = vmatpush.bf16.msra.mxu0 %v4618
    %7188 = vmatmul.bf16.gmra.mxu0 %v6897
    %v7189 = vpop.f32.mrf.mxu0
    %v7190 = vadd.f32 %v7177, %v7189
    %v7191 = vpop.f32.mrf.mxu0
    %7192 = vdwg.mxu0
    %7193 = vmatpush.bf16.msra.mxu0 %v4738
    %7194 = vmatpush.bf16.msra.mxu0 %v4730
    %7195 = vmatpush.bf16.msra.mxu0 %v4722
    %7196 = vmatpush.bf16.msra.mxu0 %v4714
    %7197 = vmatpush.bf16.msra.mxu0 %v4706
    %7198 = vmatpush.bf16.msra.mxu0 %v4698
    %7199 = vmatpush.bf16.msra.mxu0 %v4690
    %7200 = vmatpush.bf16.msra.mxu0 %v4682
    %7201 = vmatmul.bf16.gmra.mxu0 %v6903
    %v7202 = vpop.f32.mrf.mxu0
    %v7203 = vadd.f32 %v7190, %v7202
    %v7204 = vpop.f32.mrf.mxu0
    %7205 = vdwg.mxu0
    %7206 = vmatpush.bf16.msra.mxu0 %v4802
    %7207 = vmatpush.bf16.msra.mxu0 %v4794
    %7208 = vmatpush.bf16.msra.mxu0 %v4786
    %7209 = vmatpush.bf16.msra.mxu0 %v4778
    %7210 = vmatpush.bf16.msra.mxu0 %v4770
    %7211 = vmatpush.bf16.msra.mxu0 %v4762
    %7212 = vmatpush.bf16.msra.mxu0 %v4754
    %7213 = vmatpush.bf16.msra.mxu0 %v4746
    %7214 = vmatmul.bf16.gmra.mxu0 %v6904
    %v7215 = vpop.f32.mrf.mxu0
    %v7216 = vadd.f32 %v7203, %v7215
    %v7217 = vpop.f32.mrf.mxu0
    %7218 = vdwg.mxu0
    %7219 = vmatpush.bf16.msra.mxu0 %v4611
    %7220 = vmatpush.bf16.msra.mxu0 %v4603
    %7221 = vmatpush.bf16.msra.mxu0 %v4595
    %7222 = vmatpush.bf16.msra.mxu0 %v4587
    %7223 = vmatpush.bf16.msra.mxu0 %v4579
    %7224 = vmatpush.bf16.msra.mxu0 %v4571
    %7225 = vmatpush.bf16.msra.mxu0 %v4563
    %7226 = vmatpush.bf16.msra.mxu0 %v4555
    %7227 = vmatmul.bf16.gmra.mxu0 %v6896
    %v7228 = vpop.f32.mrf.mxu0
    %v7229 = vadd.f32 %v540, %v7228
    %v7230 = vpop.f32.mrf.mxu0
    %7231 = vdwg.mxu0
    %7232 = vmatpush.bf16.msra.mxu0 %v4675
    %7233 = vmatpush.bf16.msra.mxu0 %v4667
    %7234 = vmatpush.bf16.msra.mxu0 %v4659
    %7235 = vmatpush.bf16.msra.mxu0 %v4651
    %7236 = vmatpush.bf16.msra.mxu0 %v4643
    %7237 = vmatpush.bf16.msra.mxu0 %v4635
    %7238 = vmatpush.bf16.msra.mxu0 %v4627
    %7239 = vmatpush.bf16.msra.mxu0 %v4619
    %7240 = vmatmul.bf16.gmra.mxu0 %v6897
    %v7241 = vpop.f32.mrf.mxu0
    %v7242 = vadd.f32 %v7229, %v7241
    %v7243 = vpop.f32.mrf.mxu0
    %7244 = vdwg.mxu0
    %7245 = vmatpush.bf16.msra.mxu0 %v4739
    %7246 = vmatpush.bf16.msra.mxu0 %v4731
    %7247 = vmatpush.bf16.msra.mxu0 %v4723
    %7248 = vmatpush.bf16.msra.mxu0 %v4715
    %7249 = vmatpush.bf16.msra.mxu0 %v4707
    %7250 = vmatpush.bf16.msra.mxu0 %v4699
    %7251 = vmatpush.bf16.msra.mxu0 %v4691
    %7252 = vmatpush.bf16.msra.mxu0 %v4683
    %7253 = vmatmul.bf16.gmra.mxu0 %v6903
    %v7254 = vpop.f32.mrf.mxu0
    %v7255 = vadd.f32 %v7242, %v7254
    %v7256 = vpop.f32.mrf.mxu0
    %7257 = vdwg.mxu0
    %7258 = vmatpush.bf16.msra.mxu0 %v4803
    %7259 = vmatpush.bf16.msra.mxu0 %v4795
    %7260 = vmatpush.bf16.msra.mxu0 %v4787
    %7261 = vmatpush.bf16.msra.mxu0 %v4779
    %7262 = vmatpush.bf16.msra.mxu0 %v4771
    %7263 = vmatpush.bf16.msra.mxu0 %v4763
    %7264 = vmatpush.bf16.msra.mxu0 %v4755
    %7265 = vmatpush.bf16.msra.mxu0 %v4747
    %7266 = vmatmul.bf16.gmra.mxu0 %v6904
    %v7267 = vpop.f32.mrf.mxu0
    %v7268 = vadd.f32 %v7255, %v7267
    %v7269 = vpop.f32.mrf.mxu0
    %7270 = vdwg.mxu0
    %7271 = vmatpush.bf16.msra.mxu0 %v4612
    %7272 = vmatpush.bf16.msra.mxu0 %v4604
    %7273 = vmatpush.bf16.msra.mxu0 %v4596
    %7274 = vmatpush.bf16.msra.mxu0 %v4588
    %7275 = vmatpush.bf16.msra.mxu0 %v4580
    %7276 = vmatpush.bf16.msra.mxu0 %v4572
    %7277 = vmatpush.bf16.msra.mxu0 %v4564
    %7278 = vmatpush.bf16.msra.mxu0 %v4556
    %7279 = vmatmul.bf16.gmra.mxu0 %v6896
    %v7280 = vpop.f32.mrf.mxu0
    %v7281 = vadd.f32 %v541, %v7280
    %v7282 = vpop.f32.mrf.mxu0
    %7283 = vdwg.mxu0
    %7284 = vmatpush.bf16.msra.mxu0 %v4676
    %7285 = vmatpush.bf16.msra.mxu0 %v4668
    %7286 = vmatpush.bf16.msra.mxu0 %v4660
    %7287 = vmatpush.bf16.msra.mxu0 %v4652
    %7288 = vmatpush.bf16.msra.mxu0 %v4644
    %7289 = vmatpush.bf16.msra.mxu0 %v4636
    %7290 = vmatpush.bf16.msra.mxu0 %v4628
    %7291 = vmatpush.bf16.msra.mxu0 %v4620
    %7292 = vmatmul.bf16.gmra.mxu0 %v6897
    %v7293 = vpop.f32.mrf.mxu0
    %v7294 = vadd.f32 %v7281, %v7293
    %v7295 = vpop.f32.mrf.mxu0
    %7296 = vdwg.mxu0
    %7297 = vmatpush.bf16.msra.mxu0 %v4740
    %7298 = vmatpush.bf16.msra.mxu0 %v4732
    %7299 = vmatpush.bf16.msra.mxu0 %v4724
    %7300 = vmatpush.bf16.msra.mxu0 %v4716
    %7301 = vmatpush.bf16.msra.mxu0 %v4708
    %7302 = vmatpush.bf16.msra.mxu0 %v4700
    %7303 = vmatpush.bf16.msra.mxu0 %v4692
    %7304 = vmatpush.bf16.msra.mxu0 %v4684
    %7305 = vmatmul.bf16.gmra.mxu0 %v6903
    %v7306 = vpop.f32.mrf.mxu0
    %v7307 = vadd.f32 %v7294, %v7306
    %v7308 = vpop.f32.mrf.mxu0
    %7309 = vdwg.mxu0
    %7310 = vmatpush.bf16.msra.mxu0 %v4804
    %7311 = vmatpush.bf16.msra.mxu0 %v4796
    %7312 = vmatpush.bf16.msra.mxu0 %v4788
    %7313 = vmatpush.bf16.msra.mxu0 %v4780
    %7314 = vmatpush.bf16.msra.mxu0 %v4772
    %7315 = vmatpush.bf16.msra.mxu0 %v4764
    %7316 = vmatpush.bf16.msra.mxu0 %v4756
    %7317 = vmatpush.bf16.msra.mxu0 %v4748
    %7318 = vmatmul.bf16.gmra.mxu0 %v6904
    %v7319 = vpop.f32.mrf.mxu0
    %v7320 = vadd.f32 %v7307, %v7319
    %v7321 = vpop.f32.mrf.mxu0
    %7322 = vdwg.mxu0
    %s7323 = scalar_lea.vmem %s0, 8
    %v7324 = vld [vmem:[%s7323] sm:$0x3]
    %7326 = vset.pattern.permute.xlu0 0
    %7327 = vperm.xlu0 %7326, %v7324
    %v7328 = vpop.permute.xlu0 %7327
    %v7330 = vmul.f32 %v7328, %v90
    %v7331 = vmul.f32 %v7328, %v91
    %v7332 = vmul.f32 %v7328, %v92
    %v7333 = vmul.f32 %v7328, %v93
    %v7334 = vmul.f32 %v7328, %v94
    %v7335 = vmul.f32 %v7328, %v95
    %v7336 = vmul.f32 %v7328, %v96
    %v7337 = vmul.f32 %v7328, %v97
    %v7338 = vadd.f32 %v7330, %v115
    %v7339 = vadd.f32 %v7331, %v116
    %v7340 = vadd.f32 %v7332, %v117
    %v7341 = vadd.f32 %v7333, %v118
    %v7342 = vadd.f32 %v7334, %v119
    %v7343 = vadd.f32 %v7335, %v120
    %v7344 = vadd.f32 %v7336, %v121
    %v7345 = vadd.f32 %v7337, %v122
    %7346 = vmatpush.bf16.msra.mxu0 %v2841
    %7347 = vmatpush.bf16.msra.mxu0 %v2833
    %7348 = vmatpush.bf16.msra.mxu0 %v2825
    %7349 = vmatpush.bf16.msra.mxu0 %v2817
    %7350 = vmatpush.bf16.msra.mxu0 %v2809
    %7351 = vmatpush.bf16.msra.mxu0 %v2801
    %7352 = vmatpush.bf16.msra.mxu0 %v2793
    %7353 = vmatpush.bf16.msra.mxu0 %v2785
    %7354 = vmatmul.bf16.gmra.mxu0 %v6896
    %v7355 = vpop.f32.mrf.mxu0
    %v7356 = vadd.f32 0.0, %v7355
    %v7357 = vpop.f32.mrf.mxu0
    %7358 = vdwg.mxu0
    %7359 = vmatpush.bf16.msra.mxu0 %v2905
    %7360 = vmatpush.bf16.msra.mxu0 %v2897
    %7361 = vmatpush.bf16.msra.mxu0 %v2889
    %7362 = vmatpush.bf16.msra.mxu0 %v2881
    %7363 = vmatpush.bf16.msra.mxu0 %v2873
    %7364 = vmatpush.bf16.msra.mxu0 %v2865
    %7365 = vmatpush.bf16.msra.mxu0 %v2857
    %7366 = vmatpush.bf16.msra.mxu0 %v2849
    %7367 = vmatmul.bf16.gmra.mxu0 %v6897
    %v7368 = vpop.f32.mrf.mxu0
    %v7369 = vadd.f32 %v7356, %v7368
    %v7370 = vpop.f32.mrf.mxu0
    %7371 = vdwg.mxu0
    %7372 = vmatpush.bf16.msra.mxu0 %v2842
    %7373 = vmatpush.bf16.msra.mxu0 %v2834
    %7374 = vmatpush.bf16.msra.mxu0 %v2826
    %7375 = vmatpush.bf16.msra.mxu0 %v2818
    %7376 = vmatpush.bf16.msra.mxu0 %v2810
    %7377 = vmatpush.bf16.msra.mxu0 %v2802
    %7378 = vmatpush.bf16.msra.mxu0 %v2794
    %7379 = vmatpush.bf16.msra.mxu0 %v2786
    %7380 = vmatmul.bf16.gmra.mxu0 %v6896
    %v7381 = vpop.f32.mrf.mxu0
    %v7382 = vadd.f32 0.0, %v7381
    %v7383 = vpop.f32.mrf.mxu0
    %7384 = vdwg.mxu0
    %7385 = vmatpush.bf16.msra.mxu0 %v2906
    %7386 = vmatpush.bf16.msra.mxu0 %v2898
    %7387 = vmatpush.bf16.msra.mxu0 %v2890
    %7388 = vmatpush.bf16.msra.mxu0 %v2882
    %7389 = vmatpush.bf16.msra.mxu0 %v2874
    %7390 = vmatpush.bf16.msra.mxu0 %v2866
    %7391 = vmatpush.bf16.msra.mxu0 %v2858
    %7392 = vmatpush.bf16.msra.mxu0 %v2850
    %7393 = vmatmul.bf16.gmra.mxu0 %v6897
    %v7394 = vpop.f32.mrf.mxu0
    %v7395 = vadd.f32 %v7382, %v7394
    %v7396 = vpop.f32.mrf.mxu0
    %7397 = vdwg.mxu0
    %7398 = vmatpush.bf16.msra.mxu0 %v2843
    %7399 = vmatpush.bf16.msra.mxu0 %v2835
    %7400 = vmatpush.bf16.msra.mxu0 %v2827
    %7401 = vmatpush.bf16.msra.mxu0 %v2819
    %7402 = vmatpush.bf16.msra.mxu0 %v2811
    %7403 = vmatpush.bf16.msra.mxu0 %v2803
    %7404 = vmatpush.bf16.msra.mxu0 %v2795
    %7405 = vmatpush.bf16.msra.mxu0 %v2787
    %7406 = vmatmul.bf16.gmra.mxu0 %v6896
    %v7407 = vpop.f32.mrf.mxu0
    %v7408 = vadd.f32 0.0, %v7407
    %v7409 = vpop.f32.mrf.mxu0
    %7410 = vdwg.mxu0
    %7411 = vmatpush.bf16.msra.mxu0 %v2907
    %7412 = vmatpush.bf16.msra.mxu0 %v2899
    %7413 = vmatpush.bf16.msra.mxu0 %v2891
    %7414 = vmatpush.bf16.msra.mxu0 %v2883
    %7415 = vmatpush.bf16.msra.mxu0 %v2875
    %7416 = vmatpush.bf16.msra.mxu0 %v2867
    %7417 = vmatpush.bf16.msra.mxu0 %v2859
    %7418 = vmatpush.bf16.msra.mxu0 %v2851
    %7419 = vmatmul.bf16.gmra.mxu0 %v6897
    %v7420 = vpop.f32.mrf.mxu0
    %v7421 = vadd.f32 %v7408, %v7420
    %v7422 = vpop.f32.mrf.mxu0
    %7423 = vdwg.mxu0
    %7424 = vmatpush.bf16.msra.mxu0 %v2844
    %7425 = vmatpush.bf16.msra.mxu0 %v2836
    %7426 = vmatpush.bf16.msra.mxu0 %v2828
    %7427 = vmatpush.bf16.msra.mxu0 %v2820
    %7428 = vmatpush.bf16.msra.mxu0 %v2812
    %7429 = vmatpush.bf16.msra.mxu0 %v2804
    %7430 = vmatpush.bf16.msra.mxu0 %v2796
    %7431 = vmatpush.bf16.msra.mxu0 %v2788
    %7432 = vmatmul.bf16.gmra.mxu0 %v6896
    %v7433 = vpop.f32.mrf.mxu0
    %v7434 = vadd.f32 0.0, %v7433
    %v7435 = vpop.f32.mrf.mxu0
    %7436 = vdwg.mxu0
    %7437 = vmatpush.bf16.msra.mxu0 %v2908
    %7438 = vmatpush.bf16.msra.mxu0 %v2900
    %7439 = vmatpush.bf16.msra.mxu0 %v2892
    %7440 = vmatpush.bf16.msra.mxu0 %v2884
    %7441 = vmatpush.bf16.msra.mxu0 %v2876
    %7442 = vmatpush.bf16.msra.mxu0 %v2868
    %7443 = vmatpush.bf16.msra.mxu0 %v2860
    %7444 = vmatpush.bf16.msra.mxu0 %v2852
    %7445 = vmatmul.bf16.gmra.mxu0 %v6897
    %v7446 = vpop.f32.mrf.mxu0
    %v7447 = vadd.f32 %v7434, %v7446
    %v7448 = vpop.f32.mrf.mxu0
    %7449 = vdwg.mxu0
    %7450 = vmatpush.bf16.msra.mxu0 %v2845
    %7451 = vmatpush.bf16.msra.mxu0 %v2837
    %7452 = vmatpush.bf16.msra.mxu0 %v2829
    %7453 = vmatpush.bf16.msra.mxu0 %v2821
    %7454 = vmatpush.bf16.msra.mxu0 %v2813
    %7455 = vmatpush.bf16.msra.mxu0 %v2805
    %7456 = vmatpush.bf16.msra.mxu0 %v2797
    %7457 = vmatpush.bf16.msra.mxu0 %v2789
    %7458 = vmatmul.bf16.gmra.mxu0 %v6896
    %v7459 = vpop.f32.mrf.mxu0
    %v7460 = vadd.f32 0.0, %v7459
    %v7461 = vpop.f32.mrf.mxu0
    %7462 = vdwg.mxu0
    %7463 = vmatpush.bf16.msra.mxu0 %v2909
    %7464 = vmatpush.bf16.msra.mxu0 %v2901
    %7465 = vmatpush.bf16.msra.mxu0 %v2893
    %7466 = vmatpush.bf16.msra.mxu0 %v2885
    %7467 = vmatpush.bf16.msra.mxu0 %v2877
    %7468 = vmatpush.bf16.msra.mxu0 %v2869
    %7469 = vmatpush.bf16.msra.mxu0 %v2861
    %7470 = vmatpush.bf16.msra.mxu0 %v2853
    %7471 = vmatmul.bf16.gmra.mxu0 %v6897
    %v7472 = vpop.f32.mrf.mxu0
    %v7473 = vadd.f32 %v7460, %v7472
    %v7474 = vpop.f32.mrf.mxu0
    %7475 = vdwg.mxu0
    %7476 = vmatpush.bf16.msra.mxu0 %v2846
    %7477 = vmatpush.bf16.msra.mxu0 %v2838
    %7478 = vmatpush.bf16.msra.mxu0 %v2830
    %7479 = vmatpush.bf16.msra.mxu0 %v2822
    %7480 = vmatpush.bf16.msra.mxu0 %v2814
    %7481 = vmatpush.bf16.msra.mxu0 %v2806
    %7482 = vmatpush.bf16.msra.mxu0 %v2798
    %7483 = vmatpush.bf16.msra.mxu0 %v2790
    %7484 = vmatmul.bf16.gmra.mxu0 %v6896
    %v7485 = vpop.f32.mrf.mxu0
    %v7486 = vadd.f32 0.0, %v7485
    %v7487 = vpop.f32.mrf.mxu0
    %7488 = vdwg.mxu0
    %7489 = vmatpush.bf16.msra.mxu0 %v2910
    %7490 = vmatpush.bf16.msra.mxu0 %v2902
    %7491 = vmatpush.bf16.msra.mxu0 %v2894
    %7492 = vmatpush.bf16.msra.mxu0 %v2886
    %7493 = vmatpush.bf16.msra.mxu0 %v2878
    %7494 = vmatpush.bf16.msra.mxu0 %v2870
    %7495 = vmatpush.bf16.msra.mxu0 %v2862
    %7496 = vmatpush.bf16.msra.mxu0 %v2854
    %7497 = vmatmul.bf16.gmra.mxu0 %v6897
    %v7498 = vpop.f32.mrf.mxu0
    %v7499 = vadd.f32 %v7486, %v7498
    %v7500 = vpop.f32.mrf.mxu0
    %7501 = vdwg.mxu0
    %7502 = vmatpush.bf16.msra.mxu0 %v2847
    %7503 = vmatpush.bf16.msra.mxu0 %v2839
    %7504 = vmatpush.bf16.msra.mxu0 %v2831
    %7505 = vmatpush.bf16.msra.mxu0 %v2823
    %7506 = vmatpush.bf16.msra.mxu0 %v2815
    %7507 = vmatpush.bf16.msra.mxu0 %v2807
    %7508 = vmatpush.bf16.msra.mxu0 %v2799
    %7509 = vmatpush.bf16.msra.mxu0 %v2791
    %7510 = vmatmul.bf16.gmra.mxu0 %v6896
    %v7511 = vpop.f32.mrf.mxu0
    %v7512 = vadd.f32 0.0, %v7511
    %v7513 = vpop.f32.mrf.mxu0
    %7514 = vdwg.mxu0
    %7515 = vmatpush.bf16.msra.mxu0 %v2911
    %7516 = vmatpush.bf16.msra.mxu0 %v2903
    %7517 = vmatpush.bf16.msra.mxu0 %v2895
    %7518 = vmatpush.bf16.msra.mxu0 %v2887
    %7519 = vmatpush.bf16.msra.mxu0 %v2879
    %7520 = vmatpush.bf16.msra.mxu0 %v2871
    %7521 = vmatpush.bf16.msra.mxu0 %v2863
    %7522 = vmatpush.bf16.msra.mxu0 %v2855
    %7523 = vmatmul.bf16.gmra.mxu0 %v6897
    %v7524 = vpop.f32.mrf.mxu0
    %v7525 = vadd.f32 %v7512, %v7524
    %v7526 = vpop.f32.mrf.mxu0
    %7527 = vdwg.mxu0
    %7528 = vmatpush.bf16.msra.mxu0 %v2848
    %7529 = vmatpush.bf16.msra.mxu0 %v2840
    %7530 = vmatpush.bf16.msra.mxu0 %v2832
    %7531 = vmatpush.bf16.msra.mxu0 %v2824
    %7532 = vmatpush.bf16.msra.mxu0 %v2816
    %7533 = vmatpush.bf16.msra.mxu0 %v2808
    %7534 = vmatpush.bf16.msra.mxu0 %v2800
    %7535 = vmatpush.bf16.msra.mxu0 %v2792
    %7536 = vmatmul.bf16.gmra.mxu0 %v6896
    %v7537 = vpop.f32.mrf.mxu0
    %v7538 = vadd.f32 0.0, %v7537
    %v7539 = vpop.f32.mrf.mxu0
    %7540 = vdwg.mxu0
    %7541 = vmatpush.bf16.msra.mxu0 %v2912
    %7542 = vmatpush.bf16.msra.mxu0 %v2904
    %7543 = vmatpush.bf16.msra.mxu0 %v2896
    %7544 = vmatpush.bf16.msra.mxu0 %v2888
    %7545 = vmatpush.bf16.msra.mxu0 %v2880
    %7546 = vmatpush.bf16.msra.mxu0 %v2872
    %7547 = vmatpush.bf16.msra.mxu0 %v2864
    %7548 = vmatpush.bf16.msra.mxu0 %v2856
    %7549 = vmatmul.bf16.gmra.mxu0 %v6897
    %v7550 = vpop.f32.mrf.mxu0
    %v7551 = vadd.f32 %v7538, %v7550
    %v7552 = vpop.f32.mrf.mxu0
    %7553 = vdwg.mxu0
    %v7554 = vadd.f32 %v7338, %v7369
    %v7555 = vadd.f32 %v7339, %v7395
    %v7556 = vadd.f32 %v7340, %v7421
    %v7557 = vadd.f32 %v7341, %v7447
    %v7558 = vadd.f32 %v7342, %v7473
    %v7559 = vadd.f32 %v7343, %v7499
    %v7560 = vadd.f32 %v7344, %v7525
    %v7561 = vadd.f32 %v7345, %v7551
    %v7562 = vxor.u32 %v6956, 2147483648
    %v7563 = vxor.u32 %v7008, 2147483648
    %v7564 = vxor.u32 %v7060, 2147483648
    %v7565 = vxor.u32 %v7112, 2147483648
    %v7566 = vxor.u32 %v7164, 2147483648
    %v7567 = vxor.u32 %v7216, 2147483648
    %v7568 = vmul.f32 %v7562, 1.442695
    %v7569 = vpow.pop %v7568
    %v7570 = vmul.f32 %v7563, 1.442695
    %v7571 = vpow.pop %v7570
    %v7572 = vmul.f32 %v7564, 1.442695
    %v7573 = vpow.pop %v7572
    %v7574 = vmul.f32 %v7565, 1.442695
    %v7575 = vpow.pop %v7574
    %v7576 = vmul.f32 %v7566, 1.442695
    %v7577 = vpow.pop %v7576
    %v7578 = vmul.f32 %v7567, 1.442695
    %v7579 = vpow.pop %v7578
    %v7580 = vadd.f32 %v7569, 1.0
    %v7581 = vadd.f32 %v7571, 1.0
    %v7582 = vadd.f32 %v7573, 1.0
    %v7583 = vadd.f32 %v7575, 1.0
    %v7584 = vadd.f32 %v7577, 1.0
    %v7585 = vadd.f32 %v7579, 1.0
    %v7586 = vrcp.pop %v7580
    %v7587 = vmul.f32 %v7580, %v7586
    %v7588 = vsub.f32 1.0, %v7587
    %v7589 = vmul.f32 %v7586, %v7588
    %v7590 = vadd.f32 %v7586, %v7589
    %vm7591 = vweird.f32 %v7580
    %vm7592 = vweird.f32 %v7586
    %vm7593 = vmor %vm7591, %vm7592
    %v7594 = vsel %vm7593, %v7586, %v7590
    %v7595 = vand.u32 2147483647, %v7580
    %vm7596 = vcmp.eq.f32.partialorder %v7595, 8.507059e+37
    %v7597 = vand.u32 %v7580, 2147483648
    %v7598 = vor.u32 1.1754944e-38, %v7597
    %v7599 = vsel %vm7596, %v7598, %v7594
    %v7600 = vmul.f32 1.0, %v7599
    %v7601 = vrcp.pop %v7581
    %v7602 = vmul.f32 %v7581, %v7601
    %v7603 = vsub.f32 1.0, %v7602
    %v7604 = vmul.f32 %v7601, %v7603
    %v7605 = vadd.f32 %v7601, %v7604
    %vm7606 = vweird.f32 %v7581
    %vm7607 = vweird.f32 %v7601
    %vm7608 = vmor %vm7606, %vm7607
    %v7609 = vsel %vm7608, %v7601, %v7605
    %v7610 = vand.u32 2147483647, %v7581
    %vm7611 = vcmp.eq.f32.partialorder %v7610, 8.507059e+37
    %v7612 = vand.u32 %v7581, 2147483648
    %v7613 = vor.u32 1.1754944e-38, %v7612
    %v7614 = vsel %vm7611, %v7613, %v7609
    %v7615 = vmul.f32 1.0, %v7614
    %v7616 = vrcp.pop %v7582
    %v7617 = vmul.f32 %v7582, %v7616
    %v7618 = vsub.f32 1.0, %v7617
    %v7619 = vmul.f32 %v7616, %v7618
    %v7620 = vadd.f32 %v7616, %v7619
    %vm7621 = vweird.f32 %v7582
    %vm7622 = vweird.f32 %v7616
    %vm7623 = vmor %vm7621, %vm7622
    %v7624 = vsel %vm7623, %v7616, %v7620
    %v7625 = vand.u32 2147483647, %v7582
    %vm7626 = vcmp.eq.f32.partialorder %v7625, 8.507059e+37
    %v7627 = vand.u32 %v7582, 2147483648
    %v7628 = vor.u32 1.1754944e-38, %v7627
    %v7629 = vsel %vm7626, %v7628, %v7624
    %v7630 = vmul.f32 1.0, %v7629
    %v7631 = vrcp.pop %v7583
    %v7632 = vmul.f32 %v7583, %v7631
    %v7633 = vsub.f32 1.0, %v7632
    %v7634 = vmul.f32 %v7631, %v7633
    %v7635 = vadd.f32 %v7631, %v7634
    %vm7636 = vweird.f32 %v7583
    %vm7637 = vweird.f32 %v7631
    %vm7638 = vmor %vm7636, %vm7637
    %v7639 = vsel %vm7638, %v7631, %v7635
    %v7640 = vand.u32 2147483647, %v7583
    %vm7641 = vcmp.eq.f32.partialorder %v7640, 8.507059e+37
    %v7642 = vand.u32 %v7583, 2147483648
    %v7643 = vor.u32 1.1754944e-38, %v7642
    %v7644 = vsel %vm7641, %v7643, %v7639
    %v7645 = vmul.f32 1.0, %v7644
    %v7646 = vrcp.pop %v7584
    %v7647 = vmul.f32 %v7584, %v7646
    %v7648 = vsub.f32 1.0, %v7647
    %v7649 = vmul.f32 %v7646, %v7648
    %v7650 = vadd.f32 %v7646, %v7649
    %vm7651 = vweird.f32 %v7584
    %vm7652 = vweird.f32 %v7646
    %vm7653 = vmor %vm7651, %vm7652
    %v7654 = vsel %vm7653, %v7646, %v7650
    %v7655 = vand.u32 2147483647, %v7584
    %vm7656 = vcmp.eq.f32.partialorder %v7655, 8.507059e+37
    %v7657 = vand.u32 %v7584, 2147483648
    %v7658 = vor.u32 1.1754944e-38, %v7657
    %v7659 = vsel %vm7656, %v7658, %v7654
    %v7660 = vmul.f32 1.0, %v7659
    %v7661 = vrcp.pop %v7585
    %v7662 = vmul.f32 %v7585, %v7661
    %v7663 = vsub.f32 1.0, %v7662
    %v7664 = vmul.f32 %v7661, %v7663
    %v7665 = vadd.f32 %v7661, %v7664
    %vm7666 = vweird.f32 %v7585
    %vm7667 = vweird.f32 %v7661
    %vm7668 = vmor %vm7666, %vm7667
    %v7669 = vsel %vm7668, %v7661, %v7665
    %v7670 = vand.u32 2147483647, %v7585
    %vm7671 = vcmp.eq.f32.partialorder %v7670, 8.507059e+37
    %v7672 = vand.u32 %v7585, 2147483648
    %v7673 = vor.u32 1.1754944e-38, %v7672
    %v7674 = vsel %vm7671, %v7673, %v7669
    %v7675 = vmul.f32 1.0, %v7674
    %v7676 = vtanh.pop %v7268
    %v7677 = vtanh.pop %v7320
    %v7678 = vmul.f32 %v7630, %v6759
    %v7679 = vmul.f32 %v7645, %v6760
    %v7680 = vmul.f32 %v7600, %v7676
    %v7681 = vmul.f32 %v7615, %v7677
    %v7682 = vadd.f32 %v7678, %v7680
    %v7683 = vadd.f32 %v7679, %v7681
    %v7684 = vtanh.pop %v7682
    %v7685 = vtanh.pop %v7683
    %v7686 = vmul.f32 %v7660, %v7684
    %v7687 = vmul.f32 %v7675, %v7685
    %v7688 = vpack.c.bf16 %v7687, %v7686
    %v7689 = vxor.u32 %v7554, 2147483648
    %v7690 = vxor.u32 %v7555, 2147483648
    %v7691 = vxor.u32 %v7556, 2147483648
    %v7692 = vxor.u32 %v7557, 2147483648
    %v7693 = vxor.u32 %v7558, 2147483648
    %v7694 = vxor.u32 %v7559, 2147483648
    %v7695 = vmul.f32 %v7689, 1.442695
    %v7696 = vpow.pop %v7695
    %v7697 = vmul.f32 %v7690, 1.442695
    %v7698 = vpow.pop %v7697
    %v7699 = vmul.f32 %v7691, 1.442695
    %v7700 = vpow.pop %v7699
    %v7701 = vmul.f32 %v7692, 1.442695
    %v7702 = vpow.pop %v7701
    %v7703 = vmul.f32 %v7693, 1.442695
    %v7704 = vpow.pop %v7703
    %v7705 = vmul.f32 %v7694, 1.442695
    %v7706 = vpow.pop %v7705
    %v7707 = vadd.f32 %v7696, 1.0
    %v7708 = vadd.f32 %v7698, 1.0
    %v7709 = vadd.f32 %v7700, 1.0
    %v7710 = vadd.f32 %v7702, 1.0
    %v7711 = vadd.f32 %v7704, 1.0
    %v7712 = vadd.f32 %v7706, 1.0
    %v7713 = vrcp.pop %v7707
    %v7714 = vmul.f32 %v7707, %v7713
    %v7715 = vsub.f32 1.0, %v7714
    %v7716 = vmul.f32 %v7713, %v7715
    %v7717 = vadd.f32 %v7713, %v7716
    %vm7718 = vweird.f32 %v7707
    %vm7719 = vweird.f32 %v7713
    %vm7720 = vmor %vm7718, %vm7719
    %v7721 = vsel %vm7720, %v7713, %v7717
    %v7722 = vand.u32 2147483647, %v7707
    %vm7723 = vcmp.eq.f32.partialorder %v7722, 8.507059e+37
    %v7724 = vand.u32 %v7707, 2147483648
    %v7725 = vor.u32 1.1754944e-38, %v7724
    %v7726 = vsel %vm7723, %v7725, %v7721
    %v7727 = vmul.f32 1.0, %v7726
    %v7728 = vrcp.pop %v7708
    %v7729 = vmul.f32 %v7708, %v7728
    %v7730 = vsub.f32 1.0, %v7729
    %v7731 = vmul.f32 %v7728, %v7730
    %v7732 = vadd.f32 %v7728, %v7731
    %vm7733 = vweird.f32 %v7708
    %vm7734 = vweird.f32 %v7728
    %vm7735 = vmor %vm7733, %vm7734
    %v7736 = vsel %vm7735, %v7728, %v7732
    %v7737 = vand.u32 2147483647, %v7708
    %vm7738 = vcmp.eq.f32.partialorder %v7737, 8.507059e+37
    %v7739 = vand.u32 %v7708, 2147483648
    %v7740 = vor.u32 1.1754944e-38, %v7739
    %v7741 = vsel %vm7738, %v7740, %v7736
    %v7742 = vmul.f32 1.0, %v7741
    %v7743 = vrcp.pop %v7709
    %v7744 = vmul.f32 %v7709, %v7743
    %v7745 = vsub.f32 1.0, %v7744
    %v7746 = vmul.f32 %v7743, %v7745
    %v7747 = vadd.f32 %v7743, %v7746
    %vm7748 = vweird.f32 %v7709
    %vm7749 = vweird.f32 %v7743
    %vm7750 = vmor %vm7748, %vm7749
    %v7751 = vsel %vm7750, %v7743, %v7747
    %v7752 = vand.u32 2147483647, %v7709
    %vm7753 = vcmp.eq.f32.partialorder %v7752, 8.507059e+37
    %v7754 = vand.u32 %v7709, 2147483648
    %v7755 = vor.u32 1.1754944e-38, %v7754
    %v7756 = vsel %vm7753, %v7755, %v7751
    %v7757 = vmul.f32 1.0, %v7756
    %v7758 = vrcp.pop %v7710
    %v7759 = vmul.f32 %v7710, %v7758
    %v7760 = vsub.f32 1.0, %v7759
    %v7761 = vmul.f32 %v7758, %v7760
    %v7762 = vadd.f32 %v7758, %v7761
    %vm7763 = vweird.f32 %v7710
    %vm7764 = vweird.f32 %v7758
    %vm7765 = vmor %vm7763, %vm7764
    %v7766 = vsel %vm7765, %v7758, %v7762
    %v7767 = vand.u32 2147483647, %v7710
    %vm7768 = vcmp.eq.f32.partialorder %v7767, 8.507059e+37
    %v7769 = vand.u32 %v7710, 2147483648
    %v7770 = vor.u32 1.1754944e-38, %v7769
    %v7771 = vsel %vm7768, %v7770, %v7766
    %v7772 = vmul.f32 1.0, %v7771
    %v7773 = vrcp.pop %v7711
    %v7774 = vmul.f32 %v7711, %v7773
    %v7775 = vsub.f32 1.0, %v7774
    %v7776 = vmul.f32 %v7773, %v7775
    %v7777 = vadd.f32 %v7773, %v7776
    %vm7778 = vweird.f32 %v7711
    %vm7779 = vweird.f32 %v7773
    %vm7780 = vmor %vm7778, %vm7779
    %v7781 = vsel %vm7780, %v7773, %v7777
    %v7782 = vand.u32 2147483647, %v7711
    %vm7783 = vcmp.eq.f32.partialorder %v7782, 8.507059e+37
    %v7784 = vand.u32 %v7711, 2147483648
    %v7785 = vor.u32 1.1754944e-38, %v7784
    %v7786 = vsel %vm7783, %v7785, %v7781
    %v7787 = vmul.f32 1.0, %v7786
    %v7788 = vrcp.pop %v7712
    %v7789 = vmul.f32 %v7712, %v7788
    %v7790 = vsub.f32 1.0, %v7789
    %v7791 = vmul.f32 %v7788, %v7790
    %v7792 = vadd.f32 %v7788, %v7791
    %vm7793 = vweird.f32 %v7712
    %vm7794 = vweird.f32 %v7788
    %vm7795 = vmor %vm7793, %vm7794
    %v7796 = vsel %vm7795, %v7788, %v7792
    %v7797 = vand.u32 2147483647, %v7712
    %vm7798 = vcmp.eq.f32.partialorder %v7797, 8.507059e+37
    %v7799 = vand.u32 %v7712, 2147483648
    %v7800 = vor.u32 1.1754944e-38, %v7799
    %v7801 = vsel %vm7798, %v7800, %v7796
    %v7802 = vmul.f32 1.0, %v7801
    %v7803 = vtanh.pop %v7560
    %v7804 = vtanh.pop %v7561
    %v7805 = vmul.f32 %v7757, %v6886
    %v7806 = vmul.f32 %v7772, %v6887
    %v7807 = vmul.f32 %v7727, %v7803
    %v7808 = vmul.f32 %v7742, %v7804
    %v7809 = vadd.f32 %v7805, %v7807
    %v7810 = vadd.f32 %v7806, %v7808
    %v7811 = vtanh.pop %v7809
    %v7812 = vtanh.pop %v7810
    %v7813 = vmul.f32 %v7787, %v7811
    %v7814 = vmul.f32 %v7802, %v7812
    %v7815 = vpack.c.bf16 %v7814, %v7813
    %v7817 = vunpack.c.l.b16 %v7815
    %v7818 = vunpack.c.h.b16 %v7815
    %v7819 = vpack.c.b16 %v7817, %v7817
    %v7820 = vpack.c.b16 %v7818, %v7818
    %v7824 = vunpack.c.l.b16 %v7688
    %v7825 = vunpack.c.h.b16 %v7688
    %v7826 = vpack.c.b16 %v7824, %v7824
    %v7827 = vpack.c.b16 %v7825, %v7825
    %7830 = vmatpush.bf16.msra.mxu0 %v4605
    %7831 = vmatpush.bf16.msra.mxu0 %v4597
    %7832 = vmatpush.bf16.msra.mxu0 %v4589
    %7833 = vmatpush.bf16.msra.mxu0 %v4581
    %7834 = vmatpush.bf16.msra.mxu0 %v4573
    %7835 = vmatpush.bf16.msra.mxu0 %v4565
    %7836 = vmatpush.bf16.msra.mxu0 %v4557
    %7837 = vmatpush.bf16.msra.mxu0 %v4549
    %7838 = vmatmul.bf16.gmra.mxu0 %v7819
    %v7839 = vpop.f32.mrf.mxu0
    %v7840 = vadd.f32 %v534, %v7839
    %v7841 = vpop.f32.mrf.mxu0
    %7842 = vdwg.mxu0
    %7843 = vmatpush.bf16.msra.mxu0 %v4669
    %7844 = vmatpush.bf16.msra.mxu0 %v4661
    %7845 = vmatpush.bf16.msra.mxu0 %v4653
    %7846 = vmatpush.bf16.msra.mxu0 %v4645
    %7847 = vmatpush.bf16.msra.mxu0 %v4637
    %7848 = vmatpush.bf16.msra.mxu0 %v4629
    %7849 = vmatpush.bf16.msra.mxu0 %v4621
    %7850 = vmatpush.bf16.msra.mxu0 %v4613
    %7851 = vmatmul.bf16.gmra.mxu0 %v7820
    %v7852 = vpop.f32.mrf.mxu0
    %v7853 = vadd.f32 %v7840, %v7852
    %v7854 = vpop.f32.mrf.mxu0
    %7855 = vdwg.mxu0
    %7856 = vmatpush.bf16.msra.mxu0 %v4733
    %7857 = vmatpush.bf16.msra.mxu0 %v4725
    %7858 = vmatpush.bf16.msra.mxu0 %v4717
    %7859 = vmatpush.bf16.msra.mxu0 %v4709
    %7860 = vmatpush.bf16.msra.mxu0 %v4701
    %7861 = vmatpush.bf16.msra.mxu0 %v4693
    %7862 = vmatpush.bf16.msra.mxu0 %v4685
    %7863 = vmatpush.bf16.msra.mxu0 %v4677
    %7864 = vmatmul.bf16.gmra.mxu0 %v7826
    %v7865 = vpop.f32.mrf.mxu0
    %v7866 = vadd.f32 %v7853, %v7865
    %v7867 = vpop.f32.mrf.mxu0
    %7868 = vdwg.mxu0
    %7869 = vmatpush.bf16.msra.mxu0 %v4797
    %7870 = vmatpush.bf16.msra.mxu0 %v4789
    %7871 = vmatpush.bf16.msra.mxu0 %v4781
    %7872 = vmatpush.bf16.msra.mxu0 %v4773
    %7873 = vmatpush.bf16.msra.mxu0 %v4765
    %7874 = vmatpush.bf16.msra.mxu0 %v4757
    %7875 = vmatpush.bf16.msra.mxu0 %v4749
    %7876 = vmatpush.bf16.msra.mxu0 %v4741
    %7877 = vmatmul.bf16.gmra.mxu0 %v7827
    %v7878 = vpop.f32.mrf.mxu0
    %v7879 = vadd.f32 %v7866, %v7878
    %v7880 = vpop.f32.mrf.mxu0
    %7881 = vdwg.mxu0
    %7882 = vmatpush.bf16.msra.mxu0 %v4606
    %7883 = vmatpush.bf16.msra.mxu0 %v4598
    %7884 = vmatpush.bf16.msra.mxu0 %v4590
    %7885 = vmatpush.bf16.msra.mxu0 %v4582
    %7886 = vmatpush.bf16.msra.mxu0 %v4574
    %7887 = vmatpush.bf16.msra.mxu0 %v4566
    %7888 = vmatpush.bf16.msra.mxu0 %v4558
    %7889 = vmatpush.bf16.msra.mxu0 %v4550
    %7890 = vmatmul.bf16.gmra.mxu0 %v7819
    %v7891 = vpop.f32.mrf.mxu0
    %v7892 = vadd.f32 %v535, %v7891
    %v7893 = vpop.f32.mrf.mxu0
    %7894 = vdwg.mxu0
    %7895 = vmatpush.bf16.msra.mxu0 %v4670
    %7896 = vmatpush.bf16.msra.mxu0 %v4662
    %7897 = vmatpush.bf16.msra.mxu0 %v4654
    %7898 = vmatpush.bf16.msra.mxu0 %v4646
    %7899 = vmatpush.bf16.msra.mxu0 %v4638
    %7900 = vmatpush.bf16.msra.mxu0 %v4630
    %7901 = vmatpush.bf16.msra.mxu0 %v4622
    %7902 = vmatpush.bf16.msra.mxu0 %v4614
    %7903 = vmatmul.bf16.gmra.mxu0 %v7820
    %v7904 = vpop.f32.mrf.mxu0
    %v7905 = vadd.f32 %v7892, %v7904
    %v7906 = vpop.f32.mrf.mxu0
    %7907 = vdwg.mxu0
    %7908 = vmatpush.bf16.msra.mxu0 %v4734
    %7909 = vmatpush.bf16.msra.mxu0 %v4726
    %7910 = vmatpush.bf16.msra.mxu0 %v4718
    %7911 = vmatpush.bf16.msra.mxu0 %v4710
    %7912 = vmatpush.bf16.msra.mxu0 %v4702
    %7913 = vmatpush.bf16.msra.mxu0 %v4694
    %7914 = vmatpush.bf16.msra.mxu0 %v4686
    %7915 = vmatpush.bf16.msra.mxu0 %v4678
    %7916 = vmatmul.bf16.gmra.mxu0 %v7826
    %v7917 = vpop.f32.mrf.mxu0
    %v7918 = vadd.f32 %v7905, %v7917
    %v7919 = vpop.f32.mrf.mxu0
    %7920 = vdwg.mxu0
    %7921 = vmatpush.bf16.msra.mxu0 %v4798
    %7922 = vmatpush.bf16.msra.mxu0 %v4790
    %7923 = vmatpush.bf16.msra.mxu0 %v4782
    %7924 = vmatpush.bf16.msra.mxu0 %v4774
    %7925 = vmatpush.bf16.msra.mxu0 %v4766
    %7926 = vmatpush.bf16.msra.mxu0 %v4758
    %7927 = vmatpush.bf16.msra.mxu0 %v4750
    %7928 = vmatpush.bf16.msra.mxu0 %v4742
    %7929 = vmatmul.bf16.gmra.mxu0 %v7827
    %v7930 = vpop.f32.mrf.mxu0
    %v7931 = vadd.f32 %v7918, %v7930
    %v7932 = vpop.f32.mrf.mxu0
    %7933 = vdwg.mxu0
    %7934 = vmatpush.bf16.msra.mxu0 %v4607
    %7935 = vmatpush.bf16.msra.mxu0 %v4599
    %7936 = vmatpush.bf16.msra.mxu0 %v4591
    %7937 = vmatpush.bf16.msra.mxu0 %v4583
    %7938 = vmatpush.bf16.msra.mxu0 %v4575
    %7939 = vmatpush.bf16.msra.mxu0 %v4567
    %7940 = vmatpush.bf16.msra.mxu0 %v4559
    %7941 = vmatpush.bf16.msra.mxu0 %v4551
    %7942 = vmatmul.bf16.gmra.mxu0 %v7819
    %v7943 = vpop.f32.mrf.mxu0
    %v7944 = vadd.f32 %v536, %v7943
    %v7945 = vpop.f32.mrf.mxu0
    %7946 = vdwg.mxu0
    %7947 = vmatpush.bf16.msra.mxu0 %v4671
    %7948 = vmatpush.bf16.msra.mxu0 %v4663
    %7949 = vmatpush.bf16.msra.mxu0 %v4655
    %7950 = vmatpush.bf16.msra.mxu0 %v4647
    %7951 = vmatpush.bf16.msra.mxu0 %v4639
    %7952 = vmatpush.bf16.msra.mxu0 %v4631
    %7953 = vmatpush.bf16.msra.mxu0 %v4623
    %7954 = vmatpush.bf16.msra.mxu0 %v4615
    %7955 = vmatmul.bf16.gmra.mxu0 %v7820
    %v7956 = vpop.f32.mrf.mxu0
    %v7957 = vadd.f32 %v7944, %v7956
    %v7958 = vpop.f32.mrf.mxu0
    %7959 = vdwg.mxu0
    %7960 = vmatpush.bf16.msra.mxu0 %v4735
    %7961 = vmatpush.bf16.msra.mxu0 %v4727
    %7962 = vmatpush.bf16.msra.mxu0 %v4719
    %7963 = vmatpush.bf16.msra.mxu0 %v4711
    %7964 = vmatpush.bf16.msra.mxu0 %v4703
    %7965 = vmatpush.bf16.msra.mxu0 %v4695
    %7966 = vmatpush.bf16.msra.mxu0 %v4687
    %7967 = vmatpush.bf16.msra.mxu0 %v4679
    %7968 = vmatmul.bf16.gmra.mxu0 %v7826
    %v7969 = vpop.f32.mrf.mxu0
    %v7970 = vadd.f32 %v7957, %v7969
    %v7971 = vpop.f32.mrf.mxu0
    %7972 = vdwg.mxu0
    %7973 = vmatpush.bf16.msra.mxu0 %v4799
    %7974 = vmatpush.bf16.msra.mxu0 %v4791
    %7975 = vmatpush.bf16.msra.mxu0 %v4783
    %7976 = vmatpush.bf16.msra.mxu0 %v4775
    %7977 = vmatpush.bf16.msra.mxu0 %v4767
    %7978 = vmatpush.bf16.msra.mxu0 %v4759
    %7979 = vmatpush.bf16.msra.mxu0 %v4751
    %7980 = vmatpush.bf16.msra.mxu0 %v4743
    %7981 = vmatmul.bf16.gmra.mxu0 %v7827
    %v7982 = vpop.f32.mrf.mxu0
    %v7983 = vadd.f32 %v7970, %v7982
    %v7984 = vpop.f32.mrf.mxu0
    %7985 = vdwg.mxu0
    %7986 = vmatpush.bf16.msra.mxu0 %v4608
    %7987 = vmatpush.bf16.msra.mxu0 %v4600
    %7988 = vmatpush.bf16.msra.mxu0 %v4592
    %7989 = vmatpush.bf16.msra.mxu0 %v4584
    %7990 = vmatpush.bf16.msra.mxu0 %v4576
    %7991 = vmatpush.bf16.msra.mxu0 %v4568
    %7992 = vmatpush.bf16.msra.mxu0 %v4560
    %7993 = vmatpush.bf16.msra.mxu0 %v4552
    %7994 = vmatmul.bf16.gmra.mxu0 %v7819
    %v7995 = vpop.f32.mrf.mxu0
    %v7996 = vadd.f32 %v537, %v7995
    %v7997 = vpop.f32.mrf.mxu0
    %7998 = vdwg.mxu0
    %7999 = vmatpush.bf16.msra.mxu0 %v4672
    %8000 = vmatpush.bf16.msra.mxu0 %v4664
    %8001 = vmatpush.bf16.msra.mxu0 %v4656
    %8002 = vmatpush.bf16.msra.mxu0 %v4648
    %8003 = vmatpush.bf16.msra.mxu0 %v4640
    %8004 = vmatpush.bf16.msra.mxu0 %v4632
    %8005 = vmatpush.bf16.msra.mxu0 %v4624
    %8006 = vmatpush.bf16.msra.mxu0 %v4616
    %8007 = vmatmul.bf16.gmra.mxu0 %v7820
    %v8008 = vpop.f32.mrf.mxu0
    %v8009 = vadd.f32 %v7996, %v8008
    %v8010 = vpop.f32.mrf.mxu0
    %8011 = vdwg.mxu0
    %8012 = vmatpush.bf16.msra.mxu0 %v4736
    %8013 = vmatpush.bf16.msra.mxu0 %v4728
    %8014 = vmatpush.bf16.msra.mxu0 %v4720
    %8015 = vmatpush.bf16.msra.mxu0 %v4712
    %8016 = vmatpush.bf16.msra.mxu0 %v4704
    %8017 = vmatpush.bf16.msra.mxu0 %v4696
    %8018 = vmatpush.bf16.msra.mxu0 %v4688
    %8019 = vmatpush.bf16.msra.mxu0 %v4680
    %8020 = vmatmul.bf16.gmra.mxu0 %v7826
    %v8021 = vpop.f32.mrf.mxu0
    %v8022 = vadd.f32 %v8009, %v8021
    %v8023 = vpop.f32.mrf.mxu0
    %8024 = vdwg.mxu0
    %8025 = vmatpush.bf16.msra.mxu0 %v4800
    %8026 = vmatpush.bf16.msra.mxu0 %v4792
    %8027 = vmatpush.bf16.msra.mxu0 %v4784
    %8028 = vmatpush.bf16.msra.mxu0 %v4776
    %8029 = vmatpush.bf16.msra.mxu0 %v4768
    %8030 = vmatpush.bf16.msra.mxu0 %v4760
    %8031 = vmatpush.bf16.msra.mxu0 %v4752
    %8032 = vmatpush.bf16.msra.mxu0 %v4744
    %8033 = vmatmul.bf16.gmra.mxu0 %v7827
    %v8034 = vpop.f32.mrf.mxu0
    %v8035 = vadd.f32 %v8022, %v8034
    %v8036 = vpop.f32.mrf.mxu0
    %8037 = vdwg.mxu0
    %8038 = vmatpush.bf16.msra.mxu0 %v4609
    %8039 = vmatpush.bf16.msra.mxu0 %v4601
    %8040 = vmatpush.bf16.msra.mxu0 %v4593
    %8041 = vmatpush.bf16.msra.mxu0 %v4585
    %8042 = vmatpush.bf16.msra.mxu0 %v4577
    %8043 = vmatpush.bf16.msra.mxu0 %v4569
    %8044 = vmatpush.bf16.msra.mxu0 %v4561
    %8045 = vmatpush.bf16.msra.mxu0 %v4553
    %8046 = vmatmul.bf16.gmra.mxu0 %v7819
    %v8047 = vpop.f32.mrf.mxu0
    %v8048 = vadd.f32 %v538, %v8047
    %v8049 = vpop.f32.mrf.mxu0
    %8050 = vdwg.mxu0
    %8051 = vmatpush.bf16.msra.mxu0 %v4673
    %8052 = vmatpush.bf16.msra.mxu0 %v4665
    %8053 = vmatpush.bf16.msra.mxu0 %v4657
    %8054 = vmatpush.bf16.msra.mxu0 %v4649
    %8055 = vmatpush.bf16.msra.mxu0 %v4641
    %8056 = vmatpush.bf16.msra.mxu0 %v4633
    %8057 = vmatpush.bf16.msra.mxu0 %v4625
    %8058 = vmatpush.bf16.msra.mxu0 %v4617
    %8059 = vmatmul.bf16.gmra.mxu0 %v7820
    %v8060 = vpop.f32.mrf.mxu0
    %v8061 = vadd.f32 %v8048, %v8060
    %v8062 = vpop.f32.mrf.mxu0
    %8063 = vdwg.mxu0
    %8064 = vmatpush.bf16.msra.mxu0 %v4737
    %8065 = vmatpush.bf16.msra.mxu0 %v4729
    %8066 = vmatpush.bf16.msra.mxu0 %v4721
    %8067 = vmatpush.bf16.msra.mxu0 %v4713
    %8068 = vmatpush.bf16.msra.mxu0 %v4705
    %8069 = vmatpush.bf16.msra.mxu0 %v4697
    %8070 = vmatpush.bf16.msra.mxu0 %v4689
    %8071 = vmatpush.bf16.msra.mxu0 %v4681
    %8072 = vmatmul.bf16.gmra.mxu0 %v7826
    %v8073 = vpop.f32.mrf.mxu0
    %v8074 = vadd.f32 %v8061, %v8073
    %v8075 = vpop.f32.mrf.mxu0
    %8076 = vdwg.mxu0
    %8077 = vmatpush.bf16.msra.mxu0 %v4801
    %8078 = vmatpush.bf16.msra.mxu0 %v4793
    %8079 = vmatpush.bf16.msra.mxu0 %v4785
    %8080 = vmatpush.bf16.msra.mxu0 %v4777
    %8081 = vmatpush.bf16.msra.mxu0 %v4769
    %8082 = vmatpush.bf16.msra.mxu0 %v4761
    %8083 = vmatpush.bf16.msra.mxu0 %v4753
    %8084 = vmatpush.bf16.msra.mxu0 %v4745
    %8085 = vmatmul.bf16.gmra.mxu0 %v7827
    %v8086 = vpop.f32.mrf.mxu0
    %v8087 = vadd.f32 %v8074, %v8086
    %v8088 = vpop.f32.mrf.mxu0
    %8089 = vdwg.mxu0
    %8090 = vmatpush.bf16.msra.mxu0 %v4610
    %8091 = vmatpush.bf16.msra.mxu0 %v4602
    %8092 = vmatpush.bf16.msra.mxu0 %v4594
    %8093 = vmatpush.bf16.msra.mxu0 %v4586
    %8094 = vmatpush.bf16.msra.mxu0 %v4578
    %8095 = vmatpush.bf16.msra.mxu0 %v4570
    %8096 = vmatpush.bf16.msra.mxu0 %v4562
    %8097 = vmatpush.bf16.msra.mxu0 %v4554
    %8098 = vmatmul.bf16.gmra.mxu0 %v7819
    %v8099 = vpop.f32.mrf.mxu0
    %v8100 = vadd.f32 %v539, %v8099
    %v8101 = vpop.f32.mrf.mxu0
    %8102 = vdwg.mxu0
    %8103 = vmatpush.bf16.msra.mxu0 %v4674
    %8104 = vmatpush.bf16.msra.mxu0 %v4666
    %8105 = vmatpush.bf16.msra.mxu0 %v4658
    %8106 = vmatpush.bf16.msra.mxu0 %v4650
    %8107 = vmatpush.bf16.msra.mxu0 %v4642
    %8108 = vmatpush.bf16.msra.mxu0 %v4634
    %8109 = vmatpush.bf16.msra.mxu0 %v4626
    %8110 = vmatpush.bf16.msra.mxu0 %v4618
    %8111 = vmatmul.bf16.gmra.mxu0 %v7820
    %v8112 = vpop.f32.mrf.mxu0
    %v8113 = vadd.f32 %v8100, %v8112
    %v8114 = vpop.f32.mrf.mxu0
    %8115 = vdwg.mxu0
    %8116 = vmatpush.bf16.msra.mxu0 %v4738
    %8117 = vmatpush.bf16.msra.mxu0 %v4730
    %8118 = vmatpush.bf16.msra.mxu0 %v4722
    %8119 = vmatpush.bf16.msra.mxu0 %v4714
    %8120 = vmatpush.bf16.msra.mxu0 %v4706
    %8121 = vmatpush.bf16.msra.mxu0 %v4698
    %8122 = vmatpush.bf16.msra.mxu0 %v4690
    %8123 = vmatpush.bf16.msra.mxu0 %v4682
    %8124 = vmatmul.bf16.gmra.mxu0 %v7826
    %v8125 = vpop.f32.mrf.mxu0
    %v8126 = vadd.f32 %v8113, %v8125
    %v8127 = vpop.f32.mrf.mxu0
    %8128 = vdwg.mxu0
    %8129 = vmatpush.bf16.msra.mxu0 %v4802
    %8130 = vmatpush.bf16.msra.mxu0 %v4794
    %8131 = vmatpush.bf16.msra.mxu0 %v4786
    %8132 = vmatpush.bf16.msra.mxu0 %v4778
    %8133 = vmatpush.bf16.msra.mxu0 %v4770
    %8134 = vmatpush.bf16.msra.mxu0 %v4762
    %8135 = vmatpush.bf16.msra.mxu0 %v4754
    %8136 = vmatpush.bf16.msra.mxu0 %v4746
    %8137 = vmatmul.bf16.gmra.mxu0 %v7827
    %v8138 = vpop.f32.mrf.mxu0
    %v8139 = vadd.f32 %v8126, %v8138
    %v8140 = vpop.f32.mrf.mxu0
    %8141 = vdwg.mxu0
    %8142 = vmatpush.bf16.msra.mxu0 %v4611
    %8143 = vmatpush.bf16.msra.mxu0 %v4603
    %8144 = vmatpush.bf16.msra.mxu0 %v4595
    %8145 = vmatpush.bf16.msra.mxu0 %v4587
    %8146 = vmatpush.bf16.msra.mxu0 %v4579
    %8147 = vmatpush.bf16.msra.mxu0 %v4571
    %8148 = vmatpush.bf16.msra.mxu0 %v4563
    %8149 = vmatpush.bf16.msra.mxu0 %v4555
    %8150 = vmatmul.bf16.gmra.mxu0 %v7819
    %v8151 = vpop.f32.mrf.mxu0
    %v8152 = vadd.f32 %v540, %v8151
    %v8153 = vpop.f32.mrf.mxu0
    %8154 = vdwg.mxu0
    %8155 = vmatpush.bf16.msra.mxu0 %v4675
    %8156 = vmatpush.bf16.msra.mxu0 %v4667
    %8157 = vmatpush.bf16.msra.mxu0 %v4659
    %8158 = vmatpush.bf16.msra.mxu0 %v4651
    %8159 = vmatpush.bf16.msra.mxu0 %v4643
    %8160 = vmatpush.bf16.msra.mxu0 %v4635
    %8161 = vmatpush.bf16.msra.mxu0 %v4627
    %8162 = vmatpush.bf16.msra.mxu0 %v4619
    %8163 = vmatmul.bf16.gmra.mxu0 %v7820
    %v8164 = vpop.f32.mrf.mxu0
    %v8165 = vadd.f32 %v8152, %v8164
    %v8166 = vpop.f32.mrf.mxu0
    %8167 = vdwg.mxu0
    %8168 = vmatpush.bf16.msra.mxu0 %v4739
    %8169 = vmatpush.bf16.msra.mxu0 %v4731
    %8170 = vmatpush.bf16.msra.mxu0 %v4723
    %8171 = vmatpush.bf16.msra.mxu0 %v4715
    %8172 = vmatpush.bf16.msra.mxu0 %v4707
    %8173 = vmatpush.bf16.msra.mxu0 %v4699
    %8174 = vmatpush.bf16.msra.mxu0 %v4691
    %8175 = vmatpush.bf16.msra.mxu0 %v4683
    %8176 = vmatmul.bf16.gmra.mxu0 %v7826
    %v8177 = vpop.f32.mrf.mxu0
    %v8178 = vadd.f32 %v8165, %v8177
    %v8179 = vpop.f32.mrf.mxu0
    %8180 = vdwg.mxu0
    %8181 = vmatpush.bf16.msra.mxu0 %v4803
    %8182 = vmatpush.bf16.msra.mxu0 %v4795
    %8183 = vmatpush.bf16.msra.mxu0 %v4787
    %8184 = vmatpush.bf16.msra.mxu0 %v4779
    %8185 = vmatpush.bf16.msra.mxu0 %v4771
    %8186 = vmatpush.bf16.msra.mxu0 %v4763
    %8187 = vmatpush.bf16.msra.mxu0 %v4755
    %8188 = vmatpush.bf16.msra.mxu0 %v4747
    %8189 = vmatmul.bf16.gmra.mxu0 %v7827
    %v8190 = vpop.f32.mrf.mxu0
    %v8191 = vadd.f32 %v8178, %v8190
    %v8192 = vpop.f32.mrf.mxu0
    %8193 = vdwg.mxu0
    %8194 = vmatpush.bf16.msra.mxu0 %v4612
    %8195 = vmatpush.bf16.msra.mxu0 %v4604
    %8196 = vmatpush.bf16.msra.mxu0 %v4596
    %8197 = vmatpush.bf16.msra.mxu0 %v4588
    %8198 = vmatpush.bf16.msra.mxu0 %v4580
    %8199 = vmatpush.bf16.msra.mxu0 %v4572
    %8200 = vmatpush.bf16.msra.mxu0 %v4564
    %8201 = vmatpush.bf16.msra.mxu0 %v4556
    %8202 = vmatmul.bf16.gmra.mxu0 %v7819
    %v8203 = vpop.f32.mrf.mxu0
    %v8204 = vadd.f32 %v541, %v8203
    %v8205 = vpop.f32.mrf.mxu0
    %8206 = vdwg.mxu0
    %8207 = vmatpush.bf16.msra.mxu0 %v4676
    %8208 = vmatpush.bf16.msra.mxu0 %v4668
    %8209 = vmatpush.bf16.msra.mxu0 %v4660
    %8210 = vmatpush.bf16.msra.mxu0 %v4652
    %8211 = vmatpush.bf16.msra.mxu0 %v4644
    %8212 = vmatpush.bf16.msra.mxu0 %v4636
    %8213 = vmatpush.bf16.msra.mxu0 %v4628
    %8214 = vmatpush.bf16.msra.mxu0 %v4620
    %8215 = vmatmul.bf16.gmra.mxu0 %v7820
    %v8216 = vpop.f32.mrf.mxu0
    %v8217 = vadd.f32 %v8204, %v8216
    %v8218 = vpop.f32.mrf.mxu0
    %8219 = vdwg.mxu0
    %8220 = vmatpush.bf16.msra.mxu0 %v4740
    %8221 = vmatpush.bf16.msra.mxu0 %v4732
    %8222 = vmatpush.bf16.msra.mxu0 %v4724
    %8223 = vmatpush.bf16.msra.mxu0 %v4716
    %8224 = vmatpush.bf16.msra.mxu0 %v4708
    %8225 = vmatpush.bf16.msra.mxu0 %v4700
    %8226 = vmatpush.bf16.msra.mxu0 %v4692
    %8227 = vmatpush.bf16.msra.mxu0 %v4684
    %8228 = vmatmul.bf16.gmra.mxu0 %v7826
    %v8229 = vpop.f32.mrf.mxu0
    %v8230 = vadd.f32 %v8217, %v8229
    %v8231 = vpop.f32.mrf.mxu0
    %8232 = vdwg.mxu0
    %8233 = vmatpush.bf16.msra.mxu0 %v4804
    %8234 = vmatpush.bf16.msra.mxu0 %v4796
    %8235 = vmatpush.bf16.msra.mxu0 %v4788
    %8236 = vmatpush.bf16.msra.mxu0 %v4780
    %8237 = vmatpush.bf16.msra.mxu0 %v4772
    %8238 = vmatpush.bf16.msra.mxu0 %v4764
    %8239 = vmatpush.bf16.msra.mxu0 %v4756
    %8240 = vmatpush.bf16.msra.mxu0 %v4748
    %8241 = vmatmul.bf16.gmra.mxu0 %v7827
    %v8242 = vpop.f32.mrf.mxu0
    %v8243 = vadd.f32 %v8230, %v8242
    %v8244 = vpop.f32.mrf.mxu0
    %8245 = vdwg.mxu0
    %s8246 = scalar_lea.vmem %s0, 10
    %v8247 = vld [vmem:[%s8246] sm:$0x3]
    %8249 = vset.pattern.permute.xlu0 0
    %8250 = vperm.xlu0 %8249, %v8247
    %v8251 = vpop.permute.xlu0 %8250
    %v8253 = vmul.f32 %v8251, %v90
    %v8254 = vmul.f32 %v8251, %v91
    %v8255 = vmul.f32 %v8251, %v92
    %v8256 = vmul.f32 %v8251, %v93
    %v8257 = vmul.f32 %v8251, %v94
    %v8258 = vmul.f32 %v8251, %v95
    %v8259 = vmul.f32 %v8251, %v96
    %v8260 = vmul.f32 %v8251, %v97
    %v8261 = vadd.f32 %v8253, %v115
    %v8262 = vadd.f32 %v8254, %v116
    %v8263 = vadd.f32 %v8255, %v117
    %v8264 = vadd.f32 %v8256, %v118
    %v8265 = vadd.f32 %v8257, %v119
    %v8266 = vadd.f32 %v8258, %v120
    %v8267 = vadd.f32 %v8259, %v121
    %v8268 = vadd.f32 %v8260, %v122
    %8269 = vmatpush.bf16.msra.mxu0 %v2841
    %8270 = vmatpush.bf16.msra.mxu0 %v2833
    %8271 = vmatpush.bf16.msra.mxu0 %v2825
    %8272 = vmatpush.bf16.msra.mxu0 %v2817
    %8273 = vmatpush.bf16.msra.mxu0 %v2809
    %8274 = vmatpush.bf16.msra.mxu0 %v2801
    %8275 = vmatpush.bf16.msra.mxu0 %v2793
    %8276 = vmatpush.bf16.msra.mxu0 %v2785
    %8277 = vmatmul.bf16.gmra.mxu0 %v7819
    %v8278 = vpop.f32.mrf.mxu0
    %v8279 = vadd.f32 0.0, %v8278
    %v8280 = vpop.f32.mrf.mxu0
    %8281 = vdwg.mxu0
    %8282 = vmatpush.bf16.msra.mxu0 %v2905
    %8283 = vmatpush.bf16.msra.mxu0 %v2897
    %8284 = vmatpush.bf16.msra.mxu0 %v2889
    %8285 = vmatpush.bf16.msra.mxu0 %v2881
    %8286 = vmatpush.bf16.msra.mxu0 %v2873
    %8287 = vmatpush.bf16.msra.mxu0 %v2865
    %8288 = vmatpush.bf16.msra.mxu0 %v2857
    %8289 = vmatpush.bf16.msra.mxu0 %v2849
    %8290 = vmatmul.bf16.gmra.mxu0 %v7820
    %v8291 = vpop.f32.mrf.mxu0
    %v8292 = vadd.f32 %v8279, %v8291
    %v8293 = vpop.f32.mrf.mxu0
    %8294 = vdwg.mxu0
    %8295 = vmatpush.bf16.msra.mxu0 %v2842
    %8296 = vmatpush.bf16.msra.mxu0 %v2834
    %8297 = vmatpush.bf16.msra.mxu0 %v2826
    %8298 = vmatpush.bf16.msra.mxu0 %v2818
    %8299 = vmatpush.bf16.msra.mxu0 %v2810
    %8300 = vmatpush.bf16.msra.mxu0 %v2802
    %8301 = vmatpush.bf16.msra.mxu0 %v2794
    %8302 = vmatpush.bf16.msra.mxu0 %v2786
    %8303 = vmatmul.bf16.gmra.mxu0 %v7819
    %v8304 = vpop.f32.mrf.mxu0
    %v8305 = vadd.f32 0.0, %v8304
    %v8306 = vpop.f32.mrf.mxu0
    %8307 = vdwg.mxu0
    %8308 = vmatpush.bf16.msra.mxu0 %v2906
    %8309 = vmatpush.bf16.msra.mxu0 %v2898
    %8310 = vmatpush.bf16.msra.mxu0 %v2890
    %8311 = vmatpush.bf16.msra.mxu0 %v2882
    %8312 = vmatpush.bf16.msra.mxu0 %v2874
    %8313 = vmatpush.bf16.msra.mxu0 %v2866
    %8314 = vmatpush.bf16.msra.mxu0 %v2858
    %8315 = vmatpush.bf16.msra.mxu0 %v2850
    %8316 = vmatmul.bf16.gmra.mxu0 %v7820
    %v8317 = vpop.f32.mrf.mxu0
    %v8318 = vadd.f32 %v8305, %v8317
    %v8319 = vpop.f32.mrf.mxu0
    %8320 = vdwg.mxu0
    %8321 = vmatpush.bf16.msra.mxu0 %v2843
    %8322 = vmatpush.bf16.msra.mxu0 %v2835
    %8323 = vmatpush.bf16.msra.mxu0 %v2827
    %8324 = vmatpush.bf16.msra.mxu0 %v2819
    %8325 = vmatpush.bf16.msra.mxu0 %v2811
    %8326 = vmatpush.bf16.msra.mxu0 %v2803
    %8327 = vmatpush.bf16.msra.mxu0 %v2795
    %8328 = vmatpush.bf16.msra.mxu0 %v2787
    %8329 = vmatmul.bf16.gmra.mxu0 %v7819
    %v8330 = vpop.f32.mrf.mxu0
    %v8331 = vadd.f32 0.0, %v8330
    %v8332 = vpop.f32.mrf.mxu0
    %8333 = vdwg.mxu0
    %8334 = vmatpush.bf16.msra.mxu0 %v2907
    %8335 = vmatpush.bf16.msra.mxu0 %v2899
    %8336 = vmatpush.bf16.msra.mxu0 %v2891
    %8337 = vmatpush.bf16.msra.mxu0 %v2883
    %8338 = vmatpush.bf16.msra.mxu0 %v2875
    %8339 = vmatpush.bf16.msra.mxu0 %v2867
    %8340 = vmatpush.bf16.msra.mxu0 %v2859
    %8341 = vmatpush.bf16.msra.mxu0 %v2851
    %8342 = vmatmul.bf16.gmra.mxu0 %v7820
    %v8343 = vpop.f32.mrf.mxu0
    %v8344 = vadd.f32 %v8331, %v8343
    %v8345 = vpop.f32.mrf.mxu0
    %8346 = vdwg.mxu0
    %8347 = vmatpush.bf16.msra.mxu0 %v2844
    %8348 = vmatpush.bf16.msra.mxu0 %v2836
    %8349 = vmatpush.bf16.msra.mxu0 %v2828
    %8350 = vmatpush.bf16.msra.mxu0 %v2820
    %8351 = vmatpush.bf16.msra.mxu0 %v2812
    %8352 = vmatpush.bf16.msra.mxu0 %v2804
    %8353 = vmatpush.bf16.msra.mxu0 %v2796
    %8354 = vmatpush.bf16.msra.mxu0 %v2788
    %8355 = vmatmul.bf16.gmra.mxu0 %v7819
    %v8356 = vpop.f32.mrf.mxu0
    %v8357 = vadd.f32 0.0, %v8356
    %v8358 = vpop.f32.mrf.mxu0
    %8359 = vdwg.mxu0
    %8360 = vmatpush.bf16.msra.mxu0 %v2908
    %8361 = vmatpush.bf16.msra.mxu0 %v2900
    %8362 = vmatpush.bf16.msra.mxu0 %v2892
    %8363 = vmatpush.bf16.msra.mxu0 %v2884
    %8364 = vmatpush.bf16.msra.mxu0 %v2876
    %8365 = vmatpush.bf16.msra.mxu0 %v2868
    %8366 = vmatpush.bf16.msra.mxu0 %v2860
    %8367 = vmatpush.bf16.msra.mxu0 %v2852
    %8368 = vmatmul.bf16.gmra.mxu0 %v7820
    %v8369 = vpop.f32.mrf.mxu0
    %v8370 = vadd.f32 %v8357, %v8369
    %v8371 = vpop.f32.mrf.mxu0
    %8372 = vdwg.mxu0
    %8373 = vmatpush.bf16.msra.mxu0 %v2845
    %8374 = vmatpush.bf16.msra.mxu0 %v2837
    %8375 = vmatpush.bf16.msra.mxu0 %v2829
    %8376 = vmatpush.bf16.msra.mxu0 %v2821
    %8377 = vmatpush.bf16.msra.mxu0 %v2813
    %8378 = vmatpush.bf16.msra.mxu0 %v2805
    %8379 = vmatpush.bf16.msra.mxu0 %v2797
    %8380 = vmatpush.bf16.msra.mxu0 %v2789
    %8381 = vmatmul.bf16.gmra.mxu0 %v7819
    %v8382 = vpop.f32.mrf.mxu0
    %v8383 = vadd.f32 0.0, %v8382
    %v8384 = vpop.f32.mrf.mxu0
    %8385 = vdwg.mxu0
    %8386 = vmatpush.bf16.msra.mxu0 %v2909
    %8387 = vmatpush.bf16.msra.mxu0 %v2901
    %8388 = vmatpush.bf16.msra.mxu0 %v2893
    %8389 = vmatpush.bf16.msra.mxu0 %v2885
    %8390 = vmatpush.bf16.msra.mxu0 %v2877
    %8391 = vmatpush.bf16.msra.mxu0 %v2869
    %8392 = vmatpush.bf16.msra.mxu0 %v2861
    %8393 = vmatpush.bf16.msra.mxu0 %v2853
    %8394 = vmatmul.bf16.gmra.mxu0 %v7820
    %v8395 = vpop.f32.mrf.mxu0
    %v8396 = vadd.f32 %v8383, %v8395
    %v8397 = vpop.f32.mrf.mxu0
    %8398 = vdwg.mxu0
    %8399 = vmatpush.bf16.msra.mxu0 %v2846
    %8400 = vmatpush.bf16.msra.mxu0 %v2838
    %8401 = vmatpush.bf16.msra.mxu0 %v2830
    %8402 = vmatpush.bf16.msra.mxu0 %v2822
    %8403 = vmatpush.bf16.msra.mxu0 %v2814
    %8404 = vmatpush.bf16.msra.mxu0 %v2806
    %8405 = vmatpush.bf16.msra.mxu0 %v2798
    %8406 = vmatpush.bf16.msra.mxu0 %v2790
    %8407 = vmatmul.bf16.gmra.mxu0 %v7819
    %v8408 = vpop.f32.mrf.mxu0
    %v8409 = vadd.f32 0.0, %v8408
    %v8410 = vpop.f32.mrf.mxu0
    %8411 = vdwg.mxu0
    %8412 = vmatpush.bf16.msra.mxu0 %v2910
    %8413 = vmatpush.bf16.msra.mxu0 %v2902
    %8414 = vmatpush.bf16.msra.mxu0 %v2894
    %8415 = vmatpush.bf16.msra.mxu0 %v2886
    %8416 = vmatpush.bf16.msra.mxu0 %v2878
    %8417 = vmatpush.bf16.msra.mxu0 %v2870
    %8418 = vmatpush.bf16.msra.mxu0 %v2862
    %8419 = vmatpush.bf16.msra.mxu0 %v2854
    %8420 = vmatmul.bf16.gmra.mxu0 %v7820
    %v8421 = vpop.f32.mrf.mxu0
    %v8422 = vadd.f32 %v8409, %v8421
    %v8423 = vpop.f32.mrf.mxu0
    %8424 = vdwg.mxu0
    %8425 = vmatpush.bf16.msra.mxu0 %v2847
    %8426 = vmatpush.bf16.msra.mxu0 %v2839
    %8427 = vmatpush.bf16.msra.mxu0 %v2831
    %8428 = vmatpush.bf16.msra.mxu0 %v2823
    %8429 = vmatpush.bf16.msra.mxu0 %v2815
    %8430 = vmatpush.bf16.msra.mxu0 %v2807
    %8431 = vmatpush.bf16.msra.mxu0 %v2799
    %8432 = vmatpush.bf16.msra.mxu0 %v2791
    %8433 = vmatmul.bf16.gmra.mxu0 %v7819
    %v8434 = vpop.f32.mrf.mxu0
    %v8435 = vadd.f32 0.0, %v8434
    %v8436 = vpop.f32.mrf.mxu0
    %8437 = vdwg.mxu0
    %8438 = vmatpush.bf16.msra.mxu0 %v2911
    %8439 = vmatpush.bf16.msra.mxu0 %v2903
    %8440 = vmatpush.bf16.msra.mxu0 %v2895
    %8441 = vmatpush.bf16.msra.mxu0 %v2887
    %8442 = vmatpush.bf16.msra.mxu0 %v2879
    %8443 = vmatpush.bf16.msra.mxu0 %v2871
    %8444 = vmatpush.bf16.msra.mxu0 %v2863
    %8445 = vmatpush.bf16.msra.mxu0 %v2855
    %8446 = vmatmul.bf16.gmra.mxu0 %v7820
    %v8447 = vpop.f32.mrf.mxu0
    %v8448 = vadd.f32 %v8435, %v8447
    %v8449 = vpop.f32.mrf.mxu0
    %8450 = vdwg.mxu0
    %8451 = vmatpush.bf16.msra.mxu0 %v2848
    %8452 = vmatpush.bf16.msra.mxu0 %v2840
    %8453 = vmatpush.bf16.msra.mxu0 %v2832
    %8454 = vmatpush.bf16.msra.mxu0 %v2824
    %8455 = vmatpush.bf16.msra.mxu0 %v2816
    %8456 = vmatpush.bf16.msra.mxu0 %v2808
    %8457 = vmatpush.bf16.msra.mxu0 %v2800
    %8458 = vmatpush.bf16.msra.mxu0 %v2792
    %8459 = vmatmul.bf16.gmra.mxu0 %v7819
    %v8460 = vpop.f32.mrf.mxu0
    %v8461 = vadd.f32 0.0, %v8460
    %v8462 = vpop.f32.mrf.mxu0
    %8463 = vdwg.mxu0
    %8464 = vmatpush.bf16.msra.mxu0 %v2912
    %8465 = vmatpush.bf16.msra.mxu0 %v2904
    %8466 = vmatpush.bf16.msra.mxu0 %v2896
    %8467 = vmatpush.bf16.msra.mxu0 %v2888
    %8468 = vmatpush.bf16.msra.mxu0 %v2880
    %8469 = vmatpush.bf16.msra.mxu0 %v2872
    %8470 = vmatpush.bf16.msra.mxu0 %v2864
    %8471 = vmatpush.bf16.msra.mxu0 %v2856
    %8472 = vmatmul.bf16.gmra.mxu0 %v7820
    %v8473 = vpop.f32.mrf.mxu0
    %v8474 = vadd.f32 %v8461, %v8473
    %v8475 = vpop.f32.mrf.mxu0
    %8476 = vdwg.mxu0
    %v8477 = vadd.f32 %v8261, %v8292
    %v8478 = vadd.f32 %v8262, %v8318
    %v8479 = vadd.f32 %v8263, %v8344
    %v8480 = vadd.f32 %v8264, %v8370
    %v8481 = vadd.f32 %v8265, %v8396
    %v8482 = vadd.f32 %v8266, %v8422
    %v8483 = vadd.f32 %v8267, %v8448
    %v8484 = vadd.f32 %v8268, %v8474
    %v8485 = vxor.u32 %v7879, 2147483648
    %v8486 = vxor.u32 %v7931, 2147483648
    %v8487 = vxor.u32 %v7983, 2147483648
    %v8488 = vxor.u32 %v8035, 2147483648
    %v8489 = vxor.u32 %v8087, 2147483648
    %v8490 = vxor.u32 %v8139, 2147483648
    %v8491 = vmul.f32 %v8485, 1.442695
    %v8492 = vpow.pop %v8491
    %v8493 = vmul.f32 %v8486, 1.442695
    %v8494 = vpow.pop %v8493
    %v8495 = vmul.f32 %v8487, 1.442695
    %v8496 = vpow.pop %v8495
    %v8497 = vmul.f32 %v8488, 1.442695
    %v8498 = vpow.pop %v8497
    %v8499 = vmul.f32 %v8489, 1.442695
    %v8500 = vpow.pop %v8499
    %v8501 = vmul.f32 %v8490, 1.442695
    %v8502 = vpow.pop %v8501
    %v8503 = vadd.f32 %v8492, 1.0
    %v8504 = vadd.f32 %v8494, 1.0
    %v8505 = vadd.f32 %v8496, 1.0
    %v8506 = vadd.f32 %v8498, 1.0
    %v8507 = vadd.f32 %v8500, 1.0
    %v8508 = vadd.f32 %v8502, 1.0
    %v8509 = vrcp.pop %v8503
    %v8510 = vmul.f32 %v8503, %v8509
    %v8511 = vsub.f32 1.0, %v8510
    %v8512 = vmul.f32 %v8509, %v8511
    %v8513 = vadd.f32 %v8509, %v8512
    %vm8514 = vweird.f32 %v8503
    %vm8515 = vweird.f32 %v8509
    %vm8516 = vmor %vm8514, %vm8515
    %v8517 = vsel %vm8516, %v8509, %v8513
    %v8518 = vand.u32 2147483647, %v8503
    %vm8519 = vcmp.eq.f32.partialorder %v8518, 8.507059e+37
    %v8520 = vand.u32 %v8503, 2147483648
    %v8521 = vor.u32 1.1754944e-38, %v8520
    %v8522 = vsel %vm8519, %v8521, %v8517
    %v8523 = vmul.f32 1.0, %v8522
    %v8524 = vrcp.pop %v8504
    %v8525 = vmul.f32 %v8504, %v8524
    %v8526 = vsub.f32 1.0, %v8525
    %v8527 = vmul.f32 %v8524, %v8526
    %v8528 = vadd.f32 %v8524, %v8527
    %vm8529 = vweird.f32 %v8504
    %vm8530 = vweird.f32 %v8524
    %vm8531 = vmor %vm8529, %vm8530
    %v8532 = vsel %vm8531, %v8524, %v8528
    %v8533 = vand.u32 2147483647, %v8504
    %vm8534 = vcmp.eq.f32.partialorder %v8533, 8.507059e+37
    %v8535 = vand.u32 %v8504, 2147483648
    %v8536 = vor.u32 1.1754944e-38, %v8535
    %v8537 = vsel %vm8534, %v8536, %v8532
    %v8538 = vmul.f32 1.0, %v8537
    %v8539 = vrcp.pop %v8505
    %v8540 = vmul.f32 %v8505, %v8539
    %v8541 = vsub.f32 1.0, %v8540
    %v8542 = vmul.f32 %v8539, %v8541
    %v8543 = vadd.f32 %v8539, %v8542
    %vm8544 = vweird.f32 %v8505
    %vm8545 = vweird.f32 %v8539
    %vm8546 = vmor %vm8544, %vm8545
    %v8547 = vsel %vm8546, %v8539, %v8543
    %v8548 = vand.u32 2147483647, %v8505
    %vm8549 = vcmp.eq.f32.partialorder %v8548, 8.507059e+37
    %v8550 = vand.u32 %v8505, 2147483648
    %v8551 = vor.u32 1.1754944e-38, %v8550
    %v8552 = vsel %vm8549, %v8551, %v8547
    %v8553 = vmul.f32 1.0, %v8552
    %v8554 = vrcp.pop %v8506
    %v8555 = vmul.f32 %v8506, %v8554
    %v8556 = vsub.f32 1.0, %v8555
    %v8557 = vmul.f32 %v8554, %v8556
    %v8558 = vadd.f32 %v8554, %v8557
    %vm8559 = vweird.f32 %v8506
    %vm8560 = vweird.f32 %v8554
    %vm8561 = vmor %vm8559, %vm8560
    %v8562 = vsel %vm8561, %v8554, %v8558
    %v8563 = vand.u32 2147483647, %v8506
    %vm8564 = vcmp.eq.f32.partialorder %v8563, 8.507059e+37
    %v8565 = vand.u32 %v8506, 2147483648
    %v8566 = vor.u32 1.1754944e-38, %v8565
    %v8567 = vsel %vm8564, %v8566, %v8562
    %v8568 = vmul.f32 1.0, %v8567
    %v8569 = vrcp.pop %v8507
    %v8570 = vmul.f32 %v8507, %v8569
    %v8571 = vsub.f32 1.0, %v8570
    %v8572 = vmul.f32 %v8569, %v8571
    %v8573 = vadd.f32 %v8569, %v8572
    %vm8574 = vweird.f32 %v8507
    %vm8575 = vweird.f32 %v8569
    %vm8576 = vmor %vm8574, %vm8575
    %v8577 = vsel %vm8576, %v8569, %v8573
    %v8578 = vand.u32 2147483647, %v8507
    %vm8579 = vcmp.eq.f32.partialorder %v8578, 8.507059e+37
    %v8580 = vand.u32 %v8507, 2147483648
    %v8581 = vor.u32 1.1754944e-38, %v8580
    %v8582 = vsel %vm8579, %v8581, %v8577
    %v8583 = vmul.f32 1.0, %v8582
    %v8584 = vrcp.pop %v8508
    %v8585 = vmul.f32 %v8508, %v8584
    %v8586 = vsub.f32 1.0, %v8585
    %v8587 = vmul.f32 %v8584, %v8586
    %v8588 = vadd.f32 %v8584, %v8587
    %vm8589 = vweird.f32 %v8508
    %vm8590 = vweird.f32 %v8584
    %vm8591 = vmor %vm8589, %vm8590
    %v8592 = vsel %vm8591, %v8584, %v8588
    %v8593 = vand.u32 2147483647, %v8508
    %vm8594 = vcmp.eq.f32.partialorder %v8593, 8.507059e+37
    %v8595 = vand.u32 %v8508, 2147483648
    %v8596 = vor.u32 1.1754944e-38, %v8595
    %v8597 = vsel %vm8594, %v8596, %v8592
    %v8598 = vmul.f32 1.0, %v8597
    %v8599 = vtanh.pop %v8191
    %v8600 = vtanh.pop %v8243
    %v8601 = vmul.f32 %v8553, %v7682
    %v8602 = vmul.f32 %v8568, %v7683
    %v8603 = vmul.f32 %v8523, %v8599
    %v8604 = vmul.f32 %v8538, %v8600
    %v8605 = vadd.f32 %v8601, %v8603
    %v8606 = vadd.f32 %v8602, %v8604
    %v8607 = vtanh.pop %v8605
    %v8608 = vtanh.pop %v8606
    %v8609 = vmul.f32 %v8583, %v8607
    %v8610 = vmul.f32 %v8598, %v8608
    %v8611 = vpack.c.bf16 %v8610, %v8609
    %v8612 = vxor.u32 %v8477, 2147483648
    %v8613 = vxor.u32 %v8478, 2147483648
    %v8614 = vxor.u32 %v8479, 2147483648
    %v8615 = vxor.u32 %v8480, 2147483648
    %v8616 = vxor.u32 %v8481, 2147483648
    %v8617 = vxor.u32 %v8482, 2147483648
    %v8618 = vmul.f32 %v8612, 1.442695
    %v8619 = vpow.pop %v8618
    %v8620 = vmul.f32 %v8613, 1.442695
    %v8621 = vpow.pop %v8620
    %v8622 = vmul.f32 %v8614, 1.442695
    %v8623 = vpow.pop %v8622
    %v8624 = vmul.f32 %v8615, 1.442695
    %v8625 = vpow.pop %v8624
    %v8626 = vmul.f32 %v8616, 1.442695
    %v8627 = vpow.pop %v8626
    %v8628 = vmul.f32 %v8617, 1.442695
    %v8629 = vpow.pop %v8628
    %v8630 = vadd.f32 %v8619, 1.0
    %v8631 = vadd.f32 %v8621, 1.0
    %v8632 = vadd.f32 %v8623, 1.0
    %v8633 = vadd.f32 %v8625, 1.0
    %v8634 = vadd.f32 %v8627, 1.0
    %v8635 = vadd.f32 %v8629, 1.0
    %v8636 = vrcp.pop %v8630
    %v8637 = vmul.f32 %v8630, %v8636
    %v8638 = vsub.f32 1.0, %v8637
    %v8639 = vmul.f32 %v8636, %v8638
    %v8640 = vadd.f32 %v8636, %v8639
    %vm8641 = vweird.f32 %v8630
    %vm8642 = vweird.f32 %v8636
    %vm8643 = vmor %vm8641, %vm8642
    %v8644 = vsel %vm8643, %v8636, %v8640
    %v8645 = vand.u32 2147483647, %v8630
    %vm8646 = vcmp.eq.f32.partialorder %v8645, 8.507059e+37
    %v8647 = vand.u32 %v8630, 2147483648
    %v8648 = vor.u32 1.1754944e-38, %v8647
    %v8649 = vsel %vm8646, %v8648, %v8644
    %v8650 = vmul.f32 1.0, %v8649
    %v8651 = vrcp.pop %v8631
    %v8652 = vmul.f32 %v8631, %v8651
    %v8653 = vsub.f32 1.0, %v8652
    %v8654 = vmul.f32 %v8651, %v8653
    %v8655 = vadd.f32 %v8651, %v8654
    %vm8656 = vweird.f32 %v8631
    %vm8657 = vweird.f32 %v8651
    %vm8658 = vmor %vm8656, %vm8657
    %v8659 = vsel %vm8658, %v8651, %v8655
    %v8660 = vand.u32 2147483647, %v8631
    %vm8661 = vcmp.eq.f32.partialorder %v8660, 8.507059e+37
    %v8662 = vand.u32 %v8631, 2147483648
    %v8663 = vor.u32 1.1754944e-38, %v8662
    %v8664 = vsel %vm8661, %v8663, %v8659
    %v8665 = vmul.f32 1.0, %v8664
    %v8666 = vrcp.pop %v8632
    %v8667 = vmul.f32 %v8632, %v8666
    %v8668 = vsub.f32 1.0, %v8667
    %v8669 = vmul.f32 %v8666, %v8668
    %v8670 = vadd.f32 %v8666, %v8669
    %vm8671 = vweird.f32 %v8632
    %vm8672 = vweird.f32 %v8666
    %vm8673 = vmor %vm8671, %vm8672
    %v8674 = vsel %vm8673, %v8666, %v8670
    %v8675 = vand.u32 2147483647, %v8632
    %vm8676 = vcmp.eq.f32.partialorder %v8675, 8.507059e+37
    %v8677 = vand.u32 %v8632, 2147483648
    %v8678 = vor.u32 1.1754944e-38, %v8677
    %v8679 = vsel %vm8676, %v8678, %v8674
    %v8680 = vmul.f32 1.0, %v8679
    %v8681 = vrcp.pop %v8633
    %v8682 = vmul.f32 %v8633, %v8681
    %v8683 = vsub.f32 1.0, %v8682
    %v8684 = vmul.f32 %v8681, %v8683
    %v8685 = vadd.f32 %v8681, %v8684
    %vm8686 = vweird.f32 %v8633
    %vm8687 = vweird.f32 %v8681
    %vm8688 = vmor %vm8686, %vm8687
    %v8689 = vsel %vm8688, %v8681, %v8685
    %v8690 = vand.u32 2147483647, %v8633
    %vm8691 = vcmp.eq.f32.partialorder %v8690, 8.507059e+37
    %v8692 = vand.u32 %v8633, 2147483648
    %v8693 = vor.u32 1.1754944e-38, %v8692
    %v8694 = vsel %vm8691, %v8693, %v8689
    %v8695 = vmul.f32 1.0, %v8694
    %v8696 = vrcp.pop %v8634
    %v8697 = vmul.f32 %v8634, %v8696
    %v8698 = vsub.f32 1.0, %v8697
    %v8699 = vmul.f32 %v8696, %v8698
    %v8700 = vadd.f32 %v8696, %v8699
    %vm8701 = vweird.f32 %v8634
    %vm8702 = vweird.f32 %v8696
    %vm8703 = vmor %vm8701, %vm8702
    %v8704 = vsel %vm8703, %v8696, %v8700
    %v8705 = vand.u32 2147483647, %v8634
    %vm8706 = vcmp.eq.f32.partialorder %v8705, 8.507059e+37
    %v8707 = vand.u32 %v8634, 2147483648
    %v8708 = vor.u32 1.1754944e-38, %v8707
    %v8709 = vsel %vm8706, %v8708, %v8704
    %v8710 = vmul.f32 1.0, %v8709
    %v8711 = vrcp.pop %v8635
    %v8712 = vmul.f32 %v8635, %v8711
    %v8713 = vsub.f32 1.0, %v8712
    %v8714 = vmul.f32 %v8711, %v8713
    %v8715 = vadd.f32 %v8711, %v8714
    %vm8716 = vweird.f32 %v8635
    %vm8717 = vweird.f32 %v8711
    %vm8718 = vmor %vm8716, %vm8717
    %v8719 = vsel %vm8718, %v8711, %v8715
    %v8720 = vand.u32 2147483647, %v8635
    %vm8721 = vcmp.eq.f32.partialorder %v8720, 8.507059e+37
    %v8722 = vand.u32 %v8635, 2147483648
    %v8723 = vor.u32 1.1754944e-38, %v8722
    %v8724 = vsel %vm8721, %v8723, %v8719
    %v8725 = vmul.f32 1.0, %v8724
    %v8726 = vtanh.pop %v8483
    %v8727 = vtanh.pop %v8484
    %v8728 = vmul.f32 %v8680, %v7809
    %v8729 = vmul.f32 %v8695, %v7810
    %v8730 = vmul.f32 %v8650, %v8726
    %v8731 = vmul.f32 %v8665, %v8727
    %v8732 = vadd.f32 %v8728, %v8730
    %v8733 = vadd.f32 %v8729, %v8731
    %v8734 = vtanh.pop %v8732
    %v8735 = vtanh.pop %v8733
    %v8736 = vmul.f32 %v8710, %v8734
    %v8737 = vmul.f32 %v8725, %v8735
    %v8738 = vpack.c.bf16 %v8737, %v8736
    %v8740 = vunpack.c.l.b16 %v8738
    %v8741 = vunpack.c.h.b16 %v8738
    %v8742 = vpack.c.b16 %v8740, %v8740
    %v8743 = vpack.c.b16 %v8741, %v8741
    %v8747 = vunpack.c.l.b16 %v8611
    %v8748 = vunpack.c.h.b16 %v8611
    %v8749 = vpack.c.b16 %v8747, %v8747
    %v8750 = vpack.c.b16 %v8748, %v8748
    %8753 = vmatpush.bf16.msra.mxu0 %v4605
    %8754 = vmatpush.bf16.msra.mxu0 %v4597
    %8755 = vmatpush.bf16.msra.mxu0 %v4589
    %8756 = vmatpush.bf16.msra.mxu0 %v4581
    %8757 = vmatpush.bf16.msra.mxu0 %v4573
    %8758 = vmatpush.bf16.msra.mxu0 %v4565
    %8759 = vmatpush.bf16.msra.mxu0 %v4557
    %8760 = vmatpush.bf16.msra.mxu0 %v4549
    %8761 = vmatmul.bf16.gmra.mxu0 %v8742
    %v8762 = vpop.f32.mrf.mxu0
    %v8763 = vadd.f32 %v534, %v8762
    %v8764 = vpop.f32.mrf.mxu0
    %8765 = vdwg.mxu0
    %8766 = vmatpush.bf16.msra.mxu0 %v4669
    %8767 = vmatpush.bf16.msra.mxu0 %v4661
    %8768 = vmatpush.bf16.msra.mxu0 %v4653
    %8769 = vmatpush.bf16.msra.mxu0 %v4645
    %8770 = vmatpush.bf16.msra.mxu0 %v4637
    %8771 = vmatpush.bf16.msra.mxu0 %v4629
    %8772 = vmatpush.bf16.msra.mxu0 %v4621
    %8773 = vmatpush.bf16.msra.mxu0 %v4613
    %8774 = vmatmul.bf16.gmra.mxu0 %v8743
    %v8775 = vpop.f32.mrf.mxu0
    %v8776 = vadd.f32 %v8763, %v8775
    %v8777 = vpop.f32.mrf.mxu0
    %8778 = vdwg.mxu0
    %8779 = vmatpush.bf16.msra.mxu0 %v4733
    %8780 = vmatpush.bf16.msra.mxu0 %v4725
    %8781 = vmatpush.bf16.msra.mxu0 %v4717
    %8782 = vmatpush.bf16.msra.mxu0 %v4709
    %8783 = vmatpush.bf16.msra.mxu0 %v4701
    %8784 = vmatpush.bf16.msra.mxu0 %v4693
    %8785 = vmatpush.bf16.msra.mxu0 %v4685
    %8786 = vmatpush.bf16.msra.mxu0 %v4677
    %8787 = vmatmul.bf16.gmra.mxu0 %v8749
    %v8788 = vpop.f32.mrf.mxu0
    %v8789 = vadd.f32 %v8776, %v8788
    %v8790 = vpop.f32.mrf.mxu0
    %8791 = vdwg.mxu0
    %8792 = vmatpush.bf16.msra.mxu0 %v4797
    %8793 = vmatpush.bf16.msra.mxu0 %v4789
    %8794 = vmatpush.bf16.msra.mxu0 %v4781
    %8795 = vmatpush.bf16.msra.mxu0 %v4773
    %8796 = vmatpush.bf16.msra.mxu0 %v4765
    %8797 = vmatpush.bf16.msra.mxu0 %v4757
    %8798 = vmatpush.bf16.msra.mxu0 %v4749
    %8799 = vmatpush.bf16.msra.mxu0 %v4741
    %8800 = vmatmul.bf16.gmra.mxu0 %v8750
    %v8801 = vpop.f32.mrf.mxu0
    %v8802 = vadd.f32 %v8789, %v8801
    %v8803 = vpop.f32.mrf.mxu0
    %8804 = vdwg.mxu0
    %8805 = vmatpush.bf16.msra.mxu0 %v4606
    %8806 = vmatpush.bf16.msra.mxu0 %v4598
    %8807 = vmatpush.bf16.msra.mxu0 %v4590
    %8808 = vmatpush.bf16.msra.mxu0 %v4582
    %8809 = vmatpush.bf16.msra.mxu0 %v4574
    %8810 = vmatpush.bf16.msra.mxu0 %v4566
    %8811 = vmatpush.bf16.msra.mxu0 %v4558
    %8812 = vmatpush.bf16.msra.mxu0 %v4550
    %8813 = vmatmul.bf16.gmra.mxu0 %v8742
    %v8814 = vpop.f32.mrf.mxu0
    %v8815 = vadd.f32 %v535, %v8814
    %v8816 = vpop.f32.mrf.mxu0
    %8817 = vdwg.mxu0
    %8818 = vmatpush.bf16.msra.mxu0 %v4670
    %8819 = vmatpush.bf16.msra.mxu0 %v4662
    %8820 = vmatpush.bf16.msra.mxu0 %v4654
    %8821 = vmatpush.bf16.msra.mxu0 %v4646
    %8822 = vmatpush.bf16.msra.mxu0 %v4638
    %8823 = vmatpush.bf16.msra.mxu0 %v4630
    %8824 = vmatpush.bf16.msra.mxu0 %v4622
    %8825 = vmatpush.bf16.msra.mxu0 %v4614
    %8826 = vmatmul.bf16.gmra.mxu0 %v8743
    %v8827 = vpop.f32.mrf.mxu0
    %v8828 = vadd.f32 %v8815, %v8827
    %v8829 = vpop.f32.mrf.mxu0
    %8830 = vdwg.mxu0
    %8831 = vmatpush.bf16.msra.mxu0 %v4734
    %8832 = vmatpush.bf16.msra.mxu0 %v4726
    %8833 = vmatpush.bf16.msra.mxu0 %v4718
    %8834 = vmatpush.bf16.msra.mxu0 %v4710
    %8835 = vmatpush.bf16.msra.mxu0 %v4702
    %8836 = vmatpush.bf16.msra.mxu0 %v4694
    %8837 = vmatpush.bf16.msra.mxu0 %v4686
    %8838 = vmatpush.bf16.msra.mxu0 %v4678
    %8839 = vmatmul.bf16.gmra.mxu0 %v8749
    %v8840 = vpop.f32.mrf.mxu0
    %v8841 = vadd.f32 %v8828, %v8840
    %v8842 = vpop.f32.mrf.mxu0
    %8843 = vdwg.mxu0
    %8844 = vmatpush.bf16.msra.mxu0 %v4798
    %8845 = vmatpush.bf16.msra.mxu0 %v4790
    %8846 = vmatpush.bf16.msra.mxu0 %v4782
    %8847 = vmatpush.bf16.msra.mxu0 %v4774
    %8848 = vmatpush.bf16.msra.mxu0 %v4766
    %8849 = vmatpush.bf16.msra.mxu0 %v4758
    %8850 = vmatpush.bf16.msra.mxu0 %v4750
    %8851 = vmatpush.bf16.msra.mxu0 %v4742
    %8852 = vmatmul.bf16.gmra.mxu0 %v8750
    %v8853 = vpop.f32.mrf.mxu0
    %v8854 = vadd.f32 %v8841, %v8853
    %v8855 = vpop.f32.mrf.mxu0
    %8856 = vdwg.mxu0
    %8857 = vmatpush.bf16.msra.mxu0 %v4607
    %8858 = vmatpush.bf16.msra.mxu0 %v4599
    %8859 = vmatpush.bf16.msra.mxu0 %v4591
    %8860 = vmatpush.bf16.msra.mxu0 %v4583
    %8861 = vmatpush.bf16.msra.mxu0 %v4575
    %8862 = vmatpush.bf16.msra.mxu0 %v4567
    %8863 = vmatpush.bf16.msra.mxu0 %v4559
    %8864 = vmatpush.bf16.msra.mxu0 %v4551
    %8865 = vmatmul.bf16.gmra.mxu0 %v8742
    %v8866 = vpop.f32.mrf.mxu0
    %v8867 = vadd.f32 %v536, %v8866
    %v8868 = vpop.f32.mrf.mxu0
    %8869 = vdwg.mxu0
    %8870 = vmatpush.bf16.msra.mxu0 %v4671
    %8871 = vmatpush.bf16.msra.mxu0 %v4663
    %8872 = vmatpush.bf16.msra.mxu0 %v4655
    %8873 = vmatpush.bf16.msra.mxu0 %v4647
    %8874 = vmatpush.bf16.msra.mxu0 %v4639
    %8875 = vmatpush.bf16.msra.mxu0 %v4631
    %8876 = vmatpush.bf16.msra.mxu0 %v4623
    %8877 = vmatpush.bf16.msra.mxu0 %v4615
    %8878 = vmatmul.bf16.gmra.mxu0 %v8743
    %v8879 = vpop.f32.mrf.mxu0
    %v8880 = vadd.f32 %v8867, %v8879
    %v8881 = vpop.f32.mrf.mxu0
    %8882 = vdwg.mxu0
    %8883 = vmatpush.bf16.msra.mxu0 %v4735
    %8884 = vmatpush.bf16.msra.mxu0 %v4727
    %8885 = vmatpush.bf16.msra.mxu0 %v4719
    %8886 = vmatpush.bf16.msra.mxu0 %v4711
    %8887 = vmatpush.bf16.msra.mxu0 %v4703
    %8888 = vmatpush.bf16.msra.mxu0 %v4695
    %8889 = vmatpush.bf16.msra.mxu0 %v4687
    %8890 = vmatpush.bf16.msra.mxu0 %v4679
    %8891 = vmatmul.bf16.gmra.mxu0 %v8749
    %v8892 = vpop.f32.mrf.mxu0
    %v8893 = vadd.f32 %v8880, %v8892
    %v8894 = vpop.f32.mrf.mxu0
    %8895 = vdwg.mxu0
    %8896 = vmatpush.bf16.msra.mxu0 %v4799
    %8897 = vmatpush.bf16.msra.mxu0 %v4791
    %8898 = vmatpush.bf16.msra.mxu0 %v4783
    %8899 = vmatpush.bf16.msra.mxu0 %v4775
    %8900 = vmatpush.bf16.msra.mxu0 %v4767
    %8901 = vmatpush.bf16.msra.mxu0 %v4759
    %8902 = vmatpush.bf16.msra.mxu0 %v4751
    %8903 = vmatpush.bf16.msra.mxu0 %v4743
    %8904 = vmatmul.bf16.gmra.mxu0 %v8750
    %v8905 = vpop.f32.mrf.mxu0
    %v8906 = vadd.f32 %v8893, %v8905
    %v8907 = vpop.f32.mrf.mxu0
    %8908 = vdwg.mxu0
    %8909 = vmatpush.bf16.msra.mxu0 %v4608
    %8910 = vmatpush.bf16.msra.mxu0 %v4600
    %8911 = vmatpush.bf16.msra.mxu0 %v4592
    %8912 = vmatpush.bf16.msra.mxu0 %v4584
    %8913 = vmatpush.bf16.msra.mxu0 %v4576
    %8914 = vmatpush.bf16.msra.mxu0 %v4568
    %8915 = vmatpush.bf16.msra.mxu0 %v4560
    %8916 = vmatpush.bf16.msra.mxu0 %v4552
    %8917 = vmatmul.bf16.gmra.mxu0 %v8742
    %v8918 = vpop.f32.mrf.mxu0
    %v8919 = vadd.f32 %v537, %v8918
    %v8920 = vpop.f32.mrf.mxu0
    %8921 = vdwg.mxu0
    %8922 = vmatpush.bf16.msra.mxu0 %v4672
    %8923 = vmatpush.bf16.msra.mxu0 %v4664
    %8924 = vmatpush.bf16.msra.mxu0 %v4656
    %8925 = vmatpush.bf16.msra.mxu0 %v4648
    %8926 = vmatpush.bf16.msra.mxu0 %v4640
    %8927 = vmatpush.bf16.msra.mxu0 %v4632
    %8928 = vmatpush.bf16.msra.mxu0 %v4624
    %8929 = vmatpush.bf16.msra.mxu0 %v4616
    %8930 = vmatmul.bf16.gmra.mxu0 %v8743
    %v8931 = vpop.f32.mrf.mxu0
    %v8932 = vadd.f32 %v8919, %v8931
    %v8933 = vpop.f32.mrf.mxu0
    %8934 = vdwg.mxu0
    %8935 = vmatpush.bf16.msra.mxu0 %v4736
    %8936 = vmatpush.bf16.msra.mxu0 %v4728
    %8937 = vmatpush.bf16.msra.mxu0 %v4720
    %8938 = vmatpush.bf16.msra.mxu0 %v4712
    %8939 = vmatpush.bf16.msra.mxu0 %v4704
    %8940 = vmatpush.bf16.msra.mxu0 %v4696
    %8941 = vmatpush.bf16.msra.mxu0 %v4688
    %8942 = vmatpush.bf16.msra.mxu0 %v4680
    %8943 = vmatmul.bf16.gmra.mxu0 %v8749
    %v8944 = vpop.f32.mrf.mxu0
    %v8945 = vadd.f32 %v8932, %v8944
    %v8946 = vpop.f32.mrf.mxu0
    %8947 = vdwg.mxu0
    %8948 = vmatpush.bf16.msra.mxu0 %v4800
    %8949 = vmatpush.bf16.msra.mxu0 %v4792
    %8950 = vmatpush.bf16.msra.mxu0 %v4784
    %8951 = vmatpush.bf16.msra.mxu0 %v4776
    %8952 = vmatpush.bf16.msra.mxu0 %v4768
    %8953 = vmatpush.bf16.msra.mxu0 %v4760
    %8954 = vmatpush.bf16.msra.mxu0 %v4752
    %8955 = vmatpush.bf16.msra.mxu0 %v4744
    %8956 = vmatmul.bf16.gmra.mxu0 %v8750
    %v8957 = vpop.f32.mrf.mxu0
    %v8958 = vadd.f32 %v8945, %v8957
    %v8959 = vpop.f32.mrf.mxu0
    %8960 = vdwg.mxu0
    %8961 = vmatpush.bf16.msra.mxu0 %v4609
    %8962 = vmatpush.bf16.msra.mxu0 %v4601
    %8963 = vmatpush.bf16.msra.mxu0 %v4593
    %8964 = vmatpush.bf16.msra.mxu0 %v4585
    %8965 = vmatpush.bf16.msra.mxu0 %v4577
    %8966 = vmatpush.bf16.msra.mxu0 %v4569
    %8967 = vmatpush.bf16.msra.mxu0 %v4561
    %8968 = vmatpush.bf16.msra.mxu0 %v4553
    %8969 = vmatmul.bf16.gmra.mxu0 %v8742
    %v8970 = vpop.f32.mrf.mxu0
    %v8971 = vadd.f32 %v538, %v8970
    %v8972 = vpop.f32.mrf.mxu0
    %8973 = vdwg.mxu0
    %8974 = vmatpush.bf16.msra.mxu0 %v4673
    %8975 = vmatpush.bf16.msra.mxu0 %v4665
    %8976 = vmatpush.bf16.msra.mxu0 %v4657
    %8977 = vmatpush.bf16.msra.mxu0 %v4649
    %8978 = vmatpush.bf16.msra.mxu0 %v4641
    %8979 = vmatpush.bf16.msra.mxu0 %v4633
    %8980 = vmatpush.bf16.msra.mxu0 %v4625
    %8981 = vmatpush.bf16.msra.mxu0 %v4617
    %8982 = vmatmul.bf16.gmra.mxu0 %v8743
    %v8983 = vpop.f32.mrf.mxu0
    %v8984 = vadd.f32 %v8971, %v8983
    %v8985 = vpop.f32.mrf.mxu0
    %8986 = vdwg.mxu0
    %8987 = vmatpush.bf16.msra.mxu0 %v4737
    %8988 = vmatpush.bf16.msra.mxu0 %v4729
    %8989 = vmatpush.bf16.msra.mxu0 %v4721
    %8990 = vmatpush.bf16.msra.mxu0 %v4713
    %8991 = vmatpush.bf16.msra.mxu0 %v4705
    %8992 = vmatpush.bf16.msra.mxu0 %v4697
    %8993 = vmatpush.bf16.msra.mxu0 %v4689
    %8994 = vmatpush.bf16.msra.mxu0 %v4681
    %8995 = vmatmul.bf16.gmra.mxu0 %v8749
    %v8996 = vpop.f32.mrf.mxu0
    %v8997 = vadd.f32 %v8984, %v8996
    %v8998 = vpop.f32.mrf.mxu0
    %8999 = vdwg.mxu0
    %9000 = vmatpush.bf16.msra.mxu0 %v4801
    %9001 = vmatpush.bf16.msra.mxu0 %v4793
    %9002 = vmatpush.bf16.msra.mxu0 %v4785
    %9003 = vmatpush.bf16.msra.mxu0 %v4777
    %9004 = vmatpush.bf16.msra.mxu0 %v4769
    %9005 = vmatpush.bf16.msra.mxu0 %v4761
    %9006 = vmatpush.bf16.msra.mxu0 %v4753
    %9007 = vmatpush.bf16.msra.mxu0 %v4745
    %9008 = vmatmul.bf16.gmra.mxu0 %v8750
    %v9009 = vpop.f32.mrf.mxu0
    %v9010 = vadd.f32 %v8997, %v9009
    %v9011 = vpop.f32.mrf.mxu0
    %9012 = vdwg.mxu0
    %9013 = vmatpush.bf16.msra.mxu0 %v4610
    %9014 = vmatpush.bf16.msra.mxu0 %v4602
    %9015 = vmatpush.bf16.msra.mxu0 %v4594
    %9016 = vmatpush.bf16.msra.mxu0 %v4586
    %9017 = vmatpush.bf16.msra.mxu0 %v4578
    %9018 = vmatpush.bf16.msra.mxu0 %v4570
    %9019 = vmatpush.bf16.msra.mxu0 %v4562
    %9020 = vmatpush.bf16.msra.mxu0 %v4554
    %9021 = vmatmul.bf16.gmra.mxu0 %v8742
    %v9022 = vpop.f32.mrf.mxu0
    %v9023 = vadd.f32 %v539, %v9022
    %v9024 = vpop.f32.mrf.mxu0
    %9025 = vdwg.mxu0
    %9026 = vmatpush.bf16.msra.mxu0 %v4674
    %9027 = vmatpush.bf16.msra.mxu0 %v4666
    %9028 = vmatpush.bf16.msra.mxu0 %v4658
    %9029 = vmatpush.bf16.msra.mxu0 %v4650
    %9030 = vmatpush.bf16.msra.mxu0 %v4642
    %9031 = vmatpush.bf16.msra.mxu0 %v4634
    %9032 = vmatpush.bf16.msra.mxu0 %v4626
    %9033 = vmatpush.bf16.msra.mxu0 %v4618
    %9034 = vmatmul.bf16.gmra.mxu0 %v8743
    %v9035 = vpop.f32.mrf.mxu0
    %v9036 = vadd.f32 %v9023, %v9035
    %v9037 = vpop.f32.mrf.mxu0
    %9038 = vdwg.mxu0
    %9039 = vmatpush.bf16.msra.mxu0 %v4738
    %9040 = vmatpush.bf16.msra.mxu0 %v4730
    %9041 = vmatpush.bf16.msra.mxu0 %v4722
    %9042 = vmatpush.bf16.msra.mxu0 %v4714
    %9043 = vmatpush.bf16.msra.mxu0 %v4706
    %9044 = vmatpush.bf16.msra.mxu0 %v4698
    %9045 = vmatpush.bf16.msra.mxu0 %v4690
    %9046 = vmatpush.bf16.msra.mxu0 %v4682
    %9047 = vmatmul.bf16.gmra.mxu0 %v8749
    %v9048 = vpop.f32.mrf.mxu0
    %v9049 = vadd.f32 %v9036, %v9048
    %v9050 = vpop.f32.mrf.mxu0
    %9051 = vdwg.mxu0
    %9052 = vmatpush.bf16.msra.mxu0 %v4802
    %9053 = vmatpush.bf16.msra.mxu0 %v4794
    %9054 = vmatpush.bf16.msra.mxu0 %v4786
    %9055 = vmatpush.bf16.msra.mxu0 %v4778
    %9056 = vmatpush.bf16.msra.mxu0 %v4770
    %9057 = vmatpush.bf16.msra.mxu0 %v4762
    %9058 = vmatpush.bf16.msra.mxu0 %v4754
    %9059 = vmatpush.bf16.msra.mxu0 %v4746
    %9060 = vmatmul.bf16.gmra.mxu0 %v8750
    %v9061 = vpop.f32.mrf.mxu0
    %v9062 = vadd.f32 %v9049, %v9061
    %v9063 = vpop.f32.mrf.mxu0
    %9064 = vdwg.mxu0
    %9065 = vmatpush.bf16.msra.mxu0 %v4611
    %9066 = vmatpush.bf16.msra.mxu0 %v4603
    %9067 = vmatpush.bf16.msra.mxu0 %v4595
    %9068 = vmatpush.bf16.msra.mxu0 %v4587
    %9069 = vmatpush.bf16.msra.mxu0 %v4579
    %9070 = vmatpush.bf16.msra.mxu0 %v4571
    %9071 = vmatpush.bf16.msra.mxu0 %v4563
    %9072 = vmatpush.bf16.msra.mxu0 %v4555
    %9073 = vmatmul.bf16.gmra.mxu0 %v8742
    %v9074 = vpop.f32.mrf.mxu0
    %v9075 = vadd.f32 %v540, %v9074
    %v9076 = vpop.f32.mrf.mxu0
    %9077 = vdwg.mxu0
    %9078 = vmatpush.bf16.msra.mxu0 %v4675
    %9079 = vmatpush.bf16.msra.mxu0 %v4667
    %9080 = vmatpush.bf16.msra.mxu0 %v4659
    %9081 = vmatpush.bf16.msra.mxu0 %v4651
    %9082 = vmatpush.bf16.msra.mxu0 %v4643
    %9083 = vmatpush.bf16.msra.mxu0 %v4635
    %9084 = vmatpush.bf16.msra.mxu0 %v4627
    %9085 = vmatpush.bf16.msra.mxu0 %v4619
    %9086 = vmatmul.bf16.gmra.mxu0 %v8743
    %v9087 = vpop.f32.mrf.mxu0
    %v9088 = vadd.f32 %v9075, %v9087
    %v9089 = vpop.f32.mrf.mxu0
    %9090 = vdwg.mxu0
    %9091 = vmatpush.bf16.msra.mxu0 %v4739
    %9092 = vmatpush.bf16.msra.mxu0 %v4731
    %9093 = vmatpush.bf16.msra.mxu0 %v4723
    %9094 = vmatpush.bf16.msra.mxu0 %v4715
    %9095 = vmatpush.bf16.msra.mxu0 %v4707
    %9096 = vmatpush.bf16.msra.mxu0 %v4699
    %9097 = vmatpush.bf16.msra.mxu0 %v4691
    %9098 = vmatpush.bf16.msra.mxu0 %v4683
    %9099 = vmatmul.bf16.gmra.mxu0 %v8749
    %v9100 = vpop.f32.mrf.mxu0
    %v9101 = vadd.f32 %v9088, %v9100
    %v9102 = vpop.f32.mrf.mxu0
    %9103 = vdwg.mxu0
    %9104 = vmatpush.bf16.msra.mxu0 %v4803
    %9105 = vmatpush.bf16.msra.mxu0 %v4795
    %9106 = vmatpush.bf16.msra.mxu0 %v4787
    %9107 = vmatpush.bf16.msra.mxu0 %v4779
    %9108 = vmatpush.bf16.msra.mxu0 %v4771
    %9109 = vmatpush.bf16.msra.mxu0 %v4763
    %9110 = vmatpush.bf16.msra.mxu0 %v4755
    %9111 = vmatpush.bf16.msra.mxu0 %v4747
    %9112 = vmatmul.bf16.gmra.mxu0 %v8750
    %v9113 = vpop.f32.mrf.mxu0
    %v9114 = vadd.f32 %v9101, %v9113
    %v9115 = vpop.f32.mrf.mxu0
    %9116 = vdwg.mxu0
    %9117 = vmatpush.bf16.msra.mxu0 %v4612
    %9118 = vmatpush.bf16.msra.mxu0 %v4604
    %9119 = vmatpush.bf16.msra.mxu0 %v4596
    %9120 = vmatpush.bf16.msra.mxu0 %v4588
    %9121 = vmatpush.bf16.msra.mxu0 %v4580
    %9122 = vmatpush.bf16.msra.mxu0 %v4572
    %9123 = vmatpush.bf16.msra.mxu0 %v4564
    %9124 = vmatpush.bf16.msra.mxu0 %v4556
    %9125 = vmatmul.bf16.gmra.mxu0 %v8742
    %v9126 = vpop.f32.mrf.mxu0
    %v9127 = vadd.f32 %v541, %v9126
    %v9128 = vpop.f32.mrf.mxu0
    %9129 = vdwg.mxu0
    %9130 = vmatpush.bf16.msra.mxu0 %v4676
    %9131 = vmatpush.bf16.msra.mxu0 %v4668
    %9132 = vmatpush.bf16.msra.mxu0 %v4660
    %9133 = vmatpush.bf16.msra.mxu0 %v4652
    %9134 = vmatpush.bf16.msra.mxu0 %v4644
    %9135 = vmatpush.bf16.msra.mxu0 %v4636
    %9136 = vmatpush.bf16.msra.mxu0 %v4628
    %9137 = vmatpush.bf16.msra.mxu0 %v4620
    %9138 = vmatmul.bf16.gmra.mxu0 %v8743
    %v9139 = vpop.f32.mrf.mxu0
    %v9140 = vadd.f32 %v9127, %v9139
    %v9141 = vpop.f32.mrf.mxu0
    %9142 = vdwg.mxu0
    %9143 = vmatpush.bf16.msra.mxu0 %v4740
    %9144 = vmatpush.bf16.msra.mxu0 %v4732
    %9145 = vmatpush.bf16.msra.mxu0 %v4724
    %9146 = vmatpush.bf16.msra.mxu0 %v4716
    %9147 = vmatpush.bf16.msra.mxu0 %v4708
    %9148 = vmatpush.bf16.msra.mxu0 %v4700
    %9149 = vmatpush.bf16.msra.mxu0 %v4692
    %9150 = vmatpush.bf16.msra.mxu0 %v4684
    %9151 = vmatmul.bf16.gmra.mxu0 %v8749
    %v9152 = vpop.f32.mrf.mxu0
    %v9153 = vadd.f32 %v9140, %v9152
    %v9154 = vpop.f32.mrf.mxu0
    %9155 = vdwg.mxu0
    %9156 = vmatpush.bf16.msra.mxu0 %v4804
    %9157 = vmatpush.bf16.msra.mxu0 %v4796
    %9158 = vmatpush.bf16.msra.mxu0 %v4788
    %9159 = vmatpush.bf16.msra.mxu0 %v4780
    %9160 = vmatpush.bf16.msra.mxu0 %v4772
    %9161 = vmatpush.bf16.msra.mxu0 %v4764
    %9162 = vmatpush.bf16.msra.mxu0 %v4756
    %9163 = vmatpush.bf16.msra.mxu0 %v4748
    %9164 = vmatmul.bf16.gmra.mxu0 %v8750
    %v9165 = vpop.f32.mrf.mxu0
    %v9166 = vadd.f32 %v9153, %v9165
    %v9167 = vpop.f32.mrf.mxu0
    %9168 = vdwg.mxu0
    %s9169 = scalar_lea.vmem %s0, 12
    %v9170 = vld [vmem:[%s9169] sm:$0x3]
    %9172 = vset.pattern.permute.xlu0 0
    %9173 = vperm.xlu0 %9172, %v9170
    %v9174 = vpop.permute.xlu0 %9173
    %v9176 = vmul.f32 %v9174, %v90
    %v9177 = vmul.f32 %v9174, %v91
    %v9178 = vmul.f32 %v9174, %v92
    %v9179 = vmul.f32 %v9174, %v93
    %v9180 = vmul.f32 %v9174, %v94
    %v9181 = vmul.f32 %v9174, %v95
    %v9182 = vmul.f32 %v9174, %v96
    %v9183 = vmul.f32 %v9174, %v97
    %v9184 = vadd.f32 %v9176, %v115
    %v9185 = vadd.f32 %v9177, %v116
    %v9186 = vadd.f32 %v9178, %v117
    %v9187 = vadd.f32 %v9179, %v118
    %v9188 = vadd.f32 %v9180, %v119
    %v9189 = vadd.f32 %v9181, %v120
    %v9190 = vadd.f32 %v9182, %v121
    %v9191 = vadd.f32 %v9183, %v122
    %9192 = vmatpush.bf16.msra.mxu0 %v2841
    %9193 = vmatpush.bf16.msra.mxu0 %v2833
    %9194 = vmatpush.bf16.msra.mxu0 %v2825
    %9195 = vmatpush.bf16.msra.mxu0 %v2817
    %9196 = vmatpush.bf16.msra.mxu0 %v2809
    %9197 = vmatpush.bf16.msra.mxu0 %v2801
    %9198 = vmatpush.bf16.msra.mxu0 %v2793
    %9199 = vmatpush.bf16.msra.mxu0 %v2785
    %9200 = vmatmul.bf16.gmra.mxu0 %v8742
    %v9201 = vpop.f32.mrf.mxu0
    %v9202 = vadd.f32 0.0, %v9201
    %v9203 = vpop.f32.mrf.mxu0
    %9204 = vdwg.mxu0
    %9205 = vmatpush.bf16.msra.mxu0 %v2905
    %9206 = vmatpush.bf16.msra.mxu0 %v2897
    %9207 = vmatpush.bf16.msra.mxu0 %v2889
    %9208 = vmatpush.bf16.msra.mxu0 %v2881
    %9209 = vmatpush.bf16.msra.mxu0 %v2873
    %9210 = vmatpush.bf16.msra.mxu0 %v2865
    %9211 = vmatpush.bf16.msra.mxu0 %v2857
    %9212 = vmatpush.bf16.msra.mxu0 %v2849
    %9213 = vmatmul.bf16.gmra.mxu0 %v8743
    %v9214 = vpop.f32.mrf.mxu0
    %v9215 = vadd.f32 %v9202, %v9214
    %v9216 = vpop.f32.mrf.mxu0
    %9217 = vdwg.mxu0
    %9218 = vmatpush.bf16.msra.mxu0 %v2842
    %9219 = vmatpush.bf16.msra.mxu0 %v2834
    %9220 = vmatpush.bf16.msra.mxu0 %v2826
    %9221 = vmatpush.bf16.msra.mxu0 %v2818
    %9222 = vmatpush.bf16.msra.mxu0 %v2810
    %9223 = vmatpush.bf16.msra.mxu0 %v2802
    %9224 = vmatpush.bf16.msra.mxu0 %v2794
    %9225 = vmatpush.bf16.msra.mxu0 %v2786
    %9226 = vmatmul.bf16.gmra.mxu0 %v8742
    %v9227 = vpop.f32.mrf.mxu0
    %v9228 = vadd.f32 0.0, %v9227
    %v9229 = vpop.f32.mrf.mxu0
    %9230 = vdwg.mxu0
    %9231 = vmatpush.bf16.msra.mxu0 %v2906
    %9232 = vmatpush.bf16.msra.mxu0 %v2898
    %9233 = vmatpush.bf16.msra.mxu0 %v2890
    %9234 = vmatpush.bf16.msra.mxu0 %v2882
    %9235 = vmatpush.bf16.msra.mxu0 %v2874
    %9236 = vmatpush.bf16.msra.mxu0 %v2866
    %9237 = vmatpush.bf16.msra.mxu0 %v2858
    %9238 = vmatpush.bf16.msra.mxu0 %v2850
    %9239 = vmatmul.bf16.gmra.mxu0 %v8743
    %v9240 = vpop.f32.mrf.mxu0
    %v9241 = vadd.f32 %v9228, %v9240
    %v9242 = vpop.f32.mrf.mxu0
    %9243 = vdwg.mxu0
    %9244 = vmatpush.bf16.msra.mxu0 %v2843
    %9245 = vmatpush.bf16.msra.mxu0 %v2835
    %9246 = vmatpush.bf16.msra.mxu0 %v2827
    %9247 = vmatpush.bf16.msra.mxu0 %v2819
    %9248 = vmatpush.bf16.msra.mxu0 %v2811
    %9249 = vmatpush.bf16.msra.mxu0 %v2803
    %9250 = vmatpush.bf16.msra.mxu0 %v2795
    %9251 = vmatpush.bf16.msra.mxu0 %v2787
    %9252 = vmatmul.bf16.gmra.mxu0 %v8742
    %v9253 = vpop.f32.mrf.mxu0
    %v9254 = vadd.f32 0.0, %v9253
    %v9255 = vpop.f32.mrf.mxu0
    %9256 = vdwg.mxu0
    %9257 = vmatpush.bf16.msra.mxu0 %v2907
    %9258 = vmatpush.bf16.msra.mxu0 %v2899
    %9259 = vmatpush.bf16.msra.mxu0 %v2891
    %9260 = vmatpush.bf16.msra.mxu0 %v2883
    %9261 = vmatpush.bf16.msra.mxu0 %v2875
    %9262 = vmatpush.bf16.msra.mxu0 %v2867
    %9263 = vmatpush.bf16.msra.mxu0 %v2859
    %9264 = vmatpush.bf16.msra.mxu0 %v2851
    %9265 = vmatmul.bf16.gmra.mxu0 %v8743
    %v9266 = vpop.f32.mrf.mxu0
    %v9267 = vadd.f32 %v9254, %v9266
    %v9268 = vpop.f32.mrf.mxu0
    %9269 = vdwg.mxu0
    %9270 = vmatpush.bf16.msra.mxu0 %v2844
    %9271 = vmatpush.bf16.msra.mxu0 %v2836
    %9272 = vmatpush.bf16.msra.mxu0 %v2828
    %9273 = vmatpush.bf16.msra.mxu0 %v2820
    %9274 = vmatpush.bf16.msra.mxu0 %v2812
    %9275 = vmatpush.bf16.msra.mxu0 %v2804
    %9276 = vmatpush.bf16.msra.mxu0 %v2796
    %9277 = vmatpush.bf16.msra.mxu0 %v2788
    %9278 = vmatmul.bf16.gmra.mxu0 %v8742
    %v9279 = vpop.f32.mrf.mxu0
    %v9280 = vadd.f32 0.0, %v9279
    %v9281 = vpop.f32.mrf.mxu0
    %9282 = vdwg.mxu0
    %9283 = vmatpush.bf16.msra.mxu0 %v2908
    %9284 = vmatpush.bf16.msra.mxu0 %v2900
    %9285 = vmatpush.bf16.msra.mxu0 %v2892
    %9286 = vmatpush.bf16.msra.mxu0 %v2884
    %9287 = vmatpush.bf16.msra.mxu0 %v2876
    %9288 = vmatpush.bf16.msra.mxu0 %v2868
    %9289 = vmatpush.bf16.msra.mxu0 %v2860
    %9290 = vmatpush.bf16.msra.mxu0 %v2852
    %9291 = vmatmul.bf16.gmra.mxu0 %v8743
    %v9292 = vpop.f32.mrf.mxu0
    %v9293 = vadd.f32 %v9280, %v9292
    %v9294 = vpop.f32.mrf.mxu0
    %9295 = vdwg.mxu0
    %9296 = vmatpush.bf16.msra.mxu0 %v2845
    %9297 = vmatpush.bf16.msra.mxu0 %v2837
    %9298 = vmatpush.bf16.msra.mxu0 %v2829
    %9299 = vmatpush.bf16.msra.mxu0 %v2821
    %9300 = vmatpush.bf16.msra.mxu0 %v2813
    %9301 = vmatpush.bf16.msra.mxu0 %v2805
    %9302 = vmatpush.bf16.msra.mxu0 %v2797
    %9303 = vmatpush.bf16.msra.mxu0 %v2789
    %9304 = vmatmul.bf16.gmra.mxu0 %v8742
    %v9305 = vpop.f32.mrf.mxu0
    %v9306 = vadd.f32 0.0, %v9305
    %v9307 = vpop.f32.mrf.mxu0
    %9308 = vdwg.mxu0
    %9309 = vmatpush.bf16.msra.mxu0 %v2909
    %9310 = vmatpush.bf16.msra.mxu0 %v2901
    %9311 = vmatpush.bf16.msra.mxu0 %v2893
    %9312 = vmatpush.bf16.msra.mxu0 %v2885
    %9313 = vmatpush.bf16.msra.mxu0 %v2877
    %9314 = vmatpush.bf16.msra.mxu0 %v2869
    %9315 = vmatpush.bf16.msra.mxu0 %v2861
    %9316 = vmatpush.bf16.msra.mxu0 %v2853
    %9317 = vmatmul.bf16.gmra.mxu0 %v8743
    %v9318 = vpop.f32.mrf.mxu0
    %v9319 = vadd.f32 %v9306, %v9318
    %v9320 = vpop.f32.mrf.mxu0
    %9321 = vdwg.mxu0
    %9322 = vmatpush.bf16.msra.mxu0 %v2846
    %9323 = vmatpush.bf16.msra.mxu0 %v2838
    %9324 = vmatpush.bf16.msra.mxu0 %v2830
    %9325 = vmatpush.bf16.msra.mxu0 %v2822
    %9326 = vmatpush.bf16.msra.mxu0 %v2814
    %9327 = vmatpush.bf16.msra.mxu0 %v2806
    %9328 = vmatpush.bf16.msra.mxu0 %v2798
    %9329 = vmatpush.bf16.msra.mxu0 %v2790
    %9330 = vmatmul.bf16.gmra.mxu0 %v8742
    %v9331 = vpop.f32.mrf.mxu0
    %v9332 = vadd.f32 0.0, %v9331
    %v9333 = vpop.f32.mrf.mxu0
    %9334 = vdwg.mxu0
    %9335 = vmatpush.bf16.msra.mxu0 %v2910
    %9336 = vmatpush.bf16.msra.mxu0 %v2902
    %9337 = vmatpush.bf16.msra.mxu0 %v2894
    %9338 = vmatpush.bf16.msra.mxu0 %v2886
    %9339 = vmatpush.bf16.msra.mxu0 %v2878
    %9340 = vmatpush.bf16.msra.mxu0 %v2870
    %9341 = vmatpush.bf16.msra.mxu0 %v2862
    %9342 = vmatpush.bf16.msra.mxu0 %v2854
    %9343 = vmatmul.bf16.gmra.mxu0 %v8743
    %v9344 = vpop.f32.mrf.mxu0
    %v9345 = vadd.f32 %v9332, %v9344
    %v9346 = vpop.f32.mrf.mxu0
    %9347 = vdwg.mxu0
    %9348 = vmatpush.bf16.msra.mxu0 %v2847
    %9349 = vmatpush.bf16.msra.mxu0 %v2839
    %9350 = vmatpush.bf16.msra.mxu0 %v2831
    %9351 = vmatpush.bf16.msra.mxu0 %v2823
    %9352 = vmatpush.bf16.msra.mxu0 %v2815
    %9353 = vmatpush.bf16.msra.mxu0 %v2807
    %9354 = vmatpush.bf16.msra.mxu0 %v2799
    %9355 = vmatpush.bf16.msra.mxu0 %v2791
    %9356 = vmatmul.bf16.gmra.mxu0 %v8742
    %v9357 = vpop.f32.mrf.mxu0
    %v9358 = vadd.f32 0.0, %v9357
    %v9359 = vpop.f32.mrf.mxu0
    %9360 = vdwg.mxu0
    %9361 = vmatpush.bf16.msra.mxu0 %v2911
    %9362 = vmatpush.bf16.msra.mxu0 %v2903
    %9363 = vmatpush.bf16.msra.mxu0 %v2895
    %9364 = vmatpush.bf16.msra.mxu0 %v2887
    %9365 = vmatpush.bf16.msra.mxu0 %v2879
    %9366 = vmatpush.bf16.msra.mxu0 %v2871
    %9367 = vmatpush.bf16.msra.mxu0 %v2863
    %9368 = vmatpush.bf16.msra.mxu0 %v2855
    %9369 = vmatmul.bf16.gmra.mxu0 %v8743
    %v9370 = vpop.f32.mrf.mxu0
    %v9371 = vadd.f32 %v9358, %v9370
    %v9372 = vpop.f32.mrf.mxu0
    %9373 = vdwg.mxu0
    %9374 = vmatpush.bf16.msra.mxu0 %v2848
    %9375 = vmatpush.bf16.msra.mxu0 %v2840
    %9376 = vmatpush.bf16.msra.mxu0 %v2832
    %9377 = vmatpush.bf16.msra.mxu0 %v2824
    %9378 = vmatpush.bf16.msra.mxu0 %v2816
    %9379 = vmatpush.bf16.msra.mxu0 %v2808
    %9380 = vmatpush.bf16.msra.mxu0 %v2800
    %9381 = vmatpush.bf16.msra.mxu0 %v2792
    %9382 = vmatmul.bf16.gmra.mxu0 %v8742
    %v9383 = vpop.f32.mrf.mxu0
    %v9384 = vadd.f32 0.0, %v9383
    %v9385 = vpop.f32.mrf.mxu0
    %9386 = vdwg.mxu0
    %9387 = vmatpush.bf16.msra.mxu0 %v2912
    %9388 = vmatpush.bf16.msra.mxu0 %v2904
    %9389 = vmatpush.bf16.msra.mxu0 %v2896
    %9390 = vmatpush.bf16.msra.mxu0 %v2888
    %9391 = vmatpush.bf16.msra.mxu0 %v2880
    %9392 = vmatpush.bf16.msra.mxu0 %v2872
    %9393 = vmatpush.bf16.msra.mxu0 %v2864
    %9394 = vmatpush.bf16.msra.mxu0 %v2856
    %9395 = vmatmul.bf16.gmra.mxu0 %v8743
    %v9396 = vpop.f32.mrf.mxu0
    %v9397 = vadd.f32 %v9384, %v9396
    %v9398 = vpop.f32.mrf.mxu0
    %9399 = vdwg.mxu0
    %v9400 = vadd.f32 %v9184, %v9215
    %v9401 = vadd.f32 %v9185, %v9241
    %v9402 = vadd.f32 %v9186, %v9267
    %v9403 = vadd.f32 %v9187, %v9293
    %v9404 = vadd.f32 %v9188, %v9319
    %v9405 = vadd.f32 %v9189, %v9345
    %v9406 = vadd.f32 %v9190, %v9371
    %v9407 = vadd.f32 %v9191, %v9397
    %v9408 = vxor.u32 %v8802, 2147483648
    %v9409 = vxor.u32 %v8854, 2147483648
    %v9410 = vxor.u32 %v8906, 2147483648
    %v9411 = vxor.u32 %v8958, 2147483648
    %v9412 = vxor.u32 %v9010, 2147483648
    %v9413 = vxor.u32 %v9062, 2147483648
    %v9414 = vmul.f32 %v9408, 1.442695
    %v9415 = vpow.pop %v9414
    %v9416 = vmul.f32 %v9409, 1.442695
    %v9417 = vpow.pop %v9416
    %v9418 = vmul.f32 %v9410, 1.442695
    %v9419 = vpow.pop %v9418
    %v9420 = vmul.f32 %v9411, 1.442695
    %v9421 = vpow.pop %v9420
    %v9422 = vmul.f32 %v9412, 1.442695
    %v9423 = vpow.pop %v9422
    %v9424 = vmul.f32 %v9413, 1.442695
    %v9425 = vpow.pop %v9424
    %v9426 = vadd.f32 %v9415, 1.0
    %v9427 = vadd.f32 %v9417, 1.0
    %v9428 = vadd.f32 %v9419, 1.0
    %v9429 = vadd.f32 %v9421, 1.0
    %v9430 = vadd.f32 %v9423, 1.0
    %v9431 = vadd.f32 %v9425, 1.0
    %v9432 = vrcp.pop %v9426
    %v9433 = vmul.f32 %v9426, %v9432
    %v9434 = vsub.f32 1.0, %v9433
    %v9435 = vmul.f32 %v9432, %v9434
    %v9436 = vadd.f32 %v9432, %v9435
    %vm9437 = vweird.f32 %v9426
    %vm9438 = vweird.f32 %v9432
    %vm9439 = vmor %vm9437, %vm9438
    %v9440 = vsel %vm9439, %v9432, %v9436
    %v9441 = vand.u32 2147483647, %v9426
    %vm9442 = vcmp.eq.f32.partialorder %v9441, 8.507059e+37
    %v9443 = vand.u32 %v9426, 2147483648
    %v9444 = vor.u32 1.1754944e-38, %v9443
    %v9445 = vsel %vm9442, %v9444, %v9440
    %v9446 = vmul.f32 1.0, %v9445
    %v9447 = vrcp.pop %v9427
    %v9448 = vmul.f32 %v9427, %v9447
    %v9449 = vsub.f32 1.0, %v9448
    %v9450 = vmul.f32 %v9447, %v9449
    %v9451 = vadd.f32 %v9447, %v9450
    %vm9452 = vweird.f32 %v9427
    %vm9453 = vweird.f32 %v9447
    %vm9454 = vmor %vm9452, %vm9453
    %v9455 = vsel %vm9454, %v9447, %v9451
    %v9456 = vand.u32 2147483647, %v9427
    %vm9457 = vcmp.eq.f32.partialorder %v9456, 8.507059e+37
    %v9458 = vand.u32 %v9427, 2147483648
    %v9459 = vor.u32 1.1754944e-38, %v9458
    %v9460 = vsel %vm9457, %v9459, %v9455
    %v9461 = vmul.f32 1.0, %v9460
    %v9462 = vrcp.pop %v9428
    %v9463 = vmul.f32 %v9428, %v9462
    %v9464 = vsub.f32 1.0, %v9463
    %v9465 = vmul.f32 %v9462, %v9464
    %v9466 = vadd.f32 %v9462, %v9465
    %vm9467 = vweird.f32 %v9428
    %vm9468 = vweird.f32 %v9462
    %vm9469 = vmor %vm9467, %vm9468
    %v9470 = vsel %vm9469, %v9462, %v9466
    %v9471 = vand.u32 2147483647, %v9428
    %vm9472 = vcmp.eq.f32.partialorder %v9471, 8.507059e+37
    %v9473 = vand.u32 %v9428, 2147483648
    %v9474 = vor.u32 1.1754944e-38, %v9473
    %v9475 = vsel %vm9472, %v9474, %v9470
    %v9476 = vmul.f32 1.0, %v9475
    %v9477 = vrcp.pop %v9429
    %v9478 = vmul.f32 %v9429, %v9477
    %v9479 = vsub.f32 1.0, %v9478
    %v9480 = vmul.f32 %v9477, %v9479
    %v9481 = vadd.f32 %v9477, %v9480
    %vm9482 = vweird.f32 %v9429
    %vm9483 = vweird.f32 %v9477
    %vm9484 = vmor %vm9482, %vm9483
    %v9485 = vsel %vm9484, %v9477, %v9481
    %v9486 = vand.u32 2147483647, %v9429
    %vm9487 = vcmp.eq.f32.partialorder %v9486, 8.507059e+37
    %v9488 = vand.u32 %v9429, 2147483648
    %v9489 = vor.u32 1.1754944e-38, %v9488
    %v9490 = vsel %vm9487, %v9489, %v9485
    %v9491 = vmul.f32 1.0, %v9490
    %v9492 = vrcp.pop %v9430
    %v9493 = vmul.f32 %v9430, %v9492
    %v9494 = vsub.f32 1.0, %v9493
    %v9495 = vmul.f32 %v9492, %v9494
    %v9496 = vadd.f32 %v9492, %v9495
    %vm9497 = vweird.f32 %v9430
    %vm9498 = vweird.f32 %v9492
    %vm9499 = vmor %vm9497, %vm9498
    %v9500 = vsel %vm9499, %v9492, %v9496
    %v9501 = vand.u32 2147483647, %v9430
    %vm9502 = vcmp.eq.f32.partialorder %v9501, 8.507059e+37
    %v9503 = vand.u32 %v9430, 2147483648
    %v9504 = vor.u32 1.1754944e-38, %v9503
    %v9505 = vsel %vm9502, %v9504, %v9500
    %v9506 = vmul.f32 1.0, %v9505
    %v9507 = vrcp.pop %v9431
    %v9508 = vmul.f32 %v9431, %v9507
    %v9509 = vsub.f32 1.0, %v9508
    %v9510 = vmul.f32 %v9507, %v9509
    %v9511 = vadd.f32 %v9507, %v9510
    %vm9512 = vweird.f32 %v9431
    %vm9513 = vweird.f32 %v9507
    %vm9514 = vmor %vm9512, %vm9513
    %v9515 = vsel %vm9514, %v9507, %v9511
    %v9516 = vand.u32 2147483647, %v9431
    %vm9517 = vcmp.eq.f32.partialorder %v9516, 8.507059e+37
    %v9518 = vand.u32 %v9431, 2147483648
    %v9519 = vor.u32 1.1754944e-38, %v9518
    %v9520 = vsel %vm9517, %v9519, %v9515
    %v9521 = vmul.f32 1.0, %v9520
    %v9522 = vtanh.pop %v9114
    %v9523 = vtanh.pop %v9166
    %v9524 = vmul.f32 %v9476, %v8605
    %v9525 = vmul.f32 %v9491, %v8606
    %v9526 = vmul.f32 %v9446, %v9522
    %v9527 = vmul.f32 %v9461, %v9523
    %v9528 = vadd.f32 %v9524, %v9526
    %v9529 = vadd.f32 %v9525, %v9527
    %v9530 = vtanh.pop %v9528
    %v9531 = vtanh.pop %v9529
    %v9532 = vmul.f32 %v9506, %v9530
    %v9533 = vmul.f32 %v9521, %v9531
    %v9534 = vpack.c.bf16 %v9533, %v9532
    %v9535 = vxor.u32 %v9400, 2147483648
    %v9536 = vxor.u32 %v9401, 2147483648
    %v9537 = vxor.u32 %v9402, 2147483648
    %v9538 = vxor.u32 %v9403, 2147483648
    %v9539 = vxor.u32 %v9404, 2147483648
    %v9540 = vxor.u32 %v9405, 2147483648
    %v9541 = vmul.f32 %v9535, 1.442695
    %v9542 = vpow.pop %v9541
    %v9543 = vmul.f32 %v9536, 1.442695
    %v9544 = vpow.pop %v9543
    %v9545 = vmul.f32 %v9537, 1.442695
    %v9546 = vpow.pop %v9545
    %v9547 = vmul.f32 %v9538, 1.442695
    %v9548 = vpow.pop %v9547
    %v9549 = vmul.f32 %v9539, 1.442695
    %v9550 = vpow.pop %v9549
    %v9551 = vmul.f32 %v9540, 1.442695
    %v9552 = vpow.pop %v9551
    %v9553 = vadd.f32 %v9542, 1.0
    %v9554 = vadd.f32 %v9544, 1.0
    %v9555 = vadd.f32 %v9546, 1.0
    %v9556 = vadd.f32 %v9548, 1.0
    %v9557 = vadd.f32 %v9550, 1.0
    %v9558 = vadd.f32 %v9552, 1.0
    %v9559 = vrcp.pop %v9553
    %v9560 = vmul.f32 %v9553, %v9559
    %v9561 = vsub.f32 1.0, %v9560
    %v9562 = vmul.f32 %v9559, %v9561
    %v9563 = vadd.f32 %v9559, %v9562
    %vm9564 = vweird.f32 %v9553
    %vm9565 = vweird.f32 %v9559
    %vm9566 = vmor %vm9564, %vm9565
    %v9567 = vsel %vm9566, %v9559, %v9563
    %v9568 = vand.u32 2147483647, %v9553
    %vm9569 = vcmp.eq.f32.partialorder %v9568, 8.507059e+37
    %v9570 = vand.u32 %v9553, 2147483648
    %v9571 = vor.u32 1.1754944e-38, %v9570
    %v9572 = vsel %vm9569, %v9571, %v9567
    %v9573 = vmul.f32 1.0, %v9572
    %v9574 = vrcp.pop %v9554
    %v9575 = vmul.f32 %v9554, %v9574
    %v9576 = vsub.f32 1.0, %v9575
    %v9577 = vmul.f32 %v9574, %v9576
    %v9578 = vadd.f32 %v9574, %v9577
    %vm9579 = vweird.f32 %v9554
    %vm9580 = vweird.f32 %v9574
    %vm9581 = vmor %vm9579, %vm9580
    %v9582 = vsel %vm9581, %v9574, %v9578
    %v9583 = vand.u32 2147483647, %v9554
    %vm9584 = vcmp.eq.f32.partialorder %v9583, 8.507059e+37
    %v9585 = vand.u32 %v9554, 2147483648
    %v9586 = vor.u32 1.1754944e-38, %v9585
    %v9587 = vsel %vm9584, %v9586, %v9582
    %v9588 = vmul.f32 1.0, %v9587
    %v9589 = vrcp.pop %v9555
    %v9590 = vmul.f32 %v9555, %v9589
    %v9591 = vsub.f32 1.0, %v9590
    %v9592 = vmul.f32 %v9589, %v9591
    %v9593 = vadd.f32 %v9589, %v9592
    %vm9594 = vweird.f32 %v9555
    %vm9595 = vweird.f32 %v9589
    %vm9596 = vmor %vm9594, %vm9595
    %v9597 = vsel %vm9596, %v9589, %v9593
    %v9598 = vand.u32 2147483647, %v9555
    %vm9599 = vcmp.eq.f32.partialorder %v9598, 8.507059e+37
    %v9600 = vand.u32 %v9555, 2147483648
    %v9601 = vor.u32 1.1754944e-38, %v9600
    %v9602 = vsel %vm9599, %v9601, %v9597
    %v9603 = vmul.f32 1.0, %v9602
    %v9604 = vrcp.pop %v9556
    %v9605 = vmul.f32 %v9556, %v9604
    %v9606 = vsub.f32 1.0, %v9605
    %v9607 = vmul.f32 %v9604, %v9606
    %v9608 = vadd.f32 %v9604, %v9607
    %vm9609 = vweird.f32 %v9556
    %vm9610 = vweird.f32 %v9604
    %vm9611 = vmor %vm9609, %vm9610
    %v9612 = vsel %vm9611, %v9604, %v9608
    %v9613 = vand.u32 2147483647, %v9556
    %vm9614 = vcmp.eq.f32.partialorder %v9613, 8.507059e+37
    %v9615 = vand.u32 %v9556, 2147483648
    %v9616 = vor.u32 1.1754944e-38, %v9615
    %v9617 = vsel %vm9614, %v9616, %v9612
    %v9618 = vmul.f32 1.0, %v9617
    %v9619 = vrcp.pop %v9557
    %v9620 = vmul.f32 %v9557, %v9619
    %v9621 = vsub.f32 1.0, %v9620
    %v9622 = vmul.f32 %v9619, %v9621
    %v9623 = vadd.f32 %v9619, %v9622
    %vm9624 = vweird.f32 %v9557
    %vm9625 = vweird.f32 %v9619
    %vm9626 = vmor %vm9624, %vm9625
    %v9627 = vsel %vm9626, %v9619, %v9623
    %v9628 = vand.u32 2147483647, %v9557
    %vm9629 = vcmp.eq.f32.partialorder %v9628, 8.507059e+37
    %v9630 = vand.u32 %v9557, 2147483648
    %v9631 = vor.u32 1.1754944e-38, %v9630
    %v9632 = vsel %vm9629, %v9631, %v9627
    %v9633 = vmul.f32 1.0, %v9632
    %v9634 = vrcp.pop %v9558
    %v9635 = vmul.f32 %v9558, %v9634
    %v9636 = vsub.f32 1.0, %v9635
    %v9637 = vmul.f32 %v9634, %v9636
    %v9638 = vadd.f32 %v9634, %v9637
    %vm9639 = vweird.f32 %v9558
    %vm9640 = vweird.f32 %v9634
    %vm9641 = vmor %vm9639, %vm9640
    %v9642 = vsel %vm9641, %v9634, %v9638
    %v9643 = vand.u32 2147483647, %v9558
    %vm9644 = vcmp.eq.f32.partialorder %v9643, 8.507059e+37
    %v9645 = vand.u32 %v9558, 2147483648
    %v9646 = vor.u32 1.1754944e-38, %v9645
    %v9647 = vsel %vm9644, %v9646, %v9642
    %v9648 = vmul.f32 1.0, %v9647
    %v9649 = vtanh.pop %v9406
    %v9650 = vtanh.pop %v9407
    %v9651 = vmul.f32 %v9603, %v8732
    %v9652 = vmul.f32 %v9618, %v8733
    %v9653 = vmul.f32 %v9573, %v9649
    %v9654 = vmul.f32 %v9588, %v9650
    %v9655 = vadd.f32 %v9651, %v9653
    %v9656 = vadd.f32 %v9652, %v9654
    %v9657 = vtanh.pop %v9655
    %v9658 = vtanh.pop %v9656
    %v9659 = vmul.f32 %v9633, %v9657
    %v9660 = vmul.f32 %v9648, %v9658
    %v9661 = vpack.c.bf16 %v9660, %v9659
    %v9663 = vunpack.c.l.b16 %v9661
    %v9664 = vunpack.c.h.b16 %v9661
    %v9665 = vpack.c.b16 %v9663, %v9663
    %v9666 = vpack.c.b16 %v9664, %v9664
    %v9670 = vunpack.c.l.b16 %v9534
    %v9671 = vunpack.c.h.b16 %v9534
    %v9672 = vpack.c.b16 %v9670, %v9670
    %v9673 = vpack.c.b16 %v9671, %v9671
    %9676 = vmatpush.bf16.msra.mxu0 %v4605
    %9677 = vmatpush.bf16.msra.mxu0 %v4597
    %9678 = vmatpush.bf16.msra.mxu0 %v4589
    %9679 = vmatpush.bf16.msra.mxu0 %v4581
    %9680 = vmatpush.bf16.msra.mxu0 %v4573
    %9681 = vmatpush.bf16.msra.mxu0 %v4565
    %9682 = vmatpush.bf16.msra.mxu0 %v4557
    %9683 = vmatpush.bf16.msra.mxu0 %v4549
    %9684 = vmatmul.bf16.gmra.mxu0 %v9665
    %v9685 = vpop.f32.mrf.mxu0
    %v9686 = vadd.f32 %v534, %v9685
    %v9687 = vpop.f32.mrf.mxu0
    %9688 = vdwg.mxu0
    %9689 = vmatpush.bf16.msra.mxu0 %v4669
    %9690 = vmatpush.bf16.msra.mxu0 %v4661
    %9691 = vmatpush.bf16.msra.mxu0 %v4653
    %9692 = vmatpush.bf16.msra.mxu0 %v4645
    %9693 = vmatpush.bf16.msra.mxu0 %v4637
    %9694 = vmatpush.bf16.msra.mxu0 %v4629
    %9695 = vmatpush.bf16.msra.mxu0 %v4621
    %9696 = vmatpush.bf16.msra.mxu0 %v4613
    %9697 = vmatmul.bf16.gmra.mxu0 %v9666
    %v9698 = vpop.f32.mrf.mxu0
    %v9699 = vadd.f32 %v9686, %v9698
    %v9700 = vpop.f32.mrf.mxu0
    %9701 = vdwg.mxu0
    %9702 = vmatpush.bf16.msra.mxu0 %v4733
    %9703 = vmatpush.bf16.msra.mxu0 %v4725
    %9704 = vmatpush.bf16.msra.mxu0 %v4717
    %9705 = vmatpush.bf16.msra.mxu0 %v4709
    %9706 = vmatpush.bf16.msra.mxu0 %v4701
    %9707 = vmatpush.bf16.msra.mxu0 %v4693
    %9708 = vmatpush.bf16.msra.mxu0 %v4685
    %9709 = vmatpush.bf16.msra.mxu0 %v4677
    %9710 = vmatmul.bf16.gmra.mxu0 %v9672
    %v9711 = vpop.f32.mrf.mxu0
    %v9712 = vadd.f32 %v9699, %v9711
    %v9713 = vpop.f32.mrf.mxu0
    %9714 = vdwg.mxu0
    %9715 = vmatpush.bf16.msra.mxu0 %v4797
    %9716 = vmatpush.bf16.msra.mxu0 %v4789
    %9717 = vmatpush.bf16.msra.mxu0 %v4781
    %9718 = vmatpush.bf16.msra.mxu0 %v4773
    %9719 = vmatpush.bf16.msra.mxu0 %v4765
    %9720 = vmatpush.bf16.msra.mxu0 %v4757
    %9721 = vmatpush.bf16.msra.mxu0 %v4749
    %9722 = vmatpush.bf16.msra.mxu0 %v4741
    %9723 = vmatmul.bf16.gmra.mxu0 %v9673
    %v9724 = vpop.f32.mrf.mxu0
    %v9725 = vadd.f32 %v9712, %v9724
    %v9726 = vpop.f32.mrf.mxu0
    %9727 = vdwg.mxu0
    %9728 = vmatpush.bf16.msra.mxu0 %v4606
    %9729 = vmatpush.bf16.msra.mxu0 %v4598
    %9730 = vmatpush.bf16.msra.mxu0 %v4590
    %9731 = vmatpush.bf16.msra.mxu0 %v4582
    %9732 = vmatpush.bf16.msra.mxu0 %v4574
    %9733 = vmatpush.bf16.msra.mxu0 %v4566
    %9734 = vmatpush.bf16.msra.mxu0 %v4558
    %9735 = vmatpush.bf16.msra.mxu0 %v4550
    %9736 = vmatmul.bf16.gmra.mxu0 %v9665
    %v9737 = vpop.f32.mrf.mxu0
    %v9738 = vadd.f32 %v535, %v9737
    %v9739 = vpop.f32.mrf.mxu0
    %9740 = vdwg.mxu0
    %9741 = vmatpush.bf16.msra.mxu0 %v4670
    %9742 = vmatpush.bf16.msra.mxu0 %v4662
    %9743 = vmatpush.bf16.msra.mxu0 %v4654
    %9744 = vmatpush.bf16.msra.mxu0 %v4646
    %9745 = vmatpush.bf16.msra.mxu0 %v4638
    %9746 = vmatpush.bf16.msra.mxu0 %v4630
    %9747 = vmatpush.bf16.msra.mxu0 %v4622
    %9748 = vmatpush.bf16.msra.mxu0 %v4614
    %9749 = vmatmul.bf16.gmra.mxu0 %v9666
    %v9750 = vpop.f32.mrf.mxu0
    %v9751 = vadd.f32 %v9738, %v9750
    %v9752 = vpop.f32.mrf.mxu0
    %9753 = vdwg.mxu0
    %9754 = vmatpush.bf16.msra.mxu0 %v4734
    %9755 = vmatpush.bf16.msra.mxu0 %v4726
    %9756 = vmatpush.bf16.msra.mxu0 %v4718
    %9757 = vmatpush.bf16.msra.mxu0 %v4710
    %9758 = vmatpush.bf16.msra.mxu0 %v4702
    %9759 = vmatpush.bf16.msra.mxu0 %v4694
    %9760 = vmatpush.bf16.msra.mxu0 %v4686
    %9761 = vmatpush.bf16.msra.mxu0 %v4678
    %9762 = vmatmul.bf16.gmra.mxu0 %v9672
    %v9763 = vpop.f32.mrf.mxu0
    %v9764 = vadd.f32 %v9751, %v9763
    %v9765 = vpop.f32.mrf.mxu0
    %9766 = vdwg.mxu0
    %9767 = vmatpush.bf16.msra.mxu0 %v4798
    %9768 = vmatpush.bf16.msra.mxu0 %v4790
    %9769 = vmatpush.bf16.msra.mxu0 %v4782
    %9770 = vmatpush.bf16.msra.mxu0 %v4774
    %9771 = vmatpush.bf16.msra.mxu0 %v4766
    %9772 = vmatpush.bf16.msra.mxu0 %v4758
    %9773 = vmatpush.bf16.msra.mxu0 %v4750
    %9774 = vmatpush.bf16.msra.mxu0 %v4742
    %9775 = vmatmul.bf16.gmra.mxu0 %v9673
    %v9776 = vpop.f32.mrf.mxu0
    %v9777 = vadd.f32 %v9764, %v9776
    %v9778 = vpop.f32.mrf.mxu0
    %9779 = vdwg.mxu0
    %9780 = vmatpush.bf16.msra.mxu0 %v4607
    %9781 = vmatpush.bf16.msra.mxu0 %v4599
    %9782 = vmatpush.bf16.msra.mxu0 %v4591
    %9783 = vmatpush.bf16.msra.mxu0 %v4583
    %9784 = vmatpush.bf16.msra.mxu0 %v4575
    %9785 = vmatpush.bf16.msra.mxu0 %v4567
    %9786 = vmatpush.bf16.msra.mxu0 %v4559
    %9787 = vmatpush.bf16.msra.mxu0 %v4551
    %9788 = vmatmul.bf16.gmra.mxu0 %v9665
    %v9789 = vpop.f32.mrf.mxu0
    %v9790 = vadd.f32 %v536, %v9789
    %v9791 = vpop.f32.mrf.mxu0
    %9792 = vdwg.mxu0
    %9793 = vmatpush.bf16.msra.mxu0 %v4671
    %9794 = vmatpush.bf16.msra.mxu0 %v4663
    %9795 = vmatpush.bf16.msra.mxu0 %v4655
    %9796 = vmatpush.bf16.msra.mxu0 %v4647
    %9797 = vmatpush.bf16.msra.mxu0 %v4639
    %9798 = vmatpush.bf16.msra.mxu0 %v4631
    %9799 = vmatpush.bf16.msra.mxu0 %v4623
    %9800 = vmatpush.bf16.msra.mxu0 %v4615
    %9801 = vmatmul.bf16.gmra.mxu0 %v9666
    %v9802 = vpop.f32.mrf.mxu0
    %v9803 = vadd.f32 %v9790, %v9802
    %v9804 = vpop.f32.mrf.mxu0
    %9805 = vdwg.mxu0
    %9806 = vmatpush.bf16.msra.mxu0 %v4735
    %9807 = vmatpush.bf16.msra.mxu0 %v4727
    %9808 = vmatpush.bf16.msra.mxu0 %v4719
    %9809 = vmatpush.bf16.msra.mxu0 %v4711
    %9810 = vmatpush.bf16.msra.mxu0 %v4703
    %9811 = vmatpush.bf16.msra.mxu0 %v4695
    %9812 = vmatpush.bf16.msra.mxu0 %v4687
    %9813 = vmatpush.bf16.msra.mxu0 %v4679
    %9814 = vmatmul.bf16.gmra.mxu0 %v9672
    %v9815 = vpop.f32.mrf.mxu0
    %v9816 = vadd.f32 %v9803, %v9815
    %v9817 = vpop.f32.mrf.mxu0
    %9818 = vdwg.mxu0
    %9819 = vmatpush.bf16.msra.mxu0 %v4799
    %9820 = vmatpush.bf16.msra.mxu0 %v4791
    %9821 = vmatpush.bf16.msra.mxu0 %v4783
    %9822 = vmatpush.bf16.msra.mxu0 %v4775
    %9823 = vmatpush.bf16.msra.mxu0 %v4767
    %9824 = vmatpush.bf16.msra.mxu0 %v4759
    %9825 = vmatpush.bf16.msra.mxu0 %v4751
    %9826 = vmatpush.bf16.msra.mxu0 %v4743
    %9827 = vmatmul.bf16.gmra.mxu0 %v9673
    %v9828 = vpop.f32.mrf.mxu0
    %v9829 = vadd.f32 %v9816, %v9828
    %v9830 = vpop.f32.mrf.mxu0
    %9831 = vdwg.mxu0
    %9832 = vmatpush.bf16.msra.mxu0 %v4608
    %9833 = vmatpush.bf16.msra.mxu0 %v4600
    %9834 = vmatpush.bf16.msra.mxu0 %v4592
    %9835 = vmatpush.bf16.msra.mxu0 %v4584
    %9836 = vmatpush.bf16.msra.mxu0 %v4576
    %9837 = vmatpush.bf16.msra.mxu0 %v4568
    %9838 = vmatpush.bf16.msra.mxu0 %v4560
    %9839 = vmatpush.bf16.msra.mxu0 %v4552
    %9840 = vmatmul.bf16.gmra.mxu0 %v9665
    %v9841 = vpop.f32.mrf.mxu0
    %v9842 = vadd.f32 %v537, %v9841
    %v9843 = vpop.f32.mrf.mxu0
    %9844 = vdwg.mxu0
    %9845 = vmatpush.bf16.msra.mxu0 %v4672
    %9846 = vmatpush.bf16.msra.mxu0 %v4664
    %9847 = vmatpush.bf16.msra.mxu0 %v4656
    %9848 = vmatpush.bf16.msra.mxu0 %v4648
    %9849 = vmatpush.bf16.msra.mxu0 %v4640
    %9850 = vmatpush.bf16.msra.mxu0 %v4632
    %9851 = vmatpush.bf16.msra.mxu0 %v4624
    %9852 = vmatpush.bf16.msra.mxu0 %v4616
    %9853 = vmatmul.bf16.gmra.mxu0 %v9666
    %v9854 = vpop.f32.mrf.mxu0
    %v9855 = vadd.f32 %v9842, %v9854
    %v9856 = vpop.f32.mrf.mxu0
    %9857 = vdwg.mxu0
    %9858 = vmatpush.bf16.msra.mxu0 %v4736
    %9859 = vmatpush.bf16.msra.mxu0 %v4728
    %9860 = vmatpush.bf16.msra.mxu0 %v4720
    %9861 = vmatpush.bf16.msra.mxu0 %v4712
    %9862 = vmatpush.bf16.msra.mxu0 %v4704
    %9863 = vmatpush.bf16.msra.mxu0 %v4696
    %9864 = vmatpush.bf16.msra.mxu0 %v4688
    %9865 = vmatpush.bf16.msra.mxu0 %v4680
    %9866 = vmatmul.bf16.gmra.mxu0 %v9672
    %v9867 = vpop.f32.mrf.mxu0
    %v9868 = vadd.f32 %v9855, %v9867
    %v9869 = vpop.f32.mrf.mxu0
    %9870 = vdwg.mxu0
    %9871 = vmatpush.bf16.msra.mxu0 %v4800
    %9872 = vmatpush.bf16.msra.mxu0 %v4792
    %9873 = vmatpush.bf16.msra.mxu0 %v4784
    %9874 = vmatpush.bf16.msra.mxu0 %v4776
    %9875 = vmatpush.bf16.msra.mxu0 %v4768
    %9876 = vmatpush.bf16.msra.mxu0 %v4760
    %9877 = vmatpush.bf16.msra.mxu0 %v4752
    %9878 = vmatpush.bf16.msra.mxu0 %v4744
    %9879 = vmatmul.bf16.gmra.mxu0 %v9673
    %v9880 = vpop.f32.mrf.mxu0
    %v9881 = vadd.f32 %v9868, %v9880
    %v9882 = vpop.f32.mrf.mxu0
    %9883 = vdwg.mxu0
    %9884 = vmatpush.bf16.msra.mxu0 %v4609
    %9885 = vmatpush.bf16.msra.mxu0 %v4601
    %9886 = vmatpush.bf16.msra.mxu0 %v4593
    %9887 = vmatpush.bf16.msra.mxu0 %v4585
    %9888 = vmatpush.bf16.msra.mxu0 %v4577
    %9889 = vmatpush.bf16.msra.mxu0 %v4569
    %9890 = vmatpush.bf16.msra.mxu0 %v4561
    %9891 = vmatpush.bf16.msra.mxu0 %v4553
    %9892 = vmatmul.bf16.gmra.mxu0 %v9665
    %v9893 = vpop.f32.mrf.mxu0
    %v9894 = vadd.f32 %v538, %v9893
    %v9895 = vpop.f32.mrf.mxu0
    %9896 = vdwg.mxu0
    %9897 = vmatpush.bf16.msra.mxu0 %v4673
    %9898 = vmatpush.bf16.msra.mxu0 %v4665
    %9899 = vmatpush.bf16.msra.mxu0 %v4657
    %9900 = vmatpush.bf16.msra.mxu0 %v4649
    %9901 = vmatpush.bf16.msra.mxu0 %v4641
    %9902 = vmatpush.bf16.msra.mxu0 %v4633
    %9903 = vmatpush.bf16.msra.mxu0 %v4625
    %9904 = vmatpush.bf16.msra.mxu0 %v4617
    %9905 = vmatmul.bf16.gmra.mxu0 %v9666
    %v9906 = vpop.f32.mrf.mxu0
    %v9907 = vadd.f32 %v9894, %v9906
    %v9908 = vpop.f32.mrf.mxu0
    %9909 = vdwg.mxu0
    %9910 = vmatpush.bf16.msra.mxu0 %v4737
    %9911 = vmatpush.bf16.msra.mxu0 %v4729
    %9912 = vmatpush.bf16.msra.mxu0 %v4721
    %9913 = vmatpush.bf16.msra.mxu0 %v4713
    %9914 = vmatpush.bf16.msra.mxu0 %v4705
    %9915 = vmatpush.bf16.msra.mxu0 %v4697
    %9916 = vmatpush.bf16.msra.mxu0 %v4689
    %9917 = vmatpush.bf16.msra.mxu0 %v4681
    %9918 = vmatmul.bf16.gmra.mxu0 %v9672
    %v9919 = vpop.f32.mrf.mxu0
    %v9920 = vadd.f32 %v9907, %v9919
    %v9921 = vpop.f32.mrf.mxu0
    %9922 = vdwg.mxu0
    %9923 = vmatpush.bf16.msra.mxu0 %v4801
    %9924 = vmatpush.bf16.msra.mxu0 %v4793
    %9925 = vmatpush.bf16.msra.mxu0 %v4785
    %9926 = vmatpush.bf16.msra.mxu0 %v4777
    %9927 = vmatpush.bf16.msra.mxu0 %v4769
    %9928 = vmatpush.bf16.msra.mxu0 %v4761
    %9929 = vmatpush.bf16.msra.mxu0 %v4753
    %9930 = vmatpush.bf16.msra.mxu0 %v4745
    %9931 = vmatmul.bf16.gmra.mxu0 %v9673
    %v9932 = vpop.f32.mrf.mxu0
    %v9933 = vadd.f32 %v9920, %v9932
    %v9934 = vpop.f32.mrf.mxu0
    %9935 = vdwg.mxu0
    %9936 = vmatpush.bf16.msra.mxu0 %v4610
    %9937 = vmatpush.bf16.msra.mxu0 %v4602
    %9938 = vmatpush.bf16.msra.mxu0 %v4594
    %9939 = vmatpush.bf16.msra.mxu0 %v4586
    %9940 = vmatpush.bf16.msra.mxu0 %v4578
    %9941 = vmatpush.bf16.msra.mxu0 %v4570
    %9942 = vmatpush.bf16.msra.mxu0 %v4562
    %9943 = vmatpush.bf16.msra.mxu0 %v4554
    %9944 = vmatmul.bf16.gmra.mxu0 %v9665
    %v9945 = vpop.f32.mrf.mxu0
    %v9946 = vadd.f32 %v539, %v9945
    %v9947 = vpop.f32.mrf.mxu0
    %9948 = vdwg.mxu0
    %9949 = vmatpush.bf16.msra.mxu0 %v4674
    %9950 = vmatpush.bf16.msra.mxu0 %v4666
    %9951 = vmatpush.bf16.msra.mxu0 %v4658
    %9952 = vmatpush.bf16.msra.mxu0 %v4650
    %9953 = vmatpush.bf16.msra.mxu0 %v4642
    %9954 = vmatpush.bf16.msra.mxu0 %v4634
    %9955 = vmatpush.bf16.msra.mxu0 %v4626
    %9956 = vmatpush.bf16.msra.mxu0 %v4618
    %9957 = vmatmul.bf16.gmra.mxu0 %v9666
    %v9958 = vpop.f32.mrf.mxu0
    %v9959 = vadd.f32 %v9946, %v9958
    %v9960 = vpop.f32.mrf.mxu0
    %9961 = vdwg.mxu0
    %9962 = vmatpush.bf16.msra.mxu0 %v4738
    %9963 = vmatpush.bf16.msra.mxu0 %v4730
    %9964 = vmatpush.bf16.msra.mxu0 %v4722
    %9965 = vmatpush.bf16.msra.mxu0 %v4714
    %9966 = vmatpush.bf16.msra.mxu0 %v4706
    %9967 = vmatpush.bf16.msra.mxu0 %v4698
    %9968 = vmatpush.bf16.msra.mxu0 %v4690
    %9969 = vmatpush.bf16.msra.mxu0 %v4682
    %9970 = vmatmul.bf16.gmra.mxu0 %v9672
    %v9971 = vpop.f32.mrf.mxu0
    %v9972 = vadd.f32 %v9959, %v9971
    %v9973 = vpop.f32.mrf.mxu0
    %9974 = vdwg.mxu0
    %9975 = vmatpush.bf16.msra.mxu0 %v4802
    %9976 = vmatpush.bf16.msra.mxu0 %v4794
    %9977 = vmatpush.bf16.msra.mxu0 %v4786
    %9978 = vmatpush.bf16.msra.mxu0 %v4778
    %9979 = vmatpush.bf16.msra.mxu0 %v4770
    %9980 = vmatpush.bf16.msra.mxu0 %v4762
    %9981 = vmatpush.bf16.msra.mxu0 %v4754
    %9982 = vmatpush.bf16.msra.mxu0 %v4746
    %9983 = vmatmul.bf16.gmra.mxu0 %v9673
    %v9984 = vpop.f32.mrf.mxu0
    %v9985 = vadd.f32 %v9972, %v9984
    %v9986 = vpop.f32.mrf.mxu0
    %9987 = vdwg.mxu0
    %9988 = vmatpush.bf16.msra.mxu0 %v4611
    %9989 = vmatpush.bf16.msra.mxu0 %v4603
    %9990 = vmatpush.bf16.msra.mxu0 %v4595
    %9991 = vmatpush.bf16.msra.mxu0 %v4587
    %9992 = vmatpush.bf16.msra.mxu0 %v4579
    %9993 = vmatpush.bf16.msra.mxu0 %v4571
    %9994 = vmatpush.bf16.msra.mxu0 %v4563
    %9995 = vmatpush.bf16.msra.mxu0 %v4555
    %9996 = vmatmul.bf16.gmra.mxu0 %v9665
    %v9997 = vpop.f32.mrf.mxu0
    %v9998 = vadd.f32 %v540, %v9997
    %v9999 = vpop.f32.mrf.mxu0
    %10000 = vdwg.mxu0
    %10001 = vmatpush.bf16.msra.mxu0 %v4675
    %10002 = vmatpush.bf16.msra.mxu0 %v4667
    %10003 = vmatpush.bf16.msra.mxu0 %v4659
    %10004 = vmatpush.bf16.msra.mxu0 %v4651
    %10005 = vmatpush.bf16.msra.mxu0 %v4643
    %10006 = vmatpush.bf16.msra.mxu0 %v4635
    %10007 = vmatpush.bf16.msra.mxu0 %v4627
    %10008 = vmatpush.bf16.msra.mxu0 %v4619
    %10009 = vmatmul.bf16.gmra.mxu0 %v9666
    %v10010 = vpop.f32.mrf.mxu0
    %v10011 = vadd.f32 %v9998, %v10010
    %v10012 = vpop.f32.mrf.mxu0
    %10013 = vdwg.mxu0
    %10014 = vmatpush.bf16.msra.mxu0 %v4739
    %10015 = vmatpush.bf16.msra.mxu0 %v4731
    %10016 = vmatpush.bf16.msra.mxu0 %v4723
    %10017 = vmatpush.bf16.msra.mxu0 %v4715
    %10018 = vmatpush.bf16.msra.mxu0 %v4707
    %10019 = vmatpush.bf16.msra.mxu0 %v4699
    %10020 = vmatpush.bf16.msra.mxu0 %v4691
    %10021 = vmatpush.bf16.msra.mxu0 %v4683
    %10022 = vmatmul.bf16.gmra.mxu0 %v9672
    %v10023 = vpop.f32.mrf.mxu0
    %v10024 = vadd.f32 %v10011, %v10023
    %v10025 = vpop.f32.mrf.mxu0
    %10026 = vdwg.mxu0
    %10027 = vmatpush.bf16.msra.mxu0 %v4803
    %10028 = vmatpush.bf16.msra.mxu0 %v4795
    %10029 = vmatpush.bf16.msra.mxu0 %v4787
    %10030 = vmatpush.bf16.msra.mxu0 %v4779
    %10031 = vmatpush.bf16.msra.mxu0 %v4771
    %10032 = vmatpush.bf16.msra.mxu0 %v4763
    %10033 = vmatpush.bf16.msra.mxu0 %v4755
    %10034 = vmatpush.bf16.msra.mxu0 %v4747
    %10035 = vmatmul.bf16.gmra.mxu0 %v9673
    %v10036 = vpop.f32.mrf.mxu0
    %v10037 = vadd.f32 %v10024, %v10036
    %v10038 = vpop.f32.mrf.mxu0
    %10039 = vdwg.mxu0
    %10040 = vmatpush.bf16.msra.mxu0 %v4612
    %10041 = vmatpush.bf16.msra.mxu0 %v4604
    %10042 = vmatpush.bf16.msra.mxu0 %v4596
    %10043 = vmatpush.bf16.msra.mxu0 %v4588
    %10044 = vmatpush.bf16.msra.mxu0 %v4580
    %10045 = vmatpush.bf16.msra.mxu0 %v4572
    %10046 = vmatpush.bf16.msra.mxu0 %v4564
    %10047 = vmatpush.bf16.msra.mxu0 %v4556
    %10048 = vmatmul.bf16.gmra.mxu0 %v9665
    %v10049 = vpop.f32.mrf.mxu0
    %v10050 = vadd.f32 %v541, %v10049
    %v10051 = vpop.f32.mrf.mxu0
    %10052 = vdwg.mxu0
    %10053 = vmatpush.bf16.msra.mxu0 %v4676
    %10054 = vmatpush.bf16.msra.mxu0 %v4668
    %10055 = vmatpush.bf16.msra.mxu0 %v4660
    %10056 = vmatpush.bf16.msra.mxu0 %v4652
    %10057 = vmatpush.bf16.msra.mxu0 %v4644
    %10058 = vmatpush.bf16.msra.mxu0 %v4636
    %10059 = vmatpush.bf16.msra.mxu0 %v4628
    %10060 = vmatpush.bf16.msra.mxu0 %v4620
    %10061 = vmatmul.bf16.gmra.mxu0 %v9666
    %v10062 = vpop.f32.mrf.mxu0
    %v10063 = vadd.f32 %v10050, %v10062
    %v10064 = vpop.f32.mrf.mxu0
    %10065 = vdwg.mxu0
    %10066 = vmatpush.bf16.msra.mxu0 %v4740
    %10067 = vmatpush.bf16.msra.mxu0 %v4732
    %10068 = vmatpush.bf16.msra.mxu0 %v4724
    %10069 = vmatpush.bf16.msra.mxu0 %v4716
    %10070 = vmatpush.bf16.msra.mxu0 %v4708
    %10071 = vmatpush.bf16.msra.mxu0 %v4700
    %10072 = vmatpush.bf16.msra.mxu0 %v4692
    %10073 = vmatpush.bf16.msra.mxu0 %v4684
    %10074 = vmatmul.bf16.gmra.mxu0 %v9672
    %v10075 = vpop.f32.mrf.mxu0
    %v10076 = vadd.f32 %v10063, %v10075
    %v10077 = vpop.f32.mrf.mxu0
    %10078 = vdwg.mxu0
    %10079 = vmatpush.bf16.msra.mxu0 %v4804
    %10080 = vmatpush.bf16.msra.mxu0 %v4796
    %10081 = vmatpush.bf16.msra.mxu0 %v4788
    %10082 = vmatpush.bf16.msra.mxu0 %v4780
    %10083 = vmatpush.bf16.msra.mxu0 %v4772
    %10084 = vmatpush.bf16.msra.mxu0 %v4764
    %10085 = vmatpush.bf16.msra.mxu0 %v4756
    %10086 = vmatpush.bf16.msra.mxu0 %v4748
    %10087 = vmatmul.bf16.gmra.mxu0 %v9673
    %v10088 = vpop.f32.mrf.mxu0
    %v10089 = vadd.f32 %v10076, %v10088
    %v10090 = vpop.f32.mrf.mxu0
    %10091 = vdwg.mxu0
    %s10092 = scalar_lea.vmem %s0, 14
    %v10093 = vld [vmem:[%s10092] sm:$0x3]
    %10095 = vset.pattern.permute.xlu0 0
    %10096 = vperm.xlu0 %10095, %v10093
    %v10097 = vpop.permute.xlu0 %10096
    %v10099 = vmul.f32 %v10097, %v90
    %v10100 = vmul.f32 %v10097, %v91
    %v10101 = vmul.f32 %v10097, %v92
    %v10102 = vmul.f32 %v10097, %v93
    %v10103 = vmul.f32 %v10097, %v94
    %v10104 = vmul.f32 %v10097, %v95
    %v10105 = vmul.f32 %v10097, %v96
    %v10106 = vmul.f32 %v10097, %v97
    %v10107 = vadd.f32 %v10099, %v115
    %v10108 = vadd.f32 %v10100, %v116
    %v10109 = vadd.f32 %v10101, %v117
    %v10110 = vadd.f32 %v10102, %v118
    %v10111 = vadd.f32 %v10103, %v119
    %v10112 = vadd.f32 %v10104, %v120
    %v10113 = vadd.f32 %v10105, %v121
    %v10114 = vadd.f32 %v10106, %v122
    %10115 = vmatpush.bf16.msra.mxu0 %v2841
    %10116 = vmatpush.bf16.msra.mxu0 %v2833
    %10117 = vmatpush.bf16.msra.mxu0 %v2825
    %10118 = vmatpush.bf16.msra.mxu0 %v2817
    %10119 = vmatpush.bf16.msra.mxu0 %v2809
    %10120 = vmatpush.bf16.msra.mxu0 %v2801
    %10121 = vmatpush.bf16.msra.mxu0 %v2793
    %10122 = vmatpush.bf16.msra.mxu0 %v2785
    %10123 = vmatmul.bf16.gmra.mxu0 %v9665
    %v10124 = vpop.f32.mrf.mxu0
    %v10125 = vadd.f32 0.0, %v10124
    %v10126 = vpop.f32.mrf.mxu0
    %10127 = vdwg.mxu0
    %10128 = vmatpush.bf16.msra.mxu0 %v2905
    %10129 = vmatpush.bf16.msra.mxu0 %v2897
    %10130 = vmatpush.bf16.msra.mxu0 %v2889
    %10131 = vmatpush.bf16.msra.mxu0 %v2881
    %10132 = vmatpush.bf16.msra.mxu0 %v2873
    %10133 = vmatpush.bf16.msra.mxu0 %v2865
    %10134 = vmatpush.bf16.msra.mxu0 %v2857
    %10135 = vmatpush.bf16.msra.mxu0 %v2849
    %10136 = vmatmul.bf16.gmra.mxu0 %v9666
    %v10137 = vpop.f32.mrf.mxu0
    %v10138 = vadd.f32 %v10125, %v10137
    %v10139 = vpop.f32.mrf.mxu0
    %10140 = vdwg.mxu0
    %10141 = vmatpush.bf16.msra.mxu0 %v2842
    %10142 = vmatpush.bf16.msra.mxu0 %v2834
    %10143 = vmatpush.bf16.msra.mxu0 %v2826
    %10144 = vmatpush.bf16.msra.mxu0 %v2818
    %10145 = vmatpush.bf16.msra.mxu0 %v2810
    %10146 = vmatpush.bf16.msra.mxu0 %v2802
    %10147 = vmatpush.bf16.msra.mxu0 %v2794
    %10148 = vmatpush.bf16.msra.mxu0 %v2786
    %10149 = vmatmul.bf16.gmra.mxu0 %v9665
    %v10150 = vpop.f32.mrf.mxu0
    %v10151 = vadd.f32 0.0, %v10150
    %v10152 = vpop.f32.mrf.mxu0
    %10153 = vdwg.mxu0
    %10154 = vmatpush.bf16.msra.mxu0 %v2906
    %10155 = vmatpush.bf16.msra.mxu0 %v2898
    %10156 = vmatpush.bf16.msra.mxu0 %v2890
    %10157 = vmatpush.bf16.msra.mxu0 %v2882
    %10158 = vmatpush.bf16.msra.mxu0 %v2874
    %10159 = vmatpush.bf16.msra.mxu0 %v2866
    %10160 = vmatpush.bf16.msra.mxu0 %v2858
    %10161 = vmatpush.bf16.msra.mxu0 %v2850
    %10162 = vmatmul.bf16.gmra.mxu0 %v9666
    %v10163 = vpop.f32.mrf.mxu0
    %v10164 = vadd.f32 %v10151, %v10163
    %v10165 = vpop.f32.mrf.mxu0
    %10166 = vdwg.mxu0
    %10167 = vmatpush.bf16.msra.mxu0 %v2843
    %10168 = vmatpush.bf16.msra.mxu0 %v2835
    %10169 = vmatpush.bf16.msra.mxu0 %v2827
    %10170 = vmatpush.bf16.msra.mxu0 %v2819
    %10171 = vmatpush.bf16.msra.mxu0 %v2811
    %10172 = vmatpush.bf16.msra.mxu0 %v2803
    %10173 = vmatpush.bf16.msra.mxu0 %v2795
    %10174 = vmatpush.bf16.msra.mxu0 %v2787
    %10175 = vmatmul.bf16.gmra.mxu0 %v9665
    %v10176 = vpop.f32.mrf.mxu0
    %v10177 = vadd.f32 0.0, %v10176
    %v10178 = vpop.f32.mrf.mxu0
    %10179 = vdwg.mxu0
    %10180 = vmatpush.bf16.msra.mxu0 %v2907
    %10181 = vmatpush.bf16.msra.mxu0 %v2899
    %10182 = vmatpush.bf16.msra.mxu0 %v2891
    %10183 = vmatpush.bf16.msra.mxu0 %v2883
    %10184 = vmatpush.bf16.msra.mxu0 %v2875
    %10185 = vmatpush.bf16.msra.mxu0 %v2867
    %10186 = vmatpush.bf16.msra.mxu0 %v2859
    %10187 = vmatpush.bf16.msra.mxu0 %v2851
    %10188 = vmatmul.bf16.gmra.mxu0 %v9666
    %v10189 = vpop.f32.mrf.mxu0
    %v10190 = vadd.f32 %v10177, %v10189
    %v10191 = vpop.f32.mrf.mxu0
    %10192 = vdwg.mxu0
    %10193 = vmatpush.bf16.msra.mxu0 %v2844
    %10194 = vmatpush.bf16.msra.mxu0 %v2836
    %10195 = vmatpush.bf16.msra.mxu0 %v2828
    %10196 = vmatpush.bf16.msra.mxu0 %v2820
    %10197 = vmatpush.bf16.msra.mxu0 %v2812
    %10198 = vmatpush.bf16.msra.mxu0 %v2804
    %10199 = vmatpush.bf16.msra.mxu0 %v2796
    %10200 = vmatpush.bf16.msra.mxu0 %v2788
    %10201 = vmatmul.bf16.gmra.mxu0 %v9665
    %v10202 = vpop.f32.mrf.mxu0
    %v10203 = vadd.f32 0.0, %v10202
    %v10204 = vpop.f32.mrf.mxu0
    %10205 = vdwg.mxu0
    %10206 = vmatpush.bf16.msra.mxu0 %v2908
    %10207 = vmatpush.bf16.msra.mxu0 %v2900
    %10208 = vmatpush.bf16.msra.mxu0 %v2892
    %10209 = vmatpush.bf16.msra.mxu0 %v2884
    %10210 = vmatpush.bf16.msra.mxu0 %v2876
    %10211 = vmatpush.bf16.msra.mxu0 %v2868
    %10212 = vmatpush.bf16.msra.mxu0 %v2860
    %10213 = vmatpush.bf16.msra.mxu0 %v2852
    %10214 = vmatmul.bf16.gmra.mxu0 %v9666
    %v10215 = vpop.f32.mrf.mxu0
    %v10216 = vadd.f32 %v10203, %v10215
    %v10217 = vpop.f32.mrf.mxu0
    %10218 = vdwg.mxu0
    %10219 = vmatpush.bf16.msra.mxu0 %v2845
    %10220 = vmatpush.bf16.msra.mxu0 %v2837
    %10221 = vmatpush.bf16.msra.mxu0 %v2829
    %10222 = vmatpush.bf16.msra.mxu0 %v2821
    %10223 = vmatpush.bf16.msra.mxu0 %v2813
    %10224 = vmatpush.bf16.msra.mxu0 %v2805
    %10225 = vmatpush.bf16.msra.mxu0 %v2797
    %10226 = vmatpush.bf16.msra.mxu0 %v2789
    %10227 = vmatmul.bf16.gmra.mxu0 %v9665
    %v10228 = vpop.f32.mrf.mxu0
    %v10229 = vadd.f32 0.0, %v10228
    %v10230 = vpop.f32.mrf.mxu0
    %10231 = vdwg.mxu0
    %10232 = vmatpush.bf16.msra.mxu0 %v2909
    %10233 = vmatpush.bf16.msra.mxu0 %v2901
    %10234 = vmatpush.bf16.msra.mxu0 %v2893
    %10235 = vmatpush.bf16.msra.mxu0 %v2885
    %10236 = vmatpush.bf16.msra.mxu0 %v2877
    %10237 = vmatpush.bf16.msra.mxu0 %v2869
    %10238 = vmatpush.bf16.msra.mxu0 %v2861
    %10239 = vmatpush.bf16.msra.mxu0 %v2853
    %10240 = vmatmul.bf16.gmra.mxu0 %v9666
    %v10241 = vpop.f32.mrf.mxu0
    %v10242 = vadd.f32 %v10229, %v10241
    %v10243 = vpop.f32.mrf.mxu0
    %10244 = vdwg.mxu0
    %10245 = vmatpush.bf16.msra.mxu0 %v2846
    %10246 = vmatpush.bf16.msra.mxu0 %v2838
    %10247 = vmatpush.bf16.msra.mxu0 %v2830
    %10248 = vmatpush.bf16.msra.mxu0 %v2822
    %10249 = vmatpush.bf16.msra.mxu0 %v2814
    %10250 = vmatpush.bf16.msra.mxu0 %v2806
    %10251 = vmatpush.bf16.msra.mxu0 %v2798
    %10252 = vmatpush.bf16.msra.mxu0 %v2790
    %10253 = vmatmul.bf16.gmra.mxu0 %v9665
    %v10254 = vpop.f32.mrf.mxu0
    %v10255 = vadd.f32 0.0, %v10254
    %v10256 = vpop.f32.mrf.mxu0
    %10257 = vdwg.mxu0
    %10258 = vmatpush.bf16.msra.mxu0 %v2910
    %10259 = vmatpush.bf16.msra.mxu0 %v2902
    %10260 = vmatpush.bf16.msra.mxu0 %v2894
    %10261 = vmatpush.bf16.msra.mxu0 %v2886
    %10262 = vmatpush.bf16.msra.mxu0 %v2878
    %10263 = vmatpush.bf16.msra.mxu0 %v2870
    %10264 = vmatpush.bf16.msra.mxu0 %v2862
    %10265 = vmatpush.bf16.msra.mxu0 %v2854
    %10266 = vmatmul.bf16.gmra.mxu0 %v9666
    %v10267 = vpop.f32.mrf.mxu0
    %v10268 = vadd.f32 %v10255, %v10267
    %v10269 = vpop.f32.mrf.mxu0
    %10270 = vdwg.mxu0
    %10271 = vmatpush.bf16.msra.mxu0 %v2847
    %10272 = vmatpush.bf16.msra.mxu0 %v2839
    %10273 = vmatpush.bf16.msra.mxu0 %v2831
    %10274 = vmatpush.bf16.msra.mxu0 %v2823
    %10275 = vmatpush.bf16.msra.mxu0 %v2815
    %10276 = vmatpush.bf16.msra.mxu0 %v2807
    %10277 = vmatpush.bf16.msra.mxu0 %v2799
    %10278 = vmatpush.bf16.msra.mxu0 %v2791
    %10279 = vmatmul.bf16.gmra.mxu0 %v9665
    %v10280 = vpop.f32.mrf.mxu0
    %v10281 = vadd.f32 0.0, %v10280
    %v10282 = vpop.f32.mrf.mxu0
    %10283 = vdwg.mxu0
    %10284 = vmatpush.bf16.msra.mxu0 %v2911
    %10285 = vmatpush.bf16.msra.mxu0 %v2903
    %10286 = vmatpush.bf16.msra.mxu0 %v2895
    %10287 = vmatpush.bf16.msra.mxu0 %v2887
    %10288 = vmatpush.bf16.msra.mxu0 %v2879
    %10289 = vmatpush.bf16.msra.mxu0 %v2871
    %10290 = vmatpush.bf16.msra.mxu0 %v2863
    %10291 = vmatpush.bf16.msra.mxu0 %v2855
    %10292 = vmatmul.bf16.gmra.mxu0 %v9666
    %v10293 = vpop.f32.mrf.mxu0
    %v10294 = vadd.f32 %v10281, %v10293
    %v10295 = vpop.f32.mrf.mxu0
    %10296 = vdwg.mxu0
    %10297 = vmatpush.bf16.msra.mxu0 %v2848
    %10298 = vmatpush.bf16.msra.mxu0 %v2840
    %10299 = vmatpush.bf16.msra.mxu0 %v2832
    %10300 = vmatpush.bf16.msra.mxu0 %v2824
    %10301 = vmatpush.bf16.msra.mxu0 %v2816
    %10302 = vmatpush.bf16.msra.mxu0 %v2808
    %10303 = vmatpush.bf16.msra.mxu0 %v2800
    %10304 = vmatpush.bf16.msra.mxu0 %v2792
    %10305 = vmatmul.bf16.gmra.mxu0 %v9665
    %v10306 = vpop.f32.mrf.mxu0
    %v10307 = vadd.f32 0.0, %v10306
    %v10308 = vpop.f32.mrf.mxu0
    %10309 = vdwg.mxu0
    %10310 = vmatpush.bf16.msra.mxu0 %v2912
    %10311 = vmatpush.bf16.msra.mxu0 %v2904
    %10312 = vmatpush.bf16.msra.mxu0 %v2896
    %10313 = vmatpush.bf16.msra.mxu0 %v2888
    %10314 = vmatpush.bf16.msra.mxu0 %v2880
    %10315 = vmatpush.bf16.msra.mxu0 %v2872
    %10316 = vmatpush.bf16.msra.mxu0 %v2864
    %10317 = vmatpush.bf16.msra.mxu0 %v2856
    %10318 = vmatmul.bf16.gmra.mxu0 %v9666
    %v10319 = vpop.f32.mrf.mxu0
    %v10320 = vadd.f32 %v10307, %v10319
    %v10321 = vpop.f32.mrf.mxu0
    %10322 = vdwg.mxu0
    %v10323 = vadd.f32 %v10107, %v10138
    %v10324 = vadd.f32 %v10108, %v10164
    %v10325 = vadd.f32 %v10109, %v10190
    %v10326 = vadd.f32 %v10110, %v10216
    %v10327 = vadd.f32 %v10111, %v10242
    %v10328 = vadd.f32 %v10112, %v10268
    %v10329 = vadd.f32 %v10113, %v10294
    %v10330 = vadd.f32 %v10114, %v10320
    %v10331 = vxor.u32 %v9725, 2147483648
    %v10332 = vxor.u32 %v9777, 2147483648
    %v10333 = vxor.u32 %v9829, 2147483648
    %v10334 = vxor.u32 %v9881, 2147483648
    %v10335 = vxor.u32 %v9933, 2147483648
    %v10336 = vxor.u32 %v9985, 2147483648
    %v10337 = vmul.f32 %v10331, 1.442695
    %v10338 = vpow.pop %v10337
    %v10339 = vmul.f32 %v10332, 1.442695
    %v10340 = vpow.pop %v10339
    %v10341 = vmul.f32 %v10333, 1.442695
    %v10342 = vpow.pop %v10341
    %v10343 = vmul.f32 %v10334, 1.442695
    %v10344 = vpow.pop %v10343
    %v10345 = vmul.f32 %v10335, 1.442695
    %v10346 = vpow.pop %v10345
    %v10347 = vmul.f32 %v10336, 1.442695
    %v10348 = vpow.pop %v10347
    %v10349 = vadd.f32 %v10338, 1.0
    %v10350 = vadd.f32 %v10340, 1.0
    %v10351 = vadd.f32 %v10342, 1.0
    %v10352 = vadd.f32 %v10344, 1.0
    %v10353 = vadd.f32 %v10346, 1.0
    %v10354 = vadd.f32 %v10348, 1.0
    %v10355 = vrcp.pop %v10349
    %v10356 = vmul.f32 %v10349, %v10355
    %v10357 = vsub.f32 1.0, %v10356
    %v10358 = vmul.f32 %v10355, %v10357
    %v10359 = vadd.f32 %v10355, %v10358
    %vm10360 = vweird.f32 %v10349
    %vm10361 = vweird.f32 %v10355
    %vm10362 = vmor %vm10360, %vm10361
    %v10363 = vsel %vm10362, %v10355, %v10359
    %v10364 = vand.u32 2147483647, %v10349
    %vm10365 = vcmp.eq.f32.partialorder %v10364, 8.507059e+37
    %v10366 = vand.u32 %v10349, 2147483648
    %v10367 = vor.u32 1.1754944e-38, %v10366
    %v10368 = vsel %vm10365, %v10367, %v10363
    %v10369 = vmul.f32 1.0, %v10368
    %v10370 = vrcp.pop %v10350
    %v10371 = vmul.f32 %v10350, %v10370
    %v10372 = vsub.f32 1.0, %v10371
    %v10373 = vmul.f32 %v10370, %v10372
    %v10374 = vadd.f32 %v10370, %v10373
    %vm10375 = vweird.f32 %v10350
    %vm10376 = vweird.f32 %v10370
    %vm10377 = vmor %vm10375, %vm10376
    %v10378 = vsel %vm10377, %v10370, %v10374
    %v10379 = vand.u32 2147483647, %v10350
    %vm10380 = vcmp.eq.f32.partialorder %v10379, 8.507059e+37
    %v10381 = vand.u32 %v10350, 2147483648
    %v10382 = vor.u32 1.1754944e-38, %v10381
    %v10383 = vsel %vm10380, %v10382, %v10378
    %v10384 = vmul.f32 1.0, %v10383
    %v10385 = vrcp.pop %v10351
    %v10386 = vmul.f32 %v10351, %v10385
    %v10387 = vsub.f32 1.0, %v10386
    %v10388 = vmul.f32 %v10385, %v10387
    %v10389 = vadd.f32 %v10385, %v10388
    %vm10390 = vweird.f32 %v10351
    %vm10391 = vweird.f32 %v10385
    %vm10392 = vmor %vm10390, %vm10391
    %v10393 = vsel %vm10392, %v10385, %v10389
    %v10394 = vand.u32 2147483647, %v10351
    %vm10395 = vcmp.eq.f32.partialorder %v10394, 8.507059e+37
    %v10396 = vand.u32 %v10351, 2147483648
    %v10397 = vor.u32 1.1754944e-38, %v10396
    %v10398 = vsel %vm10395, %v10397, %v10393
    %v10399 = vmul.f32 1.0, %v10398
    %v10400 = vrcp.pop %v10352
    %v10401 = vmul.f32 %v10352, %v10400
    %v10402 = vsub.f32 1.0, %v10401
    %v10403 = vmul.f32 %v10400, %v10402
    %v10404 = vadd.f32 %v10400, %v10403
    %vm10405 = vweird.f32 %v10352
    %vm10406 = vweird.f32 %v10400
    %vm10407 = vmor %vm10405, %vm10406
    %v10408 = vsel %vm10407, %v10400, %v10404
    %v10409 = vand.u32 2147483647, %v10352
    %vm10410 = vcmp.eq.f32.partialorder %v10409, 8.507059e+37
    %v10411 = vand.u32 %v10352, 2147483648
    %v10412 = vor.u32 1.1754944e-38, %v10411
    %v10413 = vsel %vm10410, %v10412, %v10408
    %v10414 = vmul.f32 1.0, %v10413
    %v10415 = vrcp.pop %v10353
    %v10416 = vmul.f32 %v10353, %v10415
    %v10417 = vsub.f32 1.0, %v10416
    %v10418 = vmul.f32 %v10415, %v10417
    %v10419 = vadd.f32 %v10415, %v10418
    %vm10420 = vweird.f32 %v10353
    %vm10421 = vweird.f32 %v10415
    %vm10422 = vmor %vm10420, %vm10421
    %v10423 = vsel %vm10422, %v10415, %v10419
    %v10424 = vand.u32 2147483647, %v10353
    %vm10425 = vcmp.eq.f32.partialorder %v10424, 8.507059e+37
    %v10426 = vand.u32 %v10353, 2147483648
    %v10427 = vor.u32 1.1754944e-38, %v10426
    %v10428 = vsel %vm10425, %v10427, %v10423
    %v10429 = vmul.f32 1.0, %v10428
    %v10430 = vrcp.pop %v10354
    %v10431 = vmul.f32 %v10354, %v10430
    %v10432 = vsub.f32 1.0, %v10431
    %v10433 = vmul.f32 %v10430, %v10432
    %v10434 = vadd.f32 %v10430, %v10433
    %vm10435 = vweird.f32 %v10354
    %vm10436 = vweird.f32 %v10430
    %vm10437 = vmor %vm10435, %vm10436
    %v10438 = vsel %vm10437, %v10430, %v10434
    %v10439 = vand.u32 2147483647, %v10354
    %vm10440 = vcmp.eq.f32.partialorder %v10439, 8.507059e+37
    %v10441 = vand.u32 %v10354, 2147483648
    %v10442 = vor.u32 1.1754944e-38, %v10441
    %v10443 = vsel %vm10440, %v10442, %v10438
    %v10444 = vmul.f32 1.0, %v10443
    %v10445 = vtanh.pop %v10037
    %v10446 = vtanh.pop %v10089
    %v10447 = vmul.f32 %v10399, %v9528
    %v10448 = vmul.f32 %v10414, %v9529
    %v10449 = vmul.f32 %v10369, %v10445
    %v10450 = vmul.f32 %v10384, %v10446
    %v10451 = vadd.f32 %v10447, %v10449
    %v10452 = vadd.f32 %v10448, %v10450
    %v10453 = vtanh.pop %v10451
    %v10454 = vtanh.pop %v10452
    %v10455 = vmul.f32 %v10429, %v10453
    %v10456 = vmul.f32 %v10444, %v10454
    %v10457 = vpack.c.bf16 %v10456, %v10455
    %v10458 = vxor.u32 %v10323, 2147483648
    %v10459 = vxor.u32 %v10324, 2147483648
    %v10460 = vxor.u32 %v10325, 2147483648
    %v10461 = vxor.u32 %v10326, 2147483648
    %v10462 = vxor.u32 %v10327, 2147483648
    %v10463 = vxor.u32 %v10328, 2147483648
    %v10464 = vmul.f32 %v10458, 1.442695
    %v10465 = vpow.pop %v10464
    %v10466 = vmul.f32 %v10459, 1.442695
    %v10467 = vpow.pop %v10466
    %v10468 = vmul.f32 %v10460, 1.442695
    %v10469 = vpow.pop %v10468
    %v10470 = vmul.f32 %v10461, 1.442695
    %v10471 = vpow.pop %v10470
    %v10472 = vmul.f32 %v10462, 1.442695
    %v10473 = vpow.pop %v10472
    %v10474 = vmul.f32 %v10463, 1.442695
    %v10475 = vpow.pop %v10474
    %v10476 = vadd.f32 %v10465, 1.0
    %v10477 = vadd.f32 %v10467, 1.0
    %v10478 = vadd.f32 %v10469, 1.0
    %v10479 = vadd.f32 %v10471, 1.0
    %v10480 = vadd.f32 %v10473, 1.0
    %v10481 = vadd.f32 %v10475, 1.0
    %v10482 = vrcp.pop %v10476
    %v10483 = vmul.f32 %v10476, %v10482
    %v10484 = vsub.f32 1.0, %v10483
    %v10485 = vmul.f32 %v10482, %v10484
    %v10486 = vadd.f32 %v10482, %v10485
    %vm10487 = vweird.f32 %v10476
    %vm10488 = vweird.f32 %v10482
    %vm10489 = vmor %vm10487, %vm10488
    %v10490 = vsel %vm10489, %v10482, %v10486
    %v10491 = vand.u32 2147483647, %v10476
    %vm10492 = vcmp.eq.f32.partialorder %v10491, 8.507059e+37
    %v10493 = vand.u32 %v10476, 2147483648
    %v10494 = vor.u32 1.1754944e-38, %v10493
    %v10495 = vsel %vm10492, %v10494, %v10490
    %v10496 = vmul.f32 1.0, %v10495
    %v10497 = vrcp.pop %v10477
    %v10498 = vmul.f32 %v10477, %v10497
    %v10499 = vsub.f32 1.0, %v10498
    %v10500 = vmul.f32 %v10497, %v10499
    %v10501 = vadd.f32 %v10497, %v10500
    %vm10502 = vweird.f32 %v10477
    %vm10503 = vweird.f32 %v10497
    %vm10504 = vmor %vm10502, %vm10503
    %v10505 = vsel %vm10504, %v10497, %v10501
    %v10506 = vand.u32 2147483647, %v10477
    %vm10507 = vcmp.eq.f32.partialorder %v10506, 8.507059e+37
    %v10508 = vand.u32 %v10477, 2147483648
    %v10509 = vor.u32 1.1754944e-38, %v10508
    %v10510 = vsel %vm10507, %v10509, %v10505
    %v10511 = vmul.f32 1.0, %v10510
    %v10512 = vrcp.pop %v10478
    %v10513 = vmul.f32 %v10478, %v10512
    %v10514 = vsub.f32 1.0, %v10513
    %v10515 = vmul.f32 %v10512, %v10514
    %v10516 = vadd.f32 %v10512, %v10515
    %vm10517 = vweird.f32 %v10478
    %vm10518 = vweird.f32 %v10512
    %vm10519 = vmor %vm10517, %vm10518
    %v10520 = vsel %vm10519, %v10512, %v10516
    %v10521 = vand.u32 2147483647, %v10478
    %vm10522 = vcmp.eq.f32.partialorder %v10521, 8.507059e+37
    %v10523 = vand.u32 %v10478, 2147483648
    %v10524 = vor.u32 1.1754944e-38, %v10523
    %v10525 = vsel %vm10522, %v10524, %v10520
    %v10526 = vmul.f32 1.0, %v10525
    %v10527 = vrcp.pop %v10479
    %v10528 = vmul.f32 %v10479, %v10527
    %v10529 = vsub.f32 1.0, %v10528
    %v10530 = vmul.f32 %v10527, %v10529
    %v10531 = vadd.f32 %v10527, %v10530
    %vm10532 = vweird.f32 %v10479
    %vm10533 = vweird.f32 %v10527
    %vm10534 = vmor %vm10532, %vm10533
    %v10535 = vsel %vm10534, %v10527, %v10531
    %v10536 = vand.u32 2147483647, %v10479
    %vm10537 = vcmp.eq.f32.partialorder %v10536, 8.507059e+37
    %v10538 = vand.u32 %v10479, 2147483648
    %v10539 = vor.u32 1.1754944e-38, %v10538
    %v10540 = vsel %vm10537, %v10539, %v10535
    %v10541 = vmul.f32 1.0, %v10540
    %v10542 = vrcp.pop %v10480
    %v10543 = vmul.f32 %v10480, %v10542
    %v10544 = vsub.f32 1.0, %v10543
    %v10545 = vmul.f32 %v10542, %v10544
    %v10546 = vadd.f32 %v10542, %v10545
    %vm10547 = vweird.f32 %v10480
    %vm10548 = vweird.f32 %v10542
    %vm10549 = vmor %vm10547, %vm10548
    %v10550 = vsel %vm10549, %v10542, %v10546
    %v10551 = vand.u32 2147483647, %v10480
    %vm10552 = vcmp.eq.f32.partialorder %v10551, 8.507059e+37
    %v10553 = vand.u32 %v10480, 2147483648
    %v10554 = vor.u32 1.1754944e-38, %v10553
    %v10555 = vsel %vm10552, %v10554, %v10550
    %v10556 = vmul.f32 1.0, %v10555
    %v10557 = vrcp.pop %v10481
    %v10558 = vmul.f32 %v10481, %v10557
    %v10559 = vsub.f32 1.0, %v10558
    %v10560 = vmul.f32 %v10557, %v10559
    %v10561 = vadd.f32 %v10557, %v10560
    %vm10562 = vweird.f32 %v10481
    %vm10563 = vweird.f32 %v10557
    %vm10564 = vmor %vm10562, %vm10563
    %v10565 = vsel %vm10564, %v10557, %v10561
    %v10566 = vand.u32 2147483647, %v10481
    %vm10567 = vcmp.eq.f32.partialorder %v10566, 8.507059e+37
    %v10568 = vand.u32 %v10481, 2147483648
    %v10569 = vor.u32 1.1754944e-38, %v10568
    %v10570 = vsel %vm10567, %v10569, %v10565
    %v10571 = vmul.f32 1.0, %v10570
    %v10572 = vtanh.pop %v10329
    %v10573 = vtanh.pop %v10330
    %v10574 = vmul.f32 %v10526, %v9655
    %v10575 = vmul.f32 %v10541, %v9656
    %v10576 = vmul.f32 %v10496, %v10572
    %v10577 = vmul.f32 %v10511, %v10573
    %v10578 = vadd.f32 %v10574, %v10576
    %v10579 = vadd.f32 %v10575, %v10577
    %v10580 = vtanh.pop %v10578
    %v10581 = vtanh.pop %v10579
    %v10582 = vmul.f32 %v10556, %v10580
    %v10583 = vmul.f32 %v10571, %v10581
    %v10584 = vpack.c.bf16 %v10583, %v10582
    %v10586 = vunpack.c.l.b16 %v10584
    %v10587 = vunpack.c.h.b16 %v10584
    %v10588 = vpack.c.b16 %v10586, %v10586
    %v10589 = vpack.c.b16 %v10587, %v10587
    %v10593 = vunpack.c.l.b16 %v10457
    %v10594 = vunpack.c.h.b16 %v10457
    %v10595 = vpack.c.b16 %v10593, %v10593
    %v10596 = vpack.c.b16 %v10594, %v10594
    %10599 = vmatpush.bf16.msra.mxu0 %v4605
    %10600 = vmatpush.bf16.msra.mxu0 %v4597
    %10601 = vmatpush.bf16.msra.mxu0 %v4589
    %10602 = vmatpush.bf16.msra.mxu0 %v4581
    %10603 = vmatpush.bf16.msra.mxu0 %v4573
    %10604 = vmatpush.bf16.msra.mxu0 %v4565
    %10605 = vmatpush.bf16.msra.mxu0 %v4557
    %10606 = vmatpush.bf16.msra.mxu0 %v4549
    %10607 = vmatmul.bf16.gmra.mxu0 %v10588
    %v10608 = vpop.f32.mrf.mxu0
    %v10609 = vadd.f32 %v534, %v10608
    %v10610 = vpop.f32.mrf.mxu0
    %10611 = vdwg.mxu0
    %10612 = vmatpush.bf16.msra.mxu0 %v4669
    %10613 = vmatpush.bf16.msra.mxu0 %v4661
    %10614 = vmatpush.bf16.msra.mxu0 %v4653
    %10615 = vmatpush.bf16.msra.mxu0 %v4645
    %10616 = vmatpush.bf16.msra.mxu0 %v4637
    %10617 = vmatpush.bf16.msra.mxu0 %v4629
    %10618 = vmatpush.bf16.msra.mxu0 %v4621
    %10619 = vmatpush.bf16.msra.mxu0 %v4613
    %10620 = vmatmul.bf16.gmra.mxu0 %v10589
    %v10621 = vpop.f32.mrf.mxu0
    %v10622 = vadd.f32 %v10609, %v10621
    %v10623 = vpop.f32.mrf.mxu0
    %10624 = vdwg.mxu0
    %10625 = vmatpush.bf16.msra.mxu0 %v4733
    %10626 = vmatpush.bf16.msra.mxu0 %v4725
    %10627 = vmatpush.bf16.msra.mxu0 %v4717
    %10628 = vmatpush.bf16.msra.mxu0 %v4709
    %10629 = vmatpush.bf16.msra.mxu0 %v4701
    %10630 = vmatpush.bf16.msra.mxu0 %v4693
    %10631 = vmatpush.bf16.msra.mxu0 %v4685
    %10632 = vmatpush.bf16.msra.mxu0 %v4677
    %10633 = vmatmul.bf16.gmra.mxu0 %v10595
    %v10634 = vpop.f32.mrf.mxu0
    %v10635 = vadd.f32 %v10622, %v10634
    %v10636 = vpop.f32.mrf.mxu0
    %10637 = vdwg.mxu0
    %10638 = vmatpush.bf16.msra.mxu0 %v4797
    %10639 = vmatpush.bf16.msra.mxu0 %v4789
    %10640 = vmatpush.bf16.msra.mxu0 %v4781
    %10641 = vmatpush.bf16.msra.mxu0 %v4773
    %10642 = vmatpush.bf16.msra.mxu0 %v4765
    %10643 = vmatpush.bf16.msra.mxu0 %v4757
    %10644 = vmatpush.bf16.msra.mxu0 %v4749
    %10645 = vmatpush.bf16.msra.mxu0 %v4741
    %10646 = vmatmul.bf16.gmra.mxu0 %v10596
    %v10647 = vpop.f32.mrf.mxu0
    %v10648 = vadd.f32 %v10635, %v10647
    %v10649 = vpop.f32.mrf.mxu0
    %10650 = vdwg.mxu0
    %10651 = vmatpush.bf16.msra.mxu0 %v4606
    %10652 = vmatpush.bf16.msra.mxu0 %v4598
    %10653 = vmatpush.bf16.msra.mxu0 %v4590
    %10654 = vmatpush.bf16.msra.mxu0 %v4582
    %10655 = vmatpush.bf16.msra.mxu0 %v4574
    %10656 = vmatpush.bf16.msra.mxu0 %v4566
    %10657 = vmatpush.bf16.msra.mxu0 %v4558
    %10658 = vmatpush.bf16.msra.mxu0 %v4550
    %10659 = vmatmul.bf16.gmra.mxu0 %v10588
    %v10660 = vpop.f32.mrf.mxu0
    %v10661 = vadd.f32 %v535, %v10660
    %v10662 = vpop.f32.mrf.mxu0
    %10663 = vdwg.mxu0
    %10664 = vmatpush.bf16.msra.mxu0 %v4670
    %10665 = vmatpush.bf16.msra.mxu0 %v4662
    %10666 = vmatpush.bf16.msra.mxu0 %v4654
    %10667 = vmatpush.bf16.msra.mxu0 %v4646
    %10668 = vmatpush.bf16.msra.mxu0 %v4638
    %10669 = vmatpush.bf16.msra.mxu0 %v4630
    %10670 = vmatpush.bf16.msra.mxu0 %v4622
    %10671 = vmatpush.bf16.msra.mxu0 %v4614
    %10672 = vmatmul.bf16.gmra.mxu0 %v10589
    %v10673 = vpop.f32.mrf.mxu0
    %v10674 = vadd.f32 %v10661, %v10673
    %v10675 = vpop.f32.mrf.mxu0
    %10676 = vdwg.mxu0
    %10677 = vmatpush.bf16.msra.mxu0 %v4734
    %10678 = vmatpush.bf16.msra.mxu0 %v4726
    %10679 = vmatpush.bf16.msra.mxu0 %v4718
    %10680 = vmatpush.bf16.msra.mxu0 %v4710
    %10681 = vmatpush.bf16.msra.mxu0 %v4702
    %10682 = vmatpush.bf16.msra.mxu0 %v4694
    %10683 = vmatpush.bf16.msra.mxu0 %v4686
    %10684 = vmatpush.bf16.msra.mxu0 %v4678
    %10685 = vmatmul.bf16.gmra.mxu0 %v10595
    %v10686 = vpop.f32.mrf.mxu0
    %v10687 = vadd.f32 %v10674, %v10686
    %v10688 = vpop.f32.mrf.mxu0
    %10689 = vdwg.mxu0
    %10690 = vmatpush.bf16.msra.mxu0 %v4798
    %10691 = vmatpush.bf16.msra.mxu0 %v4790
    %10692 = vmatpush.bf16.msra.mxu0 %v4782
    %10693 = vmatpush.bf16.msra.mxu0 %v4774
    %10694 = vmatpush.bf16.msra.mxu0 %v4766
    %10695 = vmatpush.bf16.msra.mxu0 %v4758
    %10696 = vmatpush.bf16.msra.mxu0 %v4750
    %10697 = vmatpush.bf16.msra.mxu0 %v4742
    %10698 = vmatmul.bf16.gmra.mxu0 %v10596
    %v10699 = vpop.f32.mrf.mxu0
    %v10700 = vadd.f32 %v10687, %v10699
    %v10701 = vpop.f32.mrf.mxu0
    %10702 = vdwg.mxu0
    %10703 = vmatpush.bf16.msra.mxu0 %v4607
    %10704 = vmatpush.bf16.msra.mxu0 %v4599
    %10705 = vmatpush.bf16.msra.mxu0 %v4591
    %10706 = vmatpush.bf16.msra.mxu0 %v4583
    %10707 = vmatpush.bf16.msra.mxu0 %v4575
    %10708 = vmatpush.bf16.msra.mxu0 %v4567
    %10709 = vmatpush.bf16.msra.mxu0 %v4559
    %10710 = vmatpush.bf16.msra.mxu0 %v4551
    %10711 = vmatmul.bf16.gmra.mxu0 %v10588
    %v10712 = vpop.f32.mrf.mxu0
    %v10713 = vadd.f32 %v536, %v10712
    %v10714 = vpop.f32.mrf.mxu0
    %10715 = vdwg.mxu0
    %10716 = vmatpush.bf16.msra.mxu0 %v4671
    %10717 = vmatpush.bf16.msra.mxu0 %v4663
    %10718 = vmatpush.bf16.msra.mxu0 %v4655
    %10719 = vmatpush.bf16.msra.mxu0 %v4647
    %10720 = vmatpush.bf16.msra.mxu0 %v4639
    %10721 = vmatpush.bf16.msra.mxu0 %v4631
    %10722 = vmatpush.bf16.msra.mxu0 %v4623
    %10723 = vmatpush.bf16.msra.mxu0 %v4615
    %10724 = vmatmul.bf16.gmra.mxu0 %v10589
    %v10725 = vpop.f32.mrf.mxu0
    %v10726 = vadd.f32 %v10713, %v10725
    %v10727 = vpop.f32.mrf.mxu0
    %10728 = vdwg.mxu0
    %10729 = vmatpush.bf16.msra.mxu0 %v4735
    %10730 = vmatpush.bf16.msra.mxu0 %v4727
    %10731 = vmatpush.bf16.msra.mxu0 %v4719
    %10732 = vmatpush.bf16.msra.mxu0 %v4711
    %10733 = vmatpush.bf16.msra.mxu0 %v4703
    %10734 = vmatpush.bf16.msra.mxu0 %v4695
    %10735 = vmatpush.bf16.msra.mxu0 %v4687
    %10736 = vmatpush.bf16.msra.mxu0 %v4679
    %10737 = vmatmul.bf16.gmra.mxu0 %v10595
    %v10738 = vpop.f32.mrf.mxu0
    %v10739 = vadd.f32 %v10726, %v10738
    %v10740 = vpop.f32.mrf.mxu0
    %10741 = vdwg.mxu0
    %10742 = vmatpush.bf16.msra.mxu0 %v4799
    %10743 = vmatpush.bf16.msra.mxu0 %v4791
    %10744 = vmatpush.bf16.msra.mxu0 %v4783
    %10745 = vmatpush.bf16.msra.mxu0 %v4775
    %10746 = vmatpush.bf16.msra.mxu0 %v4767
    %10747 = vmatpush.bf16.msra.mxu0 %v4759
    %10748 = vmatpush.bf16.msra.mxu0 %v4751
    %10749 = vmatpush.bf16.msra.mxu0 %v4743
    %10750 = vmatmul.bf16.gmra.mxu0 %v10596
    %v10751 = vpop.f32.mrf.mxu0
    %v10752 = vadd.f32 %v10739, %v10751
    %v10753 = vpop.f32.mrf.mxu0
    %10754 = vdwg.mxu0
    %10755 = vmatpush.bf16.msra.mxu0 %v4608
    %10756 = vmatpush.bf16.msra.mxu0 %v4600
    %10757 = vmatpush.bf16.msra.mxu0 %v4592
    %10758 = vmatpush.bf16.msra.mxu0 %v4584
    %10759 = vmatpush.bf16.msra.mxu0 %v4576
    %10760 = vmatpush.bf16.msra.mxu0 %v4568
    %10761 = vmatpush.bf16.msra.mxu0 %v4560
    %10762 = vmatpush.bf16.msra.mxu0 %v4552
    %10763 = vmatmul.bf16.gmra.mxu0 %v10588
    %v10764 = vpop.f32.mrf.mxu0
    %v10765 = vadd.f32 %v537, %v10764
    %v10766 = vpop.f32.mrf.mxu0
    %10767 = vdwg.mxu0
    %10768 = vmatpush.bf16.msra.mxu0 %v4672
    %10769 = vmatpush.bf16.msra.mxu0 %v4664
    %10770 = vmatpush.bf16.msra.mxu0 %v4656
    %10771 = vmatpush.bf16.msra.mxu0 %v4648
    %10772 = vmatpush.bf16.msra.mxu0 %v4640
    %10773 = vmatpush.bf16.msra.mxu0 %v4632
    %10774 = vmatpush.bf16.msra.mxu0 %v4624
    %10775 = vmatpush.bf16.msra.mxu0 %v4616
    %10776 = vmatmul.bf16.gmra.mxu0 %v10589
    %v10777 = vpop.f32.mrf.mxu0
    %v10778 = vadd.f32 %v10765, %v10777
    %v10779 = vpop.f32.mrf.mxu0
    %10780 = vdwg.mxu0
    %10781 = vmatpush.bf16.msra.mxu0 %v4736
    %10782 = vmatpush.bf16.msra.mxu0 %v4728
    %10783 = vmatpush.bf16.msra.mxu0 %v4720
    %10784 = vmatpush.bf16.msra.mxu0 %v4712
    %10785 = vmatpush.bf16.msra.mxu0 %v4704
    %10786 = vmatpush.bf16.msra.mxu0 %v4696
    %10787 = vmatpush.bf16.msra.mxu0 %v4688
    %10788 = vmatpush.bf16.msra.mxu0 %v4680
    %10789 = vmatmul.bf16.gmra.mxu0 %v10595
    %v10790 = vpop.f32.mrf.mxu0
    %v10791 = vadd.f32 %v10778, %v10790
    %v10792 = vpop.f32.mrf.mxu0
    %10793 = vdwg.mxu0
    %10794 = vmatpush.bf16.msra.mxu0 %v4800
    %10795 = vmatpush.bf16.msra.mxu0 %v4792
    %10796 = vmatpush.bf16.msra.mxu0 %v4784
    %10797 = vmatpush.bf16.msra.mxu0 %v4776
    %10798 = vmatpush.bf16.msra.mxu0 %v4768
    %10799 = vmatpush.bf16.msra.mxu0 %v4760
    %10800 = vmatpush.bf16.msra.mxu0 %v4752
    %10801 = vmatpush.bf16.msra.mxu0 %v4744
    %10802 = vmatmul.bf16.gmra.mxu0 %v10596
    %v10803 = vpop.f32.mrf.mxu0
    %v10804 = vadd.f32 %v10791, %v10803
    %v10805 = vpop.f32.mrf.mxu0
    %10806 = vdwg.mxu0
    %10807 = vmatpush.bf16.msra.mxu0 %v4609
    %10808 = vmatpush.bf16.msra.mxu0 %v4601
    %10809 = vmatpush.bf16.msra.mxu0 %v4593
    %10810 = vmatpush.bf16.msra.mxu0 %v4585
    %10811 = vmatpush.bf16.msra.mxu0 %v4577
    %10812 = vmatpush.bf16.msra.mxu0 %v4569
    %10813 = vmatpush.bf16.msra.mxu0 %v4561
    %10814 = vmatpush.bf16.msra.mxu0 %v4553
    %10815 = vmatmul.bf16.gmra.mxu0 %v10588
    %v10816 = vpop.f32.mrf.mxu0
    %v10817 = vadd.f32 %v538, %v10816
    %v10818 = vpop.f32.mrf.mxu0
    %10819 = vdwg.mxu0
    %10820 = vmatpush.bf16.msra.mxu0 %v4673
    %10821 = vmatpush.bf16.msra.mxu0 %v4665
    %10822 = vmatpush.bf16.msra.mxu0 %v4657
    %10823 = vmatpush.bf16.msra.mxu0 %v4649
    %10824 = vmatpush.bf16.msra.mxu0 %v4641
    %10825 = vmatpush.bf16.msra.mxu0 %v4633
    %10826 = vmatpush.bf16.msra.mxu0 %v4625
    %10827 = vmatpush.bf16.msra.mxu0 %v4617
    %10828 = vmatmul.bf16.gmra.mxu0 %v10589
    %v10829 = vpop.f32.mrf.mxu0
    %v10830 = vadd.f32 %v10817, %v10829
    %v10831 = vpop.f32.mrf.mxu0
    %10832 = vdwg.mxu0
    %10833 = vmatpush.bf16.msra.mxu0 %v4737
    %10834 = vmatpush.bf16.msra.mxu0 %v4729
    %10835 = vmatpush.bf16.msra.mxu0 %v4721
    %10836 = vmatpush.bf16.msra.mxu0 %v4713
    %10837 = vmatpush.bf16.msra.mxu0 %v4705
    %10838 = vmatpush.bf16.msra.mxu0 %v4697
    %10839 = vmatpush.bf16.msra.mxu0 %v4689
    %10840 = vmatpush.bf16.msra.mxu0 %v4681
    %10841 = vmatmul.bf16.gmra.mxu0 %v10595
    %v10842 = vpop.f32.mrf.mxu0
    %v10843 = vadd.f32 %v10830, %v10842
    %v10844 = vpop.f32.mrf.mxu0
    %10845 = vdwg.mxu0
    %10846 = vmatpush.bf16.msra.mxu0 %v4801
    %10847 = vmatpush.bf16.msra.mxu0 %v4793
    %10848 = vmatpush.bf16.msra.mxu0 %v4785
    %10849 = vmatpush.bf16.msra.mxu0 %v4777
    %10850 = vmatpush.bf16.msra.mxu0 %v4769
    %10851 = vmatpush.bf16.msra.mxu0 %v4761
    %10852 = vmatpush.bf16.msra.mxu0 %v4753
    %10853 = vmatpush.bf16.msra.mxu0 %v4745
    %10854 = vmatmul.bf16.gmra.mxu0 %v10596
    %v10855 = vpop.f32.mrf.mxu0
    %v10856 = vadd.f32 %v10843, %v10855
    %v10857 = vpop.f32.mrf.mxu0
    %10858 = vdwg.mxu0
    %10859 = vmatpush.bf16.msra.mxu0 %v4610
    %10860 = vmatpush.bf16.msra.mxu0 %v4602
    %10861 = vmatpush.bf16.msra.mxu0 %v4594
    %10862 = vmatpush.bf16.msra.mxu0 %v4586
    %10863 = vmatpush.bf16.msra.mxu0 %v4578
    %10864 = vmatpush.bf16.msra.mxu0 %v4570
    %10865 = vmatpush.bf16.msra.mxu0 %v4562
    %10866 = vmatpush.bf16.msra.mxu0 %v4554
    %10867 = vmatmul.bf16.gmra.mxu0 %v10588
    %v10868 = vpop.f32.mrf.mxu0
    %v10869 = vadd.f32 %v539, %v10868
    %v10870 = vpop.f32.mrf.mxu0
    %10871 = vdwg.mxu0
    %10872 = vmatpush.bf16.msra.mxu0 %v4674
    %10873 = vmatpush.bf16.msra.mxu0 %v4666
    %10874 = vmatpush.bf16.msra.mxu0 %v4658
    %10875 = vmatpush.bf16.msra.mxu0 %v4650
    %10876 = vmatpush.bf16.msra.mxu0 %v4642
    %10877 = vmatpush.bf16.msra.mxu0 %v4634
    %10878 = vmatpush.bf16.msra.mxu0 %v4626
    %10879 = vmatpush.bf16.msra.mxu0 %v4618
    %10880 = vmatmul.bf16.gmra.mxu0 %v10589
    %v10881 = vpop.f32.mrf.mxu0
    %v10882 = vadd.f32 %v10869, %v10881
    %v10883 = vpop.f32.mrf.mxu0
    %10884 = vdwg.mxu0
    %10885 = vmatpush.bf16.msra.mxu0 %v4738
    %10886 = vmatpush.bf16.msra.mxu0 %v4730
    %10887 = vmatpush.bf16.msra.mxu0 %v4722
    %10888 = vmatpush.bf16.msra.mxu0 %v4714
    %10889 = vmatpush.bf16.msra.mxu0 %v4706
    %10890 = vmatpush.bf16.msra.mxu0 %v4698
    %10891 = vmatpush.bf16.msra.mxu0 %v4690
    %10892 = vmatpush.bf16.msra.mxu0 %v4682
    %10893 = vmatmul.bf16.gmra.mxu0 %v10595
    %v10894 = vpop.f32.mrf.mxu0
    %v10895 = vadd.f32 %v10882, %v10894
    %v10896 = vpop.f32.mrf.mxu0
    %10897 = vdwg.mxu0
    %10898 = vmatpush.bf16.msra.mxu0 %v4802
    %10899 = vmatpush.bf16.msra.mxu0 %v4794
    %10900 = vmatpush.bf16.msra.mxu0 %v4786
    %10901 = vmatpush.bf16.msra.mxu0 %v4778
    %10902 = vmatpush.bf16.msra.mxu0 %v4770
    %10903 = vmatpush.bf16.msra.mxu0 %v4762
    %10904 = vmatpush.bf16.msra.mxu0 %v4754
    %10905 = vmatpush.bf16.msra.mxu0 %v4746
    %10906 = vmatmul.bf16.gmra.mxu0 %v10596
    %v10907 = vpop.f32.mrf.mxu0
    %v10908 = vadd.f32 %v10895, %v10907
    %v10909 = vpop.f32.mrf.mxu0
    %10910 = vdwg.mxu0
    %10911 = vmatpush.bf16.msra.mxu0 %v4611
    %10912 = vmatpush.bf16.msra.mxu0 %v4603
    %10913 = vmatpush.bf16.msra.mxu0 %v4595
    %10914 = vmatpush.bf16.msra.mxu0 %v4587
    %10915 = vmatpush.bf16.msra.mxu0 %v4579
    %10916 = vmatpush.bf16.msra.mxu0 %v4571
    %10917 = vmatpush.bf16.msra.mxu0 %v4563
    %10918 = vmatpush.bf16.msra.mxu0 %v4555
    %10919 = vmatmul.bf16.gmra.mxu0 %v10588
    %v10920 = vpop.f32.mrf.mxu0
    %v10921 = vadd.f32 %v540, %v10920
    %v10922 = vpop.f32.mrf.mxu0
    %10923 = vdwg.mxu0
    %10924 = vmatpush.bf16.msra.mxu0 %v4675
    %10925 = vmatpush.bf16.msra.mxu0 %v4667
    %10926 = vmatpush.bf16.msra.mxu0 %v4659
    %10927 = vmatpush.bf16.msra.mxu0 %v4651
    %10928 = vmatpush.bf16.msra.mxu0 %v4643
    %10929 = vmatpush.bf16.msra.mxu0 %v4635
    %10930 = vmatpush.bf16.msra.mxu0 %v4627
    %10931 = vmatpush.bf16.msra.mxu0 %v4619
    %10932 = vmatmul.bf16.gmra.mxu0 %v10589
    %v10933 = vpop.f32.mrf.mxu0
    %v10934 = vadd.f32 %v10921, %v10933
    %v10935 = vpop.f32.mrf.mxu0
    %10936 = vdwg.mxu0
    %10937 = vmatpush.bf16.msra.mxu0 %v4739
    %10938 = vmatpush.bf16.msra.mxu0 %v4731
    %10939 = vmatpush.bf16.msra.mxu0 %v4723
    %10940 = vmatpush.bf16.msra.mxu0 %v4715
    %10941 = vmatpush.bf16.msra.mxu0 %v4707
    %10942 = vmatpush.bf16.msra.mxu0 %v4699
    %10943 = vmatpush.bf16.msra.mxu0 %v4691
    %10944 = vmatpush.bf16.msra.mxu0 %v4683
    %10945 = vmatmul.bf16.gmra.mxu0 %v10595
    %v10946 = vpop.f32.mrf.mxu0
    %v10947 = vadd.f32 %v10934, %v10946
    %v10948 = vpop.f32.mrf.mxu0
    %10949 = vdwg.mxu0
    %10950 = vmatpush.bf16.msra.mxu0 %v4803
    %10951 = vmatpush.bf16.msra.mxu0 %v4795
    %10952 = vmatpush.bf16.msra.mxu0 %v4787
    %10953 = vmatpush.bf16.msra.mxu0 %v4779
    %10954 = vmatpush.bf16.msra.mxu0 %v4771
    %10955 = vmatpush.bf16.msra.mxu0 %v4763
    %10956 = vmatpush.bf16.msra.mxu0 %v4755
    %10957 = vmatpush.bf16.msra.mxu0 %v4747
    %10958 = vmatmul.bf16.gmra.mxu0 %v10596
    %v10959 = vpop.f32.mrf.mxu0
    %v10960 = vadd.f32 %v10947, %v10959
    %v10961 = vpop.f32.mrf.mxu0
    %10962 = vdwg.mxu0
    %10963 = vmatpush.bf16.msra.mxu0 %v4612
    %10964 = vmatpush.bf16.msra.mxu0 %v4604
    %10965 = vmatpush.bf16.msra.mxu0 %v4596
    %10966 = vmatpush.bf16.msra.mxu0 %v4588
    %10967 = vmatpush.bf16.msra.mxu0 %v4580
    %10968 = vmatpush.bf16.msra.mxu0 %v4572
    %10969 = vmatpush.bf16.msra.mxu0 %v4564
    %10970 = vmatpush.bf16.msra.mxu0 %v4556
    %10971 = vmatmul.bf16.gmra.mxu0 %v10588
    %v10972 = vpop.f32.mrf.mxu0
    %v10973 = vadd.f32 %v541, %v10972
    %v10974 = vpop.f32.mrf.mxu0
    %10975 = vdwg.mxu0
    %10976 = vmatpush.bf16.msra.mxu0 %v4676
    %10977 = vmatpush.bf16.msra.mxu0 %v4668
    %10978 = vmatpush.bf16.msra.mxu0 %v4660
    %10979 = vmatpush.bf16.msra.mxu0 %v4652
    %10980 = vmatpush.bf16.msra.mxu0 %v4644
    %10981 = vmatpush.bf16.msra.mxu0 %v4636
    %10982 = vmatpush.bf16.msra.mxu0 %v4628
    %10983 = vmatpush.bf16.msra.mxu0 %v4620
    %10984 = vmatmul.bf16.gmra.mxu0 %v10589
    %v10985 = vpop.f32.mrf.mxu0
    %v10986 = vadd.f32 %v10973, %v10985
    %v10987 = vpop.f32.mrf.mxu0
    %10988 = vdwg.mxu0
    %10989 = vmatpush.bf16.msra.mxu0 %v4740
    %10990 = vmatpush.bf16.msra.mxu0 %v4732
    %10991 = vmatpush.bf16.msra.mxu0 %v4724
    %10992 = vmatpush.bf16.msra.mxu0 %v4716
    %10993 = vmatpush.bf16.msra.mxu0 %v4708
    %10994 = vmatpush.bf16.msra.mxu0 %v4700
    %10995 = vmatpush.bf16.msra.mxu0 %v4692
    %10996 = vmatpush.bf16.msra.mxu0 %v4684
    %10997 = vmatmul.bf16.gmra.mxu0 %v10595
    %v10998 = vpop.f32.mrf.mxu0
    %v10999 = vadd.f32 %v10986, %v10998
    %v11000 = vpop.f32.mrf.mxu0
    %11001 = vdwg.mxu0
    %11002 = vmatpush.bf16.msra.mxu0 %v4804
    %11003 = vmatpush.bf16.msra.mxu0 %v4796
    %11004 = vmatpush.bf16.msra.mxu0 %v4788
    %11005 = vmatpush.bf16.msra.mxu0 %v4780
    %11006 = vmatpush.bf16.msra.mxu0 %v4772
    %11007 = vmatpush.bf16.msra.mxu0 %v4764
    %11008 = vmatpush.bf16.msra.mxu0 %v4756
    %11009 = vmatpush.bf16.msra.mxu0 %v4748
    %11010 = vmatmul.bf16.gmra.mxu0 %v10596
    %v11011 = vpop.f32.mrf.mxu0
    %v11012 = vadd.f32 %v10999, %v11011
    %v11013 = vpop.f32.mrf.mxu0
    %11014 = vdwg.mxu0
    %v11015 = vxor.u32 %v10648, 2147483648
    %v11016 = vxor.u32 %v10700, 2147483648
    %v11017 = vxor.u32 %v10752, 2147483648
    %v11018 = vxor.u32 %v10804, 2147483648
    %v11019 = vxor.u32 %v10856, 2147483648
    %v11020 = vxor.u32 %v10908, 2147483648
    %v11021 = vmul.f32 %v11015, 1.442695
    %v11022 = vpow.pop %v11021
    %v11023 = vmul.f32 %v11016, 1.442695
    %v11024 = vpow.pop %v11023
    %v11025 = vmul.f32 %v11017, 1.442695
    %v11026 = vpow.pop %v11025
    %v11027 = vmul.f32 %v11018, 1.442695
    %v11028 = vpow.pop %v11027
    %v11029 = vmul.f32 %v11019, 1.442695
    %v11030 = vpow.pop %v11029
    %v11031 = vmul.f32 %v11020, 1.442695
    %v11032 = vpow.pop %v11031
    %v11033 = vadd.f32 %v11022, 1.0
    %v11034 = vadd.f32 %v11024, 1.0
    %v11035 = vadd.f32 %v11026, 1.0
    %v11036 = vadd.f32 %v11028, 1.0
    %v11037 = vadd.f32 %v11030, 1.0
    %v11038 = vadd.f32 %v11032, 1.0
    %v11039 = vrcp.pop %v11033
    %v11040 = vmul.f32 %v11033, %v11039
    %v11041 = vsub.f32 1.0, %v11040
    %v11042 = vmul.f32 %v11039, %v11041
    %v11043 = vadd.f32 %v11039, %v11042
    %vm11044 = vweird.f32 %v11033
    %vm11045 = vweird.f32 %v11039
    %vm11046 = vmor %vm11044, %vm11045
    %v11047 = vsel %vm11046, %v11039, %v11043
    %v11048 = vand.u32 2147483647, %v11033
    %vm11049 = vcmp.eq.f32.partialorder %v11048, 8.507059e+37
    %v11050 = vand.u32 %v11033, 2147483648
    %v11051 = vor.u32 1.1754944e-38, %v11050
    %v11052 = vsel %vm11049, %v11051, %v11047
    %v11053 = vmul.f32 1.0, %v11052
    %v11054 = vrcp.pop %v11034
    %v11055 = vmul.f32 %v11034, %v11054
    %v11056 = vsub.f32 1.0, %v11055
    %v11057 = vmul.f32 %v11054, %v11056
    %v11058 = vadd.f32 %v11054, %v11057
    %vm11059 = vweird.f32 %v11034
    %vm11060 = vweird.f32 %v11054
    %vm11061 = vmor %vm11059, %vm11060
    %v11062 = vsel %vm11061, %v11054, %v11058
    %v11063 = vand.u32 2147483647, %v11034
    %vm11064 = vcmp.eq.f32.partialorder %v11063, 8.507059e+37
    %v11065 = vand.u32 %v11034, 2147483648
    %v11066 = vor.u32 1.1754944e-38, %v11065
    %v11067 = vsel %vm11064, %v11066, %v11062
    %v11068 = vmul.f32 1.0, %v11067
    %v11069 = vrcp.pop %v11035
    %v11070 = vmul.f32 %v11035, %v11069
    %v11071 = vsub.f32 1.0, %v11070
    %v11072 = vmul.f32 %v11069, %v11071
    %v11073 = vadd.f32 %v11069, %v11072
    %vm11074 = vweird.f32 %v11035
    %vm11075 = vweird.f32 %v11069
    %vm11076 = vmor %vm11074, %vm11075
    %v11077 = vsel %vm11076, %v11069, %v11073
    %v11078 = vand.u32 2147483647, %v11035
    %vm11079 = vcmp.eq.f32.partialorder %v11078, 8.507059e+37
    %v11080 = vand.u32 %v11035, 2147483648
    %v11081 = vor.u32 1.1754944e-38, %v11080
    %v11082 = vsel %vm11079, %v11081, %v11077
    %v11083 = vmul.f32 1.0, %v11082
    %v11084 = vrcp.pop %v11036
    %v11085 = vmul.f32 %v11036, %v11084
    %v11086 = vsub.f32 1.0, %v11085
    %v11087 = vmul.f32 %v11084, %v11086
    %v11088 = vadd.f32 %v11084, %v11087
    %vm11089 = vweird.f32 %v11036
    %vm11090 = vweird.f32 %v11084
    %vm11091 = vmor %vm11089, %vm11090
    %v11092 = vsel %vm11091, %v11084, %v11088
    %v11093 = vand.u32 2147483647, %v11036
    %vm11094 = vcmp.eq.f32.partialorder %v11093, 8.507059e+37
    %v11095 = vand.u32 %v11036, 2147483648
    %v11096 = vor.u32 1.1754944e-38, %v11095
    %v11097 = vsel %vm11094, %v11096, %v11092
    %v11098 = vmul.f32 1.0, %v11097
    %v11099 = vrcp.pop %v11037
    %v11100 = vmul.f32 %v11037, %v11099
    %v11101 = vsub.f32 1.0, %v11100
    %v11102 = vmul.f32 %v11099, %v11101
    %v11103 = vadd.f32 %v11099, %v11102
    %vm11104 = vweird.f32 %v11037
    %vm11105 = vweird.f32 %v11099
    %vm11106 = vmor %vm11104, %vm11105
    %v11107 = vsel %vm11106, %v11099, %v11103
    %v11108 = vand.u32 2147483647, %v11037
    %vm11109 = vcmp.eq.f32.partialorder %v11108, 8.507059e+37
    %v11110 = vand.u32 %v11037, 2147483648
    %v11111 = vor.u32 1.1754944e-38, %v11110
    %v11112 = vsel %vm11109, %v11111, %v11107
    %v11113 = vmul.f32 1.0, %v11112
    %v11114 = vrcp.pop %v11038
    %v11115 = vmul.f32 %v11038, %v11114
    %v11116 = vsub.f32 1.0, %v11115
    %v11117 = vmul.f32 %v11114, %v11116
    %v11118 = vadd.f32 %v11114, %v11117
    %vm11119 = vweird.f32 %v11038
    %vm11120 = vweird.f32 %v11114
    %vm11121 = vmor %vm11119, %vm11120
    %v11122 = vsel %vm11121, %v11114, %v11118
    %v11123 = vand.u32 2147483647, %v11038
    %vm11124 = vcmp.eq.f32.partialorder %v11123, 8.507059e+37
    %v11125 = vand.u32 %v11038, 2147483648
    %v11126 = vor.u32 1.1754944e-38, %v11125
    %v11127 = vsel %vm11124, %v11126, %v11122
    %v11128 = vmul.f32 1.0, %v11127
    %v11129 = vtanh.pop %v10960
    %v11130 = vtanh.pop %v11012
    %v11131 = vmul.f32 %v11083, %v10451
    %v11132 = vmul.f32 %v11098, %v10452
    %v11133 = vmul.f32 %v11053, %v11129
    %v11134 = vmul.f32 %v11068, %v11130
    %v11135 = vadd.f32 %v11131, %v11133
    %v11136 = vadd.f32 %v11132, %v11134
    %v11137 = vtanh.pop %v11135
    %v11138 = vtanh.pop %v11136
    %v11139 = vmul.f32 %v11113, %v11137
    %v11140 = vmul.f32 %v11128, %v11138
    %v11141 = vpack.c.bf16 %v11139, %v11139
    %v11142 = vpack.c.bf16 %v11140, %v11140
    %s11143 = smul.u32 %s2246, 1
    %s11144 = sshll.u32 %s11143, 4
    %11145 = dma.done %s66, %s11144
    %v11146 = vld [vmem:[#allocation4] sm:$0xf]
    %v11147 = vld [vmem:[#allocation4 + $0x4] sm:$0xf]
    %v11148 = vld [vmem:[#allocation4 + $0x8] sm:$0xf]
    %v11149 = vld [vmem:[#allocation4 + $0xc] sm:$0xf]
    %v11150 = vld [vmem:[#allocation4 + $0x10] sm:$0xf]
    %v11151 = vld [vmem:[#allocation4 + $0x14] sm:$0xf]
    %v11152 = vld [vmem:[#allocation4 + $0x18] sm:$0xf]
    %v11153 = vld [vmem:[#allocation4 + $0x1c] sm:$0xf]
    %v11154 = vld [vmem:[#allocation4 + $0x20] sm:$0xf]
    %v11155 = vld [vmem:[#allocation4 + $0x24] sm:$0xf]
    %v11156 = vld [vmem:[#allocation4 + $0x28] sm:$0xf]
    %v11157 = vld [vmem:[#allocation4 + $0x2c] sm:$0xf]
    %v11158 = vld [vmem:[#allocation4 + $0x30] sm:$0xf]
    %v11159 = vld [vmem:[#allocation4 + $0x34] sm:$0xf]
    %v11160 = vld [vmem:[#allocation4 + $0x38] sm:$0xf]
    %v11161 = vld [vmem:[#allocation4 + $0x3c] sm:$0xf]
    %v11162 = vld [vmem:[#allocation4 + $0x40] sm:$0xf]
    %v11163 = vld [vmem:[#allocation4 + $0x44] sm:$0xf]
    %v11164 = vld [vmem:[#allocation4 + $0x48] sm:$0xf]
    %v11165 = vld [vmem:[#allocation4 + $0x4c] sm:$0xf]
    %v11166 = vld [vmem:[#allocation4 + $0x50] sm:$0xf]
    %v11167 = vld [vmem:[#allocation4 + $0x54] sm:$0xf]
    %v11168 = vld [vmem:[#allocation4 + $0x58] sm:$0xf]
    %v11169 = vld [vmem:[#allocation4 + $0x5c] sm:$0xf]
    %v11170 = vld [vmem:[#allocation4 + $0x60] sm:$0xf]
    %v11171 = vld [vmem:[#allocation4 + $0x64] sm:$0xf]
    %v11172 = vld [vmem:[#allocation4 + $0x68] sm:$0xf]
    %v11173 = vld [vmem:[#allocation4 + $0x6c] sm:$0xf]
    %v11174 = vld [vmem:[#allocation4 + $0x70] sm:$0xf]
    %v11175 = vld [vmem:[#allocation4 + $0x74] sm:$0xf]
    %v11176 = vld [vmem:[#allocation4 + $0x78] sm:$0xf]
    %v11177 = vld [vmem:[#allocation4 + $0x7c] sm:$0xf]
    %v11178 = vld [vmem:[%s7] sm:$0x1]
    %v11180 = vperm.slane %v11178, 0
    %v11214 = vunpack.c.l.b16 %v11146
    %v11215 = vunpack.c.l.b16 %v11147
    %v11216 = vunpack.c.l.b16 %v11148
    %v11217 = vunpack.c.l.b16 %v11149
    %v11218 = vunpack.c.l.b16 %v11150
    %v11219 = vunpack.c.l.b16 %v11151
    %v11220 = vunpack.c.l.b16 %v11152
    %v11221 = vunpack.c.l.b16 %v11153
    %v11222 = vunpack.c.l.b16 %v11154
    %v11223 = vunpack.c.l.b16 %v11155
    %v11224 = vunpack.c.l.b16 %v11156
    %v11225 = vunpack.c.l.b16 %v11157
    %v11226 = vunpack.c.l.b16 %v11158
    %v11227 = vunpack.c.l.b16 %v11159
    %v11228 = vunpack.c.l.b16 %v11160
    %v11229 = vunpack.c.l.b16 %v11161
    %v11230 = vunpack.c.l.b16 %v11162
    %v11231 = vunpack.c.l.b16 %v11163
    %v11232 = vunpack.c.l.b16 %v11164
    %v11233 = vunpack.c.l.b16 %v11165
    %v11234 = vunpack.c.l.b16 %v11166
    %v11235 = vunpack.c.l.b16 %v11167
    %v11236 = vunpack.c.l.b16 %v11168
    %v11237 = vunpack.c.l.b16 %v11169
    %v11238 = vunpack.c.l.b16 %v11170
    %v11239 = vunpack.c.l.b16 %v11171
    %v11240 = vunpack.c.l.b16 %v11172
    %v11241 = vunpack.c.l.b16 %v11173
    %v11242 = vunpack.c.l.b16 %v11174
    %v11243 = vunpack.c.l.b16 %v11175
    %v11244 = vunpack.c.l.b16 %v11176
    %v11245 = vunpack.c.l.b16 %v11177
    %v11246 = vpack.c.b16 %v11215, %v11214
    %v11247 = vpack.c.b16 %v11217, %v11216
    %v11248 = vpack.c.b16 %v11219, %v11218
    %v11249 = vpack.c.b16 %v11221, %v11220
    %v11250 = vpack.c.b16 %v11223, %v11222
    %v11251 = vpack.c.b16 %v11225, %v11224
    %v11252 = vpack.c.b16 %v11227, %v11226
    %v11253 = vpack.c.b16 %v11229, %v11228
    %v11254 = vpack.c.b16 %v11231, %v11230
    %v11255 = vpack.c.b16 %v11233, %v11232
    %v11256 = vpack.c.b16 %v11235, %v11234
    %v11257 = vpack.c.b16 %v11237, %v11236
    %v11258 = vpack.c.b16 %v11239, %v11238
    %v11259 = vpack.c.b16 %v11241, %v11240
    %v11260 = vpack.c.b16 %v11243, %v11242
    %v11261 = vpack.c.b16 %v11245, %v11244
    %11278 = vmatpush.bf16.msra.mxu0 %v11253
    %11279 = vmatpush.bf16.msra.mxu0 %v11252
    %11280 = vmatpush.bf16.msra.mxu0 %v11251
    %11281 = vmatpush.bf16.msra.mxu0 %v11250
    %11282 = vmatpush.bf16.msra.mxu0 %v11249
    %11283 = vmatpush.bf16.msra.mxu0 %v11248
    %11284 = vmatpush.bf16.msra.mxu0 %v11247
    %11285 = vmatpush.bf16.msra.mxu0 %v11246
    %11286 = vmatmul.bf16.gmra.mxu0 %v11141
    %v11287 = vpop.f32.mrf.mxu0
    %v11288 = vadd.f32 %v11180, %v11287
    %v11289 = vpop.f32.mrf.mxu0
    %11290 = vdwg.mxu0
    %11291 = vmatpush.bf16.msra.mxu0 %v11261
    %11292 = vmatpush.bf16.msra.mxu0 %v11260
    %11293 = vmatpush.bf16.msra.mxu0 %v11259
    %11294 = vmatpush.bf16.msra.mxu0 %v11258
    %11295 = vmatpush.bf16.msra.mxu0 %v11257
    %11296 = vmatpush.bf16.msra.mxu0 %v11256
    %11297 = vmatpush.bf16.msra.mxu0 %v11255
    %11298 = vmatpush.bf16.msra.mxu0 %v11254
    %11299 = vmatmul.bf16.gmra.mxu0 %v11142
    %v11300 = vpop.f32.mrf.mxu0
    %v11301 = vadd.f32 %v11288, %v11300
    %v11302 = vpop.f32.mrf.mxu0
    %11303 = vdwg.mxu0
    %11304 = vst [vmem:[#allocation9] sm:$0x3] %v11301
    // Predicated region
    $region38: #{tpu_custom_call.1} parent=1 // pred_check
      _
    $region39: #{tpu_custom_call.1} parent=1 // pred_check_branch
      %11306 = sbr.rel (0) target = $region41
    $region40: #{tpu_custom_call.1} parent=1 // pred_region
      %11308 = vsyncadd [#allocation8], 0
      %s11310 = sshll.u32 [#allocation9], 4
      %s11311 = int_to_ptr.vmem [resolvable:$true] %s11310
      %s11312 = sshll.u32 %s8, 4
      %s11313 = int_to_ptr.hbm [resolvable:$true] %s11312
      %11315 = dma.vmem_to_hbm [thread:$0]  %s11311, 32, %s11313, [#allocation8]
    $region41: #{tpu_custom_call.1} parent=1 // pred_fallthru
      _
    // Predicated region
    $region42: #{tpu_custom_call.1} parent=1 // pred_check
      _
    $region43: #{tpu_custom_call.1} parent=1 // pred_check_branch
      %11317 = sbr.rel (0) target = $region45
    $region44: #{tpu_custom_call.1} parent=1 // pred_region
      %11319 = dma.done [#allocation8], 32
    $region45: #{tpu_custom_call.1} parent=1 // pred_fallthru
      _
    %11320 = vsyncpa [#allocation7], 1
    %11321 = vsyncpa [#allocation8], 1
  %11322 = vsyncmov [#allocation5]
  %s11323 = vpop.sfrf %11322
  %p11324 = scmp.eq.s32.totalorder %s11323, 0
  %p11325 = pneg %p11324
  %11327 = shalt.err (%p11325)
  %s11328 = scalar_lea.sflag [#allocation5], 1
  %11329 = vsyncmov %s11328
  %s11330 = vpop.sfrf %11329
  %p11331 = scmp.eq.s32.totalorder %s11330, 0
  %p11332 = pneg %p11331
  %11334 = shalt.err (%p11332)
  %s11335 = scalar_lea.sflag [#allocation5], 2
  %11336 = vsyncmov %s11335
  %s11337 = vpop.sfrf %11336
  %p11338 = scmp.eq.s32.totalorder %s11337, 0
  %p11339 = pneg %p11338
  %11341 = shalt.err (%p11339)

</llo_original>
